<compile_context>
chip_gen: v7x
topology: tpu7x:2x2x1
jax: 0.10.0
libtpu: 0.0.40
codegen_flags: <defaults>
</compile_context>

<pallas_src>
import functools
from math import sqrt

import jax
import jax.numpy as jnp
from jax.experimental import pallas as pl
from jax.experimental.pallas import tpu as pltpu


# Which spatial axis each of the 9 convolutions acts on (module order).
_CONV_AXIS = {
    "conv_l1": "D", "conv_l2": "H", "conv_l3": "W",
    "conv_r1": "H", "conv_r2": "D", "conv_r3": "W",
    "conv_v1": "W", "conv_v2": "D", "conv_v3": "H",
}
_CONV_ORDER = ("conv_l1", "conv_l2", "conv_l3",
               "conv_r1", "conv_r2", "conv_r3",
               "conv_v1", "conv_v2", "conv_v3")


def _make_kernel(row0, rc, stride_by_axis, pad_by_axis, axes_by_conv):
    """Build the fused GlobalConvBlock kernel.

    row0           : first flattened row of the D-central region
    rc             : rows computed per stage (= D * Hp * Wp)
    stride_by_axis : {'D': Hp*Wp, 'H': Wp, 'W': 1} flattened row strides
    pad_by_axis    : true conv pads {'D': p0, 'H': p1, 'W': p2}
    axes_by_conv   : 9 axis chars, one per conv, in _CONV_ORDER order
    """

    def conv_stage(load, w_ref, axis, bias, mask=None):
        # One 1-D "same" conv: k shifted lane-slices -> k MXU matmuls, f32 acc.
        k = w_ref.shape[0]
        co = w_ref.shape[1]
        stride = stride_by_axis[axis]
        pad = pad_by_axis[axis]
        acc = jnp.zeros((co, rc), jnp.float32)
        for t in range(k):
            lo = row0 + (t - pad) * stride            # static lane offset
            acc = acc + jnp.dot(w_ref[t], load(lo),
                                preferred_element_type=jnp.float32)
        # bias (Cout,1) broadcasts over lanes; mask (1,rc) zeroes the H/W halo
        # so the next stage reads exact zero padding (even with nonzero bias).
        out = acc + bias
        if mask is not None:
            out = out * mask
        return out

    def kernel(x_ref,
               wl1, wl2, wl3, wr1, wr2, wr3, wv1, wv2, wv3,
               b_ref, mask_ref, out_ref, buf_a, buf_b):
        # x_ref : (1, Cin, R)  one zero-padded, flattened volume (chan-first)
        # w*    : (k, Cout, Cin_or_Cout)  per-tap matrices of each conv
        # b_ref : (9, Cout, 1) biases of the 9 convs
        # mask  : (1, rc)      1.0 on valid (h,w), 0.0 on the H/W halo
        # out   : (1, Cout, rc)
        # buf_* : (Cout, R)    VMEM ping-pong buffers (halo kept at zero)
        cout = out_ref.shape[1]

        # Zero every step (cheap: a few KB) -- keeps halos exact and stays
        # correct even when the "parallel" batch axis is split across cores.
        buf_a[...] = jnp.zeros(buf_a.shape, buf_a.dtype)
        buf_b[...] = jnp.zeros(buf_b.shape, buf_b.dtype)

        xv = x_ref[0]                      # (Cin, R)
        mask = mask_ref[...]               # (1, rc) f32

        weights = (wl1, wl2, wl3, wr1, wr2, wr3, wv1, wv2, wv3)
        total = jnp.zeros((cout, rc), jnp.float32)

        for br in range(3):
            w1, w2, w3 = weights[3 * br:3 * br + 3]
            a1, a2, a3 = axes_by_conv[3 * br:3 * br + 3]

            # stage 1: x -> buf_a
            r1 = conv_stage(lambda lo: xv[:, lo:lo + rc],
                            w1, a1, b_ref[3 * br + 0], mask)
            buf_a[:, row0:row0 + rc] = r1.astype(buf_a.dtype)
            # stage 2: buf_a -> buf_b
            r2 = conv_stage(lambda lo: buf_a[:, lo:lo + rc],
                            w2, a2, b_ref[3 * br + 1], mask)
            buf_b[:, row0:row0 + rc] = r2.astype(buf_b.dtype)
            # stage 3: buf_b -> branch sum (halo columns dropped by wrapper,
            # so no mask needed here)
            r3 = conv_stage(lambda lo: buf_b[:, lo:lo + rc],
                            w3, a3, b_ref[3 * br + 2])
            total = total + r3

        out_ref[0] = total.astype(out_ref.dtype)

    return kernel


@functools.partial(jax.jit, static_argnames=("kernel_size", "compute_dtype"))
def global_conv_block(x, params, kernel_size, compute_dtype=None):
    """Fused GlobalConvBlock forward.

    x            : (N, Cin, D, H, W)
    params       : dict name -> (weight, bias); weight in PyTorch OIDHW layout
                   (Cout, Cin', kd, kh, kw), bias (Cout,)
    kernel_size  : (k0, k1, k2), all odd
    compute_dtype: optional operand dtype (e.g. jnp.bfloat16); acc stays f32.
    """
    k0, k1, k2 = kernel_size
    assert k0 % 2 == 1 and k1 % 2 == 1 and k2 % 2 == 1, "odd kernel sizes only"
    p0, p1, p2 = (k0 - 1) // 2, (k1 - 1) // 2, (k2 - 1) // 2
    # keep at least a 1-wide zero halo so every shifted read stays in-bounds
    e0, e1, e2 = max(p0, 1), max(p1, 1), max(p2, 1)

    n, cin, d, h, w = x.shape
    cout = params["conv_l1"][0].shape[0]
    dp, hp, wp = d + 2 * e0, h + 2 * e1, w + 2 * e2
    s_d, s_h, s_w = hp * wp, wp, 1
    tot_rows = dp * s_d                 # R : padded flattened volume
    rc = d * s_d                        # rows computed per stage
    row0 = e0 * s_d                     # start of the D-central region

    work_dtype = jnp.dtype(compute_dtype) if compute_dtype is not None else x.dtype

    # ---- glue (cheap, XLA level): pad once, flatten spatial, reformat weights
    x_w = x.astype(work_dtype)
    x_pad = jnp.pad(x_w, ((0, 0), (0, 0), (e0, e0), (e1, e1), (e2, e2)))
    x_flat = x_pad.reshape(n, cin, tot_rows)

    def tap_matrices(name):
        wgt, _ = params[name]
        axis = _CONV_AXIS[name]
        if axis == "D":
            wk = wgt[:, :, :, 0, 0]
        elif axis == "H":
            wk = wgt[:, :, 0, :, 0]
        else:
            wk = wgt[:, :, 0, 0, :]
        # (Cout, Cin', k) -> (k, Cout, Cin')
        return jnp.transpose(wk, (2, 0, 1)).astype(work_dtype)

    w_list = [tap_matrices(name) for name in _CONV_ORDER]
    b_all = jnp.stack([params[name][1] for name in _CONV_ORDER]
                      ).astype(work_dtype).reshape(9, cout, 1)

    # 1.0 on valid (h, w) inside the D-central rows, 0.0 on the H/W halo.
    idx = jnp.arange(rc)
    hh = (idx // wp) % hp
    ww = idx % wp
    mask = (((hh >= e1) & (hh < e1 + h)) &
            ((ww >= e2) & (ww < e2 + w))).astype(jnp.float32).reshape(1, rc)

    kernel = _make_kernel(
        row0, rc,
        stride_by_axis={"D": s_d, "H": s_h, "W": s_w},
        pad_by_axis={"D": p0, "H": p1, "W": p2},
        axes_by_conv=tuple(_CONV_AXIS[name] for name in _CONV_ORDER))

    in_specs = [pl.BlockSpec((1, cin, tot_rows), lambda i: (i, 0, 0))]
    # weights / biases / mask: constant block index -> stay resident in VMEM
    in_specs += [pl.BlockSpec(wi.shape, lambda i: (0, 0, 0)) for wi in w_list]
    in_specs += [pl.BlockSpec((9, cout, 1), lambda i: (0, 0, 0)),
                 pl.BlockSpec((1, rc), lambda i: (0, 0))]

    out_flat = pl.pallas_call(
        kernel,
        out_shape=jax.ShapeDtypeStruct((n, cout, rc), work_dtype),
        grid_spec=pltpu.PrefetchScalarGridSpec(
            num_scalar_prefetch=0,
            grid=(n,),
            in_specs=in_specs,
            out_specs=pl.BlockSpec((1, cout, rc), lambda i: (i, 0, 0)),
            scratch_shapes=[pltpu.VMEM((cout, tot_rows), work_dtype),
                            pltpu.VMEM((cout, tot_rows), work_dtype)]),
        compiler_params=pltpu.CompilerParams(
            dimension_semantics=("parallel",)),
    )(x_flat, *w_list, b_all, mask)

    # drop the H/W halo columns and restore (N, Cout, D, H, W)
    out = out_flat.reshape(n, cout, d, hp, wp)[:, :, :, e1:e1 + h, e2:e2 + w]
    return out


def reference(x, params, kernel_size):
    """Independent pure-JAX reference: 9 separate lax convs, NCDHW."""
    p0, p1, p2 = [(k - 1) // 2 for k in kernel_size]
    dn = ("NCDHW", "OIDHW", "NCDHW")
    pad = {"D": ((p0, p0), (0, 0), (0, 0)),
           "H": ((0, 0), (p1, p1), (0, 0)),
           "W": ((0, 0), (0, 0), (p2, p2))}

    def conv(v, name):
        wgt, b = params[name]
        out = jax.lax.conv_general_dilated(
            v, wgt, window_strides=(1, 1, 1), padding=pad[_CONV_AXIS[name]],
            dimension_numbers=dn, precision=jax.lax.Precision.HIGHEST)
        return out + b[None, :, None, None, None]

    x_l = conv(conv(conv(x, "conv_l1"), "conv_l2"), "conv_l3")
    x_r = conv(conv(conv(x, "conv_r1"), "conv_r2"), "conv_r3")
    x_v = conv(conv(conv(x, "conv_v1"), "conv_v2"), "conv_v3")
    return x_l + x_r + x_v


if __name__ == "__main__":
    key = jax.random.PRNGKey(0)

    N, IN_DIM, OUT_DIM = 2, 4, 8
    D = H = W = 8
    KS = (3, 3, 3)

    conv_defs = {
        "conv_l1": (IN_DIM, OUT_DIM, (KS[0], 1, 1)),
        "conv_l2": (OUT_DIM, OUT_DIM, (1, KS[1], 1)),
        "conv_l3": (OUT_DIM, OUT_DIM, (1, 1, KS[2])),
        "conv_r1": (IN_DIM, OUT_DIM, (1, KS[1], 1)),
        "conv_r2": (OUT_DIM, OUT_DIM, (KS[0], 1, 1)),
        "conv_r3": (OUT_DIM, OUT_DIM, (1, 1, KS[2])),
        "conv_v1": (IN_DIM, OUT_DIM, (1, 1, KS[2])),
        "conv_v2": (OUT_DIM, OUT_DIM, (KS[0], 1, 1)),
        "conv_v3": (OUT_DIM, OUT_DIM, (1, KS[1], 1)),
    }

    keys = jax.random.split(key, len(conv_defs) + 2)
    x = jax.random.normal(keys[0], (N, IN_DIM, D, H, W), jnp.float32)

    # weight ~ N(0, sqrt(2/n)), n = kd*kh*kw*out_channels; bias zero
    # (matches the module's __init__; BatchNorm3d init branch is never hit).
    params = {}
    for i, (name, (ci, co, (kd, kh, kw))) in enumerate(sorted(conv_defs.items())):
        nfan = kd * kh * kw * co
        wgt = jax.random.normal(keys[i + 1], (co, ci, kd, kh, kw),
                                jnp.float32) * sqrt(2.0 / nfan)
        params[name] = (wgt, jnp.zeros((co,), jnp.float32))

    # --- f32 path (module-init weights, zero biases) ---
    out = jax.block_until_ready(global_conv_block(x, params, kernel_size=KS))
    ref = reference(x, params, KS)
    err = float(jnp.max(jnp.abs(out - ref)))
    assert out.shape == (N, OUT_DIM, D, H, W)
    assert jnp.allclose(out, ref, atol=5e-3, rtol=5e-3), f"f32 max |err| = {err}"

    # --- f32 path with non-zero biases (exercises exact bias/halo handling) ---
    params_b = {}
    for j, name in enumerate(sorted(params)):
        wgt, b = params[name]
        bias = 0.1 * jax.random.normal(jax.random.fold_in(keys[-1], j),
                                       b.shape, jnp.float32)
        params_b[name] = (wgt, bias)
    out_b = jax.block_until_ready(global_conv_block(x, params_b, kernel_size=KS))
    ref_b = reference(x, params_b, KS)
    err_b = float(jnp.max(jnp.abs(out_b - ref_b)))
    assert jnp.allclose(out_b, ref_b, atol=5e-3, rtol=5e-3), \
        f"bias max |err| = {err_b}"

    # --- bf16 operands / f32 accumulation ---
    out_bf16 = jax.block_until_ready(
        global_conv_block(x, params_b, kernel_size=KS,
                          compute_dtype=jnp.bfloat16))
    q = lambda a: a.astype(jnp.bfloat16).astype(jnp.float32)
    params_q = {name: (q(wgt), q(b)) for name, (wgt, b) in params_b.items()}
    ref_q = reference(q(x), params_q, KS)
    err_q = float(jnp.max(jnp.abs(out_bf16.astype(jnp.float32) - ref_q)))
    assert jnp.allclose(out_bf16.astype(jnp.float32), ref_q,
                        atol=2e-1, rtol=1e-1), f"bf16 max |err| = {err_q}"

    print("KERNEL_OK")
</pallas_src>

<mosaic_0001>
module attributes {stable_mosaic.version = 11 : i64} {
  func.func @kernel(%arg0: i32, %arg1: memref<1x4x1000xf32, #tpu.memory_space<vmem>>, %arg2: memref<3x8x4xf32, #tpu.memory_space<vmem>>, %arg3: memref<3x8x8xf32, #tpu.memory_space<vmem>>, %arg4: memref<3x8x8xf32, #tpu.memory_space<vmem>>, %arg5: memref<3x8x4xf32, #tpu.memory_space<vmem>>, %arg6: memref<3x8x8xf32, #tpu.memory_space<vmem>>, %arg7: memref<3x8x8xf32, #tpu.memory_space<vmem>>, %arg8: memref<3x8x4xf32, #tpu.memory_space<vmem>>, %arg9: memref<3x8x8xf32, #tpu.memory_space<vmem>>, %arg10: memref<3x8x8xf32, #tpu.memory_space<vmem>>, %arg11: memref<9x8x1xf32, #tpu.memory_space<vmem>>, %arg12: memref<1x800xf32, #tpu.memory_space<vmem>>, %arg13: memref<1x8x800xf32, #tpu.memory_space<vmem>>, %arg14: memref<8x1000xf32, #tpu.memory_space<vmem>>, %arg15: memref<8x1000xf32, #tpu.memory_space<vmem>>) attributes {dimension_semantics = [#tpu.dimension_semantics<parallel>], iteration_bounds = array<i64: 2>, scalar_prefetch = 0 : i64, scratch_operands = 2 : i64, tpu.core_type = #tpu.core_type<tc>, window_params = [{transform_indices = @transform_0, window_bounds = array<i64: 1, 4, 1000>}, {pipeline_mode = #tpu.pipeline_mode<synchronous>, transform_indices = @transform_1, window_bounds = array<i64: 3, 8, 4>}, {pipeline_mode = #tpu.pipeline_mode<synchronous>, transform_indices = @transform_2, window_bounds = array<i64: 3, 8, 8>}, {pipeline_mode = #tpu.pipeline_mode<synchronous>, transform_indices = @transform_3, window_bounds = array<i64: 3, 8, 8>}, {pipeline_mode = #tpu.pipeline_mode<synchronous>, transform_indices = @transform_4, window_bounds = array<i64: 3, 8, 4>}, {pipeline_mode = #tpu.pipeline_mode<synchronous>, transform_indices = @transform_5, window_bounds = array<i64: 3, 8, 8>}, {pipeline_mode = #tpu.pipeline_mode<synchronous>, transform_indices = @transform_6, window_bounds = array<i64: 3, 8, 8>}, {pipeline_mode = #tpu.pipeline_mode<synchronous>, transform_indices = @transform_7, window_bounds = array<i64: 3, 8, 4>}, {pipeline_mode = #tpu.pipeline_mode<synchronous>, transform_indices = @transform_8, window_bounds = array<i64: 3, 8, 8>}, {pipeline_mode = #tpu.pipeline_mode<synchronous>, transform_indices = @transform_9, window_bounds = array<i64: 3, 8, 8>}, {pipeline_mode = #tpu.pipeline_mode<synchronous>, transform_indices = @transform_10, window_bounds = array<i64: 9, 8, 1>}, {pipeline_mode = #tpu.pipeline_mode<synchronous>, transform_indices = @transform_11, window_bounds = array<i64: 1, 800>}, {transform_indices = @transform_12, window_bounds = array<i64: 1, 8, 800>}]} {
    %cst = arith.constant 0.000000e+00 : f32
    %0 = vector.broadcast %cst : f32 to vector<8x1000xf32>
    %c0 = arith.constant 0 : index
    %c0_0 = arith.constant 0 : index
    %1 = vector.load %arg14[%c0, %c0_0] : memref<8x1000xf32, #tpu.memory_space<vmem>>, vector<8x1000xf32>
    tpu.vector_store %arg14[%c0, %c0_0], %0 {strides = array<i32>} : memref<8x1000xf32, #tpu.memory_space<vmem>>, vector<8x1000xf32>,
    %cst_1 = arith.constant 0.000000e+00 : f32
    %2 = vector.broadcast %cst_1 : f32 to vector<8x1000xf32>
    %c0_2 = arith.constant 0 : index
    %c0_3 = arith.constant 0 : index
    %3 = vector.load %arg15[%c0_2, %c0_3] : memref<8x1000xf32, #tpu.memory_space<vmem>>, vector<8x1000xf32>
    tpu.vector_store %arg15[%c0_2, %c0_3], %2 {strides = array<i32>} : memref<8x1000xf32, #tpu.memory_space<vmem>>, vector<8x1000xf32>,
    %c0_4 = arith.constant 0 : index
    %c0_5 = arith.constant 0 : index
    %c0_6 = arith.constant 0 : index
    %4 = vector.load %arg1[%c0_4, %c0_5, %c0_6] : memref<1x4x1000xf32, #tpu.memory_space<vmem>>, vector<1x4x1000xf32>
    %5 = vector.shape_cast %4 : vector<1x4x1000xf32> to vector<4x1000xf32>
    %c0_7 = arith.constant 0 : index
    %c0_8 = arith.constant 0 : index
    %6 = vector.load %arg12[%c0_7, %c0_8] : memref<1x800xf32, #tpu.memory_space<vmem>>, vector<1x800xf32>
    %cst_9 = arith.constant 0.000000e+00 : f32
    %7 = vector.broadcast %cst_9 : f32 to vector<8x800xf32>
    %c0_10 = arith.constant 0 : index
    %c0_11 = arith.constant 0 : index
    %c0_12 = arith.constant 0 : index
    %8 = vector.load %arg11[%c0_10, %c0_11, %c0_12] : memref<9x8x1xf32, #tpu.memory_space<vmem>>, vector<1x8x1xf32>
    %9 = vector.shape_cast %8 : vector<1x8x1xf32> to vector<8x1xf32>
    %cst_13 = arith.constant 0.000000e+00 : f32
    %10 = vector.broadcast %cst_13 : f32 to vector<8x800xf32>
    %c0_14 = arith.constant 0 : index
    %c0_15 = arith.constant 0 : index
    %c0_16 = arith.constant 0 : index
    %11 = vector.load %arg2[%c0_14, %c0_15, %c0_16] : memref<3x8x4xf32, #tpu.memory_space<vmem>>, vector<1x8x4xf32>
    %12 = vector.shape_cast %11 : vector<1x8x4xf32> to vector<8x4xf32>
    %13 = vector.extract_strided_slice %5 {offsets = [0, 0], sizes = [4, 800], strides = [1, 1]} : vector<4x1000xf32> to vector<4x800xf32>
    %cst_17 = arith.constant dense<0.000000e+00> : vector<8x800xf32>
    %14 = tpu.matmul %12, %13, %cst_17 {dimension_numbers = #tpu.dot_dimension_numbers<[1], [0], [0], [1], [0, 0, 1, 1], [], []>} : vector<8x4xf32>, vector<4x800xf32>, vector<8x800xf32> -> vector<8x800xf32>
    %15 = arith.addf %10, %14 : vector<8x800xf32>
    %c1 = arith.constant 1 : index
    %c0_18 = arith.constant 0 : index
    %c0_19 = arith.constant 0 : index
    %16 = vector.load %arg2[%c1, %c0_18, %c0_19] : memref<3x8x4xf32, #tpu.memory_space<vmem>>, vector<1x8x4xf32>
    %17 = vector.shape_cast %16 : vector<1x8x4xf32> to vector<8x4xf32>
    %18 = vector.extract_strided_slice %5 {offsets = [0, 100], sizes = [4, 800], strides = [1, 1]} : vector<4x1000xf32> to vector<4x800xf32>
    %cst_20 = arith.constant dense<0.000000e+00> : vector<8x800xf32>
    %19 = tpu.matmul %17, %18, %cst_20 {dimension_numbers = #tpu.dot_dimension_numbers<[1], [0], [0], [1], [0, 0, 1, 1], [], []>} : vector<8x4xf32>, vector<4x800xf32>, vector<8x800xf32> -> vector<8x800xf32>
    %20 = arith.addf %15, %19 : vector<8x800xf32>
    %c2 = arith.constant 2 : index
    %c0_21 = arith.constant 0 : index
    %c0_22 = arith.constant 0 : index
    %21 = vector.load %arg2[%c2, %c0_21, %c0_22] : memref<3x8x4xf32, #tpu.memory_space<vmem>>, vector<1x8x4xf32>
    %22 = vector.shape_cast %21 : vector<1x8x4xf32> to vector<8x4xf32>
    %23 = vector.extract_strided_slice %5 {offsets = [0, 200], sizes = [4, 800], strides = [1, 1]} : vector<4x1000xf32> to vector<4x800xf32>
    %cst_23 = arith.constant dense<0.000000e+00> : vector<8x800xf32>
    %24 = tpu.matmul %22, %23, %cst_23 {dimension_numbers = #tpu.dot_dimension_numbers<[1], [0], [0], [1], [0, 0, 1, 1], [], []>} : vector<8x4xf32>, vector<4x800xf32>, vector<8x800xf32> -> vector<8x800xf32>
    %25 = arith.addf %20, %24 : vector<8x800xf32>
    %26 = vector.broadcast %9 : vector<8x1xf32> to vector<8x800xf32>
    %27 = arith.addf %25, %26 : vector<8x800xf32>
    %28 = vector.broadcast %6 : vector<1x800xf32> to vector<8x800xf32>
    %29 = arith.mulf %27, %28 : vector<8x800xf32>
    %c0_24 = arith.constant 0 : index
    %c100 = arith.constant 100 : index
    %30 = vector.load %arg14[%c0_24, %c100] : memref<8x1000xf32, #tpu.memory_space<vmem>>, vector<8x800xf32>
    tpu.vector_store %arg14[%c0_24, %c100], %29 {strides = array<i32>} : memref<8x1000xf32, #tpu.memory_space<vmem>>, vector<8x800xf32>,
    %c1_25 = arith.constant 1 : index
    %c0_26 = arith.constant 0 : index
    %c0_27 = arith.constant 0 : index
    %31 = vector.load %arg11[%c1_25, %c0_26, %c0_27] : memref<9x8x1xf32, #tpu.memory_space<vmem>>, vector<1x8x1xf32>
    %32 = vector.shape_cast %31 : vector<1x8x1xf32> to vector<8x1xf32>
    %cst_28 = arith.constant 0.000000e+00 : f32
    %33 = vector.broadcast %cst_28 : f32 to vector<8x800xf32>
    %c0_29 = arith.constant 0 : index
    %c0_30 = arith.constant 0 : index
    %c0_31 = arith.constant 0 : index
    %34 = vector.load %arg3[%c0_29, %c0_30, %c0_31] : memref<3x8x8xf32, #tpu.memory_space<vmem>>, vector<1x8x8xf32>
    %35 = vector.shape_cast %34 : vector<1x8x8xf32> to vector<8x8xf32>
    %c0_32 = arith.constant 0 : index
    %c90 = arith.constant 90 : index
    %36 = vector.load %arg14[%c0_32, %c90] : memref<8x1000xf32, #tpu.memory_space<vmem>>, vector<8x800xf32>
    %cst_33 = arith.constant dense<0.000000e+00> : vector<8x800xf32>
    %37 = tpu.matmul %35, %36, %cst_33 {dimension_numbers = #tpu.dot_dimension_numbers<[1], [0], [0], [1], [0, 0, 1, 1], [], []>} : vector<8x8xf32>, vector<8x800xf32>, vector<8x800xf32> -> vector<8x800xf32>
    %38 = arith.addf %33, %37 : vector<8x800xf32>
    %c1_34 = arith.constant 1 : index
    %c0_35 = arith.constant 0 : index
    %c0_36 = arith.constant 0 : index
    %39 = vector.load %arg3[%c1_34, %c0_35, %c0_36] : memref<3x8x8xf32, #tpu.memory_space<vmem>>, vector<1x8x8xf32>
    %40 = vector.shape_cast %39 : vector<1x8x8xf32> to vector<8x8xf32>
    %c0_37 = arith.constant 0 : index
    %c100_38 = arith.constant 100 : index
    %41 = vector.load %arg14[%c0_37, %c100_38] : memref<8x1000xf32, #tpu.memory_space<vmem>>, vector<8x800xf32>
    %cst_39 = arith.constant dense<0.000000e+00> : vector<8x800xf32>
    %42 = tpu.matmul %40, %41, %cst_39 {dimension_numbers = #tpu.dot_dimension_numbers<[1], [0], [0], [1], [0, 0, 1, 1], [], []>} : vector<8x8xf32>, vector<8x800xf32>, vector<8x800xf32> -> vector<8x800xf32>
    %43 = arith.addf %38, %42 : vector<8x800xf32>
    %c2_40 = arith.constant 2 : index
    %c0_41 = arith.constant 0 : index
    %c0_42 = arith.constant 0 : index
    %44 = vector.load %arg3[%c2_40, %c0_41, %c0_42] : memref<3x8x8xf32, #tpu.memory_space<vmem>>, vector<1x8x8xf32>
    %45 = vector.shape_cast %44 : vector<1x8x8xf32> to vector<8x8xf32>
    %c0_43 = arith.constant 0 : index
    %c110 = arith.constant 110 : index
    %46 = vector.load %arg14[%c0_43, %c110] : memref<8x1000xf32, #tpu.memory_space<vmem>>, vector<8x800xf32>
    %cst_44 = arith.constant dense<0.000000e+00> : vector<8x800xf32>
    %47 = tpu.matmul %45, %46, %cst_44 {dimension_numbers = #tpu.dot_dimension_numbers<[1], [0], [0], [1], [0, 0, 1, 1], [], []>} : vector<8x8xf32>, vector<8x800xf32>, vector<8x800xf32> -> vector<8x800xf32>
    %48 = arith.addf %43, %47 : vector<8x800xf32>
    %49 = vector.broadcast %32 : vector<8x1xf32> to vector<8x800xf32>
    %50 = arith.addf %48, %49 : vector<8x800xf32>
    %51 = vector.broadcast %6 : vector<1x800xf32> to vector<8x800xf32>
    %52 = arith.mulf %50, %51 : vector<8x800xf32>
    %c0_45 = arith.constant 0 : index
    %c100_46 = arith.constant 100 : index
    %53 = vector.load %arg15[%c0_45, %c100_46] : memref<8x1000xf32, #tpu.memory_space<vmem>>, vector<8x800xf32>
    tpu.vector_store %arg15[%c0_45, %c100_46], %52 {strides = array<i32>} : memref<8x1000xf32, #tpu.memory_space<vmem>>, vector<8x800xf32>,
    %c2_47 = arith.constant 2 : index
    %c0_48 = arith.constant 0 : index
    %c0_49 = arith.constant 0 : index
    %54 = vector.load %arg11[%c2_47, %c0_48, %c0_49] : memref<9x8x1xf32, #tpu.memory_space<vmem>>, vector<1x8x1xf32>
    %55 = vector.shape_cast %54 : vector<1x8x1xf32> to vector<8x1xf32>
    %cst_50 = arith.constant 0.000000e+00 : f32
    %56 = vector.broadcast %cst_50 : f32 to vector<8x800xf32>
    %c0_51 = arith.constant 0 : index
    %c0_52 = arith.constant 0 : index
    %c0_53 = arith.constant 0 : index
    %57 = vector.load %arg4[%c0_51, %c0_52, %c0_53] : memref<3x8x8xf32, #tpu.memory_space<vmem>>, vector<1x8x8xf32>
    %58 = vector.shape_cast %57 : vector<1x8x8xf32> to vector<8x8xf32>
    %c0_54 = arith.constant 0 : index
    %c99 = arith.constant 99 : index
    %59 = vector.load %arg15[%c0_54, %c99] : memref<8x1000xf32, #tpu.memory_space<vmem>>, vector<8x800xf32>
    %cst_55 = arith.constant dense<0.000000e+00> : vector<8x800xf32>
    %60 = tpu.matmul %58, %59, %cst_55 {dimension_numbers = #tpu.dot_dimension_numbers<[1], [0], [0], [1], [0, 0, 1, 1], [], []>} : vector<8x8xf32>, vector<8x800xf32>, vector<8x800xf32> -> vector<8x800xf32>
    %61 = arith.addf %56, %60 : vector<8x800xf32>
    %c1_56 = arith.constant 1 : index
    %c0_57 = arith.constant 0 : index
    %c0_58 = arith.constant 0 : index
    %62 = vector.load %arg4[%c1_56, %c0_57, %c0_58] : memref<3x8x8xf32, #tpu.memory_space<vmem>>, vector<1x8x8xf32>
    %63 = vector.shape_cast %62 : vector<1x8x8xf32> to vector<8x8xf32>
    %c0_59 = arith.constant 0 : index
    %c100_60 = arith.constant 100 : index
    %64 = vector.load %arg15[%c0_59, %c100_60] : memref<8x1000xf32, #tpu.memory_space<vmem>>, vector<8x800xf32>
    %cst_61 = arith.constant dense<0.000000e+00> : vector<8x800xf32>
    %65 = tpu.matmul %63, %64, %cst_61 {dimension_numbers = #tpu.dot_dimension_numbers<[1], [0], [0], [1], [0, 0, 1, 1], [], []>} : vector<8x8xf32>, vector<8x800xf32>, vector<8x800xf32> -> vector<8x800xf32>
    %66 = arith.addf %61, %65 : vector<8x800xf32>
    %c2_62 = arith.constant 2 : index
    %c0_63 = arith.constant 0 : index
    %c0_64 = arith.constant 0 : index
    %67 = vector.load %arg4[%c2_62, %c0_63, %c0_64] : memref<3x8x8xf32, #tpu.memory_space<vmem>>, vector<1x8x8xf32>
    %68 = vector.shape_cast %67 : vector<1x8x8xf32> to vector<8x8xf32>
    %c0_65 = arith.constant 0 : index
    %c101 = arith.constant 101 : index
    %69 = vector.load %arg15[%c0_65, %c101] : memref<8x1000xf32, #tpu.memory_space<vmem>>, vector<8x800xf32>
    %cst_66 = arith.constant dense<0.000000e+00> : vector<8x800xf32>
    %70 = tpu.matmul %68, %69, %cst_66 {dimension_numbers = #tpu.dot_dimension_numbers<[1], [0], [0], [1], [0, 0, 1, 1], [], []>} : vector<8x8xf32>, vector<8x800xf32>, vector<8x800xf32> -> vector<8x800xf32>
    %71 = arith.addf %66, %70 : vector<8x800xf32>
    %72 = vector.broadcast %55 : vector<8x1xf32> to vector<8x800xf32>
    %73 = arith.addf %71, %72 : vector<8x800xf32>
    %74 = arith.addf %7, %73 : vector<8x800xf32>
    %c3 = arith.constant 3 : index
    %c0_67 = arith.constant 0 : index
    %c0_68 = arith.constant 0 : index
    %75 = vector.load %arg11[%c3, %c0_67, %c0_68] : memref<9x8x1xf32, #tpu.memory_space<vmem>>, vector<1x8x1xf32>
    %76 = vector.shape_cast %75 : vector<1x8x1xf32> to vector<8x1xf32>
    %cst_69 = arith.constant 0.000000e+00 : f32
    %77 = vector.broadcast %cst_69 : f32 to vector<8x800xf32>
    %c0_70 = arith.constant 0 : index
    %c0_71 = arith.constant 0 : index
    %c0_72 = arith.constant 0 : index
    %78 = vector.load %arg5[%c0_70, %c0_71, %c0_72] : memref<3x8x4xf32, #tpu.memory_space<vmem>>, vector<1x8x4xf32>
    %79 = vector.shape_cast %78 : vector<1x8x4xf32> to vector<8x4xf32>
    %80 = vector.extract_strided_slice %5 {offsets = [0, 90], sizes = [4, 800], strides = [1, 1]} : vector<4x1000xf32> to vector<4x800xf32>
    %cst_73 = arith.constant dense<0.000000e+00> : vector<8x800xf32>
    %81 = tpu.matmul %79, %80, %cst_73 {dimension_numbers = #tpu.dot_dimension_numbers<[1], [0], [0], [1], [0, 0, 1, 1], [], []>} : vector<8x4xf32>, vector<4x800xf32>, vector<8x800xf32> -> vector<8x800xf32>
    %82 = arith.addf %77, %81 : vector<8x800xf32>
    %c1_74 = arith.constant 1 : index
    %c0_75 = arith.constant 0 : index
    %c0_76 = arith.constant 0 : index
    %83 = vector.load %arg5[%c1_74, %c0_75, %c0_76] : memref<3x8x4xf32, #tpu.memory_space<vmem>>, vector<1x8x4xf32>
    %84 = vector.shape_cast %83 : vector<1x8x4xf32> to vector<8x4xf32>
    %85 = vector.extract_strided_slice %5 {offsets = [0, 100], sizes = [4, 800], strides = [1, 1]} : vector<4x1000xf32> to vector<4x800xf32>
    %cst_77 = arith.constant dense<0.000000e+00> : vector<8x800xf32>
    %86 = tpu.matmul %84, %85, %cst_77 {dimension_numbers = #tpu.dot_dimension_numbers<[1], [0], [0], [1], [0, 0, 1, 1], [], []>} : vector<8x4xf32>, vector<4x800xf32>, vector<8x800xf32> -> vector<8x800xf32>
    %87 = arith.addf %82, %86 : vector<8x800xf32>
    %c2_78 = arith.constant 2 : index
    %c0_79 = arith.constant 0 : index
    %c0_80 = arith.constant 0 : index
    %88 = vector.load %arg5[%c2_78, %c0_79, %c0_80] : memref<3x8x4xf32, #tpu.memory_space<vmem>>, vector<1x8x4xf32>
    %89 = vector.shape_cast %88 : vector<1x8x4xf32> to vector<8x4xf32>
    %90 = vector.extract_strided_slice %5 {offsets = [0, 110], sizes = [4, 800], strides = [1, 1]} : vector<4x1000xf32> to vector<4x800xf32>
    %cst_81 = arith.constant dense<0.000000e+00> : vector<8x800xf32>
    %91 = tpu.matmul %89, %90, %cst_81 {dimension_numbers = #tpu.dot_dimension_numbers<[1], [0], [0], [1], [0, 0, 1, 1], [], []>} : vector<8x4xf32>, vector<4x800xf32>, vector<8x800xf32> -> vector<8x800xf32>
    %92 = arith.addf %87, %91 : vector<8x800xf32>
    %93 = vector.broadcast %76 : vector<8x1xf32> to vector<8x800xf32>
    %94 = arith.addf %92, %93 : vector<8x800xf32>
    %95 = vector.broadcast %6 : vector<1x800xf32> to vector<8x800xf32>
    %96 = arith.mulf %94, %95 : vector<8x800xf32>
    %c0_82 = arith.constant 0 : index
    %c100_83 = arith.constant 100 : index
    %97 = vector.load %arg14[%c0_82, %c100_83] : memref<8x1000xf32, #tpu.memory_space<vmem>>, vector<8x800xf32>
    tpu.vector_store %arg14[%c0_82, %c100_83], %96 {strides = array<i32>} : memref<8x1000xf32, #tpu.memory_space<vmem>>, vector<8x800xf32>,
    %c4 = arith.constant 4 : index
    %c0_84 = arith.constant 0 : index
    %c0_85 = arith.constant 0 : index
    %98 = vector.load %arg11[%c4, %c0_84, %c0_85] : memref<9x8x1xf32, #tpu.memory_space<vmem>>, vector<1x8x1xf32>
    %99 = vector.shape_cast %98 : vector<1x8x1xf32> to vector<8x1xf32>
    %cst_86 = arith.constant 0.000000e+00 : f32
    %100 = vector.broadcast %cst_86 : f32 to vector<8x800xf32>
    %c0_87 = arith.constant 0 : index
    %c0_88 = arith.constant 0 : index
    %c0_89 = arith.constant 0 : index
    %101 = vector.load %arg6[%c0_87, %c0_88, %c0_89] : memref<3x8x8xf32, #tpu.memory_space<vmem>>, vector<1x8x8xf32>
    %102 = vector.shape_cast %101 : vector<1x8x8xf32> to vector<8x8xf32>
    %c0_90 = arith.constant 0 : index
    %c0_91 = arith.constant 0 : index
    %103 = vector.load %arg14[%c0_90, %c0_91] : memref<8x1000xf32, #tpu.memory_space<vmem>>, vector<8x800xf32>
    %cst_92 = arith.constant dense<0.000000e+00> : vector<8x800xf32>
    %104 = tpu.matmul %102, %103, %cst_92 {dimension_numbers = #tpu.dot_dimension_numbers<[1], [0], [0], [1], [0, 0, 1, 1], [], []>} : vector<8x8xf32>, vector<8x800xf32>, vector<8x800xf32> -> vector<8x800xf32>
    %105 = arith.addf %100, %104 : vector<8x800xf32>
    %c1_93 = arith.constant 1 : index
    %c0_94 = arith.constant 0 : index
    %c0_95 = arith.constant 0 : index
    %106 = vector.load %arg6[%c1_93, %c0_94, %c0_95] : memref<3x8x8xf32, #tpu.memory_space<vmem>>, vector<1x8x8xf32>
    %107 = vector.shape_cast %106 : vector<1x8x8xf32> to vector<8x8xf32>
    %c0_96 = arith.constant 0 : index
    %c100_97 = arith.constant 100 : index
    %108 = vector.load %arg14[%c0_96, %c100_97] : memref<8x1000xf32, #tpu.memory_space<vmem>>, vector<8x800xf32>
    %cst_98 = arith.constant dense<0.000000e+00> : vector<8x800xf32>
    %109 = tpu.matmul %107, %108, %cst_98 {dimension_numbers = #tpu.dot_dimension_numbers<[1], [0], [0], [1], [0, 0, 1, 1], [], []>} : vector<8x8xf32>, vector<8x800xf32>, vector<8x800xf32> -> vector<8x800xf32>
    %110 = arith.addf %105, %109 : vector<8x800xf32>
    %c2_99 = arith.constant 2 : index
    %c0_100 = arith.constant 0 : index
    %c0_101 = arith.constant 0 : index
    %111 = vector.load %arg6[%c2_99, %c0_100, %c0_101] : memref<3x8x8xf32, #tpu.memory_space<vmem>>, vector<1x8x8xf32>
    %112 = vector.shape_cast %111 : vector<1x8x8xf32> to vector<8x8xf32>
    %c0_102 = arith.constant 0 : index
    %c200 = arith.constant 200 : index
    %113 = vector.load %arg14[%c0_102, %c200] : memref<8x1000xf32, #tpu.memory_space<vmem>>, vector<8x800xf32>
    %cst_103 = arith.constant dense<0.000000e+00> : vector<8x800xf32>
    %114 = tpu.matmul %112, %113, %cst_103 {dimension_numbers = #tpu.dot_dimension_numbers<[1], [0], [0], [1], [0, 0, 1, 1], [], []>} : vector<8x8xf32>, vector<8x800xf32>, vector<8x800xf32> -> vector<8x800xf32>
    %115 = arith.addf %110, %114 : vector<8x800xf32>
    %116 = vector.broadcast %99 : vector<8x1xf32> to vector<8x800xf32>
    %117 = arith.addf %115, %116 : vector<8x800xf32>
    %118 = vector.broadcast %6 : vector<1x800xf32> to vector<8x800xf32>
    %119 = arith.mulf %117, %118 : vector<8x800xf32>
    %c0_104 = arith.constant 0 : index
    %c100_105 = arith.constant 100 : index
    %120 = vector.load %arg15[%c0_104, %c100_105] : memref<8x1000xf32, #tpu.memory_space<vmem>>, vector<8x800xf32>
    tpu.vector_store %arg15[%c0_104, %c100_105], %119 {strides = array<i32>} : memref<8x1000xf32, #tpu.memory_space<vmem>>, vector<8x800xf32>,
    %c5 = arith.constant 5 : index
    %c0_106 = arith.constant 0 : index
    %c0_107 = arith.constant 0 : index
    %121 = vector.load %arg11[%c5, %c0_106, %c0_107] : memref<9x8x1xf32, #tpu.memory_space<vmem>>, vector<1x8x1xf32>
    %122 = vector.shape_cast %121 : vector<1x8x1xf32> to vector<8x1xf32>
    %cst_108 = arith.constant 0.000000e+00 : f32
    %123 = vector.broadcast %cst_108 : f32 to vector<8x800xf32>
    %c0_109 = arith.constant 0 : index
    %c0_110 = arith.constant 0 : index
    %c0_111 = arith.constant 0 : index
    %124 = vector.load %arg7[%c0_109, %c0_110, %c0_111] : memref<3x8x8xf32, #tpu.memory_space<vmem>>, vector<1x8x8xf32>
    %125 = vector.shape_cast %124 : vector<1x8x8xf32> to vector<8x8xf32>
    %c0_112 = arith.constant 0 : index
    %c99_113 = arith.constant 99 : index
    %126 = vector.load %arg15[%c0_112, %c99_113] : memref<8x1000xf32, #tpu.memory_space<vmem>>, vector<8x800xf32>
    %cst_114 = arith.constant dense<0.000000e+00> : vector<8x800xf32>
    %127 = tpu.matmul %125, %126, %cst_114 {dimension_numbers = #tpu.dot_dimension_numbers<[1], [0], [0], [1], [0, 0, 1, 1], [], []>} : vector<8x8xf32>, vector<8x800xf32>, vector<8x800xf32> -> vector<8x800xf32>
    %128 = arith.addf %123, %127 : vector<8x800xf32>
    %c1_115 = arith.constant 1 : index
    %c0_116 = arith.constant 0 : index
    %c0_117 = arith.constant 0 : index
    %129 = vector.load %arg7[%c1_115, %c0_116, %c0_117] : memref<3x8x8xf32, #tpu.memory_space<vmem>>, vector<1x8x8xf32>
    %130 = vector.shape_cast %129 : vector<1x8x8xf32> to vector<8x8xf32>
    %c0_118 = arith.constant 0 : index
    %c100_119 = arith.constant 100 : index
    %131 = vector.load %arg15[%c0_118, %c100_119] : memref<8x1000xf32, #tpu.memory_space<vmem>>, vector<8x800xf32>
    %cst_120 = arith.constant dense<0.000000e+00> : vector<8x800xf32>
    %132 = tpu.matmul %130, %131, %cst_120 {dimension_numbers = #tpu.dot_dimension_numbers<[1], [0], [0], [1], [0, 0, 1, 1], [], []>} : vector<8x8xf32>, vector<8x800xf32>, vector<8x800xf32> -> vector<8x800xf32>
    %133 = arith.addf %128, %132 : vector<8x800xf32>
    %c2_121 = arith.constant 2 : index
    %c0_122 = arith.constant 0 : index
    %c0_123 = arith.constant 0 : index
    %134 = vector.load %arg7[%c2_121, %c0_122, %c0_123] : memref<3x8x8xf32, #tpu.memory_space<vmem>>, vector<1x8x8xf32>
    %135 = vector.shape_cast %134 : vector<1x8x8xf32> to vector<8x8xf32>
    %c0_124 = arith.constant 0 : index
    %c101_125 = arith.constant 101 : index
    %136 = vector.load %arg15[%c0_124, %c101_125] : memref<8x1000xf32, #tpu.memory_space<vmem>>, vector<8x800xf32>
    %cst_126 = arith.constant dense<0.000000e+00> : vector<8x800xf32>
    %137 = tpu.matmul %135, %136, %cst_126 {dimension_numbers = #tpu.dot_dimension_numbers<[1], [0], [0], [1], [0, 0, 1, 1], [], []>} : vector<8x8xf32>, vector<8x800xf32>, vector<8x800xf32> -> vector<8x800xf32>
    %138 = arith.addf %133, %137 : vector<8x800xf32>
    %139 = vector.broadcast %122 : vector<8x1xf32> to vector<8x800xf32>
    %140 = arith.addf %138, %139 : vector<8x800xf32>
    %141 = arith.addf %74, %140 : vector<8x800xf32>
    %c6 = arith.constant 6 : index
    %c0_127 = arith.constant 0 : index
    %c0_128 = arith.constant 0 : index
    %142 = vector.load %arg11[%c6, %c0_127, %c0_128] : memref<9x8x1xf32, #tpu.memory_space<vmem>>, vector<1x8x1xf32>
    %143 = vector.shape_cast %142 : vector<1x8x1xf32> to vector<8x1xf32>
    %cst_129 = arith.constant 0.000000e+00 : f32
    %144 = vector.broadcast %cst_129 : f32 to vector<8x800xf32>
    %c0_130 = arith.constant 0 : index
    %c0_131 = arith.constant 0 : index
    %c0_132 = arith.constant 0 : index
    %145 = vector.load %arg8[%c0_130, %c0_131, %c0_132] : memref<3x8x4xf32, #tpu.memory_space<vmem>>, vector<1x8x4xf32>
    %146 = vector.shape_cast %145 : vector<1x8x4xf32> to vector<8x4xf32>
    %147 = vector.extract_strided_slice %5 {offsets = [0, 99], sizes = [4, 800], strides = [1, 1]} : vector<4x1000xf32> to vector<4x800xf32>
    %cst_133 = arith.constant dense<0.000000e+00> : vector<8x800xf32>
    %148 = tpu.matmul %146, %147, %cst_133 {dimension_numbers = #tpu.dot_dimension_numbers<[1], [0], [0], [1], [0, 0, 1, 1], [], []>} : vector<8x4xf32>, vector<4x800xf32>, vector<8x800xf32> -> vector<8x800xf32>
    %149 = arith.addf %144, %148 : vector<8x800xf32>
    %c1_134 = arith.constant 1 : index
    %c0_135 = arith.constant 0 : index
    %c0_136 = arith.constant 0 : index
    %150 = vector.load %arg8[%c1_134, %c0_135, %c0_136] : memref<3x8x4xf32, #tpu.memory_space<vmem>>, vector<1x8x4xf32>
    %151 = vector.shape_cast %150 : vector<1x8x4xf32> to vector<8x4xf32>
    %152 = vector.extract_strided_slice %5 {offsets = [0, 100], sizes = [4, 800], strides = [1, 1]} : vector<4x1000xf32> to vector<4x800xf32>
    %cst_137 = arith.constant dense<0.000000e+00> : vector<8x800xf32>
    %153 = tpu.matmul %151, %152, %cst_137 {dimension_numbers = #tpu.dot_dimension_numbers<[1], [0], [0], [1], [0, 0, 1, 1], [], []>} : vector<8x4xf32>, vector<4x800xf32>, vector<8x800xf32> -> vector<8x800xf32>
    %154 = arith.addf %149, %153 : vector<8x800xf32>
    %c2_138 = arith.constant 2 : index
    %c0_139 = arith.constant 0 : index
    %c0_140 = arith.constant 0 : index
    %155 = vector.load %arg8[%c2_138, %c0_139, %c0_140] : memref<3x8x4xf32, #tpu.memory_space<vmem>>, vector<1x8x4xf32>
    %156 = vector.shape_cast %155 : vector<1x8x4xf32> to vector<8x4xf32>
    %157 = vector.extract_strided_slice %5 {offsets = [0, 101], sizes = [4, 800], strides = [1, 1]} : vector<4x1000xf32> to vector<4x800xf32>
    %cst_141 = arith.constant dense<0.000000e+00> : vector<8x800xf32>
    %158 = tpu.matmul %156, %157, %cst_141 {dimension_numbers = #tpu.dot_dimension_numbers<[1], [0], [0], [1], [0, 0, 1, 1], [], []>} : vector<8x4xf32>, vector<4x800xf32>, vector<8x800xf32> -> vector<8x800xf32>
    %159 = arith.addf %154, %158 : vector<8x800xf32>
    %160 = vector.broadcast %143 : vector<8x1xf32> to vector<8x800xf32>
    %161 = arith.addf %159, %160 : vector<8x800xf32>
    %162 = vector.broadcast %6 : vector<1x800xf32> to vector<8x800xf32>
    %163 = arith.mulf %161, %162 : vector<8x800xf32>
    %c0_142 = arith.constant 0 : index
    %c100_143 = arith.constant 100 : index
    %164 = vector.load %arg14[%c0_142, %c100_143] : memref<8x1000xf32, #tpu.memory_space<vmem>>, vector<8x800xf32>
    tpu.vector_store %arg14[%c0_142, %c100_143], %163 {strides = array<i32>} : memref<8x1000xf32, #tpu.memory_space<vmem>>, vector<8x800xf32>,
    %c7 = arith.constant 7 : index
    %c0_144 = arith.constant 0 : index
    %c0_145 = arith.constant 0 : index
    %165 = vector.load %arg11[%c7, %c0_144, %c0_145] : memref<9x8x1xf32, #tpu.memory_space<vmem>>, vector<1x8x1xf32>
    %166 = vector.shape_cast %165 : vector<1x8x1xf32> to vector<8x1xf32>
    %cst_146 = arith.constant 0.000000e+00 : f32
    %167 = vector.broadcast %cst_146 : f32 to vector<8x800xf32>
    %c0_147 = arith.constant 0 : index
    %c0_148 = arith.constant 0 : index
    %c0_149 = arith.constant 0 : index
    %168 = vector.load %arg9[%c0_147, %c0_148, %c0_149] : memref<3x8x8xf32, #tpu.memory_space<vmem>>, vector<1x8x8xf32>
    %169 = vector.shape_cast %168 : vector<1x8x8xf32> to vector<8x8xf32>
    %c0_150 = arith.constant 0 : index
    %c0_151 = arith.constant 0 : index
    %170 = vector.load %arg14[%c0_150, %c0_151] : memref<8x1000xf32, #tpu.memory_space<vmem>>, vector<8x800xf32>
    %cst_152 = arith.constant dense<0.000000e+00> : vector<8x800xf32>
    %171 = tpu.matmul %169, %170, %cst_152 {dimension_numbers = #tpu.dot_dimension_numbers<[1], [0], [0], [1], [0, 0, 1, 1], [], []>} : vector<8x8xf32>, vector<8x800xf32>, vector<8x800xf32> -> vector<8x800xf32>
    %172 = arith.addf %167, %171 : vector<8x800xf32>
    %c1_153 = arith.constant 1 : index
    %c0_154 = arith.constant 0 : index
    %c0_155 = arith.constant 0 : index
    %173 = vector.load %arg9[%c1_153, %c0_154, %c0_155] : memref<3x8x8xf32, #tpu.memory_space<vmem>>, vector<1x8x8xf32>
    %174 = vector.shape_cast %173 : vector<1x8x8xf32> to vector<8x8xf32>
    %c0_156 = arith.constant 0 : index
    %c100_157 = arith.constant 100 : index
    %175 = vector.load %arg14[%c0_156, %c100_157] : memref<8x1000xf32, #tpu.memory_space<vmem>>, vector<8x800xf32>
    %cst_158 = arith.constant dense<0.000000e+00> : vector<8x800xf32>
    %176 = tpu.matmul %174, %175, %cst_158 {dimension_numbers = #tpu.dot_dimension_numbers<[1], [0], [0], [1], [0, 0, 1, 1], [], []>} : vector<8x8xf32>, vector<8x800xf32>, vector<8x800xf32> -> vector<8x800xf32>
    %177 = arith.addf %172, %176 : vector<8x800xf32>
    %c2_159 = arith.constant 2 : index
    %c0_160 = arith.constant 0 : index
    %c0_161 = arith.constant 0 : index
    %178 = vector.load %arg9[%c2_159, %c0_160, %c0_161] : memref<3x8x8xf32, #tpu.memory_space<vmem>>, vector<1x8x8xf32>
    %179 = vector.shape_cast %178 : vector<1x8x8xf32> to vector<8x8xf32>
    %c0_162 = arith.constant 0 : index
    %c200_163 = arith.constant 200 : index
    %180 = vector.load %arg14[%c0_162, %c200_163] : memref<8x1000xf32, #tpu.memory_space<vmem>>, vector<8x800xf32>
    %cst_164 = arith.constant dense<0.000000e+00> : vector<8x800xf32>
    %181 = tpu.matmul %179, %180, %cst_164 {dimension_numbers = #tpu.dot_dimension_numbers<[1], [0], [0], [1], [0, 0, 1, 1], [], []>} : vector<8x8xf32>, vector<8x800xf32>, vector<8x800xf32> -> vector<8x800xf32>
    %182 = arith.addf %177, %181 : vector<8x800xf32>
    %183 = vector.broadcast %166 : vector<8x1xf32> to vector<8x800xf32>
    %184 = arith.addf %182, %183 : vector<8x800xf32>
    %185 = vector.broadcast %6 : vector<1x800xf32> to vector<8x800xf32>
    %186 = arith.mulf %184, %185 : vector<8x800xf32>
    %c0_165 = arith.constant 0 : index
    %c100_166 = arith.constant 100 : index
    %187 = vector.load %arg15[%c0_165, %c100_166] : memref<8x1000xf32, #tpu.memory_space<vmem>>, vector<8x800xf32>
    tpu.vector_store %arg15[%c0_165, %c100_166], %186 {strides = array<i32>} : memref<8x1000xf32, #tpu.memory_space<vmem>>, vector<8x800xf32>,
    %c8 = arith.constant 8 : index
    %c0_167 = arith.constant 0 : index
    %c0_168 = arith.constant 0 : index
    %188 = vector.load %arg11[%c8, %c0_167, %c0_168] : memref<9x8x1xf32, #tpu.memory_space<vmem>>, vector<1x8x1xf32>
    %189 = vector.shape_cast %188 : vector<1x8x1xf32> to vector<8x1xf32>
    %cst_169 = arith.constant 0.000000e+00 : f32
    %190 = vector.broadcast %cst_169 : f32 to vector<8x800xf32>
    %c0_170 = arith.constant 0 : index
    %c0_171 = arith.constant 0 : index
    %c0_172 = arith.constant 0 : index
    %191 = vector.load %arg10[%c0_170, %c0_171, %c0_172] : memref<3x8x8xf32, #tpu.memory_space<vmem>>, vector<1x8x8xf32>
    %192 = vector.shape_cast %191 : vector<1x8x8xf32> to vector<8x8xf32>
    %c0_173 = arith.constant 0 : index
    %c90_174 = arith.constant 90 : index
    %193 = vector.load %arg15[%c0_173, %c90_174] : memref<8x1000xf32, #tpu.memory_space<vmem>>, vector<8x800xf32>
    %cst_175 = arith.constant dense<0.000000e+00> : vector<8x800xf32>
    %194 = tpu.matmul %192, %193, %cst_175 {dimension_numbers = #tpu.dot_dimension_numbers<[1], [0], [0], [1], [0, 0, 1, 1], [], []>} : vector<8x8xf32>, vector<8x800xf32>, vector<8x800xf32> -> vector<8x800xf32>
    %195 = arith.addf %190, %194 : vector<8x800xf32>
    %c1_176 = arith.constant 1 : index
    %c0_177 = arith.constant 0 : index
    %c0_178 = arith.constant 0 : index
    %196 = vector.load %arg10[%c1_176, %c0_177, %c0_178] : memref<3x8x8xf32, #tpu.memory_space<vmem>>, vector<1x8x8xf32>
    %197 = vector.shape_cast %196 : vector<1x8x8xf32> to vector<8x8xf32>
    %c0_179 = arith.constant 0 : index
    %c100_180 = arith.constant 100 : index
    %198 = vector.load %arg15[%c0_179, %c100_180] : memref<8x1000xf32, #tpu.memory_space<vmem>>, vector<8x800xf32>
    %cst_181 = arith.constant dense<0.000000e+00> : vector<8x800xf32>
    %199 = tpu.matmul %197, %198, %cst_181 {dimension_numbers = #tpu.dot_dimension_numbers<[1], [0], [0], [1], [0, 0, 1, 1], [], []>} : vector<8x8xf32>, vector<8x800xf32>, vector<8x800xf32> -> vector<8x800xf32>
    %200 = arith.addf %195, %199 : vector<8x800xf32>
    %c2_182 = arith.constant 2 : index
    %c0_183 = arith.constant 0 : index
    %c0_184 = arith.constant 0 : index
    %201 = vector.load %arg10[%c2_182, %c0_183, %c0_184] : memref<3x8x8xf32, #tpu.memory_space<vmem>>, vector<1x8x8xf32>
    %202 = vector.shape_cast %201 : vector<1x8x8xf32> to vector<8x8xf32>
    %c0_185 = arith.constant 0 : index
    %c110_186 = arith.constant 110 : index
    %203 = vector.load %arg15[%c0_185, %c110_186] : memref<8x1000xf32, #tpu.memory_space<vmem>>, vector<8x800xf32>
    %cst_187 = arith.constant dense<0.000000e+00> : vector<8x800xf32>
    %204 = tpu.matmul %202, %203, %cst_187 {dimension_numbers = #tpu.dot_dimension_numbers<[1], [0], [0], [1], [0, 0, 1, 1], [], []>} : vector<8x8xf32>, vector<8x800xf32>, vector<8x800xf32> -> vector<8x800xf32>
    %205 = arith.addf %200, %204 : vector<8x800xf32>
    %206 = vector.broadcast %189 : vector<8x1xf32> to vector<8x800xf32>
    %207 = arith.addf %205, %206 : vector<8x800xf32>
    %208 = arith.addf %141, %207 : vector<8x800xf32>
    %c0_188 = arith.constant 0 : index
    %c0_189 = arith.constant 0 : index
    %c0_190 = arith.constant 0 : index
    %209 = vector.load %arg13[%c0_188, %c0_189, %c0_190] : memref<1x8x800xf32, #tpu.memory_space<vmem>>, vector<1x8x800xf32>
    %210 = vector.shape_cast %209 : vector<1x8x800xf32> to vector<8x800xf32>
    %211 = vector.shape_cast %208 : vector<8x800xf32> to vector<1x8x800xf32>
    tpu.vector_store %arg13[%c0_188, %c0_189, %c0_190], %211 {strides = array<i32>} : memref<1x8x800xf32, #tpu.memory_space<vmem>>, vector<1x8x800xf32>,
    return
  }
  func.func @transform_0(%arg0: i32) -> (i32, i32, i32) {
    %c0_i32 = arith.constant 0 : i32
    %c0_i32_0 = arith.constant 0 : i32
    %c0_i32_1 = arith.constant 0 : i32
    return %arg0, %c0_i32, %c0_i32_0 : i32, i32, i32
  }
  func.func @transform_1(%arg0: i32) -> (i32, i32, i32) {
    %c0_i32 = arith.constant 0 : i32
    %c0_i32_0 = arith.constant 0 : i32
    %c0_i32_1 = arith.constant 0 : i32
    %c0_i32_2 = arith.constant 0 : i32
    return %c0_i32, %c0_i32_0, %c0_i32_1 : i32, i32, i32
  }
  func.func @transform_2(%arg0: i32) -> (i32, i32, i32) {
    %c0_i32 = arith.constant 0 : i32
    %c0_i32_0 = arith.constant 0 : i32
    %c0_i32_1 = arith.constant 0 : i32
    %c0_i32_2 = arith.constant 0 : i32
    return %c0_i32, %c0_i32_0, %c0_i32_1 : i32, i32, i32
  }
  func.func @transform_3(%arg0: i32) -> (i32, i32, i32) {
    %c0_i32 = arith.constant 0 : i32
    %c0_i32_0 = arith.constant 0 : i32
    %c0_i32_1 = arith.constant 0 : i32
    %c0_i32_2 = arith.constant 0 : i32
    return %c0_i32, %c0_i32_0, %c0_i32_1 : i32, i32, i32
  }
  func.func @transform_4(%arg0: i32) -> (i32, i32, i32) {
    %c0_i32 = arith.constant 0 : i32
    %c0_i32_0 = arith.constant 0 : i32
    %c0_i32_1 = arith.constant 0 : i32
    %c0_i32_2 = arith.constant 0 : i32
    return %c0_i32, %c0_i32_0, %c0_i32_1 : i32, i32, i32
  }
  func.func @transform_5(%arg0: i32) -> (i32, i32, i32) {
    %c0_i32 = arith.constant 0 : i32
    %c0_i32_0 = arith.constant 0 : i32
    %c0_i32_1 = arith.constant 0 : i32
    %c0_i32_2 = arith.constant 0 : i32
    return %c0_i32, %c0_i32_0, %c0_i32_1 : i32, i32, i32
  }
  func.func @transform_6(%arg0: i32) -> (i32, i32, i32) {
    %c0_i32 = arith.constant 0 : i32
    %c0_i32_0 = arith.constant 0 : i32
    %c0_i32_1 = arith.constant 0 : i32
    %c0_i32_2 = arith.constant 0 : i32
    return %c0_i32, %c0_i32_0, %c0_i32_1 : i32, i32, i32
  }
  func.func @transform_7(%arg0: i32) -> (i32, i32, i32) {
    %c0_i32 = arith.constant 0 : i32
    %c0_i32_0 = arith.constant 0 : i32
    %c0_i32_1 = arith.constant 0 : i32
    %c0_i32_2 = arith.constant 0 : i32
    return %c0_i32, %c0_i32_0, %c0_i32_1 : i32, i32, i32
  }
  func.func @transform_8(%arg0: i32) -> (i32, i32, i32) {
    %c0_i32 = arith.constant 0 : i32
    %c0_i32_0 = arith.constant 0 : i32
    %c0_i32_1 = arith.constant 0 : i32
    %c0_i32_2 = arith.constant 0 : i32
    return %c0_i32, %c0_i32_0, %c0_i32_1 : i32, i32, i32
  }
  func.func @transform_9(%arg0: i32) -> (i32, i32, i32) {
    %c0_i32 = arith.constant 0 : i32
    %c0_i32_0 = arith.constant 0 : i32
    %c0_i32_1 = arith.constant 0 : i32
    %c0_i32_2 = arith.constant 0 : i32
    return %c0_i32, %c0_i32_0, %c0_i32_1 : i32, i32, i32
  }
  func.func @transform_10(%arg0: i32) -> (i32, i32, i32) {
    %c0_i32 = arith.constant 0 : i32
    %c0_i32_0 = arith.constant 0 : i32
    %c0_i32_1 = arith.constant 0 : i32
    %c0_i32_2 = arith.constant 0 : i32
    return %c0_i32, %c0_i32_0, %c0_i32_1 : i32, i32, i32
  }
  func.func @transform_11(%arg0: i32) -> (i32, i32) {
    %c0_i32 = arith.constant 0 : i32
    %c0_i32_0 = arith.constant 0 : i32
    %c0_i32_1 = arith.constant 0 : i32
    return %c0_i32, %c0_i32_0 : i32, i32
  }
  func.func @transform_12(%arg0: i32) -> (i32, i32, i32) {
    %c0_i32 = arith.constant 0 : i32
    %c0_i32_0 = arith.constant 0 : i32
    %c0_i32_1 = arith.constant 0 : i32
    return %arg0, %c0_i32, %c0_i32_0 : i32, i32, i32
  }
}

</mosaic_0001>

<llo_original>
// kernel: global_conv_block.1
$region0: #{global_conv_block.1}
  #allocation0 [shape = 'u32[]', space=smem, size = 0x4, offset = 0x4, fixed_abs, tag = 'smem constant byte address 0x4 - core index']
  #allocation1 [shape = 'u32[144,128]{1,0:T(1,128)}', space=vmem, size = 0x12000, scoped, tag = 'internal scratch']
  #allocation2 [shape = 'f32[8,1000]{1,0:T(8,128)}', space=vmem, size = 0x8000, scoped, tag = 'scratch operand']
  #allocation3 [shape = 'f32[8,1000]{1,0:T(8,128)}', space=vmem, size = 0x8000, scoped, tag = 'scratch operand']
  %s0 = inlined_call_operand.vmem [shape: f32[2,4,1000], index: 0, kind: input, shape index: {}]
  %s1 = inlined_call_operand.vmem [shape: f32[3,8,4], index: 1, kind: input, shape index: {}]
  %s2 = inlined_call_operand.vmem [shape: f32[3,8,8], index: 2, kind: input, shape index: {}]
  %s3 = inlined_call_operand.vmem [shape: f32[3,8,8], index: 3, kind: input, shape index: {}]
  %s4 = inlined_call_operand.vmem [shape: f32[3,8,4], index: 4, kind: input, shape index: {}]
  %s5 = inlined_call_operand.vmem [shape: f32[3,8,8], index: 5, kind: input, shape index: {}]
  %s6 = inlined_call_operand.vmem [shape: f32[3,8,8], index: 6, kind: input, shape index: {}]
  %s7 = inlined_call_operand.vmem [shape: f32[3,8,4], index: 7, kind: input, shape index: {}]
  %s8 = inlined_call_operand.vmem [shape: f32[3,8,8], index: 8, kind: input, shape index: {}]
  %s9 = inlined_call_operand.vmem [shape: f32[3,8,8], index: 9, kind: input, shape index: {}]
  %s10 = inlined_call_operand.vmem [shape: f32[9,8,1], index: 10, kind: input, shape index: {}]
  %s11 = inlined_call_operand.vmem [shape: f32[1,800], index: 11, kind: input, shape index: {}]
  %s12 = inlined_call_operand.vmem [shape: f32[2,8,800], index: 12, kind: output, shape index: {}]
  %s13 = sld [smem:[#allocation0]]
  $region81: #{global_conv_block.1} parent=0
    _
  %s15 = ssub.s32 1, %s13
  %s16 = scalar_select 0, %s15, %s13
  loop: start=0, step=1, limit=4
  $region2: #{global_conv_block.1} parent=0 // loop_pre_header
    _
  $region3: #{global_conv_block.1} parent=0 // loop_header
    %s18 = sphi 0, %s22
    %p19 = scmp.ge.s32.totalorder %s18, 4
    %s28 = sphi 0, %s30
    %s31 = sphi 0, %s28
    %s32 = sphi 0, %s31
    %s48 = sphi 0, %s32
    %s52 = sphi 0, %s52
    %s54 = sphi 0, %s52
    %s55 = sphi 0, %s54
    %s69 = sphi 0, %s55
    %s73 = sphi 0, %s73
    %s75 = sphi 0, %s73
    %s76 = sphi 0, %s75
    %s90 = sphi 0, %s76
    %s94 = sphi 0, %s94
    %s96 = sphi 0, %s94
    %s97 = sphi 0, %s96
    %s111 = sphi 0, %s97
    %s115 = sphi 0, %s115
    %s117 = sphi 0, %s115
    %s118 = sphi 0, %s117
    %s132 = sphi 0, %s118
    %s136 = sphi 0, %s136
    %s138 = sphi 0, %s136
    %s139 = sphi 0, %s138
    %s153 = sphi 0, %s139
    %s157 = sphi 0, %s157
    %s159 = sphi 0, %s157
    %s160 = sphi 0, %s159
    %s174 = sphi 0, %s160
    %s178 = sphi 0, %s178
    %s180 = sphi 0, %s178
    %s181 = sphi 0, %s180
    %s195 = sphi 0, %s181
    %s199 = sphi 0, %s199
    %s201 = sphi 0, %s199
    %s202 = sphi 0, %s201
    %s216 = sphi 0, %s202
    %s220 = sphi 0, %s220
    %s222 = sphi 0, %s220
    %s223 = sphi 0, %s222
    %s237 = sphi 0, %s223
    %s241 = sphi 0, %s241
    %s243 = sphi 0, %s241
    %s244 = sphi 0, %s243
    %s258 = sphi 0, %s244
    %s262 = sphi 0, %s262
    %s264 = sphi 0, %s262
    %s265 = sphi 0, %s264
    %s279 = sphi 0, %s265
    %s285 = sphi 0, %s287
    %s288 = sphi 0, %s285
    %s289 = sphi 0, %s288
    %s305 = sphi 0, %s289
  $region4: #{global_conv_block.1} parent=0 // loop_header_branch
    %21 = sbr.rel (%p19) target = $region8
  $region5: #{global_conv_block.1} parent=0 // loop_body
    %s23 = ssub.s32 %s18, 1
    %s24 = ssub.s32 %s18, 2
    %s25 = sadd.s32 %s18, 1
    %s26 = ssub.s32 %s18, %s25
    %p27 = scmp.eq.s32.totalorder %s26, 0
    %s29 = sadd.s32 %s28, 1
    %s30 = scalar_select %p27, %s28, %s29
    %p33 = pneg %p27
    %p34 = scmp.eq.s32.totalorder %s18, 1
    %p35 = por %p33, %p34
    %p36 = scmp.ne.s32.totalorder %s28, %s31
    %p37 = scmp.eq.s32.totalorder %s18, 0
    %p38 = por %p36, %p37
    %p39 = scmp.ne.s32.totalorder %s28, %s31
    %p40 = scmp.eq.s32.totalorder %s23, 1
    %p41 = por %p39, %p40
    %p42 = scmp.ne.s32.totalorder %s31, %s32
    %p43 = scmp.eq.s32.totalorder %s23, 0
    %p44 = por %p42, %p43
    %p45 = scmp.ne.s32.totalorder %s31, %s32
    %p46 = scmp.eq.s32.totalorder %s24, 1
    %p47 = por %p45, %p46
    %p49 = scmp.ne.s32.totalorder %s32, %s48
    %p50 = scmp.eq.s32.totalorder %s24, 0
    %p51 = por %p49, %p50
    %s53 = sadd.s32 %s52, 1
    %p56 = scmp.eq.s32.totalorder %s18, 1
    %p57 = scmp.ne.s32.totalorder %s52, %s54
    %p58 = scmp.eq.s32.totalorder %s18, 0
    %p59 = por %p57, %p58
    %p60 = scmp.ne.s32.totalorder %s52, %s54
    %p61 = scmp.eq.s32.totalorder %s23, 1
    %p62 = por %p60, %p61
    %p63 = scmp.ne.s32.totalorder %s54, %s55
    %p64 = scmp.eq.s32.totalorder %s23, 0
    %p65 = por %p63, %p64
    %p66 = scmp.ne.s32.totalorder %s54, %s55
    %p67 = scmp.eq.s32.totalorder %s24, 1
    %p68 = por %p66, %p67
    %p70 = scmp.ne.s32.totalorder %s55, %s69
    %p71 = scmp.eq.s32.totalorder %s24, 0
    %p72 = por %p70, %p71
    %s74 = sadd.s32 %s73, 1
    %p77 = scmp.eq.s32.totalorder %s18, 1
    %p78 = scmp.ne.s32.totalorder %s73, %s75
    %p79 = scmp.eq.s32.totalorder %s18, 0
    %p80 = por %p78, %p79
    %p81 = scmp.ne.s32.totalorder %s73, %s75
    %p82 = scmp.eq.s32.totalorder %s23, 1
    %p83 = por %p81, %p82
    %p84 = scmp.ne.s32.totalorder %s75, %s76
    %p85 = scmp.eq.s32.totalorder %s23, 0
    %p86 = por %p84, %p85
    %p87 = scmp.ne.s32.totalorder %s75, %s76
    %p88 = scmp.eq.s32.totalorder %s24, 1
    %p89 = por %p87, %p88
    %p91 = scmp.ne.s32.totalorder %s76, %s90
    %p92 = scmp.eq.s32.totalorder %s24, 0
    %p93 = por %p91, %p92
    %s95 = sadd.s32 %s94, 1
    %p98 = scmp.eq.s32.totalorder %s18, 1
    %p99 = scmp.ne.s32.totalorder %s94, %s96
    %p100 = scmp.eq.s32.totalorder %s18, 0
    %p101 = por %p99, %p100
    %p102 = scmp.ne.s32.totalorder %s94, %s96
    %p103 = scmp.eq.s32.totalorder %s23, 1
    %p104 = por %p102, %p103
    %p105 = scmp.ne.s32.totalorder %s96, %s97
    %p106 = scmp.eq.s32.totalorder %s23, 0
    %p107 = por %p105, %p106
    %p108 = scmp.ne.s32.totalorder %s96, %s97
    %p109 = scmp.eq.s32.totalorder %s24, 1
    %p110 = por %p108, %p109
    %p112 = scmp.ne.s32.totalorder %s97, %s111
    %p113 = scmp.eq.s32.totalorder %s24, 0
    %p114 = por %p112, %p113
    %s116 = sadd.s32 %s115, 1
    %p119 = scmp.eq.s32.totalorder %s18, 1
    %p120 = scmp.ne.s32.totalorder %s115, %s117
    %p121 = scmp.eq.s32.totalorder %s18, 0
    %p122 = por %p120, %p121
    %p123 = scmp.ne.s32.totalorder %s115, %s117
    %p124 = scmp.eq.s32.totalorder %s23, 1
    %p125 = por %p123, %p124
    %p126 = scmp.ne.s32.totalorder %s117, %s118
    %p127 = scmp.eq.s32.totalorder %s23, 0
    %p128 = por %p126, %p127
    %p129 = scmp.ne.s32.totalorder %s117, %s118
    %p130 = scmp.eq.s32.totalorder %s24, 1
    %p131 = por %p129, %p130
    %p133 = scmp.ne.s32.totalorder %s118, %s132
    %p134 = scmp.eq.s32.totalorder %s24, 0
    %p135 = por %p133, %p134
    %s137 = sadd.s32 %s136, 1
    %p140 = scmp.eq.s32.totalorder %s18, 1
    %p141 = scmp.ne.s32.totalorder %s136, %s138
    %p142 = scmp.eq.s32.totalorder %s18, 0
    %p143 = por %p141, %p142
    %p144 = scmp.ne.s32.totalorder %s136, %s138
    %p145 = scmp.eq.s32.totalorder %s23, 1
    %p146 = por %p144, %p145
    %p147 = scmp.ne.s32.totalorder %s138, %s139
    %p148 = scmp.eq.s32.totalorder %s23, 0
    %p149 = por %p147, %p148
    %p150 = scmp.ne.s32.totalorder %s138, %s139
    %p151 = scmp.eq.s32.totalorder %s24, 1
    %p152 = por %p150, %p151
    %p154 = scmp.ne.s32.totalorder %s139, %s153
    %p155 = scmp.eq.s32.totalorder %s24, 0
    %p156 = por %p154, %p155
    %s158 = sadd.s32 %s157, 1
    %p161 = scmp.eq.s32.totalorder %s18, 1
    %p162 = scmp.ne.s32.totalorder %s157, %s159
    %p163 = scmp.eq.s32.totalorder %s18, 0
    %p164 = por %p162, %p163
    %p165 = scmp.ne.s32.totalorder %s157, %s159
    %p166 = scmp.eq.s32.totalorder %s23, 1
    %p167 = por %p165, %p166
    %p168 = scmp.ne.s32.totalorder %s159, %s160
    %p169 = scmp.eq.s32.totalorder %s23, 0
    %p170 = por %p168, %p169
    %p171 = scmp.ne.s32.totalorder %s159, %s160
    %p172 = scmp.eq.s32.totalorder %s24, 1
    %p173 = por %p171, %p172
    %p175 = scmp.ne.s32.totalorder %s160, %s174
    %p176 = scmp.eq.s32.totalorder %s24, 0
    %p177 = por %p175, %p176
    %s179 = sadd.s32 %s178, 1
    %p182 = scmp.eq.s32.totalorder %s18, 1
    %p183 = scmp.ne.s32.totalorder %s178, %s180
    %p184 = scmp.eq.s32.totalorder %s18, 0
    %p185 = por %p183, %p184
    %p186 = scmp.ne.s32.totalorder %s178, %s180
    %p187 = scmp.eq.s32.totalorder %s23, 1
    %p188 = por %p186, %p187
    %p189 = scmp.ne.s32.totalorder %s180, %s181
    %p190 = scmp.eq.s32.totalorder %s23, 0
    %p191 = por %p189, %p190
    %p192 = scmp.ne.s32.totalorder %s180, %s181
    %p193 = scmp.eq.s32.totalorder %s24, 1
    %p194 = por %p192, %p193
    %p196 = scmp.ne.s32.totalorder %s181, %s195
    %p197 = scmp.eq.s32.totalorder %s24, 0
    %p198 = por %p196, %p197
    %s200 = sadd.s32 %s199, 1
    %p203 = scmp.eq.s32.totalorder %s18, 1
    %p204 = scmp.ne.s32.totalorder %s199, %s201
    %p205 = scmp.eq.s32.totalorder %s18, 0
    %p206 = por %p204, %p205
    %p207 = scmp.ne.s32.totalorder %s199, %s201
    %p208 = scmp.eq.s32.totalorder %s23, 1
    %p209 = por %p207, %p208
    %p210 = scmp.ne.s32.totalorder %s201, %s202
    %p211 = scmp.eq.s32.totalorder %s23, 0
    %p212 = por %p210, %p211
    %p213 = scmp.ne.s32.totalorder %s201, %s202
    %p214 = scmp.eq.s32.totalorder %s24, 1
    %p215 = por %p213, %p214
    %p217 = scmp.ne.s32.totalorder %s202, %s216
    %p218 = scmp.eq.s32.totalorder %s24, 0
    %p219 = por %p217, %p218
    %s221 = sadd.s32 %s220, 1
    %p224 = scmp.eq.s32.totalorder %s18, 1
    %p225 = scmp.ne.s32.totalorder %s220, %s222
    %p226 = scmp.eq.s32.totalorder %s18, 0
    %p227 = por %p225, %p226
    %p228 = scmp.ne.s32.totalorder %s220, %s222
    %p229 = scmp.eq.s32.totalorder %s23, 1
    %p230 = por %p228, %p229
    %p231 = scmp.ne.s32.totalorder %s222, %s223
    %p232 = scmp.eq.s32.totalorder %s23, 0
    %p233 = por %p231, %p232
    %p234 = scmp.ne.s32.totalorder %s222, %s223
    %p235 = scmp.eq.s32.totalorder %s24, 1
    %p236 = por %p234, %p235
    %p238 = scmp.ne.s32.totalorder %s223, %s237
    %p239 = scmp.eq.s32.totalorder %s24, 0
    %p240 = por %p238, %p239
    %s242 = sadd.s32 %s241, 1
    %p245 = scmp.eq.s32.totalorder %s18, 1
    %p246 = scmp.ne.s32.totalorder %s241, %s243
    %p247 = scmp.eq.s32.totalorder %s18, 0
    %p248 = por %p246, %p247
    %p249 = scmp.ne.s32.totalorder %s241, %s243
    %p250 = scmp.eq.s32.totalorder %s23, 1
    %p251 = por %p249, %p250
    %p252 = scmp.ne.s32.totalorder %s243, %s244
    %p253 = scmp.eq.s32.totalorder %s23, 0
    %p254 = por %p252, %p253
    %p255 = scmp.ne.s32.totalorder %s243, %s244
    %p256 = scmp.eq.s32.totalorder %s24, 1
    %p257 = por %p255, %p256
    %p259 = scmp.ne.s32.totalorder %s244, %s258
    %p260 = scmp.eq.s32.totalorder %s24, 0
    %p261 = por %p259, %p260
    %s263 = sadd.s32 %s262, 1
    %p266 = scmp.eq.s32.totalorder %s18, 1
    %p267 = scmp.ne.s32.totalorder %s262, %s264
    %p268 = scmp.eq.s32.totalorder %s18, 0
    %p269 = por %p267, %p268
    %p270 = scmp.ne.s32.totalorder %s262, %s264
    %p271 = scmp.eq.s32.totalorder %s23, 1
    %p272 = por %p270, %p271
    %p273 = scmp.ne.s32.totalorder %s264, %s265
    %p274 = scmp.eq.s32.totalorder %s23, 0
    %p275 = por %p273, %p274
    %p276 = scmp.ne.s32.totalorder %s264, %s265
    %p277 = scmp.eq.s32.totalorder %s24, 1
    %p278 = por %p276, %p277
    %p280 = scmp.ne.s32.totalorder %s265, %s279
    %p281 = scmp.eq.s32.totalorder %s24, 0
    %p282 = por %p280, %p281
    %s283 = ssub.s32 %s18, %s25
    %p284 = scmp.eq.s32.totalorder %s283, 0
    %s286 = sadd.s32 %s285, 1
    %s287 = scalar_select %p284, %s285, %s286
    %p290 = pneg %p284
    %p291 = scmp.eq.s32.totalorder %s18, 1
    %p292 = por %p290, %p291
    %p293 = scmp.ne.s32.totalorder %s285, %s288
    %p294 = scmp.eq.s32.totalorder %s18, 0
    %p295 = por %p293, %p294
    %p296 = scmp.ne.s32.totalorder %s285, %s288
    %p297 = scmp.eq.s32.totalorder %s23, 1
    %p298 = por %p296, %p297
    %p299 = scmp.ne.s32.totalorder %s288, %s289
    %p300 = scmp.eq.s32.totalorder %s23, 0
    %p301 = por %p299, %p300
    %p302 = scmp.ne.s32.totalorder %s288, %s289
    %p303 = scmp.eq.s32.totalorder %s24, 1
    %p304 = por %p302, %p303
    %p306 = scmp.ne.s32.totalorder %s289, %s305
    %p307 = scmp.eq.s32.totalorder %s24, 0
    %p308 = por %p306, %p307
    %p309 = scmp.le.s32.totalorder 1, %s18
    %p310 = scmp.lt.s32.totalorder %s18, 3
    %p311 = pnand %p309, %p310
    %p312 = pneg %p311
    // Predicated region
    $region9: #{global_conv_block.1} parent=5 // pred_check
      _
    $region10: #{global_conv_block.1} parent=5 // pred_check_branch
      %314 = sbr.rel (%p311) target = $region12
    $region11: #{global_conv_block.1} parent=5 // pred_region
      %s315 = ssub.s32 %s18, 1
      // Predicated region
      $region13: #{global_conv_block.1} parent=11 // pred_check
        %p316 = pneg %p65
      $region14: #{global_conv_block.1} parent=11 // pred_check_branch
        %318 = sbr.rel (%p316) target = $region16
      $region15: #{global_conv_block.1} parent=11 // pred_region
        _
      $region16: #{global_conv_block.1} parent=11 // pred_fallthru
        _
      // Predicated region
      $region17: #{global_conv_block.1} parent=11 // pred_check
        %p319 = pneg %p86
      $region18: #{global_conv_block.1} parent=11 // pred_check_branch
        %321 = sbr.rel (%p319) target = $region20
      $region19: #{global_conv_block.1} parent=11 // pred_region
        _
      $region20: #{global_conv_block.1} parent=11 // pred_fallthru
        _
      // Predicated region
      $region21: #{global_conv_block.1} parent=11 // pred_check
        %p322 = pneg %p107
      $region22: #{global_conv_block.1} parent=11 // pred_check_branch
        %324 = sbr.rel (%p322) target = $region24
      $region23: #{global_conv_block.1} parent=11 // pred_region
        _
      $region24: #{global_conv_block.1} parent=11 // pred_fallthru
        _
      // Predicated region
      $region25: #{global_conv_block.1} parent=11 // pred_check
        %p325 = pneg %p128
      $region26: #{global_conv_block.1} parent=11 // pred_check_branch
        %327 = sbr.rel (%p325) target = $region28
      $region27: #{global_conv_block.1} parent=11 // pred_region
        _
      $region28: #{global_conv_block.1} parent=11 // pred_fallthru
        _
      // Predicated region
      $region29: #{global_conv_block.1} parent=11 // pred_check
        %p328 = pneg %p149
      $region30: #{global_conv_block.1} parent=11 // pred_check_branch
        %330 = sbr.rel (%p328) target = $region32
      $region31: #{global_conv_block.1} parent=11 // pred_region
        _
      $region32: #{global_conv_block.1} parent=11 // pred_fallthru
        _
      // Predicated region
      $region33: #{global_conv_block.1} parent=11 // pred_check
        %p331 = pneg %p170
      $region34: #{global_conv_block.1} parent=11 // pred_check_branch
        %333 = sbr.rel (%p331) target = $region36
      $region35: #{global_conv_block.1} parent=11 // pred_region
        _
      $region36: #{global_conv_block.1} parent=11 // pred_fallthru
        _
      // Predicated region
      $region37: #{global_conv_block.1} parent=11 // pred_check
        %p334 = pneg %p191
      $region38: #{global_conv_block.1} parent=11 // pred_check_branch
        %336 = sbr.rel (%p334) target = $region40
      $region39: #{global_conv_block.1} parent=11 // pred_region
        _
      $region40: #{global_conv_block.1} parent=11 // pred_fallthru
        _
      // Predicated region
      $region41: #{global_conv_block.1} parent=11 // pred_check
        %p337 = pneg %p212
      $region42: #{global_conv_block.1} parent=11 // pred_check_branch
        %339 = sbr.rel (%p337) target = $region44
      $region43: #{global_conv_block.1} parent=11 // pred_region
        _
      $region44: #{global_conv_block.1} parent=11 // pred_fallthru
        _
      // Predicated region
      $region45: #{global_conv_block.1} parent=11 // pred_check
        %p340 = pneg %p233
      $region46: #{global_conv_block.1} parent=11 // pred_check_branch
        %342 = sbr.rel (%p340) target = $region48
      $region47: #{global_conv_block.1} parent=11 // pred_region
        _
      $region48: #{global_conv_block.1} parent=11 // pred_fallthru
        _
      // Predicated region
      $region49: #{global_conv_block.1} parent=11 // pred_check
        %p343 = pneg %p254
      $region50: #{global_conv_block.1} parent=11 // pred_check_branch
        %345 = sbr.rel (%p343) target = $region52
      $region51: #{global_conv_block.1} parent=11 // pred_region
        _
      $region52: #{global_conv_block.1} parent=11 // pred_fallthru
        _
      // Predicated region
      $region53: #{global_conv_block.1} parent=11 // pred_check
        %p346 = pneg %p275
      $region54: #{global_conv_block.1} parent=11 // pred_check_branch
        %348 = sbr.rel (%p346) target = $region56
      $region55: #{global_conv_block.1} parent=11 // pred_region
        _
      $region56: #{global_conv_block.1} parent=11 // pred_fallthru
        _
    $region12: #{global_conv_block.1} parent=5 // pred_fallthru
      _
    %p349 = scmp.lt.s32.totalorder %s18, 2
    // Predicated region
    $region57: #{global_conv_block.1} parent=5 // pred_check
      %p350 = pneg %p349
    $region58: #{global_conv_block.1} parent=5 // pred_check_branch
      %352 = sbr.rel (%p350) target = $region60
    $region59: #{global_conv_block.1} parent=5 // pred_region
      // Predicated region
      $region61: #{global_conv_block.1} parent=59 // pred_check
        %p353 = pneg %p38
      $region62: #{global_conv_block.1} parent=59 // pred_check_branch
        %355 = sbr.rel (%p353) target = $region64
      $region63: #{global_conv_block.1} parent=59 // pred_region
        %p356 = scmp.lt.s32.totalorder %s18, 1
        %s357 = scalar_select %p356, %s18, 1
        %s358 = smul.addr %s357, 8
        %s359 = smul.addr %s358, 4
        %s360 = scalar_lea.vmem %s0, %s359
      $region64: #{global_conv_block.1} parent=59 // pred_fallthru
        _
    $region60: #{global_conv_block.1} parent=5 // pred_fallthru
      _
    %p361 = scmp.le.s32.totalorder 1, %s18
    %p362 = scmp.lt.s32.totalorder %s18, 3
    %p363 = pnand %p361, %p362
    %p364 = pneg %p363
    // Predicated region
    $region65: #{global_conv_block.1} parent=5 // pred_check
      _
    $region66: #{global_conv_block.1} parent=5 // pred_check_branch
      %366 = sbr.rel (%p363) target = $region68
    $region67: #{global_conv_block.1} parent=5 // pred_region
      %s367 = ssub.s32 %s18, 1
      %p368 = scmp.lt.s32.totalorder %s23, 1
      %s369 = scalar_select %p368, %s23, 1
      %s370 = smul.addr %s369, 8
      %s371 = smul.addr %s370, 4
      %s372 = scalar_lea.vmem %s0, %s371
      %p373 = pneg %p44
      %p374 = pneg %p41
      %p375 = pneg %p65
      %p376 = pneg %p62
      %p377 = pneg %p86
      %p378 = pneg %p83
      %p379 = pneg %p107
      %p380 = pneg %p104
      %p381 = pneg %p128
      %p382 = pneg %p125
      %p383 = pneg %p149
      %p384 = pneg %p146
      %p385 = pneg %p170
      %p386 = pneg %p167
      %p387 = pneg %p191
      %p388 = pneg %p188
      %p389 = pneg %p212
      %p390 = pneg %p209
      %p391 = pneg %p233
      %p392 = pneg %p230
      %p393 = pneg %p254
      %p394 = pneg %p251
      %p395 = pneg %p275
      %p396 = pneg %p272
      %p397 = pneg %p301
      %p398 = pneg %p298
      %p399 = scmp.lt.s32.totalorder %s23, 1
      %s400 = scalar_select %p399, %s23, 1
      %s401 = smul.addr %s400, 7
      %s402 = smul.addr %s401, 8
      %s403 = scalar_lea.vmem %s12, %s402
      %p404 = scmp.lt.s32.totalorder %s23, 1
      %s405 = scalar_select %p404, %s23, 1
      %s406 = smul.addr %s405, 8
      %s407 = smul.addr %s406, 4
      %s408 = scalar_lea.vmem %s0, %s407
      %p409 = scmp.lt.s32.totalorder %s23, 1
      %s410 = scalar_select %p409, %s23, 1
      %s411 = smul.addr %s410, 7
      %s412 = smul.addr %s411, 8
      %s413 = scalar_lea.vmem %s12, %s412
      %414 = vst [vmem:[#allocation2] sm:$0xff] 0.0
      %415 = vst [vmem:[#allocation2 + $0x8] sm:$0xff] 0.0
      %416 = vst [vmem:[#allocation2 + $0x10] sm:$0xff] 0.0
      %417 = vst [vmem:[#allocation2 + $0x18] sm:$0xff] 0.0
      %418 = vst [vmem:[#allocation2 + $0x20] sm:$0xff] 0.0
      %419 = vst [vmem:[#allocation2 + $0x28] sm:$0xff] 0.0
      %420 = vst [vmem:[#allocation2 + $0x30] sm:$0xff] 0.0
      %vm421 = vcmask 850944
      %422 = vst.msk [vmem:[#allocation2 + $0x38] sm:$0xff] %vm421, 0.0
      %423 = vst [vmem:[#allocation3] sm:$0xff] 0.0
      %424 = vst [vmem:[#allocation3 + $0x8] sm:$0xff] 0.0
      %425 = vst [vmem:[#allocation3 + $0x10] sm:$0xff] 0.0
      %426 = vst [vmem:[#allocation3 + $0x18] sm:$0xff] 0.0
      %427 = vst [vmem:[#allocation3 + $0x20] sm:$0xff] 0.0
      %428 = vst [vmem:[#allocation3 + $0x28] sm:$0xff] 0.0
      %429 = vst [vmem:[#allocation3 + $0x30] sm:$0xff] 0.0
      %430 = vst.msk [vmem:[#allocation3 + $0x38] sm:$0xff] %vm421, 0.0
      %v431 = vld [vmem:[%s408] sm:$0xff]
      %v432 = vld [vmem:[%s408 + $0x8] sm:$0xff]
      %v433 = vld [vmem:[%s408 + $0x10] sm:$0xff]
      %v434 = vld [vmem:[%s408 + $0x18] sm:$0xff]
      %v435 = vld [vmem:[%s11] sm:$0x7f]
      %v436 = vld [vmem:[%s10] sm:$0xff]
      %v437 = vld [vmem:[%s1] sm:$0xff]
      %s438 = scalar_lea.vmem %s1, 8
      %v439 = vld [vmem:[%s438] sm:$0xff]
      %v444 = vcombine.high %v431, %v431
      %v445 = vcombine.high %v432, %v432
      %v446 = vcombine.high %v433, %v433
      %v447 = vcombine.high %v434, %v434
      %448 = vrot.lane.b32.xlu0 %v431, 28
      %v449 = vpop.permute.xlu0 %448
      %450 = vrot.lane.b32.xlu0 %v444, 28
      %v451 = vpop.permute.xlu0 %450
      %452 = vrot.lane.b32.xlu0 %v432, 28
      %v453 = vpop.permute.xlu0 %452
      %454 = vrot.lane.b32.xlu0 %v445, 28
      %v455 = vpop.permute.xlu0 %454
      %456 = vrot.lane.b32.xlu0 %v433, 28
      %v457 = vpop.permute.xlu0 %456
      %458 = vrot.lane.b32.xlu0 %v446, 28
      %v459 = vpop.permute.xlu0 %458
      %460 = vrot.lane.b32.xlu0 %v434, 28
      %v461 = vpop.permute.xlu0 %460
      %462 = vrot.lane.b32.xlu0 %v447, 28
      %v463 = vpop.permute.xlu0 %462
      %vm464 = vcmask 228352
      %v465 = vsel %vm464, %v449, %v451
      %v466 = vsel %vm464, %v451, %v453
      %v467 = vsel %vm464, %v453, %v455
      %v468 = vsel %vm464, %v455, %v457
      %v469 = vsel %vm464, %v457, %v459
      %v470 = vsel %vm464, %v459, %v461
      %v471 = vsel %vm464, %v461, %v463
      %vm472 = vcmask 31744
      %v474 = vsel %vm472, %v439, 0
      %vm476 = vcmask 1043456
      %v477 = vsel %vm476, %v465, 0
      %v479 = vsel %vm476, %v466, 0
      %v481 = vsel %vm476, %v467, 0
      %v483 = vsel %vm476, %v468, 0
      %v485 = vsel %vm476, %v469, 0
      %v487 = vsel %vm476, %v470, 0
      %v489 = vsel %vm476, %v471, 0
      %491 = vmatprep.subr.mxu0 %v479
      %492 = vmatpush1.msra.mxu0 %v477
      %493 = vmatprep.subr.mxu0 0.0
      %494 = vmatpush1.msra.mxu0 0.0
      %495 = vmatprep.subr.mxu0 0.0
      %496 = vmatpush1.msra.mxu0 0.0
      %497 = vmatprep.subr.mxu0 0.0
      %498 = vmatpush1.msra.mxu0 0.0
      %499 = vmatprep.subr.mxu0 0.0
      %500 = vmatpush1.msra.mxu0 0.0
      %501 = vmatprep.subr.mxu0 0.0
      %502 = vmatpush1.msra.mxu0 0.0
      %503 = vmatprep.subr.mxu0 0.0
      %504 = vmatpush1.msra.mxu0 0.0
      %505 = vmatprep.subr.mxu0 0.0
      %506 = vmatpush1.msra.mxu0 0.0
      %507 = vmatprep.subr.mxu0 0.0
      %508 = vmatpush1.msra.mxu0 0.0
      %509 = vmatprep.subr.mxu0 0.0
      %510 = vmatpush1.msra.mxu0 0.0
      %511 = vmatprep.subr.mxu0 0.0
      %512 = vmatpush1.msra.mxu0 0.0
      %513 = vmatprep.subr.mxu0 0.0
      %514 = vmatpush1.msra.mxu0 0.0
      %515 = vmatprep.subr.mxu0 0.0
      %516 = vmatpush1.msra.mxu0 0.0
      %517 = vmatprep.subr.mxu0 0.0
      %518 = vmatpush1.msra.mxu0 0.0
      %519 = vmatprep.subr.mxu0 0.0
      %520 = vmatpush1.msra.mxu0 0.0
      %521 = vmatprep.subr.mxu0 0.0
      %522 = vmatpush1.msra.mxu0 0.0
      %523 = vmatprep.subr.mxu0 0.0
      %524 = vmatpush1.msra.mxu0 0.0
      %525 = vmatprep.subr.mxu0 0.0
      %526 = vmatpush1.msra.mxu0 0.0
      %527 = vmatprep.subr.mxu0 0.0
      %528 = vmatpush1.msra.mxu0 0.0
      %529 = vmatprep.subr.mxu0 0.0
      %530 = vmatpush1.msra.mxu0 0.0
      %531 = vmatprep.subr.mxu0 0.0
      %532 = vmatpush1.msra.mxu0 0.0
      %533 = vmatprep.subr.mxu0 0.0
      %534 = vmatpush1.msra.mxu0 0.0
      %535 = vmatprep.subr.mxu0 0.0
      %536 = vmatpush1.msra.mxu0 0.0
      %537 = vmatprep.subr.mxu0 0.0
      %538 = vmatpush1.msra.mxu0 0.0
      %539 = vmatprep.subr.mxu0 0.0
      %540 = vmatpush1.msra.mxu0 0.0
      %541 = vmatprep.subr.mxu0 0.0
      %542 = vmatpush1.msra.mxu0 0.0
      %543 = vmatprep.subr.mxu0 0.0
      %544 = vmatpush1.msra.mxu0 0.0
      %545 = vmatprep.subr.mxu0 0.0
      %546 = vmatpush1.msra.mxu0 0.0
      %547 = vmatprep.subr.mxu0 0.0
      %548 = vmatpush1.msra.mxu0 0.0
      %549 = vmatprep.subr.mxu0 0.0
      %550 = vmatpush1.msra.mxu0 0.0
      %551 = vmatprep.subr.mxu0 0.0
      %552 = vmatpush1.msra.mxu0 0.0
      %553 = vmatprep.subr.mxu0 0.0
      %554 = vmatpush1.msra.mxu0 0.0
      %555 = vmatprep.mubr.f32.mxu0 0.0
      %556 = vmatmul.mubr.f32.gmra.mrb[0].mxu0 %v474
      %v557 = vpop.f32.mrb[0].mxu0
      %v558 = vadd.f32 0.0, %v557
      %v559 = vpop.f32.mrb[0].mxu0
      %v560 = vadd.f32 0.0, %v559
      %561 = vdwg.mxu0
      %562 = vmatprep.subr.mxu0 %v483
      %563 = vmatpush1.msra.mxu0 %v481
      %564 = vmatprep.subr.mxu0 0.0
      %565 = vmatpush1.msra.mxu0 0.0
      %566 = vmatprep.subr.mxu0 0.0
      %567 = vmatpush1.msra.mxu0 0.0
      %568 = vmatprep.subr.mxu0 0.0
      %569 = vmatpush1.msra.mxu0 0.0
      %570 = vmatprep.subr.mxu0 0.0
      %571 = vmatpush1.msra.mxu0 0.0
      %572 = vmatprep.subr.mxu0 0.0
      %573 = vmatpush1.msra.mxu0 0.0
      %574 = vmatprep.subr.mxu0 0.0
      %575 = vmatpush1.msra.mxu0 0.0
      %576 = vmatprep.subr.mxu0 0.0
      %577 = vmatpush1.msra.mxu0 0.0
      %578 = vmatprep.subr.mxu0 0.0
      %579 = vmatpush1.msra.mxu0 0.0
      %580 = vmatprep.subr.mxu0 0.0
      %581 = vmatpush1.msra.mxu0 0.0
      %582 = vmatprep.subr.mxu0 0.0
      %583 = vmatpush1.msra.mxu0 0.0
      %584 = vmatprep.subr.mxu0 0.0
      %585 = vmatpush1.msra.mxu0 0.0
      %586 = vmatprep.subr.mxu0 0.0
      %587 = vmatpush1.msra.mxu0 0.0
      %588 = vmatprep.subr.mxu0 0.0
      %589 = vmatpush1.msra.mxu0 0.0
      %590 = vmatprep.subr.mxu0 0.0
      %591 = vmatpush1.msra.mxu0 0.0
      %592 = vmatprep.subr.mxu0 0.0
      %593 = vmatpush1.msra.mxu0 0.0
      %594 = vmatprep.subr.mxu0 0.0
      %595 = vmatpush1.msra.mxu0 0.0
      %596 = vmatprep.subr.mxu0 0.0
      %597 = vmatpush1.msra.mxu0 0.0
      %598 = vmatprep.subr.mxu0 0.0
      %599 = vmatpush1.msra.mxu0 0.0
      %600 = vmatprep.subr.mxu0 0.0
      %601 = vmatpush1.msra.mxu0 0.0
      %602 = vmatprep.subr.mxu0 0.0
      %603 = vmatpush1.msra.mxu0 0.0
      %604 = vmatprep.subr.mxu0 0.0
      %605 = vmatpush1.msra.mxu0 0.0
      %606 = vmatprep.subr.mxu0 0.0
      %607 = vmatpush1.msra.mxu0 0.0
      %608 = vmatprep.subr.mxu0 0.0
      %609 = vmatpush1.msra.mxu0 0.0
      %610 = vmatprep.subr.mxu0 0.0
      %611 = vmatpush1.msra.mxu0 0.0
      %612 = vmatprep.subr.mxu0 0.0
      %613 = vmatpush1.msra.mxu0 0.0
      %614 = vmatprep.subr.mxu0 0.0
      %615 = vmatpush1.msra.mxu0 0.0
      %616 = vmatprep.subr.mxu0 0.0
      %617 = vmatpush1.msra.mxu0 0.0
      %618 = vmatprep.subr.mxu0 0.0
      %619 = vmatpush1.msra.mxu0 0.0
      %620 = vmatprep.subr.mxu0 0.0
      %621 = vmatpush1.msra.mxu0 0.0
      %622 = vmatprep.subr.mxu0 0.0
      %623 = vmatpush1.msra.mxu0 0.0
      %624 = vmatprep.subr.mxu0 0.0
      %625 = vmatpush1.msra.mxu0 0.0
      %626 = vmatprep.mubr.f32.mxu0 0.0
      %627 = vmatmul.mubr.f32.gmra.mrb[0].mxu0 %v474
      %v628 = vpop.f32.mrb[0].mxu0
      %v629 = vadd.f32 0.0, %v628
      %v630 = vpop.f32.mrb[0].mxu0
      %v631 = vadd.f32 0.0, %v630
      %632 = vdwg.mxu0
      %633 = vmatprep.subr.mxu0 %v487
      %634 = vmatpush1.msra.mxu0 %v485
      %635 = vmatprep.subr.mxu0 0.0
      %636 = vmatpush1.msra.mxu0 0.0
      %637 = vmatprep.subr.mxu0 0.0
      %638 = vmatpush1.msra.mxu0 0.0
      %639 = vmatprep.subr.mxu0 0.0
      %640 = vmatpush1.msra.mxu0 0.0
      %641 = vmatprep.subr.mxu0 0.0
      %642 = vmatpush1.msra.mxu0 0.0
      %643 = vmatprep.subr.mxu0 0.0
      %644 = vmatpush1.msra.mxu0 0.0
      %645 = vmatprep.subr.mxu0 0.0
      %646 = vmatpush1.msra.mxu0 0.0
      %647 = vmatprep.subr.mxu0 0.0
      %648 = vmatpush1.msra.mxu0 0.0
      %649 = vmatprep.subr.mxu0 0.0
      %650 = vmatpush1.msra.mxu0 0.0
      %651 = vmatprep.subr.mxu0 0.0
      %652 = vmatpush1.msra.mxu0 0.0
      %653 = vmatprep.subr.mxu0 0.0
      %654 = vmatpush1.msra.mxu0 0.0
      %655 = vmatprep.subr.mxu0 0.0
      %656 = vmatpush1.msra.mxu0 0.0
      %657 = vmatprep.subr.mxu0 0.0
      %658 = vmatpush1.msra.mxu0 0.0
      %659 = vmatprep.subr.mxu0 0.0
      %660 = vmatpush1.msra.mxu0 0.0
      %661 = vmatprep.subr.mxu0 0.0
      %662 = vmatpush1.msra.mxu0 0.0
      %663 = vmatprep.subr.mxu0 0.0
      %664 = vmatpush1.msra.mxu0 0.0
      %665 = vmatprep.subr.mxu0 0.0
      %666 = vmatpush1.msra.mxu0 0.0
      %667 = vmatprep.subr.mxu0 0.0
      %668 = vmatpush1.msra.mxu0 0.0
      %669 = vmatprep.subr.mxu0 0.0
      %670 = vmatpush1.msra.mxu0 0.0
      %671 = vmatprep.subr.mxu0 0.0
      %672 = vmatpush1.msra.mxu0 0.0
      %673 = vmatprep.subr.mxu0 0.0
      %674 = vmatpush1.msra.mxu0 0.0
      %675 = vmatprep.subr.mxu0 0.0
      %676 = vmatpush1.msra.mxu0 0.0
      %677 = vmatprep.subr.mxu0 0.0
      %678 = vmatpush1.msra.mxu0 0.0
      %679 = vmatprep.subr.mxu0 0.0
      %680 = vmatpush1.msra.mxu0 0.0
      %681 = vmatprep.subr.mxu0 0.0
      %682 = vmatpush1.msra.mxu0 0.0
      %683 = vmatprep.subr.mxu0 0.0
      %684 = vmatpush1.msra.mxu0 0.0
      %685 = vmatprep.subr.mxu0 0.0
      %686 = vmatpush1.msra.mxu0 0.0
      %687 = vmatprep.subr.mxu0 0.0
      %688 = vmatpush1.msra.mxu0 0.0
      %689 = vmatprep.subr.mxu0 0.0
      %690 = vmatpush1.msra.mxu0 0.0
      %691 = vmatprep.subr.mxu0 0.0
      %692 = vmatpush1.msra.mxu0 0.0
      %693 = vmatprep.subr.mxu0 0.0
      %694 = vmatpush1.msra.mxu0 0.0
      %695 = vmatprep.subr.mxu0 0.0
      %696 = vmatpush1.msra.mxu0 0.0
      %697 = vmatprep.mubr.f32.mxu0 0.0
      %698 = vmatmul.mubr.f32.gmra.mrb[0].mxu0 %v474
      %v699 = vpop.f32.mrb[0].mxu0
      %v700 = vadd.f32 0.0, %v699
      %v701 = vpop.f32.mrb[0].mxu0
      %v702 = vadd.f32 0.0, %v701
      %703 = vdwg.mxu0
      %704 = vmatprep.subr.mxu0 0.0
      %705 = vmatpush1.msra.mxu0 %v489
      %706 = vmatprep.subr.mxu0 0.0
      %707 = vmatpush1.msra.mxu0 0.0
      %708 = vmatprep.subr.mxu0 0.0
      %709 = vmatpush1.msra.mxu0 0.0
      %710 = vmatprep.subr.mxu0 0.0
      %711 = vmatpush1.msra.mxu0 0.0
      %712 = vmatprep.subr.mxu0 0.0
      %713 = vmatpush1.msra.mxu0 0.0
      %714 = vmatprep.subr.mxu0 0.0
      %715 = vmatpush1.msra.mxu0 0.0
      %716 = vmatprep.subr.mxu0 0.0
      %717 = vmatpush1.msra.mxu0 0.0
      %718 = vmatprep.subr.mxu0 0.0
      %719 = vmatpush1.msra.mxu0 0.0
      %720 = vmatprep.subr.mxu0 0.0
      %721 = vmatpush1.msra.mxu0 0.0
      %722 = vmatprep.subr.mxu0 0.0
      %723 = vmatpush1.msra.mxu0 0.0
      %724 = vmatprep.subr.mxu0 0.0
      %725 = vmatpush1.msra.mxu0 0.0
      %726 = vmatprep.subr.mxu0 0.0
      %727 = vmatpush1.msra.mxu0 0.0
      %728 = vmatprep.subr.mxu0 0.0
      %729 = vmatpush1.msra.mxu0 0.0
      %730 = vmatprep.subr.mxu0 0.0
      %731 = vmatpush1.msra.mxu0 0.0
      %732 = vmatprep.subr.mxu0 0.0
      %733 = vmatpush1.msra.mxu0 0.0
      %734 = vmatprep.subr.mxu0 0.0
      %735 = vmatpush1.msra.mxu0 0.0
      %736 = vmatprep.subr.mxu0 0.0
      %737 = vmatpush1.msra.mxu0 0.0
      %738 = vmatprep.subr.mxu0 0.0
      %739 = vmatpush1.msra.mxu0 0.0
      %740 = vmatprep.subr.mxu0 0.0
      %741 = vmatpush1.msra.mxu0 0.0
      %742 = vmatprep.subr.mxu0 0.0
      %743 = vmatpush1.msra.mxu0 0.0
      %744 = vmatprep.subr.mxu0 0.0
      %745 = vmatpush1.msra.mxu0 0.0
      %746 = vmatprep.subr.mxu0 0.0
      %747 = vmatpush1.msra.mxu0 0.0
      %748 = vmatprep.subr.mxu0 0.0
      %749 = vmatpush1.msra.mxu0 0.0
      %750 = vmatprep.subr.mxu0 0.0
      %751 = vmatpush1.msra.mxu0 0.0
      %752 = vmatprep.subr.mxu0 0.0
      %753 = vmatpush1.msra.mxu0 0.0
      %754 = vmatprep.subr.mxu0 0.0
      %755 = vmatpush1.msra.mxu0 0.0
      %756 = vmatprep.subr.mxu0 0.0
      %757 = vmatpush1.msra.mxu0 0.0
      %758 = vmatprep.subr.mxu0 0.0
      %759 = vmatpush1.msra.mxu0 0.0
      %760 = vmatprep.subr.mxu0 0.0
      %761 = vmatpush1.msra.mxu0 0.0
      %762 = vmatprep.subr.mxu0 0.0
      %763 = vmatpush1.msra.mxu0 0.0
      %764 = vmatprep.subr.mxu0 0.0
      %765 = vmatpush1.msra.mxu0 0.0
      %766 = vmatprep.subr.mxu0 0.0
      %767 = vmatpush1.msra.mxu0 0.0
      %768 = vmatprep.mubr.f32.mxu0 0.0
      %769 = vmatmul.mubr.f32.gmra.mrb[0].mxu0 %v474
      %v770 = vpop.f32.mrb[0].mxu0
      %v771 = vadd.f32 0.0, %v770
      %v772 = vpop.f32.mrb[0].mxu0
      %773 = vdwg.mxu0
      %v775 = vsel %vm472, %v437, 0
      %v777 = vsel %vm476, %v431, 0
      %v779 = vsel %vm476, %v444, 0
      %v781 = vsel %vm476, %v432, 0
      %v783 = vsel %vm476, %v445, 0
      %v785 = vsel %vm476, %v433, 0
      %v787 = vsel %vm476, %v446, 0
      %v789 = vsel %vm476, %v434, 0
      %791 = vmatprep.subr.mxu0 %v779
      %792 = vmatpush1.msra.mxu0 %v777
      %793 = vmatprep.subr.mxu0 0.0
      %794 = vmatpush1.msra.mxu0 0.0
      %795 = vmatprep.subr.mxu0 0.0
      %796 = vmatpush1.msra.mxu0 0.0
      %797 = vmatprep.subr.mxu0 0.0
      %798 = vmatpush1.msra.mxu0 0.0
      %799 = vmatprep.subr.mxu0 0.0
      %800 = vmatpush1.msra.mxu0 0.0
      %801 = vmatprep.subr.mxu0 0.0
      %802 = vmatpush1.msra.mxu0 0.0
      %803 = vmatprep.subr.mxu0 0.0
      %804 = vmatpush1.msra.mxu0 0.0
      %805 = vmatprep.subr.mxu0 0.0
      %806 = vmatpush1.msra.mxu0 0.0
      %807 = vmatprep.subr.mxu0 0.0
      %808 = vmatpush1.msra.mxu0 0.0
      %809 = vmatprep.subr.mxu0 0.0
      %810 = vmatpush1.msra.mxu0 0.0
      %811 = vmatprep.subr.mxu0 0.0
      %812 = vmatpush1.msra.mxu0 0.0
      %813 = vmatprep.subr.mxu0 0.0
      %814 = vmatpush1.msra.mxu0 0.0
      %815 = vmatprep.subr.mxu0 0.0
      %816 = vmatpush1.msra.mxu0 0.0
      %817 = vmatprep.subr.mxu0 0.0
      %818 = vmatpush1.msra.mxu0 0.0
      %819 = vmatprep.subr.mxu0 0.0
      %820 = vmatpush1.msra.mxu0 0.0
      %821 = vmatprep.subr.mxu0 0.0
      %822 = vmatpush1.msra.mxu0 0.0
      %823 = vmatprep.subr.mxu0 0.0
      %824 = vmatpush1.msra.mxu0 0.0
      %825 = vmatprep.subr.mxu0 0.0
      %826 = vmatpush1.msra.mxu0 0.0
      %827 = vmatprep.subr.mxu0 0.0
      %828 = vmatpush1.msra.mxu0 0.0
      %829 = vmatprep.subr.mxu0 0.0
      %830 = vmatpush1.msra.mxu0 0.0
      %831 = vmatprep.subr.mxu0 0.0
      %832 = vmatpush1.msra.mxu0 0.0
      %833 = vmatprep.subr.mxu0 0.0
      %834 = vmatpush1.msra.mxu0 0.0
      %835 = vmatprep.subr.mxu0 0.0
      %836 = vmatpush1.msra.mxu0 0.0
      %837 = vmatprep.subr.mxu0 0.0
      %838 = vmatpush1.msra.mxu0 0.0
      %839 = vmatprep.subr.mxu0 0.0
      %840 = vmatpush1.msra.mxu0 0.0
      %841 = vmatprep.subr.mxu0 0.0
      %842 = vmatpush1.msra.mxu0 0.0
      %843 = vmatprep.subr.mxu0 0.0
      %844 = vmatpush1.msra.mxu0 0.0
      %845 = vmatprep.subr.mxu0 0.0
      %846 = vmatpush1.msra.mxu0 0.0
      %847 = vmatprep.subr.mxu0 0.0
      %848 = vmatpush1.msra.mxu0 0.0
      %849 = vmatprep.subr.mxu0 0.0
      %850 = vmatpush1.msra.mxu0 0.0
      %851 = vmatprep.subr.mxu0 0.0
      %852 = vmatpush1.msra.mxu0 0.0
      %853 = vmatprep.subr.mxu0 0.0
      %854 = vmatpush1.msra.mxu0 0.0
      %855 = vmatprep.mubr.f32.mxu0 0.0
      %856 = vmatmul.mubr.f32.gmra.mrb[0].mxu0 %v775
      %v857 = vpop.f32.mrb[0].mxu0
      %v858 = vadd.f32 %v558, %v857
      %v859 = vpop.f32.mrb[0].mxu0
      %v860 = vadd.f32 %v560, %v859
      %861 = vdwg.mxu0
      %862 = vmatprep.subr.mxu0 %v783
      %863 = vmatpush1.msra.mxu0 %v781
      %864 = vmatprep.subr.mxu0 0.0
      %865 = vmatpush1.msra.mxu0 0.0
      %866 = vmatprep.subr.mxu0 0.0
      %867 = vmatpush1.msra.mxu0 0.0
      %868 = vmatprep.subr.mxu0 0.0
      %869 = vmatpush1.msra.mxu0 0.0
      %870 = vmatprep.subr.mxu0 0.0
      %871 = vmatpush1.msra.mxu0 0.0
      %872 = vmatprep.subr.mxu0 0.0
      %873 = vmatpush1.msra.mxu0 0.0
      %874 = vmatprep.subr.mxu0 0.0
      %875 = vmatpush1.msra.mxu0 0.0
      %876 = vmatprep.subr.mxu0 0.0
      %877 = vmatpush1.msra.mxu0 0.0
      %878 = vmatprep.subr.mxu0 0.0
      %879 = vmatpush1.msra.mxu0 0.0
      %880 = vmatprep.subr.mxu0 0.0
      %881 = vmatpush1.msra.mxu0 0.0
      %882 = vmatprep.subr.mxu0 0.0
      %883 = vmatpush1.msra.mxu0 0.0
      %884 = vmatprep.subr.mxu0 0.0
      %885 = vmatpush1.msra.mxu0 0.0
      %886 = vmatprep.subr.mxu0 0.0
      %887 = vmatpush1.msra.mxu0 0.0
      %888 = vmatprep.subr.mxu0 0.0
      %889 = vmatpush1.msra.mxu0 0.0
      %890 = vmatprep.subr.mxu0 0.0
      %891 = vmatpush1.msra.mxu0 0.0
      %892 = vmatprep.subr.mxu0 0.0
      %893 = vmatpush1.msra.mxu0 0.0
      %894 = vmatprep.subr.mxu0 0.0
      %895 = vmatpush1.msra.mxu0 0.0
      %896 = vmatprep.subr.mxu0 0.0
      %897 = vmatpush1.msra.mxu0 0.0
      %898 = vmatprep.subr.mxu0 0.0
      %899 = vmatpush1.msra.mxu0 0.0
      %900 = vmatprep.subr.mxu0 0.0
      %901 = vmatpush1.msra.mxu0 0.0
      %902 = vmatprep.subr.mxu0 0.0
      %903 = vmatpush1.msra.mxu0 0.0
      %904 = vmatprep.subr.mxu0 0.0
      %905 = vmatpush1.msra.mxu0 0.0
      %906 = vmatprep.subr.mxu0 0.0
      %907 = vmatpush1.msra.mxu0 0.0
      %908 = vmatprep.subr.mxu0 0.0
      %909 = vmatpush1.msra.mxu0 0.0
      %910 = vmatprep.subr.mxu0 0.0
      %911 = vmatpush1.msra.mxu0 0.0
      %912 = vmatprep.subr.mxu0 0.0
      %913 = vmatpush1.msra.mxu0 0.0
      %914 = vmatprep.subr.mxu0 0.0
      %915 = vmatpush1.msra.mxu0 0.0
      %916 = vmatprep.subr.mxu0 0.0
      %917 = vmatpush1.msra.mxu0 0.0
      %918 = vmatprep.subr.mxu0 0.0
      %919 = vmatpush1.msra.mxu0 0.0
      %920 = vmatprep.subr.mxu0 0.0
      %921 = vmatpush1.msra.mxu0 0.0
      %922 = vmatprep.subr.mxu0 0.0
      %923 = vmatpush1.msra.mxu0 0.0
      %924 = vmatprep.subr.mxu0 0.0
      %925 = vmatpush1.msra.mxu0 0.0
      %926 = vmatprep.mubr.f32.mxu0 0.0
      %927 = vmatmul.mubr.f32.gmra.mrb[0].mxu0 %v775
      %v928 = vpop.f32.mrb[0].mxu0
      %v929 = vadd.f32 %v629, %v928
      %v930 = vpop.f32.mrb[0].mxu0
      %v931 = vadd.f32 %v631, %v930
      %932 = vdwg.mxu0
      %933 = vmatprep.subr.mxu0 %v787
      %934 = vmatpush1.msra.mxu0 %v785
      %935 = vmatprep.subr.mxu0 0.0
      %936 = vmatpush1.msra.mxu0 0.0
      %937 = vmatprep.subr.mxu0 0.0
      %938 = vmatpush1.msra.mxu0 0.0
      %939 = vmatprep.subr.mxu0 0.0
      %940 = vmatpush1.msra.mxu0 0.0
      %941 = vmatprep.subr.mxu0 0.0
      %942 = vmatpush1.msra.mxu0 0.0
      %943 = vmatprep.subr.mxu0 0.0
      %944 = vmatpush1.msra.mxu0 0.0
      %945 = vmatprep.subr.mxu0 0.0
      %946 = vmatpush1.msra.mxu0 0.0
      %947 = vmatprep.subr.mxu0 0.0
      %948 = vmatpush1.msra.mxu0 0.0
      %949 = vmatprep.subr.mxu0 0.0
      %950 = vmatpush1.msra.mxu0 0.0
      %951 = vmatprep.subr.mxu0 0.0
      %952 = vmatpush1.msra.mxu0 0.0
      %953 = vmatprep.subr.mxu0 0.0
      %954 = vmatpush1.msra.mxu0 0.0
      %955 = vmatprep.subr.mxu0 0.0
      %956 = vmatpush1.msra.mxu0 0.0
      %957 = vmatprep.subr.mxu0 0.0
      %958 = vmatpush1.msra.mxu0 0.0
      %959 = vmatprep.subr.mxu0 0.0
      %960 = vmatpush1.msra.mxu0 0.0
      %961 = vmatprep.subr.mxu0 0.0
      %962 = vmatpush1.msra.mxu0 0.0
      %963 = vmatprep.subr.mxu0 0.0
      %964 = vmatpush1.msra.mxu0 0.0
      %965 = vmatprep.subr.mxu0 0.0
      %966 = vmatpush1.msra.mxu0 0.0
      %967 = vmatprep.subr.mxu0 0.0
      %968 = vmatpush1.msra.mxu0 0.0
      %969 = vmatprep.subr.mxu0 0.0
      %970 = vmatpush1.msra.mxu0 0.0
      %971 = vmatprep.subr.mxu0 0.0
      %972 = vmatpush1.msra.mxu0 0.0
      %973 = vmatprep.subr.mxu0 0.0
      %974 = vmatpush1.msra.mxu0 0.0
      %975 = vmatprep.subr.mxu0 0.0
      %976 = vmatpush1.msra.mxu0 0.0
      %977 = vmatprep.subr.mxu0 0.0
      %978 = vmatpush1.msra.mxu0 0.0
      %979 = vmatprep.subr.mxu0 0.0
      %980 = vmatpush1.msra.mxu0 0.0
      %981 = vmatprep.subr.mxu0 0.0
      %982 = vmatpush1.msra.mxu0 0.0
      %983 = vmatprep.subr.mxu0 0.0
      %984 = vmatpush1.msra.mxu0 0.0
      %985 = vmatprep.subr.mxu0 0.0
      %986 = vmatpush1.msra.mxu0 0.0
      %987 = vmatprep.subr.mxu0 0.0
      %988 = vmatpush1.msra.mxu0 0.0
      %989 = vmatprep.subr.mxu0 0.0
      %990 = vmatpush1.msra.mxu0 0.0
      %991 = vmatprep.subr.mxu0 0.0
      %992 = vmatpush1.msra.mxu0 0.0
      %993 = vmatprep.subr.mxu0 0.0
      %994 = vmatpush1.msra.mxu0 0.0
      %995 = vmatprep.subr.mxu0 0.0
      %996 = vmatpush1.msra.mxu0 0.0
      %997 = vmatprep.mubr.f32.mxu0 0.0
      %998 = vmatmul.mubr.f32.gmra.mrb[0].mxu0 %v775
      %v999 = vpop.f32.mrb[0].mxu0
      %v1000 = vadd.f32 %v700, %v999
      %v1001 = vpop.f32.mrb[0].mxu0
      %v1002 = vadd.f32 %v702, %v1001
      %1003 = vdwg.mxu0
      %1004 = vmatprep.subr.mxu0 0.0
      %1005 = vmatpush1.msra.mxu0 %v789
      %1006 = vmatprep.subr.mxu0 0.0
      %1007 = vmatpush1.msra.mxu0 0.0
      %1008 = vmatprep.subr.mxu0 0.0
      %1009 = vmatpush1.msra.mxu0 0.0
      %1010 = vmatprep.subr.mxu0 0.0
      %1011 = vmatpush1.msra.mxu0 0.0
      %1012 = vmatprep.subr.mxu0 0.0
      %1013 = vmatpush1.msra.mxu0 0.0
      %1014 = vmatprep.subr.mxu0 0.0
      %1015 = vmatpush1.msra.mxu0 0.0
      %1016 = vmatprep.subr.mxu0 0.0
      %1017 = vmatpush1.msra.mxu0 0.0
      %1018 = vmatprep.subr.mxu0 0.0
      %1019 = vmatpush1.msra.mxu0 0.0
      %1020 = vmatprep.subr.mxu0 0.0
      %1021 = vmatpush1.msra.mxu0 0.0
      %1022 = vmatprep.subr.mxu0 0.0
      %1023 = vmatpush1.msra.mxu0 0.0
      %1024 = vmatprep.subr.mxu0 0.0
      %1025 = vmatpush1.msra.mxu0 0.0
      %1026 = vmatprep.subr.mxu0 0.0
      %1027 = vmatpush1.msra.mxu0 0.0
      %1028 = vmatprep.subr.mxu0 0.0
      %1029 = vmatpush1.msra.mxu0 0.0
      %1030 = vmatprep.subr.mxu0 0.0
      %1031 = vmatpush1.msra.mxu0 0.0
      %1032 = vmatprep.subr.mxu0 0.0
      %1033 = vmatpush1.msra.mxu0 0.0
      %1034 = vmatprep.subr.mxu0 0.0
      %1035 = vmatpush1.msra.mxu0 0.0
      %1036 = vmatprep.subr.mxu0 0.0
      %1037 = vmatpush1.msra.mxu0 0.0
      %1038 = vmatprep.subr.mxu0 0.0
      %1039 = vmatpush1.msra.mxu0 0.0
      %1040 = vmatprep.subr.mxu0 0.0
      %1041 = vmatpush1.msra.mxu0 0.0
      %1042 = vmatprep.subr.mxu0 0.0
      %1043 = vmatpush1.msra.mxu0 0.0
      %1044 = vmatprep.subr.mxu0 0.0
      %1045 = vmatpush1.msra.mxu0 0.0
      %1046 = vmatprep.subr.mxu0 0.0
      %1047 = vmatpush1.msra.mxu0 0.0
      %1048 = vmatprep.subr.mxu0 0.0
      %1049 = vmatpush1.msra.mxu0 0.0
      %1050 = vmatprep.subr.mxu0 0.0
      %1051 = vmatpush1.msra.mxu0 0.0
      %1052 = vmatprep.subr.mxu0 0.0
      %1053 = vmatpush1.msra.mxu0 0.0
      %1054 = vmatprep.subr.mxu0 0.0
      %1055 = vmatpush1.msra.mxu0 0.0
      %1056 = vmatprep.subr.mxu0 0.0
      %1057 = vmatpush1.msra.mxu0 0.0
      %1058 = vmatprep.subr.mxu0 0.0
      %1059 = vmatpush1.msra.mxu0 0.0
      %1060 = vmatprep.subr.mxu0 0.0
      %1061 = vmatpush1.msra.mxu0 0.0
      %1062 = vmatprep.subr.mxu0 0.0
      %1063 = vmatpush1.msra.mxu0 0.0
      %1064 = vmatprep.subr.mxu0 0.0
      %1065 = vmatpush1.msra.mxu0 0.0
      %1066 = vmatprep.subr.mxu0 0.0
      %1067 = vmatpush1.msra.mxu0 0.0
      %1068 = vmatprep.mubr.f32.mxu0 0.0
      %1069 = vmatmul.mubr.f32.gmra.mrb[0].mxu0 %v775
      %v1070 = vpop.f32.mrb[0].mxu0
      %v1071 = vadd.f32 %v771, %v1070
      %v1072 = vpop.f32.mrb[0].mxu0
      %1073 = vdwg.mxu0
      %s1074 = scalar_lea.vmem %s1, 16
      %v1075 = vld [vmem:[%s1074] sm:$0xff]
      %1076 = vrot.lane.b32.xlu0 %v444, 56
      %v1077 = vpop.permute.xlu0 %1076
      %1078 = vrot.lane.b32.xlu0 %v432, 56
      %v1079 = vpop.permute.xlu0 %1078
      %1080 = vrot.lane.b32.xlu0 %v445, 56
      %v1081 = vpop.permute.xlu0 %1080
      %1082 = vrot.lane.b32.xlu0 %v433, 56
      %v1083 = vpop.permute.xlu0 %1082
      %1084 = vrot.lane.b32.xlu0 %v446, 56
      %v1085 = vpop.permute.xlu0 %1084
      %1086 = vrot.lane.b32.xlu0 %v434, 56
      %v1087 = vpop.permute.xlu0 %1086
      %1088 = vrot.lane.b32.xlu0 %v447, 56
      %v1089 = vpop.permute.xlu0 %1088
      %vm1090 = vcmask 457728
      %v1091 = vsel %vm1090, %v1077, %v1079
      %v1092 = vsel %vm1090, %v1079, %v1081
      %v1093 = vsel %vm1090, %v1081, %v1083
      %v1094 = vsel %vm1090, %v1083, %v1085
      %v1095 = vsel %vm1090, %v1085, %v1087
      %v1096 = vsel %vm1090, %v1087, %v1089
      %v1098 = vsel %vm472, %v1075, 0
      %v1100 = vsel %vm476, %v1091, 0
      %v1102 = vsel %vm476, %v1092, 0
      %v1104 = vsel %vm476, %v1093, 0
      %v1106 = vsel %vm476, %v1094, 0
      %v1108 = vsel %vm476, %v1095, 0
      %v1110 = vsel %vm476, %v1096, 0
      %v1112 = vsel %vm476, %v1089, 0
      %1114 = vmatprep.subr.mxu0 %v1102
      %1115 = vmatpush1.msra.mxu0 %v1100
      %1116 = vmatprep.subr.mxu0 0.0
      %1117 = vmatpush1.msra.mxu0 0.0
      %1118 = vmatprep.subr.mxu0 0.0
      %1119 = vmatpush1.msra.mxu0 0.0
      %1120 = vmatprep.subr.mxu0 0.0
      %1121 = vmatpush1.msra.mxu0 0.0
      %1122 = vmatprep.subr.mxu0 0.0
      %1123 = vmatpush1.msra.mxu0 0.0
      %1124 = vmatprep.subr.mxu0 0.0
      %1125 = vmatpush1.msra.mxu0 0.0
      %1126 = vmatprep.subr.mxu0 0.0
      %1127 = vmatpush1.msra.mxu0 0.0
      %1128 = vmatprep.subr.mxu0 0.0
      %1129 = vmatpush1.msra.mxu0 0.0
      %1130 = vmatprep.subr.mxu0 0.0
      %1131 = vmatpush1.msra.mxu0 0.0
      %1132 = vmatprep.subr.mxu0 0.0
      %1133 = vmatpush1.msra.mxu0 0.0
      %1134 = vmatprep.subr.mxu0 0.0
      %1135 = vmatpush1.msra.mxu0 0.0
      %1136 = vmatprep.subr.mxu0 0.0
      %1137 = vmatpush1.msra.mxu0 0.0
      %1138 = vmatprep.subr.mxu0 0.0
      %1139 = vmatpush1.msra.mxu0 0.0
      %1140 = vmatprep.subr.mxu0 0.0
      %1141 = vmatpush1.msra.mxu0 0.0
      %1142 = vmatprep.subr.mxu0 0.0
      %1143 = vmatpush1.msra.mxu0 0.0
      %1144 = vmatprep.subr.mxu0 0.0
      %1145 = vmatpush1.msra.mxu0 0.0
      %1146 = vmatprep.subr.mxu0 0.0
      %1147 = vmatpush1.msra.mxu0 0.0
      %1148 = vmatprep.subr.mxu0 0.0
      %1149 = vmatpush1.msra.mxu0 0.0
      %1150 = vmatprep.subr.mxu0 0.0
      %1151 = vmatpush1.msra.mxu0 0.0
      %1152 = vmatprep.subr.mxu0 0.0
      %1153 = vmatpush1.msra.mxu0 0.0
      %1154 = vmatprep.subr.mxu0 0.0
      %1155 = vmatpush1.msra.mxu0 0.0
      %1156 = vmatprep.subr.mxu0 0.0
      %1157 = vmatpush1.msra.mxu0 0.0
      %1158 = vmatprep.subr.mxu0 0.0
      %1159 = vmatpush1.msra.mxu0 0.0
      %1160 = vmatprep.subr.mxu0 0.0
      %1161 = vmatpush1.msra.mxu0 0.0
      %1162 = vmatprep.subr.mxu0 0.0
      %1163 = vmatpush1.msra.mxu0 0.0
      %1164 = vmatprep.subr.mxu0 0.0
      %1165 = vmatpush1.msra.mxu0 0.0
      %1166 = vmatprep.subr.mxu0 0.0
      %1167 = vmatpush1.msra.mxu0 0.0
      %1168 = vmatprep.subr.mxu0 0.0
      %1169 = vmatpush1.msra.mxu0 0.0
      %1170 = vmatprep.subr.mxu0 0.0
      %1171 = vmatpush1.msra.mxu0 0.0
      %1172 = vmatprep.subr.mxu0 0.0
      %1173 = vmatpush1.msra.mxu0 0.0
      %1174 = vmatprep.subr.mxu0 0.0
      %1175 = vmatpush1.msra.mxu0 0.0
      %1176 = vmatprep.subr.mxu0 0.0
      %1177 = vmatpush1.msra.mxu0 0.0
      %1178 = vmatprep.mubr.f32.mxu0 0.0
      %1179 = vmatmul.mubr.f32.gmra.mrb[0].mxu0 %v1098
      %v1180 = vpop.f32.mrb[0].mxu0
      %v1181 = vadd.f32 0.0, %v1180
      %v1182 = vpop.f32.mrb[0].mxu0
      %v1183 = vadd.f32 0.0, %v1182
      %1184 = vdwg.mxu0
      %1185 = vmatprep.subr.mxu0 %v1106
      %1186 = vmatpush1.msra.mxu0 %v1104
      %1187 = vmatprep.subr.mxu0 0.0
      %1188 = vmatpush1.msra.mxu0 0.0
      %1189 = vmatprep.subr.mxu0 0.0
      %1190 = vmatpush1.msra.mxu0 0.0
      %1191 = vmatprep.subr.mxu0 0.0
      %1192 = vmatpush1.msra.mxu0 0.0
      %1193 = vmatprep.subr.mxu0 0.0
      %1194 = vmatpush1.msra.mxu0 0.0
      %1195 = vmatprep.subr.mxu0 0.0
      %1196 = vmatpush1.msra.mxu0 0.0
      %1197 = vmatprep.subr.mxu0 0.0
      %1198 = vmatpush1.msra.mxu0 0.0
      %1199 = vmatprep.subr.mxu0 0.0
      %1200 = vmatpush1.msra.mxu0 0.0
      %1201 = vmatprep.subr.mxu0 0.0
      %1202 = vmatpush1.msra.mxu0 0.0
      %1203 = vmatprep.subr.mxu0 0.0
      %1204 = vmatpush1.msra.mxu0 0.0
      %1205 = vmatprep.subr.mxu0 0.0
      %1206 = vmatpush1.msra.mxu0 0.0
      %1207 = vmatprep.subr.mxu0 0.0
      %1208 = vmatpush1.msra.mxu0 0.0
      %1209 = vmatprep.subr.mxu0 0.0
      %1210 = vmatpush1.msra.mxu0 0.0
      %1211 = vmatprep.subr.mxu0 0.0
      %1212 = vmatpush1.msra.mxu0 0.0
      %1213 = vmatprep.subr.mxu0 0.0
      %1214 = vmatpush1.msra.mxu0 0.0
      %1215 = vmatprep.subr.mxu0 0.0
      %1216 = vmatpush1.msra.mxu0 0.0
      %1217 = vmatprep.subr.mxu0 0.0
      %1218 = vmatpush1.msra.mxu0 0.0
      %1219 = vmatprep.subr.mxu0 0.0
      %1220 = vmatpush1.msra.mxu0 0.0
      %1221 = vmatprep.subr.mxu0 0.0
      %1222 = vmatpush1.msra.mxu0 0.0
      %1223 = vmatprep.subr.mxu0 0.0
      %1224 = vmatpush1.msra.mxu0 0.0
      %1225 = vmatprep.subr.mxu0 0.0
      %1226 = vmatpush1.msra.mxu0 0.0
      %1227 = vmatprep.subr.mxu0 0.0
      %1228 = vmatpush1.msra.mxu0 0.0
      %1229 = vmatprep.subr.mxu0 0.0
      %1230 = vmatpush1.msra.mxu0 0.0
      %1231 = vmatprep.subr.mxu0 0.0
      %1232 = vmatpush1.msra.mxu0 0.0
      %1233 = vmatprep.subr.mxu0 0.0
      %1234 = vmatpush1.msra.mxu0 0.0
      %1235 = vmatprep.subr.mxu0 0.0
      %1236 = vmatpush1.msra.mxu0 0.0
      %1237 = vmatprep.subr.mxu0 0.0
      %1238 = vmatpush1.msra.mxu0 0.0
      %1239 = vmatprep.subr.mxu0 0.0
      %1240 = vmatpush1.msra.mxu0 0.0
      %1241 = vmatprep.subr.mxu0 0.0
      %1242 = vmatpush1.msra.mxu0 0.0
      %1243 = vmatprep.subr.mxu0 0.0
      %1244 = vmatpush1.msra.mxu0 0.0
      %1245 = vmatprep.subr.mxu0 0.0
      %1246 = vmatpush1.msra.mxu0 0.0
      %1247 = vmatprep.subr.mxu0 0.0
      %1248 = vmatpush1.msra.mxu0 0.0
      %1249 = vmatprep.mubr.f32.mxu0 0.0
      %1250 = vmatmul.mubr.f32.gmra.mrb[0].mxu0 %v1098
      %v1251 = vpop.f32.mrb[0].mxu0
      %v1252 = vadd.f32 0.0, %v1251
      %v1253 = vpop.f32.mrb[0].mxu0
      %v1254 = vadd.f32 0.0, %v1253
      %1255 = vdwg.mxu0
      %1256 = vmatprep.subr.mxu0 %v1110
      %1257 = vmatpush1.msra.mxu0 %v1108
      %1258 = vmatprep.subr.mxu0 0.0
      %1259 = vmatpush1.msra.mxu0 0.0
      %1260 = vmatprep.subr.mxu0 0.0
      %1261 = vmatpush1.msra.mxu0 0.0
      %1262 = vmatprep.subr.mxu0 0.0
      %1263 = vmatpush1.msra.mxu0 0.0
      %1264 = vmatprep.subr.mxu0 0.0
      %1265 = vmatpush1.msra.mxu0 0.0
      %1266 = vmatprep.subr.mxu0 0.0
      %1267 = vmatpush1.msra.mxu0 0.0
      %1268 = vmatprep.subr.mxu0 0.0
      %1269 = vmatpush1.msra.mxu0 0.0
      %1270 = vmatprep.subr.mxu0 0.0
      %1271 = vmatpush1.msra.mxu0 0.0
      %1272 = vmatprep.subr.mxu0 0.0
      %1273 = vmatpush1.msra.mxu0 0.0
      %1274 = vmatprep.subr.mxu0 0.0
      %1275 = vmatpush1.msra.mxu0 0.0
      %1276 = vmatprep.subr.mxu0 0.0
      %1277 = vmatpush1.msra.mxu0 0.0
      %1278 = vmatprep.subr.mxu0 0.0
      %1279 = vmatpush1.msra.mxu0 0.0
      %1280 = vmatprep.subr.mxu0 0.0
      %1281 = vmatpush1.msra.mxu0 0.0
      %1282 = vmatprep.subr.mxu0 0.0
      %1283 = vmatpush1.msra.mxu0 0.0
      %1284 = vmatprep.subr.mxu0 0.0
      %1285 = vmatpush1.msra.mxu0 0.0
      %1286 = vmatprep.subr.mxu0 0.0
      %1287 = vmatpush1.msra.mxu0 0.0
      %1288 = vmatprep.subr.mxu0 0.0
      %1289 = vmatpush1.msra.mxu0 0.0
      %1290 = vmatprep.subr.mxu0 0.0
      %1291 = vmatpush1.msra.mxu0 0.0
      %1292 = vmatprep.subr.mxu0 0.0
      %1293 = vmatpush1.msra.mxu0 0.0
      %1294 = vmatprep.subr.mxu0 0.0
      %1295 = vmatpush1.msra.mxu0 0.0
      %1296 = vmatprep.subr.mxu0 0.0
      %1297 = vmatpush1.msra.mxu0 0.0
      %1298 = vmatprep.subr.mxu0 0.0
      %1299 = vmatpush1.msra.mxu0 0.0
      %1300 = vmatprep.subr.mxu0 0.0
      %1301 = vmatpush1.msra.mxu0 0.0
      %1302 = vmatprep.subr.mxu0 0.0
      %1303 = vmatpush1.msra.mxu0 0.0
      %1304 = vmatprep.subr.mxu0 0.0
      %1305 = vmatpush1.msra.mxu0 0.0
      %1306 = vmatprep.subr.mxu0 0.0
      %1307 = vmatpush1.msra.mxu0 0.0
      %1308 = vmatprep.subr.mxu0 0.0
      %1309 = vmatpush1.msra.mxu0 0.0
      %1310 = vmatprep.subr.mxu0 0.0
      %1311 = vmatpush1.msra.mxu0 0.0
      %1312 = vmatprep.subr.mxu0 0.0
      %1313 = vmatpush1.msra.mxu0 0.0
      %1314 = vmatprep.subr.mxu0 0.0
      %1315 = vmatpush1.msra.mxu0 0.0
      %1316 = vmatprep.subr.mxu0 0.0
      %1317 = vmatpush1.msra.mxu0 0.0
      %1318 = vmatprep.subr.mxu0 0.0
      %1319 = vmatpush1.msra.mxu0 0.0
      %1320 = vmatprep.mubr.f32.mxu0 0.0
      %1321 = vmatmul.mubr.f32.gmra.mrb[0].mxu0 %v1098
      %v1322 = vpop.f32.mrb[0].mxu0
      %v1323 = vadd.f32 0.0, %v1322
      %v1324 = vpop.f32.mrb[0].mxu0
      %v1325 = vadd.f32 0.0, %v1324
      %1326 = vdwg.mxu0
      %1327 = vmatprep.subr.mxu0 0.0
      %1328 = vmatpush1.msra.mxu0 %v1112
      %1329 = vmatprep.subr.mxu0 0.0
      %1330 = vmatpush1.msra.mxu0 0.0
      %1331 = vmatprep.subr.mxu0 0.0
      %1332 = vmatpush1.msra.mxu0 0.0
      %1333 = vmatprep.subr.mxu0 0.0
      %1334 = vmatpush1.msra.mxu0 0.0
      %1335 = vmatprep.subr.mxu0 0.0
      %1336 = vmatpush1.msra.mxu0 0.0
      %1337 = vmatprep.subr.mxu0 0.0
      %1338 = vmatpush1.msra.mxu0 0.0
      %1339 = vmatprep.subr.mxu0 0.0
      %1340 = vmatpush1.msra.mxu0 0.0
      %1341 = vmatprep.subr.mxu0 0.0
      %1342 = vmatpush1.msra.mxu0 0.0
      %1343 = vmatprep.subr.mxu0 0.0
      %1344 = vmatpush1.msra.mxu0 0.0
      %1345 = vmatprep.subr.mxu0 0.0
      %1346 = vmatpush1.msra.mxu0 0.0
      %1347 = vmatprep.subr.mxu0 0.0
      %1348 = vmatpush1.msra.mxu0 0.0
      %1349 = vmatprep.subr.mxu0 0.0
      %1350 = vmatpush1.msra.mxu0 0.0
      %1351 = vmatprep.subr.mxu0 0.0
      %1352 = vmatpush1.msra.mxu0 0.0
      %1353 = vmatprep.subr.mxu0 0.0
      %1354 = vmatpush1.msra.mxu0 0.0
      %1355 = vmatprep.subr.mxu0 0.0
      %1356 = vmatpush1.msra.mxu0 0.0
      %1357 = vmatprep.subr.mxu0 0.0
      %1358 = vmatpush1.msra.mxu0 0.0
      %1359 = vmatprep.subr.mxu0 0.0
      %1360 = vmatpush1.msra.mxu0 0.0
      %1361 = vmatprep.subr.mxu0 0.0
      %1362 = vmatpush1.msra.mxu0 0.0
      %1363 = vmatprep.subr.mxu0 0.0
      %1364 = vmatpush1.msra.mxu0 0.0
      %1365 = vmatprep.subr.mxu0 0.0
      %1366 = vmatpush1.msra.mxu0 0.0
      %1367 = vmatprep.subr.mxu0 0.0
      %1368 = vmatpush1.msra.mxu0 0.0
      %1369 = vmatprep.subr.mxu0 0.0
      %1370 = vmatpush1.msra.mxu0 0.0
      %1371 = vmatprep.subr.mxu0 0.0
      %1372 = vmatpush1.msra.mxu0 0.0
      %1373 = vmatprep.subr.mxu0 0.0
      %1374 = vmatpush1.msra.mxu0 0.0
      %1375 = vmatprep.subr.mxu0 0.0
      %1376 = vmatpush1.msra.mxu0 0.0
      %1377 = vmatprep.subr.mxu0 0.0
      %1378 = vmatpush1.msra.mxu0 0.0
      %1379 = vmatprep.subr.mxu0 0.0
      %1380 = vmatpush1.msra.mxu0 0.0
      %1381 = vmatprep.subr.mxu0 0.0
      %1382 = vmatpush1.msra.mxu0 0.0
      %1383 = vmatprep.subr.mxu0 0.0
      %1384 = vmatpush1.msra.mxu0 0.0
      %1385 = vmatprep.subr.mxu0 0.0
      %1386 = vmatpush1.msra.mxu0 0.0
      %1387 = vmatprep.subr.mxu0 0.0
      %1388 = vmatpush1.msra.mxu0 0.0
      %1389 = vmatprep.subr.mxu0 0.0
      %1390 = vmatpush1.msra.mxu0 0.0
      %1391 = vmatprep.mubr.f32.mxu0 0.0
      %1392 = vmatmul.mubr.f32.gmra.mrb[0].mxu0 %v1098
      %v1393 = vpop.f32.mrb[0].mxu0
      %v1394 = vadd.f32 0.0, %v1393
      %v1395 = vpop.f32.mrb[0].mxu0
      %1396 = vdwg.mxu0
      %v1397 = vadd.f32 %v858, %v1181
      %v1398 = vadd.f32 %v860, %v1183
      %v1399 = vadd.f32 %v929, %v1252
      %v1400 = vadd.f32 %v931, %v1254
      %v1401 = vadd.f32 %v1000, %v1323
      %v1402 = vadd.f32 %v1002, %v1325
      %v1403 = vadd.f32 %v1071, %v1394
      %1405 = vset.pattern.permute.xlu0 0
      %1406 = vperm.xlu0 %1405, %v436
      %v1407 = vpop.permute.xlu0 %1406
      %v1409 = vadd.f32 %v1397, %v1407
      %v1410 = vadd.f32 %v1398, %v1407
      %v1411 = vadd.f32 %v1399, %v1407
      %v1412 = vadd.f32 %v1400, %v1407
      %v1413 = vadd.f32 %v1401, %v1407
      %v1414 = vadd.f32 %v1402, %v1407
      %v1415 = vadd.f32 %v1403, %v1407
      %v1417 = vlaneseq
      %v1418 = vshrl.u32 %v1417, 7
      %v1419 = vsub.s32 0, %v1418
      %v1420 = vrot.slane %v435, %v1419
      %v1421 = vlaneseq
      %v1422 = vshrl.u32 %v1421, 7
      %v1423 = vsub.s32 1, %v1422
      %v1424 = vrot.slane %v435, %v1423
      %v1425 = vlaneseq
      %v1426 = vshrl.u32 %v1425, 7
      %v1427 = vsub.s32 2, %v1426
      %v1428 = vrot.slane %v435, %v1427
      %v1429 = vlaneseq
      %v1430 = vshrl.u32 %v1429, 7
      %v1431 = vsub.s32 3, %v1430
      %v1432 = vrot.slane %v435, %v1431
      %v1433 = vlaneseq
      %v1434 = vshrl.u32 %v1433, 7
      %v1435 = vsub.s32 4, %v1434
      %v1436 = vrot.slane %v435, %v1435
      %v1437 = vlaneseq
      %v1438 = vshrl.u32 %v1437, 7
      %v1439 = vsub.s32 5, %v1438
      %v1440 = vrot.slane %v435, %v1439
      %v1441 = vlaneseq
      %v1442 = vshrl.u32 %v1441, 7
      %v1443 = vsub.s32 6, %v1442
      %v1444 = vrot.slane %v435, %v1443
      %v1452 = vmul.f32 %v1409, %v1420
      %v1453 = vmul.f32 %v1410, %v1424
      %v1454 = vmul.f32 %v1411, %v1428
      %v1455 = vmul.f32 %v1412, %v1432
      %v1456 = vmul.f32 %v1413, %v1436
      %v1457 = vmul.f32 %v1414, %v1440
      %v1458 = vmul.f32 %v1415, %v1444
      %1466 = vrot.lane.b32.xlu0 %v1452, 100
      %v1467 = vpop.permute.xlu0 %1466
      %1468 = vrot.lane.b32.xlu0 %v1453, 100
      %v1469 = vpop.permute.xlu0 %1468
      %1470 = vrot.lane.b32.xlu0 %v1454, 100
      %v1471 = vpop.permute.xlu0 %1470
      %1472 = vrot.lane.b32.xlu0 %v1455, 100
      %v1473 = vpop.permute.xlu0 %1472
      %1474 = vrot.lane.b32.xlu0 %v1456, 100
      %v1475 = vpop.permute.xlu0 %1474
      %1476 = vrot.lane.b32.xlu0 %v1457, 100
      %v1477 = vpop.permute.xlu0 %1476
      %1478 = vrot.lane.b32.xlu0 %v1458, 100
      %v1479 = vpop.permute.xlu0 %1478
      %vm1480 = vcmask 818176
      %v1481 = vsel %vm1480, %v1467, %v1469
      %v1482 = vsel %vm1480, %v1469, %v1471
      %v1483 = vsel %vm1480, %v1471, %v1473
      %v1484 = vsel %vm1480, %v1473, %v1475
      %v1485 = vsel %vm1480, %v1475, %v1477
      %v1486 = vsel %vm1480, %v1477, %v1479
      %vm1495 = vcmask 1048352
      %1496 = vst.msk [vmem:[#allocation2] sm:$0xff] %vm1495, %v1467
      %1497 = vst [vmem:[#allocation2 + $0x8] sm:$0xff] %v1481
      %1498 = vst [vmem:[#allocation2 + $0x10] sm:$0xff] %v1482
      %1499 = vst [vmem:[#allocation2 + $0x18] sm:$0xff] %v1483
      %1500 = vst [vmem:[#allocation2 + $0x20] sm:$0xff] %v1484
      %1501 = vst [vmem:[#allocation2 + $0x28] sm:$0xff] %v1485
      %1502 = vst [vmem:[#allocation2 + $0x30] sm:$0xff] %v1486
      %1503 = vst.msk [vmem:[#allocation2 + $0x38] sm:$0xff] %vm472, %v1479
      %s1504 = scalar_lea.vmem %s10, 8
      %v1505 = vld [vmem:[%s1504] sm:$0xff]
      %v1506 = vld [vmem:[%s2] sm:$0xff]
      %v1507 = vld [vmem:[#allocation2] sm:$0xff]
      %v1508 = vld [vmem:[#allocation2 + $0x8] sm:$0xff]
      %v1509 = vld [vmem:[#allocation2 + $0x10] sm:$0xff]
      %v1510 = vld [vmem:[#allocation2 + $0x18] sm:$0xff]
      %v1511 = vld [vmem:[#allocation2 + $0x20] sm:$0xff]
      %v1512 = vld [vmem:[#allocation2 + $0x28] sm:$0xff]
      %v1513 = vld [vmem:[#allocation2 + $0x30] sm:$0xff]
      %s1514 = scalar_lea.vmem %s2, 8
      %v1515 = vld [vmem:[%s1514] sm:$0xff]
      %v1516 = vld [vmem:[#allocation2 + $0x38] sm:$0xff]
      %1525 = vrot.lane.b32.xlu0 %v1507, 28
      %v1526 = vpop.permute.xlu0 %1525
      %1527 = vrot.lane.b32.xlu0 %v1508, 28
      %v1528 = vpop.permute.xlu0 %1527
      %1529 = vrot.lane.b32.xlu0 %v1509, 28
      %v1530 = vpop.permute.xlu0 %1529
      %1531 = vrot.lane.b32.xlu0 %v1510, 28
      %v1532 = vpop.permute.xlu0 %1531
      %1533 = vrot.lane.b32.xlu0 %v1511, 28
      %v1534 = vpop.permute.xlu0 %1533
      %1535 = vrot.lane.b32.xlu0 %v1512, 28
      %v1536 = vpop.permute.xlu0 %1535
      %1537 = vrot.lane.b32.xlu0 %v1513, 28
      %v1538 = vpop.permute.xlu0 %1537
      %1539 = vrot.lane.b32.xlu0 %v1516, 28
      %v1540 = vpop.permute.xlu0 %1539
      %v1541 = vsel %vm464, %v1526, %v1528
      %v1542 = vsel %vm464, %v1528, %v1530
      %v1543 = vsel %vm464, %v1530, %v1532
      %v1544 = vsel %vm464, %v1532, %v1534
      %v1545 = vsel %vm464, %v1534, %v1536
      %v1546 = vsel %vm464, %v1536, %v1538
      %v1547 = vsel %vm464, %v1538, %v1540
      %vm1555 = vcmask 64512
      %v1557 = vsel %vm1555, %v1515, 0
      %1559 = vmatprep.subr.mxu0 %v1542
      %1560 = vmatpush1.msra.mxu0 %v1541
      %1561 = vmatprep.subr.mxu0 0.0
      %1562 = vmatpush1.msra.mxu0 0.0
      %1563 = vmatprep.subr.mxu0 0.0
      %1564 = vmatpush1.msra.mxu0 0.0
      %1565 = vmatprep.subr.mxu0 0.0
      %1566 = vmatpush1.msra.mxu0 0.0
      %1567 = vmatprep.subr.mxu0 0.0
      %1568 = vmatpush1.msra.mxu0 0.0
      %1569 = vmatprep.subr.mxu0 0.0
      %1570 = vmatpush1.msra.mxu0 0.0
      %1571 = vmatprep.subr.mxu0 0.0
      %1572 = vmatpush1.msra.mxu0 0.0
      %1573 = vmatprep.subr.mxu0 0.0
      %1574 = vmatpush1.msra.mxu0 0.0
      %1575 = vmatprep.subr.mxu0 0.0
      %1576 = vmatpush1.msra.mxu0 0.0
      %1577 = vmatprep.subr.mxu0 0.0
      %1578 = vmatpush1.msra.mxu0 0.0
      %1579 = vmatprep.subr.mxu0 0.0
      %1580 = vmatpush1.msra.mxu0 0.0
      %1581 = vmatprep.subr.mxu0 0.0
      %1582 = vmatpush1.msra.mxu0 0.0
      %1583 = vmatprep.subr.mxu0 0.0
      %1584 = vmatpush1.msra.mxu0 0.0
      %1585 = vmatprep.subr.mxu0 0.0
      %1586 = vmatpush1.msra.mxu0 0.0
      %1587 = vmatprep.subr.mxu0 0.0
      %1588 = vmatpush1.msra.mxu0 0.0
      %1589 = vmatprep.subr.mxu0 0.0
      %1590 = vmatpush1.msra.mxu0 0.0
      %1591 = vmatprep.subr.mxu0 0.0
      %1592 = vmatpush1.msra.mxu0 0.0
      %1593 = vmatprep.subr.mxu0 0.0
      %1594 = vmatpush1.msra.mxu0 0.0
      %1595 = vmatprep.subr.mxu0 0.0
      %1596 = vmatpush1.msra.mxu0 0.0
      %1597 = vmatprep.subr.mxu0 0.0
      %1598 = vmatpush1.msra.mxu0 0.0
      %1599 = vmatprep.subr.mxu0 0.0
      %1600 = vmatpush1.msra.mxu0 0.0
      %1601 = vmatprep.subr.mxu0 0.0
      %1602 = vmatpush1.msra.mxu0 0.0
      %1603 = vmatprep.subr.mxu0 0.0
      %1604 = vmatpush1.msra.mxu0 0.0
      %1605 = vmatprep.subr.mxu0 0.0
      %1606 = vmatpush1.msra.mxu0 0.0
      %1607 = vmatprep.subr.mxu0 0.0
      %1608 = vmatpush1.msra.mxu0 0.0
      %1609 = vmatprep.subr.mxu0 0.0
      %1610 = vmatpush1.msra.mxu0 0.0
      %1611 = vmatprep.subr.mxu0 0.0
      %1612 = vmatpush1.msra.mxu0 0.0
      %1613 = vmatprep.subr.mxu0 0.0
      %1614 = vmatpush1.msra.mxu0 0.0
      %1615 = vmatprep.subr.mxu0 0.0
      %1616 = vmatpush1.msra.mxu0 0.0
      %1617 = vmatprep.subr.mxu0 0.0
      %1618 = vmatpush1.msra.mxu0 0.0
      %1619 = vmatprep.subr.mxu0 0.0
      %1620 = vmatpush1.msra.mxu0 0.0
      %1621 = vmatprep.subr.mxu0 0.0
      %1622 = vmatpush1.msra.mxu0 0.0
      %1623 = vmatprep.mubr.f32.mxu0 0.0
      %1624 = vmatmul.mubr.f32.gmra.mrb[0].mxu0 %v1557
      %v1625 = vpop.f32.mrb[0].mxu0
      %v1626 = vadd.f32 0.0, %v1625
      %v1627 = vpop.f32.mrb[0].mxu0
      %v1628 = vadd.f32 0.0, %v1627
      %1629 = vdwg.mxu0
      %1630 = vmatprep.subr.mxu0 %v1544
      %1631 = vmatpush1.msra.mxu0 %v1543
      %1632 = vmatprep.subr.mxu0 0.0
      %1633 = vmatpush1.msra.mxu0 0.0
      %1634 = vmatprep.subr.mxu0 0.0
      %1635 = vmatpush1.msra.mxu0 0.0
      %1636 = vmatprep.subr.mxu0 0.0
      %1637 = vmatpush1.msra.mxu0 0.0
      %1638 = vmatprep.subr.mxu0 0.0
      %1639 = vmatpush1.msra.mxu0 0.0
      %1640 = vmatprep.subr.mxu0 0.0
      %1641 = vmatpush1.msra.mxu0 0.0
      %1642 = vmatprep.subr.mxu0 0.0
      %1643 = vmatpush1.msra.mxu0 0.0
      %1644 = vmatprep.subr.mxu0 0.0
      %1645 = vmatpush1.msra.mxu0 0.0
      %1646 = vmatprep.subr.mxu0 0.0
      %1647 = vmatpush1.msra.mxu0 0.0
      %1648 = vmatprep.subr.mxu0 0.0
      %1649 = vmatpush1.msra.mxu0 0.0
      %1650 = vmatprep.subr.mxu0 0.0
      %1651 = vmatpush1.msra.mxu0 0.0
      %1652 = vmatprep.subr.mxu0 0.0
      %1653 = vmatpush1.msra.mxu0 0.0
      %1654 = vmatprep.subr.mxu0 0.0
      %1655 = vmatpush1.msra.mxu0 0.0
      %1656 = vmatprep.subr.mxu0 0.0
      %1657 = vmatpush1.msra.mxu0 0.0
      %1658 = vmatprep.subr.mxu0 0.0
      %1659 = vmatpush1.msra.mxu0 0.0
      %1660 = vmatprep.subr.mxu0 0.0
      %1661 = vmatpush1.msra.mxu0 0.0
      %1662 = vmatprep.subr.mxu0 0.0
      %1663 = vmatpush1.msra.mxu0 0.0
      %1664 = vmatprep.subr.mxu0 0.0
      %1665 = vmatpush1.msra.mxu0 0.0
      %1666 = vmatprep.subr.mxu0 0.0
      %1667 = vmatpush1.msra.mxu0 0.0
      %1668 = vmatprep.subr.mxu0 0.0
      %1669 = vmatpush1.msra.mxu0 0.0
      %1670 = vmatprep.subr.mxu0 0.0
      %1671 = vmatpush1.msra.mxu0 0.0
      %1672 = vmatprep.subr.mxu0 0.0
      %1673 = vmatpush1.msra.mxu0 0.0
      %1674 = vmatprep.subr.mxu0 0.0
      %1675 = vmatpush1.msra.mxu0 0.0
      %1676 = vmatprep.subr.mxu0 0.0
      %1677 = vmatpush1.msra.mxu0 0.0
      %1678 = vmatprep.subr.mxu0 0.0
      %1679 = vmatpush1.msra.mxu0 0.0
      %1680 = vmatprep.subr.mxu0 0.0
      %1681 = vmatpush1.msra.mxu0 0.0
      %1682 = vmatprep.subr.mxu0 0.0
      %1683 = vmatpush1.msra.mxu0 0.0
      %1684 = vmatprep.subr.mxu0 0.0
      %1685 = vmatpush1.msra.mxu0 0.0
      %1686 = vmatprep.subr.mxu0 0.0
      %1687 = vmatpush1.msra.mxu0 0.0
      %1688 = vmatprep.subr.mxu0 0.0
      %1689 = vmatpush1.msra.mxu0 0.0
      %1690 = vmatprep.subr.mxu0 0.0
      %1691 = vmatpush1.msra.mxu0 0.0
      %1692 = vmatprep.subr.mxu0 0.0
      %1693 = vmatpush1.msra.mxu0 0.0
      %1694 = vmatprep.mubr.f32.mxu0 0.0
      %1695 = vmatmul.mubr.f32.gmra.mrb[0].mxu0 %v1557
      %v1696 = vpop.f32.mrb[0].mxu0
      %v1697 = vadd.f32 0.0, %v1696
      %v1698 = vpop.f32.mrb[0].mxu0
      %v1699 = vadd.f32 0.0, %v1698
      %1700 = vdwg.mxu0
      %1701 = vmatprep.subr.mxu0 %v1546
      %1702 = vmatpush1.msra.mxu0 %v1545
      %1703 = vmatprep.subr.mxu0 0.0
      %1704 = vmatpush1.msra.mxu0 0.0
      %1705 = vmatprep.subr.mxu0 0.0
      %1706 = vmatpush1.msra.mxu0 0.0
      %1707 = vmatprep.subr.mxu0 0.0
      %1708 = vmatpush1.msra.mxu0 0.0
      %1709 = vmatprep.subr.mxu0 0.0
      %1710 = vmatpush1.msra.mxu0 0.0
      %1711 = vmatprep.subr.mxu0 0.0
      %1712 = vmatpush1.msra.mxu0 0.0
      %1713 = vmatprep.subr.mxu0 0.0
      %1714 = vmatpush1.msra.mxu0 0.0
      %1715 = vmatprep.subr.mxu0 0.0
      %1716 = vmatpush1.msra.mxu0 0.0
      %1717 = vmatprep.subr.mxu0 0.0
      %1718 = vmatpush1.msra.mxu0 0.0
      %1719 = vmatprep.subr.mxu0 0.0
      %1720 = vmatpush1.msra.mxu0 0.0
      %1721 = vmatprep.subr.mxu0 0.0
      %1722 = vmatpush1.msra.mxu0 0.0
      %1723 = vmatprep.subr.mxu0 0.0
      %1724 = vmatpush1.msra.mxu0 0.0
      %1725 = vmatprep.subr.mxu0 0.0
      %1726 = vmatpush1.msra.mxu0 0.0
      %1727 = vmatprep.subr.mxu0 0.0
      %1728 = vmatpush1.msra.mxu0 0.0
      %1729 = vmatprep.subr.mxu0 0.0
      %1730 = vmatpush1.msra.mxu0 0.0
      %1731 = vmatprep.subr.mxu0 0.0
      %1732 = vmatpush1.msra.mxu0 0.0
      %1733 = vmatprep.subr.mxu0 0.0
      %1734 = vmatpush1.msra.mxu0 0.0
      %1735 = vmatprep.subr.mxu0 0.0
      %1736 = vmatpush1.msra.mxu0 0.0
      %1737 = vmatprep.subr.mxu0 0.0
      %1738 = vmatpush1.msra.mxu0 0.0
      %1739 = vmatprep.subr.mxu0 0.0
      %1740 = vmatpush1.msra.mxu0 0.0
      %1741 = vmatprep.subr.mxu0 0.0
      %1742 = vmatpush1.msra.mxu0 0.0
      %1743 = vmatprep.subr.mxu0 0.0
      %1744 = vmatpush1.msra.mxu0 0.0
      %1745 = vmatprep.subr.mxu0 0.0
      %1746 = vmatpush1.msra.mxu0 0.0
      %1747 = vmatprep.subr.mxu0 0.0
      %1748 = vmatpush1.msra.mxu0 0.0
      %1749 = vmatprep.subr.mxu0 0.0
      %1750 = vmatpush1.msra.mxu0 0.0
      %1751 = vmatprep.subr.mxu0 0.0
      %1752 = vmatpush1.msra.mxu0 0.0
      %1753 = vmatprep.subr.mxu0 0.0
      %1754 = vmatpush1.msra.mxu0 0.0
      %1755 = vmatprep.subr.mxu0 0.0
      %1756 = vmatpush1.msra.mxu0 0.0
      %1757 = vmatprep.subr.mxu0 0.0
      %1758 = vmatpush1.msra.mxu0 0.0
      %1759 = vmatprep.subr.mxu0 0.0
      %1760 = vmatpush1.msra.mxu0 0.0
      %1761 = vmatprep.subr.mxu0 0.0
      %1762 = vmatpush1.msra.mxu0 0.0
      %1763 = vmatprep.subr.mxu0 0.0
      %1764 = vmatpush1.msra.mxu0 0.0
      %1765 = vmatprep.mubr.f32.mxu0 0.0
      %1766 = vmatmul.mubr.f32.gmra.mrb[0].mxu0 %v1557
      %v1767 = vpop.f32.mrb[0].mxu0
      %v1768 = vadd.f32 0.0, %v1767
      %v1769 = vpop.f32.mrb[0].mxu0
      %v1770 = vadd.f32 0.0, %v1769
      %1771 = vdwg.mxu0
      %1772 = vmatprep.subr.mxu0 0.0
      %1773 = vmatpush1.msra.mxu0 %v1547
      %1774 = vmatprep.subr.mxu0 0.0
      %1775 = vmatpush1.msra.mxu0 0.0
      %1776 = vmatprep.subr.mxu0 0.0
      %1777 = vmatpush1.msra.mxu0 0.0
      %1778 = vmatprep.subr.mxu0 0.0
      %1779 = vmatpush1.msra.mxu0 0.0
      %1780 = vmatprep.subr.mxu0 0.0
      %1781 = vmatpush1.msra.mxu0 0.0
      %1782 = vmatprep.subr.mxu0 0.0
      %1783 = vmatpush1.msra.mxu0 0.0
      %1784 = vmatprep.subr.mxu0 0.0
      %1785 = vmatpush1.msra.mxu0 0.0
      %1786 = vmatprep.subr.mxu0 0.0
      %1787 = vmatpush1.msra.mxu0 0.0
      %1788 = vmatprep.subr.mxu0 0.0
      %1789 = vmatpush1.msra.mxu0 0.0
      %1790 = vmatprep.subr.mxu0 0.0
      %1791 = vmatpush1.msra.mxu0 0.0
      %1792 = vmatprep.subr.mxu0 0.0
      %1793 = vmatpush1.msra.mxu0 0.0
      %1794 = vmatprep.subr.mxu0 0.0
      %1795 = vmatpush1.msra.mxu0 0.0
      %1796 = vmatprep.subr.mxu0 0.0
      %1797 = vmatpush1.msra.mxu0 0.0
      %1798 = vmatprep.subr.mxu0 0.0
      %1799 = vmatpush1.msra.mxu0 0.0
      %1800 = vmatprep.subr.mxu0 0.0
      %1801 = vmatpush1.msra.mxu0 0.0
      %1802 = vmatprep.subr.mxu0 0.0
      %1803 = vmatpush1.msra.mxu0 0.0
      %1804 = vmatprep.subr.mxu0 0.0
      %1805 = vmatpush1.msra.mxu0 0.0
      %1806 = vmatprep.subr.mxu0 0.0
      %1807 = vmatpush1.msra.mxu0 0.0
      %1808 = vmatprep.subr.mxu0 0.0
      %1809 = vmatpush1.msra.mxu0 0.0
      %1810 = vmatprep.subr.mxu0 0.0
      %1811 = vmatpush1.msra.mxu0 0.0
      %1812 = vmatprep.subr.mxu0 0.0
      %1813 = vmatpush1.msra.mxu0 0.0
      %1814 = vmatprep.subr.mxu0 0.0
      %1815 = vmatpush1.msra.mxu0 0.0
      %1816 = vmatprep.subr.mxu0 0.0
      %1817 = vmatpush1.msra.mxu0 0.0
      %1818 = vmatprep.subr.mxu0 0.0
      %1819 = vmatpush1.msra.mxu0 0.0
      %1820 = vmatprep.subr.mxu0 0.0
      %1821 = vmatpush1.msra.mxu0 0.0
      %1822 = vmatprep.subr.mxu0 0.0
      %1823 = vmatpush1.msra.mxu0 0.0
      %1824 = vmatprep.subr.mxu0 0.0
      %1825 = vmatpush1.msra.mxu0 0.0
      %1826 = vmatprep.subr.mxu0 0.0
      %1827 = vmatpush1.msra.mxu0 0.0
      %1828 = vmatprep.subr.mxu0 0.0
      %1829 = vmatpush1.msra.mxu0 0.0
      %1830 = vmatprep.subr.mxu0 0.0
      %1831 = vmatpush1.msra.mxu0 0.0
      %1832 = vmatprep.subr.mxu0 0.0
      %1833 = vmatpush1.msra.mxu0 0.0
      %1834 = vmatprep.subr.mxu0 0.0
      %1835 = vmatpush1.msra.mxu0 0.0
      %1836 = vmatprep.mubr.f32.mxu0 0.0
      %1837 = vmatmul.mubr.f32.gmra.mrb[0].mxu0 %v1557
      %v1838 = vpop.f32.mrb[0].mxu0
      %v1839 = vadd.f32 0.0, %v1838
      %v1840 = vpop.f32.mrb[0].mxu0
      %1841 = vdwg.mxu0
      %1842 = vrot.lane.b32.xlu0 %v1507, 38
      %v1843 = vpop.permute.xlu0 %1842
      %1844 = vrot.lane.b32.xlu0 %v1508, 38
      %v1845 = vpop.permute.xlu0 %1844
      %1846 = vrot.lane.b32.xlu0 %v1509, 38
      %v1847 = vpop.permute.xlu0 %1846
      %1848 = vrot.lane.b32.xlu0 %v1510, 38
      %v1849 = vpop.permute.xlu0 %1848
      %1850 = vrot.lane.b32.xlu0 %v1511, 38
      %v1851 = vpop.permute.xlu0 %1850
      %1852 = vrot.lane.b32.xlu0 %v1512, 38
      %v1853 = vpop.permute.xlu0 %1852
      %1854 = vrot.lane.b32.xlu0 %v1513, 38
      %v1855 = vpop.permute.xlu0 %1854
      %vm1856 = vcmask 310272
      %v1857 = vsel %vm1856, %v1843, %v1845
      %v1858 = vsel %vm1856, %v1845, %v1847
      %v1859 = vsel %vm1856, %v1847, %v1849
      %v1860 = vsel %vm1856, %v1849, %v1851
      %v1861 = vsel %vm1856, %v1851, %v1853
      %v1862 = vsel %vm1856, %v1853, %v1855
      %v1871 = vsel %vm1555, %v1506, 0
      %1873 = vmatprep.subr.mxu0 %v1858
      %1874 = vmatpush1.msra.mxu0 %v1857
      %1875 = vmatprep.subr.mxu0 0.0
      %1876 = vmatpush1.msra.mxu0 0.0
      %1877 = vmatprep.subr.mxu0 0.0
      %1878 = vmatpush1.msra.mxu0 0.0
      %1879 = vmatprep.subr.mxu0 0.0
      %1880 = vmatpush1.msra.mxu0 0.0
      %1881 = vmatprep.subr.mxu0 0.0
      %1882 = vmatpush1.msra.mxu0 0.0
      %1883 = vmatprep.subr.mxu0 0.0
      %1884 = vmatpush1.msra.mxu0 0.0
      %1885 = vmatprep.subr.mxu0 0.0
      %1886 = vmatpush1.msra.mxu0 0.0
      %1887 = vmatprep.subr.mxu0 0.0
      %1888 = vmatpush1.msra.mxu0 0.0
      %1889 = vmatprep.subr.mxu0 0.0
      %1890 = vmatpush1.msra.mxu0 0.0
      %1891 = vmatprep.subr.mxu0 0.0
      %1892 = vmatpush1.msra.mxu0 0.0
      %1893 = vmatprep.subr.mxu0 0.0
      %1894 = vmatpush1.msra.mxu0 0.0
      %1895 = vmatprep.subr.mxu0 0.0
      %1896 = vmatpush1.msra.mxu0 0.0
      %1897 = vmatprep.subr.mxu0 0.0
      %1898 = vmatpush1.msra.mxu0 0.0
      %1899 = vmatprep.subr.mxu0 0.0
      %1900 = vmatpush1.msra.mxu0 0.0
      %1901 = vmatprep.subr.mxu0 0.0
      %1902 = vmatpush1.msra.mxu0 0.0
      %1903 = vmatprep.subr.mxu0 0.0
      %1904 = vmatpush1.msra.mxu0 0.0
      %1905 = vmatprep.subr.mxu0 0.0
      %1906 = vmatpush1.msra.mxu0 0.0
      %1907 = vmatprep.subr.mxu0 0.0
      %1908 = vmatpush1.msra.mxu0 0.0
      %1909 = vmatprep.subr.mxu0 0.0
      %1910 = vmatpush1.msra.mxu0 0.0
      %1911 = vmatprep.subr.mxu0 0.0
      %1912 = vmatpush1.msra.mxu0 0.0
      %1913 = vmatprep.subr.mxu0 0.0
      %1914 = vmatpush1.msra.mxu0 0.0
      %1915 = vmatprep.subr.mxu0 0.0
      %1916 = vmatpush1.msra.mxu0 0.0
      %1917 = vmatprep.subr.mxu0 0.0
      %1918 = vmatpush1.msra.mxu0 0.0
      %1919 = vmatprep.subr.mxu0 0.0
      %1920 = vmatpush1.msra.mxu0 0.0
      %1921 = vmatprep.subr.mxu0 0.0
      %1922 = vmatpush1.msra.mxu0 0.0
      %1923 = vmatprep.subr.mxu0 0.0
      %1924 = vmatpush1.msra.mxu0 0.0
      %1925 = vmatprep.subr.mxu0 0.0
      %1926 = vmatpush1.msra.mxu0 0.0
      %1927 = vmatprep.subr.mxu0 0.0
      %1928 = vmatpush1.msra.mxu0 0.0
      %1929 = vmatprep.subr.mxu0 0.0
      %1930 = vmatpush1.msra.mxu0 0.0
      %1931 = vmatprep.subr.mxu0 0.0
      %1932 = vmatpush1.msra.mxu0 0.0
      %1933 = vmatprep.subr.mxu0 0.0
      %1934 = vmatpush1.msra.mxu0 0.0
      %1935 = vmatprep.subr.mxu0 0.0
      %1936 = vmatpush1.msra.mxu0 0.0
      %1937 = vmatprep.mubr.f32.mxu0 0.0
      %1938 = vmatmul.mubr.f32.gmra.mrb[0].mxu0 %v1871
      %v1939 = vpop.f32.mrb[0].mxu0
      %v1940 = vadd.f32 %v1626, %v1939
      %v1941 = vpop.f32.mrb[0].mxu0
      %v1942 = vadd.f32 %v1628, %v1941
      %1943 = vdwg.mxu0
      %1944 = vmatprep.subr.mxu0 %v1860
      %1945 = vmatpush1.msra.mxu0 %v1859
      %1946 = vmatprep.subr.mxu0 0.0
      %1947 = vmatpush1.msra.mxu0 0.0
      %1948 = vmatprep.subr.mxu0 0.0
      %1949 = vmatpush1.msra.mxu0 0.0
      %1950 = vmatprep.subr.mxu0 0.0
      %1951 = vmatpush1.msra.mxu0 0.0
      %1952 = vmatprep.subr.mxu0 0.0
      %1953 = vmatpush1.msra.mxu0 0.0
      %1954 = vmatprep.subr.mxu0 0.0
      %1955 = vmatpush1.msra.mxu0 0.0
      %1956 = vmatprep.subr.mxu0 0.0
      %1957 = vmatpush1.msra.mxu0 0.0
      %1958 = vmatprep.subr.mxu0 0.0
      %1959 = vmatpush1.msra.mxu0 0.0
      %1960 = vmatprep.subr.mxu0 0.0
      %1961 = vmatpush1.msra.mxu0 0.0
      %1962 = vmatprep.subr.mxu0 0.0
      %1963 = vmatpush1.msra.mxu0 0.0
      %1964 = vmatprep.subr.mxu0 0.0
      %1965 = vmatpush1.msra.mxu0 0.0
      %1966 = vmatprep.subr.mxu0 0.0
      %1967 = vmatpush1.msra.mxu0 0.0
      %1968 = vmatprep.subr.mxu0 0.0
      %1969 = vmatpush1.msra.mxu0 0.0
      %1970 = vmatprep.subr.mxu0 0.0
      %1971 = vmatpush1.msra.mxu0 0.0
      %1972 = vmatprep.subr.mxu0 0.0
      %1973 = vmatpush1.msra.mxu0 0.0
      %1974 = vmatprep.subr.mxu0 0.0
      %1975 = vmatpush1.msra.mxu0 0.0
      %1976 = vmatprep.subr.mxu0 0.0
      %1977 = vmatpush1.msra.mxu0 0.0
      %1978 = vmatprep.subr.mxu0 0.0
      %1979 = vmatpush1.msra.mxu0 0.0
      %1980 = vmatprep.subr.mxu0 0.0
      %1981 = vmatpush1.msra.mxu0 0.0
      %1982 = vmatprep.subr.mxu0 0.0
      %1983 = vmatpush1.msra.mxu0 0.0
      %1984 = vmatprep.subr.mxu0 0.0
      %1985 = vmatpush1.msra.mxu0 0.0
      %1986 = vmatprep.subr.mxu0 0.0
      %1987 = vmatpush1.msra.mxu0 0.0
      %1988 = vmatprep.subr.mxu0 0.0
      %1989 = vmatpush1.msra.mxu0 0.0
      %1990 = vmatprep.subr.mxu0 0.0
      %1991 = vmatpush1.msra.mxu0 0.0
      %1992 = vmatprep.subr.mxu0 0.0
      %1993 = vmatpush1.msra.mxu0 0.0
      %1994 = vmatprep.subr.mxu0 0.0
      %1995 = vmatpush1.msra.mxu0 0.0
      %1996 = vmatprep.subr.mxu0 0.0
      %1997 = vmatpush1.msra.mxu0 0.0
      %1998 = vmatprep.subr.mxu0 0.0
      %1999 = vmatpush1.msra.mxu0 0.0
      %2000 = vmatprep.subr.mxu0 0.0
      %2001 = vmatpush1.msra.mxu0 0.0
      %2002 = vmatprep.subr.mxu0 0.0
      %2003 = vmatpush1.msra.mxu0 0.0
      %2004 = vmatprep.subr.mxu0 0.0
      %2005 = vmatpush1.msra.mxu0 0.0
      %2006 = vmatprep.subr.mxu0 0.0
      %2007 = vmatpush1.msra.mxu0 0.0
      %2008 = vmatprep.mubr.f32.mxu0 0.0
      %2009 = vmatmul.mubr.f32.gmra.mrb[0].mxu0 %v1871
      %v2010 = vpop.f32.mrb[0].mxu0
      %v2011 = vadd.f32 %v1697, %v2010
      %v2012 = vpop.f32.mrb[0].mxu0
      %v2013 = vadd.f32 %v1699, %v2012
      %2014 = vdwg.mxu0
      %2015 = vmatprep.subr.mxu0 %v1862
      %2016 = vmatpush1.msra.mxu0 %v1861
      %2017 = vmatprep.subr.mxu0 0.0
      %2018 = vmatpush1.msra.mxu0 0.0
      %2019 = vmatprep.subr.mxu0 0.0
      %2020 = vmatpush1.msra.mxu0 0.0
      %2021 = vmatprep.subr.mxu0 0.0
      %2022 = vmatpush1.msra.mxu0 0.0
      %2023 = vmatprep.subr.mxu0 0.0
      %2024 = vmatpush1.msra.mxu0 0.0
      %2025 = vmatprep.subr.mxu0 0.0
      %2026 = vmatpush1.msra.mxu0 0.0
      %2027 = vmatprep.subr.mxu0 0.0
      %2028 = vmatpush1.msra.mxu0 0.0
      %2029 = vmatprep.subr.mxu0 0.0
      %2030 = vmatpush1.msra.mxu0 0.0
      %2031 = vmatprep.subr.mxu0 0.0
      %2032 = vmatpush1.msra.mxu0 0.0
      %2033 = vmatprep.subr.mxu0 0.0
      %2034 = vmatpush1.msra.mxu0 0.0
      %2035 = vmatprep.subr.mxu0 0.0
      %2036 = vmatpush1.msra.mxu0 0.0
      %2037 = vmatprep.subr.mxu0 0.0
      %2038 = vmatpush1.msra.mxu0 0.0
      %2039 = vmatprep.subr.mxu0 0.0
      %2040 = vmatpush1.msra.mxu0 0.0
      %2041 = vmatprep.subr.mxu0 0.0
      %2042 = vmatpush1.msra.mxu0 0.0
      %2043 = vmatprep.subr.mxu0 0.0
      %2044 = vmatpush1.msra.mxu0 0.0
      %2045 = vmatprep.subr.mxu0 0.0
      %2046 = vmatpush1.msra.mxu0 0.0
      %2047 = vmatprep.subr.mxu0 0.0
      %2048 = vmatpush1.msra.mxu0 0.0
      %2049 = vmatprep.subr.mxu0 0.0
      %2050 = vmatpush1.msra.mxu0 0.0
      %2051 = vmatprep.subr.mxu0 0.0
      %2052 = vmatpush1.msra.mxu0 0.0
      %2053 = vmatprep.subr.mxu0 0.0
      %2054 = vmatpush1.msra.mxu0 0.0
      %2055 = vmatprep.subr.mxu0 0.0
      %2056 = vmatpush1.msra.mxu0 0.0
      %2057 = vmatprep.subr.mxu0 0.0
      %2058 = vmatpush1.msra.mxu0 0.0
      %2059 = vmatprep.subr.mxu0 0.0
      %2060 = vmatpush1.msra.mxu0 0.0
      %2061 = vmatprep.subr.mxu0 0.0
      %2062 = vmatpush1.msra.mxu0 0.0
      %2063 = vmatprep.subr.mxu0 0.0
      %2064 = vmatpush1.msra.mxu0 0.0
      %2065 = vmatprep.subr.mxu0 0.0
      %2066 = vmatpush1.msra.mxu0 0.0
      %2067 = vmatprep.subr.mxu0 0.0
      %2068 = vmatpush1.msra.mxu0 0.0
      %2069 = vmatprep.subr.mxu0 0.0
      %2070 = vmatpush1.msra.mxu0 0.0
      %2071 = vmatprep.subr.mxu0 0.0
      %2072 = vmatpush1.msra.mxu0 0.0
      %2073 = vmatprep.subr.mxu0 0.0
      %2074 = vmatpush1.msra.mxu0 0.0
      %2075 = vmatprep.subr.mxu0 0.0
      %2076 = vmatpush1.msra.mxu0 0.0
      %2077 = vmatprep.subr.mxu0 0.0
      %2078 = vmatpush1.msra.mxu0 0.0
      %2079 = vmatprep.mubr.f32.mxu0 0.0
      %2080 = vmatmul.mubr.f32.gmra.mrb[0].mxu0 %v1871
      %v2081 = vpop.f32.mrb[0].mxu0
      %v2082 = vadd.f32 %v1768, %v2081
      %v2083 = vpop.f32.mrb[0].mxu0
      %v2084 = vadd.f32 %v1770, %v2083
      %2085 = vdwg.mxu0
      %2086 = vmatprep.subr.mxu0 0.0
      %2087 = vmatpush1.msra.mxu0 %v1855
      %2088 = vmatprep.subr.mxu0 0.0
      %2089 = vmatpush1.msra.mxu0 0.0
      %2090 = vmatprep.subr.mxu0 0.0
      %2091 = vmatpush1.msra.mxu0 0.0
      %2092 = vmatprep.subr.mxu0 0.0
      %2093 = vmatpush1.msra.mxu0 0.0
      %2094 = vmatprep.subr.mxu0 0.0
      %2095 = vmatpush1.msra.mxu0 0.0
      %2096 = vmatprep.subr.mxu0 0.0
      %2097 = vmatpush1.msra.mxu0 0.0
      %2098 = vmatprep.subr.mxu0 0.0
      %2099 = vmatpush1.msra.mxu0 0.0
      %2100 = vmatprep.subr.mxu0 0.0
      %2101 = vmatpush1.msra.mxu0 0.0
      %2102 = vmatprep.subr.mxu0 0.0
      %2103 = vmatpush1.msra.mxu0 0.0
      %2104 = vmatprep.subr.mxu0 0.0
      %2105 = vmatpush1.msra.mxu0 0.0
      %2106 = vmatprep.subr.mxu0 0.0
      %2107 = vmatpush1.msra.mxu0 0.0
      %2108 = vmatprep.subr.mxu0 0.0
      %2109 = vmatpush1.msra.mxu0 0.0
      %2110 = vmatprep.subr.mxu0 0.0
      %2111 = vmatpush1.msra.mxu0 0.0
      %2112 = vmatprep.subr.mxu0 0.0
      %2113 = vmatpush1.msra.mxu0 0.0
      %2114 = vmatprep.subr.mxu0 0.0
      %2115 = vmatpush1.msra.mxu0 0.0
      %2116 = vmatprep.subr.mxu0 0.0
      %2117 = vmatpush1.msra.mxu0 0.0
      %2118 = vmatprep.subr.mxu0 0.0
      %2119 = vmatpush1.msra.mxu0 0.0
      %2120 = vmatprep.subr.mxu0 0.0
      %2121 = vmatpush1.msra.mxu0 0.0
      %2122 = vmatprep.subr.mxu0 0.0
      %2123 = vmatpush1.msra.mxu0 0.0
      %2124 = vmatprep.subr.mxu0 0.0
      %2125 = vmatpush1.msra.mxu0 0.0
      %2126 = vmatprep.subr.mxu0 0.0
      %2127 = vmatpush1.msra.mxu0 0.0
      %2128 = vmatprep.subr.mxu0 0.0
      %2129 = vmatpush1.msra.mxu0 0.0
      %2130 = vmatprep.subr.mxu0 0.0
      %2131 = vmatpush1.msra.mxu0 0.0
      %2132 = vmatprep.subr.mxu0 0.0
      %2133 = vmatpush1.msra.mxu0 0.0
      %2134 = vmatprep.subr.mxu0 0.0
      %2135 = vmatpush1.msra.mxu0 0.0
      %2136 = vmatprep.subr.mxu0 0.0
      %2137 = vmatpush1.msra.mxu0 0.0
      %2138 = vmatprep.subr.mxu0 0.0
      %2139 = vmatpush1.msra.mxu0 0.0
      %2140 = vmatprep.subr.mxu0 0.0
      %2141 = vmatpush1.msra.mxu0 0.0
      %2142 = vmatprep.subr.mxu0 0.0
      %2143 = vmatpush1.msra.mxu0 0.0
      %2144 = vmatprep.subr.mxu0 0.0
      %2145 = vmatpush1.msra.mxu0 0.0
      %2146 = vmatprep.subr.mxu0 0.0
      %2147 = vmatpush1.msra.mxu0 0.0
      %2148 = vmatprep.subr.mxu0 0.0
      %2149 = vmatpush1.msra.mxu0 0.0
      %2150 = vmatprep.mubr.f32.mxu0 0.0
      %2151 = vmatmul.mubr.f32.gmra.mrb[0].mxu0 %v1871
      %v2152 = vpop.f32.mrb[0].mxu0
      %v2153 = vadd.f32 %v1839, %v2152
      %v2154 = vpop.f32.mrb[0].mxu0
      %2155 = vdwg.mxu0
      %s2156 = scalar_lea.vmem %s2, 16
      %v2157 = vld [vmem:[%s2156] sm:$0xff]
      %2158 = vrot.lane.b32.xlu0 %v1507, 18
      %v2159 = vpop.permute.xlu0 %2158
      %2160 = vrot.lane.b32.xlu0 %v1508, 18
      %v2161 = vpop.permute.xlu0 %2160
      %2162 = vrot.lane.b32.xlu0 %v1509, 18
      %v2163 = vpop.permute.xlu0 %2162
      %2164 = vrot.lane.b32.xlu0 %v1510, 18
      %v2165 = vpop.permute.xlu0 %2164
      %2166 = vrot.lane.b32.xlu0 %v1511, 18
      %v2167 = vpop.permute.xlu0 %2166
      %2168 = vrot.lane.b32.xlu0 %v1512, 18
      %v2169 = vpop.permute.xlu0 %2168
      %2170 = vrot.lane.b32.xlu0 %v1513, 18
      %v2171 = vpop.permute.xlu0 %2170
      %2172 = vrot.lane.b32.xlu0 %v1516, 18
      %v2173 = vpop.permute.xlu0 %2172
      %vm2174 = vcmask 146432
      %v2175 = vsel %vm2174, %v2159, %v2161
      %v2176 = vsel %vm2174, %v2161, %v2163
      %v2177 = vsel %vm2174, %v2163, %v2165
      %v2178 = vsel %vm2174, %v2165, %v2167
      %v2179 = vsel %vm2174, %v2167, %v2169
      %v2180 = vsel %vm2174, %v2169, %v2171
      %v2181 = vsel %vm2174, %v2171, %v2173
      %v2190 = vsel %vm1555, %v2157, 0
      %2192 = vmatprep.subr.mxu0 %v2176
      %2193 = vmatpush1.msra.mxu0 %v2175
      %2194 = vmatprep.subr.mxu0 0.0
      %2195 = vmatpush1.msra.mxu0 0.0
      %2196 = vmatprep.subr.mxu0 0.0
      %2197 = vmatpush1.msra.mxu0 0.0
      %2198 = vmatprep.subr.mxu0 0.0
      %2199 = vmatpush1.msra.mxu0 0.0
      %2200 = vmatprep.subr.mxu0 0.0
      %2201 = vmatpush1.msra.mxu0 0.0
      %2202 = vmatprep.subr.mxu0 0.0
      %2203 = vmatpush1.msra.mxu0 0.0
      %2204 = vmatprep.subr.mxu0 0.0
      %2205 = vmatpush1.msra.mxu0 0.0
      %2206 = vmatprep.subr.mxu0 0.0
      %2207 = vmatpush1.msra.mxu0 0.0
      %2208 = vmatprep.subr.mxu0 0.0
      %2209 = vmatpush1.msra.mxu0 0.0
      %2210 = vmatprep.subr.mxu0 0.0
      %2211 = vmatpush1.msra.mxu0 0.0
      %2212 = vmatprep.subr.mxu0 0.0
      %2213 = vmatpush1.msra.mxu0 0.0
      %2214 = vmatprep.subr.mxu0 0.0
      %2215 = vmatpush1.msra.mxu0 0.0
      %2216 = vmatprep.subr.mxu0 0.0
      %2217 = vmatpush1.msra.mxu0 0.0
      %2218 = vmatprep.subr.mxu0 0.0
      %2219 = vmatpush1.msra.mxu0 0.0
      %2220 = vmatprep.subr.mxu0 0.0
      %2221 = vmatpush1.msra.mxu0 0.0
      %2222 = vmatprep.subr.mxu0 0.0
      %2223 = vmatpush1.msra.mxu0 0.0
      %2224 = vmatprep.subr.mxu0 0.0
      %2225 = vmatpush1.msra.mxu0 0.0
      %2226 = vmatprep.subr.mxu0 0.0
      %2227 = vmatpush1.msra.mxu0 0.0
      %2228 = vmatprep.subr.mxu0 0.0
      %2229 = vmatpush1.msra.mxu0 0.0
      %2230 = vmatprep.subr.mxu0 0.0
      %2231 = vmatpush1.msra.mxu0 0.0
      %2232 = vmatprep.subr.mxu0 0.0
      %2233 = vmatpush1.msra.mxu0 0.0
      %2234 = vmatprep.subr.mxu0 0.0
      %2235 = vmatpush1.msra.mxu0 0.0
      %2236 = vmatprep.subr.mxu0 0.0
      %2237 = vmatpush1.msra.mxu0 0.0
      %2238 = vmatprep.subr.mxu0 0.0
      %2239 = vmatpush1.msra.mxu0 0.0
      %2240 = vmatprep.subr.mxu0 0.0
      %2241 = vmatpush1.msra.mxu0 0.0
      %2242 = vmatprep.subr.mxu0 0.0
      %2243 = vmatpush1.msra.mxu0 0.0
      %2244 = vmatprep.subr.mxu0 0.0
      %2245 = vmatpush1.msra.mxu0 0.0
      %2246 = vmatprep.subr.mxu0 0.0
      %2247 = vmatpush1.msra.mxu0 0.0
      %2248 = vmatprep.subr.mxu0 0.0
      %2249 = vmatpush1.msra.mxu0 0.0
      %2250 = vmatprep.subr.mxu0 0.0
      %2251 = vmatpush1.msra.mxu0 0.0
      %2252 = vmatprep.subr.mxu0 0.0
      %2253 = vmatpush1.msra.mxu0 0.0
      %2254 = vmatprep.subr.mxu0 0.0
      %2255 = vmatpush1.msra.mxu0 0.0
      %2256 = vmatprep.mubr.f32.mxu0 0.0
      %2257 = vmatmul.mubr.f32.gmra.mrb[0].mxu0 %v2190
      %v2258 = vpop.f32.mrb[0].mxu0
      %v2259 = vadd.f32 0.0, %v2258
      %v2260 = vpop.f32.mrb[0].mxu0
      %v2261 = vadd.f32 0.0, %v2260
      %2262 = vdwg.mxu0
      %2263 = vmatprep.subr.mxu0 %v2178
      %2264 = vmatpush1.msra.mxu0 %v2177
      %2265 = vmatprep.subr.mxu0 0.0
      %2266 = vmatpush1.msra.mxu0 0.0
      %2267 = vmatprep.subr.mxu0 0.0
      %2268 = vmatpush1.msra.mxu0 0.0
      %2269 = vmatprep.subr.mxu0 0.0
      %2270 = vmatpush1.msra.mxu0 0.0
      %2271 = vmatprep.subr.mxu0 0.0
      %2272 = vmatpush1.msra.mxu0 0.0
      %2273 = vmatprep.subr.mxu0 0.0
      %2274 = vmatpush1.msra.mxu0 0.0
      %2275 = vmatprep.subr.mxu0 0.0
      %2276 = vmatpush1.msra.mxu0 0.0
      %2277 = vmatprep.subr.mxu0 0.0
      %2278 = vmatpush1.msra.mxu0 0.0
      %2279 = vmatprep.subr.mxu0 0.0
      %2280 = vmatpush1.msra.mxu0 0.0
      %2281 = vmatprep.subr.mxu0 0.0
      %2282 = vmatpush1.msra.mxu0 0.0
      %2283 = vmatprep.subr.mxu0 0.0
      %2284 = vmatpush1.msra.mxu0 0.0
      %2285 = vmatprep.subr.mxu0 0.0
      %2286 = vmatpush1.msra.mxu0 0.0
      %2287 = vmatprep.subr.mxu0 0.0
      %2288 = vmatpush1.msra.mxu0 0.0
      %2289 = vmatprep.subr.mxu0 0.0
      %2290 = vmatpush1.msra.mxu0 0.0
      %2291 = vmatprep.subr.mxu0 0.0
      %2292 = vmatpush1.msra.mxu0 0.0
      %2293 = vmatprep.subr.mxu0 0.0
      %2294 = vmatpush1.msra.mxu0 0.0
      %2295 = vmatprep.subr.mxu0 0.0
      %2296 = vmatpush1.msra.mxu0 0.0
      %2297 = vmatprep.subr.mxu0 0.0
      %2298 = vmatpush1.msra.mxu0 0.0
      %2299 = vmatprep.subr.mxu0 0.0
      %2300 = vmatpush1.msra.mxu0 0.0
      %2301 = vmatprep.subr.mxu0 0.0
      %2302 = vmatpush1.msra.mxu0 0.0
      %2303 = vmatprep.subr.mxu0 0.0
      %2304 = vmatpush1.msra.mxu0 0.0
      %2305 = vmatprep.subr.mxu0 0.0
      %2306 = vmatpush1.msra.mxu0 0.0
      %2307 = vmatprep.subr.mxu0 0.0
      %2308 = vmatpush1.msra.mxu0 0.0
      %2309 = vmatprep.subr.mxu0 0.0
      %2310 = vmatpush1.msra.mxu0 0.0
      %2311 = vmatprep.subr.mxu0 0.0
      %2312 = vmatpush1.msra.mxu0 0.0
      %2313 = vmatprep.subr.mxu0 0.0
      %2314 = vmatpush1.msra.mxu0 0.0
      %2315 = vmatprep.subr.mxu0 0.0
      %2316 = vmatpush1.msra.mxu0 0.0
      %2317 = vmatprep.subr.mxu0 0.0
      %2318 = vmatpush1.msra.mxu0 0.0
      %2319 = vmatprep.subr.mxu0 0.0
      %2320 = vmatpush1.msra.mxu0 0.0
      %2321 = vmatprep.subr.mxu0 0.0
      %2322 = vmatpush1.msra.mxu0 0.0
      %2323 = vmatprep.subr.mxu0 0.0
      %2324 = vmatpush1.msra.mxu0 0.0
      %2325 = vmatprep.subr.mxu0 0.0
      %2326 = vmatpush1.msra.mxu0 0.0
      %2327 = vmatprep.mubr.f32.mxu0 0.0
      %2328 = vmatmul.mubr.f32.gmra.mrb[0].mxu0 %v2190
      %v2329 = vpop.f32.mrb[0].mxu0
      %v2330 = vadd.f32 0.0, %v2329
      %v2331 = vpop.f32.mrb[0].mxu0
      %v2332 = vadd.f32 0.0, %v2331
      %2333 = vdwg.mxu0
      %2334 = vmatprep.subr.mxu0 %v2180
      %2335 = vmatpush1.msra.mxu0 %v2179
      %2336 = vmatprep.subr.mxu0 0.0
      %2337 = vmatpush1.msra.mxu0 0.0
      %2338 = vmatprep.subr.mxu0 0.0
      %2339 = vmatpush1.msra.mxu0 0.0
      %2340 = vmatprep.subr.mxu0 0.0
      %2341 = vmatpush1.msra.mxu0 0.0
      %2342 = vmatprep.subr.mxu0 0.0
      %2343 = vmatpush1.msra.mxu0 0.0
      %2344 = vmatprep.subr.mxu0 0.0
      %2345 = vmatpush1.msra.mxu0 0.0
      %2346 = vmatprep.subr.mxu0 0.0
      %2347 = vmatpush1.msra.mxu0 0.0
      %2348 = vmatprep.subr.mxu0 0.0
      %2349 = vmatpush1.msra.mxu0 0.0
      %2350 = vmatprep.subr.mxu0 0.0
      %2351 = vmatpush1.msra.mxu0 0.0
      %2352 = vmatprep.subr.mxu0 0.0
      %2353 = vmatpush1.msra.mxu0 0.0
      %2354 = vmatprep.subr.mxu0 0.0
      %2355 = vmatpush1.msra.mxu0 0.0
      %2356 = vmatprep.subr.mxu0 0.0
      %2357 = vmatpush1.msra.mxu0 0.0
      %2358 = vmatprep.subr.mxu0 0.0
      %2359 = vmatpush1.msra.mxu0 0.0
      %2360 = vmatprep.subr.mxu0 0.0
      %2361 = vmatpush1.msra.mxu0 0.0
      %2362 = vmatprep.subr.mxu0 0.0
      %2363 = vmatpush1.msra.mxu0 0.0
      %2364 = vmatprep.subr.mxu0 0.0
      %2365 = vmatpush1.msra.mxu0 0.0
      %2366 = vmatprep.subr.mxu0 0.0
      %2367 = vmatpush1.msra.mxu0 0.0
      %2368 = vmatprep.subr.mxu0 0.0
      %2369 = vmatpush1.msra.mxu0 0.0
      %2370 = vmatprep.subr.mxu0 0.0
      %2371 = vmatpush1.msra.mxu0 0.0
      %2372 = vmatprep.subr.mxu0 0.0
      %2373 = vmatpush1.msra.mxu0 0.0
      %2374 = vmatprep.subr.mxu0 0.0
      %2375 = vmatpush1.msra.mxu0 0.0
      %2376 = vmatprep.subr.mxu0 0.0
      %2377 = vmatpush1.msra.mxu0 0.0
      %2378 = vmatprep.subr.mxu0 0.0
      %2379 = vmatpush1.msra.mxu0 0.0
      %2380 = vmatprep.subr.mxu0 0.0
      %2381 = vmatpush1.msra.mxu0 0.0
      %2382 = vmatprep.subr.mxu0 0.0
      %2383 = vmatpush1.msra.mxu0 0.0
      %2384 = vmatprep.subr.mxu0 0.0
      %2385 = vmatpush1.msra.mxu0 0.0
      %2386 = vmatprep.subr.mxu0 0.0
      %2387 = vmatpush1.msra.mxu0 0.0
      %2388 = vmatprep.subr.mxu0 0.0
      %2389 = vmatpush1.msra.mxu0 0.0
      %2390 = vmatprep.subr.mxu0 0.0
      %2391 = vmatpush1.msra.mxu0 0.0
      %2392 = vmatprep.subr.mxu0 0.0
      %2393 = vmatpush1.msra.mxu0 0.0
      %2394 = vmatprep.subr.mxu0 0.0
      %2395 = vmatpush1.msra.mxu0 0.0
      %2396 = vmatprep.subr.mxu0 0.0
      %2397 = vmatpush1.msra.mxu0 0.0
      %2398 = vmatprep.mubr.f32.mxu0 0.0
      %2399 = vmatmul.mubr.f32.gmra.mrb[0].mxu0 %v2190
      %v2400 = vpop.f32.mrb[0].mxu0
      %v2401 = vadd.f32 0.0, %v2400
      %v2402 = vpop.f32.mrb[0].mxu0
      %v2403 = vadd.f32 0.0, %v2402
      %2404 = vdwg.mxu0
      %2405 = vmatprep.subr.mxu0 0.0
      %2406 = vmatpush1.msra.mxu0 %v2181
      %2407 = vmatprep.subr.mxu0 0.0
      %2408 = vmatpush1.msra.mxu0 0.0
      %2409 = vmatprep.subr.mxu0 0.0
      %2410 = vmatpush1.msra.mxu0 0.0
      %2411 = vmatprep.subr.mxu0 0.0
      %2412 = vmatpush1.msra.mxu0 0.0
      %2413 = vmatprep.subr.mxu0 0.0
      %2414 = vmatpush1.msra.mxu0 0.0
      %2415 = vmatprep.subr.mxu0 0.0
      %2416 = vmatpush1.msra.mxu0 0.0
      %2417 = vmatprep.subr.mxu0 0.0
      %2418 = vmatpush1.msra.mxu0 0.0
      %2419 = vmatprep.subr.mxu0 0.0
      %2420 = vmatpush1.msra.mxu0 0.0
      %2421 = vmatprep.subr.mxu0 0.0
      %2422 = vmatpush1.msra.mxu0 0.0
      %2423 = vmatprep.subr.mxu0 0.0
      %2424 = vmatpush1.msra.mxu0 0.0
      %2425 = vmatprep.subr.mxu0 0.0
      %2426 = vmatpush1.msra.mxu0 0.0
      %2427 = vmatprep.subr.mxu0 0.0
      %2428 = vmatpush1.msra.mxu0 0.0
      %2429 = vmatprep.subr.mxu0 0.0
      %2430 = vmatpush1.msra.mxu0 0.0
      %2431 = vmatprep.subr.mxu0 0.0
      %2432 = vmatpush1.msra.mxu0 0.0
      %2433 = vmatprep.subr.mxu0 0.0
      %2434 = vmatpush1.msra.mxu0 0.0
      %2435 = vmatprep.subr.mxu0 0.0
      %2436 = vmatpush1.msra.mxu0 0.0
      %2437 = vmatprep.subr.mxu0 0.0
      %2438 = vmatpush1.msra.mxu0 0.0
      %2439 = vmatprep.subr.mxu0 0.0
      %2440 = vmatpush1.msra.mxu0 0.0
      %2441 = vmatprep.subr.mxu0 0.0
      %2442 = vmatpush1.msra.mxu0 0.0
      %2443 = vmatprep.subr.mxu0 0.0
      %2444 = vmatpush1.msra.mxu0 0.0
      %2445 = vmatprep.subr.mxu0 0.0
      %2446 = vmatpush1.msra.mxu0 0.0
      %2447 = vmatprep.subr.mxu0 0.0
      %2448 = vmatpush1.msra.mxu0 0.0
      %2449 = vmatprep.subr.mxu0 0.0
      %2450 = vmatpush1.msra.mxu0 0.0
      %2451 = vmatprep.subr.mxu0 0.0
      %2452 = vmatpush1.msra.mxu0 0.0
      %2453 = vmatprep.subr.mxu0 0.0
      %2454 = vmatpush1.msra.mxu0 0.0
      %2455 = vmatprep.subr.mxu0 0.0
      %2456 = vmatpush1.msra.mxu0 0.0
      %2457 = vmatprep.subr.mxu0 0.0
      %2458 = vmatpush1.msra.mxu0 0.0
      %2459 = vmatprep.subr.mxu0 0.0
      %2460 = vmatpush1.msra.mxu0 0.0
      %2461 = vmatprep.subr.mxu0 0.0
      %2462 = vmatpush1.msra.mxu0 0.0
      %2463 = vmatprep.subr.mxu0 0.0
      %2464 = vmatpush1.msra.mxu0 0.0
      %2465 = vmatprep.subr.mxu0 0.0
      %2466 = vmatpush1.msra.mxu0 0.0
      %2467 = vmatprep.subr.mxu0 0.0
      %2468 = vmatpush1.msra.mxu0 0.0
      %2469 = vmatprep.mubr.f32.mxu0 0.0
      %2470 = vmatmul.mubr.f32.gmra.mrb[0].mxu0 %v2190
      %v2471 = vpop.f32.mrb[0].mxu0
      %v2472 = vadd.f32 0.0, %v2471
      %v2473 = vpop.f32.mrb[0].mxu0
      %2474 = vdwg.mxu0
      %v2475 = vadd.f32 %v1940, %v2259
      %v2476 = vadd.f32 %v1942, %v2261
      %v2477 = vadd.f32 %v2011, %v2330
      %v2478 = vadd.f32 %v2013, %v2332
      %v2479 = vadd.f32 %v2082, %v2401
      %v2480 = vadd.f32 %v2084, %v2403
      %v2481 = vadd.f32 %v2153, %v2472
      %2483 = vset.pattern.permute.xlu0 0
      %2484 = vperm.xlu0 %2483, %v1505
      %v2485 = vpop.permute.xlu0 %2484
      %v2487 = vadd.f32 %v2475, %v2485
      %v2488 = vadd.f32 %v2476, %v2485
      %v2489 = vadd.f32 %v2477, %v2485
      %v2490 = vadd.f32 %v2478, %v2485
      %v2491 = vadd.f32 %v2479, %v2485
      %v2492 = vadd.f32 %v2480, %v2485
      %v2493 = vadd.f32 %v2481, %v2485
      %v2494 = vmul.f32 %v2487, %v1420
      %v2495 = vmul.f32 %v2488, %v1424
      %v2496 = vmul.f32 %v2489, %v1428
      %v2497 = vmul.f32 %v2490, %v1432
      %v2498 = vmul.f32 %v2491, %v1436
      %v2499 = vmul.f32 %v2492, %v1440
      %v2500 = vmul.f32 %v2493, %v1444
      %2508 = vrot.lane.b32.xlu0 %v2494, 100
      %v2509 = vpop.permute.xlu0 %2508
      %2510 = vrot.lane.b32.xlu0 %v2495, 100
      %v2511 = vpop.permute.xlu0 %2510
      %2512 = vrot.lane.b32.xlu0 %v2496, 100
      %v2513 = vpop.permute.xlu0 %2512
      %2514 = vrot.lane.b32.xlu0 %v2497, 100
      %v2515 = vpop.permute.xlu0 %2514
      %2516 = vrot.lane.b32.xlu0 %v2498, 100
      %v2517 = vpop.permute.xlu0 %2516
      %2518 = vrot.lane.b32.xlu0 %v2499, 100
      %v2519 = vpop.permute.xlu0 %2518
      %2520 = vrot.lane.b32.xlu0 %v2500, 100
      %v2521 = vpop.permute.xlu0 %2520
      %v2522 = vsel %vm1480, %v2509, %v2511
      %v2523 = vsel %vm1480, %v2511, %v2513
      %v2524 = vsel %vm1480, %v2513, %v2515
      %v2525 = vsel %vm1480, %v2515, %v2517
      %v2526 = vsel %vm1480, %v2517, %v2519
      %v2527 = vsel %vm1480, %v2519, %v2521
      %2536 = vst.msk [vmem:[#allocation3] sm:$0xff] %vm1495, %v2509
      %2537 = vst [vmem:[#allocation3 + $0x8] sm:$0xff] %v2522
      %2538 = vst [vmem:[#allocation3 + $0x10] sm:$0xff] %v2523
      %2539 = vst [vmem:[#allocation3 + $0x18] sm:$0xff] %v2524
      %2540 = vst [vmem:[#allocation3 + $0x20] sm:$0xff] %v2525
      %2541 = vst [vmem:[#allocation3 + $0x28] sm:$0xff] %v2526
      %2542 = vst [vmem:[#allocation3 + $0x30] sm:$0xff] %v2527
      %2543 = vst.msk [vmem:[#allocation3 + $0x38] sm:$0xff] %vm472, %v2521
      %s2544 = scalar_lea.vmem %s10, 16
      %v2545 = vld [vmem:[%s2544] sm:$0xff]
      %v2546 = vld [vmem:[%s3] sm:$0xff]
      %v2547 = vld [vmem:[#allocation3] sm:$0xff]
      %v2548 = vld [vmem:[#allocation3 + $0x8] sm:$0xff]
      %v2549 = vld [vmem:[#allocation3 + $0x10] sm:$0xff]
      %v2550 = vld [vmem:[#allocation3 + $0x18] sm:$0xff]
      %v2551 = vld [vmem:[#allocation3 + $0x20] sm:$0xff]
      %v2552 = vld [vmem:[#allocation3 + $0x28] sm:$0xff]
      %v2553 = vld [vmem:[#allocation3 + $0x30] sm:$0xff]
      %v2554 = vld [vmem:[#allocation3 + $0x38] sm:$0xff]
      %s2555 = scalar_lea.vmem %s3, 8
      %v2556 = vld [vmem:[%s2555] sm:$0xff]
      %2565 = vrot.lane.b32.xlu0 %v2547, 28
      %v2566 = vpop.permute.xlu0 %2565
      %2567 = vrot.lane.b32.xlu0 %v2548, 28
      %v2568 = vpop.permute.xlu0 %2567
      %2569 = vrot.lane.b32.xlu0 %v2549, 28
      %v2570 = vpop.permute.xlu0 %2569
      %2571 = vrot.lane.b32.xlu0 %v2550, 28
      %v2572 = vpop.permute.xlu0 %2571
      %2573 = vrot.lane.b32.xlu0 %v2551, 28
      %v2574 = vpop.permute.xlu0 %2573
      %2575 = vrot.lane.b32.xlu0 %v2552, 28
      %v2576 = vpop.permute.xlu0 %2575
      %2577 = vrot.lane.b32.xlu0 %v2553, 28
      %v2578 = vpop.permute.xlu0 %2577
      %2579 = vrot.lane.b32.xlu0 %v2554, 28
      %v2580 = vpop.permute.xlu0 %2579
      %v2581 = vsel %vm464, %v2566, %v2568
      %v2582 = vsel %vm464, %v2568, %v2570
      %v2583 = vsel %vm464, %v2570, %v2572
      %v2584 = vsel %vm464, %v2572, %v2574
      %v2585 = vsel %vm464, %v2574, %v2576
      %v2586 = vsel %vm464, %v2576, %v2578
      %v2587 = vsel %vm464, %v2578, %v2580
      %v2596 = vsel %vm1555, %v2556, 0
      %2598 = vmatprep.subr.mxu0 %v2582
      %2599 = vmatpush1.msra.mxu0 %v2581
      %2600 = vmatprep.subr.mxu0 0.0
      %2601 = vmatpush1.msra.mxu0 0.0
      %2602 = vmatprep.subr.mxu0 0.0
      %2603 = vmatpush1.msra.mxu0 0.0
      %2604 = vmatprep.subr.mxu0 0.0
      %2605 = vmatpush1.msra.mxu0 0.0
      %2606 = vmatprep.subr.mxu0 0.0
      %2607 = vmatpush1.msra.mxu0 0.0
      %2608 = vmatprep.subr.mxu0 0.0
      %2609 = vmatpush1.msra.mxu0 0.0
      %2610 = vmatprep.subr.mxu0 0.0
      %2611 = vmatpush1.msra.mxu0 0.0
      %2612 = vmatprep.subr.mxu0 0.0
      %2613 = vmatpush1.msra.mxu0 0.0
      %2614 = vmatprep.subr.mxu0 0.0
      %2615 = vmatpush1.msra.mxu0 0.0
      %2616 = vmatprep.subr.mxu0 0.0
      %2617 = vmatpush1.msra.mxu0 0.0
      %2618 = vmatprep.subr.mxu0 0.0
      %2619 = vmatpush1.msra.mxu0 0.0
      %2620 = vmatprep.subr.mxu0 0.0
      %2621 = vmatpush1.msra.mxu0 0.0
      %2622 = vmatprep.subr.mxu0 0.0
      %2623 = vmatpush1.msra.mxu0 0.0
      %2624 = vmatprep.subr.mxu0 0.0
      %2625 = vmatpush1.msra.mxu0 0.0
      %2626 = vmatprep.subr.mxu0 0.0
      %2627 = vmatpush1.msra.mxu0 0.0
      %2628 = vmatprep.subr.mxu0 0.0
      %2629 = vmatpush1.msra.mxu0 0.0
      %2630 = vmatprep.subr.mxu0 0.0
      %2631 = vmatpush1.msra.mxu0 0.0
      %2632 = vmatprep.subr.mxu0 0.0
      %2633 = vmatpush1.msra.mxu0 0.0
      %2634 = vmatprep.subr.mxu0 0.0
      %2635 = vmatpush1.msra.mxu0 0.0
      %2636 = vmatprep.subr.mxu0 0.0
      %2637 = vmatpush1.msra.mxu0 0.0
      %2638 = vmatprep.subr.mxu0 0.0
      %2639 = vmatpush1.msra.mxu0 0.0
      %2640 = vmatprep.subr.mxu0 0.0
      %2641 = vmatpush1.msra.mxu0 0.0
      %2642 = vmatprep.subr.mxu0 0.0
      %2643 = vmatpush1.msra.mxu0 0.0
      %2644 = vmatprep.subr.mxu0 0.0
      %2645 = vmatpush1.msra.mxu0 0.0
      %2646 = vmatprep.subr.mxu0 0.0
      %2647 = vmatpush1.msra.mxu0 0.0
      %2648 = vmatprep.subr.mxu0 0.0
      %2649 = vmatpush1.msra.mxu0 0.0
      %2650 = vmatprep.subr.mxu0 0.0
      %2651 = vmatpush1.msra.mxu0 0.0
      %2652 = vmatprep.subr.mxu0 0.0
      %2653 = vmatpush1.msra.mxu0 0.0
      %2654 = vmatprep.subr.mxu0 0.0
      %2655 = vmatpush1.msra.mxu0 0.0
      %2656 = vmatprep.subr.mxu0 0.0
      %2657 = vmatpush1.msra.mxu0 0.0
      %2658 = vmatprep.subr.mxu0 0.0
      %2659 = vmatpush1.msra.mxu0 0.0
      %2660 = vmatprep.subr.mxu0 0.0
      %2661 = vmatpush1.msra.mxu0 0.0
      %2662 = vmatprep.mubr.f32.mxu0 0.0
      %2663 = vmatmul.mubr.f32.gmra.mrb[0].mxu0 %v2596
      %v2664 = vpop.f32.mrb[0].mxu0
      %v2665 = vadd.f32 0.0, %v2664
      %v2666 = vpop.f32.mrb[0].mxu0
      %v2667 = vadd.f32 0.0, %v2666
      %2668 = vdwg.mxu0
      %2669 = vmatprep.subr.mxu0 %v2584
      %2670 = vmatpush1.msra.mxu0 %v2583
      %2671 = vmatprep.subr.mxu0 0.0
      %2672 = vmatpush1.msra.mxu0 0.0
      %2673 = vmatprep.subr.mxu0 0.0
      %2674 = vmatpush1.msra.mxu0 0.0
      %2675 = vmatprep.subr.mxu0 0.0
      %2676 = vmatpush1.msra.mxu0 0.0
      %2677 = vmatprep.subr.mxu0 0.0
      %2678 = vmatpush1.msra.mxu0 0.0
      %2679 = vmatprep.subr.mxu0 0.0
      %2680 = vmatpush1.msra.mxu0 0.0
      %2681 = vmatprep.subr.mxu0 0.0
      %2682 = vmatpush1.msra.mxu0 0.0
      %2683 = vmatprep.subr.mxu0 0.0
      %2684 = vmatpush1.msra.mxu0 0.0
      %2685 = vmatprep.subr.mxu0 0.0
      %2686 = vmatpush1.msra.mxu0 0.0
      %2687 = vmatprep.subr.mxu0 0.0
      %2688 = vmatpush1.msra.mxu0 0.0
      %2689 = vmatprep.subr.mxu0 0.0
      %2690 = vmatpush1.msra.mxu0 0.0
      %2691 = vmatprep.subr.mxu0 0.0
      %2692 = vmatpush1.msra.mxu0 0.0
      %2693 = vmatprep.subr.mxu0 0.0
      %2694 = vmatpush1.msra.mxu0 0.0
      %2695 = vmatprep.subr.mxu0 0.0
      %2696 = vmatpush1.msra.mxu0 0.0
      %2697 = vmatprep.subr.mxu0 0.0
      %2698 = vmatpush1.msra.mxu0 0.0
      %2699 = vmatprep.subr.mxu0 0.0
      %2700 = vmatpush1.msra.mxu0 0.0
      %2701 = vmatprep.subr.mxu0 0.0
      %2702 = vmatpush1.msra.mxu0 0.0
      %2703 = vmatprep.subr.mxu0 0.0
      %2704 = vmatpush1.msra.mxu0 0.0
      %2705 = vmatprep.subr.mxu0 0.0
      %2706 = vmatpush1.msra.mxu0 0.0
      %2707 = vmatprep.subr.mxu0 0.0
      %2708 = vmatpush1.msra.mxu0 0.0
      %2709 = vmatprep.subr.mxu0 0.0
      %2710 = vmatpush1.msra.mxu0 0.0
      %2711 = vmatprep.subr.mxu0 0.0
      %2712 = vmatpush1.msra.mxu0 0.0
      %2713 = vmatprep.subr.mxu0 0.0
      %2714 = vmatpush1.msra.mxu0 0.0
      %2715 = vmatprep.subr.mxu0 0.0
      %2716 = vmatpush1.msra.mxu0 0.0
      %2717 = vmatprep.subr.mxu0 0.0
      %2718 = vmatpush1.msra.mxu0 0.0
      %2719 = vmatprep.subr.mxu0 0.0
      %2720 = vmatpush1.msra.mxu0 0.0
      %2721 = vmatprep.subr.mxu0 0.0
      %2722 = vmatpush1.msra.mxu0 0.0
      %2723 = vmatprep.subr.mxu0 0.0
      %2724 = vmatpush1.msra.mxu0 0.0
      %2725 = vmatprep.subr.mxu0 0.0
      %2726 = vmatpush1.msra.mxu0 0.0
      %2727 = vmatprep.subr.mxu0 0.0
      %2728 = vmatpush1.msra.mxu0 0.0
      %2729 = vmatprep.subr.mxu0 0.0
      %2730 = vmatpush1.msra.mxu0 0.0
      %2731 = vmatprep.subr.mxu0 0.0
      %2732 = vmatpush1.msra.mxu0 0.0
      %2733 = vmatprep.mubr.f32.mxu0 0.0
      %2734 = vmatmul.mubr.f32.gmra.mrb[0].mxu0 %v2596
      %v2735 = vpop.f32.mrb[0].mxu0
      %v2736 = vadd.f32 0.0, %v2735
      %v2737 = vpop.f32.mrb[0].mxu0
      %v2738 = vadd.f32 0.0, %v2737
      %2739 = vdwg.mxu0
      %2740 = vmatprep.subr.mxu0 %v2586
      %2741 = vmatpush1.msra.mxu0 %v2585
      %2742 = vmatprep.subr.mxu0 0.0
      %2743 = vmatpush1.msra.mxu0 0.0
      %2744 = vmatprep.subr.mxu0 0.0
      %2745 = vmatpush1.msra.mxu0 0.0
      %2746 = vmatprep.subr.mxu0 0.0
      %2747 = vmatpush1.msra.mxu0 0.0
      %2748 = vmatprep.subr.mxu0 0.0
      %2749 = vmatpush1.msra.mxu0 0.0
      %2750 = vmatprep.subr.mxu0 0.0
      %2751 = vmatpush1.msra.mxu0 0.0
      %2752 = vmatprep.subr.mxu0 0.0
      %2753 = vmatpush1.msra.mxu0 0.0
      %2754 = vmatprep.subr.mxu0 0.0
      %2755 = vmatpush1.msra.mxu0 0.0
      %2756 = vmatprep.subr.mxu0 0.0
      %2757 = vmatpush1.msra.mxu0 0.0
      %2758 = vmatprep.subr.mxu0 0.0
      %2759 = vmatpush1.msra.mxu0 0.0
      %2760 = vmatprep.subr.mxu0 0.0
      %2761 = vmatpush1.msra.mxu0 0.0
      %2762 = vmatprep.subr.mxu0 0.0
      %2763 = vmatpush1.msra.mxu0 0.0
      %2764 = vmatprep.subr.mxu0 0.0
      %2765 = vmatpush1.msra.mxu0 0.0
      %2766 = vmatprep.subr.mxu0 0.0
      %2767 = vmatpush1.msra.mxu0 0.0
      %2768 = vmatprep.subr.mxu0 0.0
      %2769 = vmatpush1.msra.mxu0 0.0
      %2770 = vmatprep.subr.mxu0 0.0
      %2771 = vmatpush1.msra.mxu0 0.0
      %2772 = vmatprep.subr.mxu0 0.0
      %2773 = vmatpush1.msra.mxu0 0.0
      %2774 = vmatprep.subr.mxu0 0.0
      %2775 = vmatpush1.msra.mxu0 0.0
      %2776 = vmatprep.subr.mxu0 0.0
      %2777 = vmatpush1.msra.mxu0 0.0
      %2778 = vmatprep.subr.mxu0 0.0
      %2779 = vmatpush1.msra.mxu0 0.0
      %2780 = vmatprep.subr.mxu0 0.0
      %2781 = vmatpush1.msra.mxu0 0.0
      %2782 = vmatprep.subr.mxu0 0.0
      %2783 = vmatpush1.msra.mxu0 0.0
      %2784 = vmatprep.subr.mxu0 0.0
      %2785 = vmatpush1.msra.mxu0 0.0
      %2786 = vmatprep.subr.mxu0 0.0
      %2787 = vmatpush1.msra.mxu0 0.0
      %2788 = vmatprep.subr.mxu0 0.0
      %2789 = vmatpush1.msra.mxu0 0.0
      %2790 = vmatprep.subr.mxu0 0.0
      %2791 = vmatpush1.msra.mxu0 0.0
      %2792 = vmatprep.subr.mxu0 0.0
      %2793 = vmatpush1.msra.mxu0 0.0
      %2794 = vmatprep.subr.mxu0 0.0
      %2795 = vmatpush1.msra.mxu0 0.0
      %2796 = vmatprep.subr.mxu0 0.0
      %2797 = vmatpush1.msra.mxu0 0.0
      %2798 = vmatprep.subr.mxu0 0.0
      %2799 = vmatpush1.msra.mxu0 0.0
      %2800 = vmatprep.subr.mxu0 0.0
      %2801 = vmatpush1.msra.mxu0 0.0
      %2802 = vmatprep.subr.mxu0 0.0
      %2803 = vmatpush1.msra.mxu0 0.0
      %2804 = vmatprep.mubr.f32.mxu0 0.0
      %2805 = vmatmul.mubr.f32.gmra.mrb[0].mxu0 %v2596
      %v2806 = vpop.f32.mrb[0].mxu0
      %v2807 = vadd.f32 0.0, %v2806
      %v2808 = vpop.f32.mrb[0].mxu0
      %v2809 = vadd.f32 0.0, %v2808
      %2810 = vdwg.mxu0
      %2811 = vmatprep.subr.mxu0 0.0
      %2812 = vmatpush1.msra.mxu0 %v2587
      %2813 = vmatprep.subr.mxu0 0.0
      %2814 = vmatpush1.msra.mxu0 0.0
      %2815 = vmatprep.subr.mxu0 0.0
      %2816 = vmatpush1.msra.mxu0 0.0
      %2817 = vmatprep.subr.mxu0 0.0
      %2818 = vmatpush1.msra.mxu0 0.0
      %2819 = vmatprep.subr.mxu0 0.0
      %2820 = vmatpush1.msra.mxu0 0.0
      %2821 = vmatprep.subr.mxu0 0.0
      %2822 = vmatpush1.msra.mxu0 0.0
      %2823 = vmatprep.subr.mxu0 0.0
      %2824 = vmatpush1.msra.mxu0 0.0
      %2825 = vmatprep.subr.mxu0 0.0
      %2826 = vmatpush1.msra.mxu0 0.0
      %2827 = vmatprep.subr.mxu0 0.0
      %2828 = vmatpush1.msra.mxu0 0.0
      %2829 = vmatprep.subr.mxu0 0.0
      %2830 = vmatpush1.msra.mxu0 0.0
      %2831 = vmatprep.subr.mxu0 0.0
      %2832 = vmatpush1.msra.mxu0 0.0
      %2833 = vmatprep.subr.mxu0 0.0
      %2834 = vmatpush1.msra.mxu0 0.0
      %2835 = vmatprep.subr.mxu0 0.0
      %2836 = vmatpush1.msra.mxu0 0.0
      %2837 = vmatprep.subr.mxu0 0.0
      %2838 = vmatpush1.msra.mxu0 0.0
      %2839 = vmatprep.subr.mxu0 0.0
      %2840 = vmatpush1.msra.mxu0 0.0
      %2841 = vmatprep.subr.mxu0 0.0
      %2842 = vmatpush1.msra.mxu0 0.0
      %2843 = vmatprep.subr.mxu0 0.0
      %2844 = vmatpush1.msra.mxu0 0.0
      %2845 = vmatprep.subr.mxu0 0.0
      %2846 = vmatpush1.msra.mxu0 0.0
      %2847 = vmatprep.subr.mxu0 0.0
      %2848 = vmatpush1.msra.mxu0 0.0
      %2849 = vmatprep.subr.mxu0 0.0
      %2850 = vmatpush1.msra.mxu0 0.0
      %2851 = vmatprep.subr.mxu0 0.0
      %2852 = vmatpush1.msra.mxu0 0.0
      %2853 = vmatprep.subr.mxu0 0.0
      %2854 = vmatpush1.msra.mxu0 0.0
      %2855 = vmatprep.subr.mxu0 0.0
      %2856 = vmatpush1.msra.mxu0 0.0
      %2857 = vmatprep.subr.mxu0 0.0
      %2858 = vmatpush1.msra.mxu0 0.0
      %2859 = vmatprep.subr.mxu0 0.0
      %2860 = vmatpush1.msra.mxu0 0.0
      %2861 = vmatprep.subr.mxu0 0.0
      %2862 = vmatpush1.msra.mxu0 0.0
      %2863 = vmatprep.subr.mxu0 0.0
      %2864 = vmatpush1.msra.mxu0 0.0
      %2865 = vmatprep.subr.mxu0 0.0
      %2866 = vmatpush1.msra.mxu0 0.0
      %2867 = vmatprep.subr.mxu0 0.0
      %2868 = vmatpush1.msra.mxu0 0.0
      %2869 = vmatprep.subr.mxu0 0.0
      %2870 = vmatpush1.msra.mxu0 0.0
      %2871 = vmatprep.subr.mxu0 0.0
      %2872 = vmatpush1.msra.mxu0 0.0
      %2873 = vmatprep.subr.mxu0 0.0
      %2874 = vmatpush1.msra.mxu0 0.0
      %2875 = vmatprep.mubr.f32.mxu0 0.0
      %2876 = vmatmul.mubr.f32.gmra.mrb[0].mxu0 %v2596
      %v2877 = vpop.f32.mrb[0].mxu0
      %v2878 = vadd.f32 0.0, %v2877
      %v2879 = vpop.f32.mrb[0].mxu0
      %2880 = vdwg.mxu0
      %2881 = vrot.lane.b32.xlu0 %v2547, 29
      %v2882 = vpop.permute.xlu0 %2881
      %2883 = vrot.lane.b32.xlu0 %v2548, 29
      %v2884 = vpop.permute.xlu0 %2883
      %2885 = vrot.lane.b32.xlu0 %v2549, 29
      %v2886 = vpop.permute.xlu0 %2885
      %2887 = vrot.lane.b32.xlu0 %v2550, 29
      %v2888 = vpop.permute.xlu0 %2887
      %2889 = vrot.lane.b32.xlu0 %v2551, 29
      %v2890 = vpop.permute.xlu0 %2889
      %2891 = vrot.lane.b32.xlu0 %v2552, 29
      %v2892 = vpop.permute.xlu0 %2891
      %2893 = vrot.lane.b32.xlu0 %v2553, 29
      %v2894 = vpop.permute.xlu0 %2893
      %2895 = vrot.lane.b32.xlu0 %v2554, 29
      %v2896 = vpop.permute.xlu0 %2895
      %vm2897 = vcmask 236544
      %v2898 = vsel %vm2897, %v2882, %v2884
      %v2899 = vsel %vm2897, %v2884, %v2886
      %v2900 = vsel %vm2897, %v2886, %v2888
      %v2901 = vsel %vm2897, %v2888, %v2890
      %v2902 = vsel %vm2897, %v2890, %v2892
      %v2903 = vsel %vm2897, %v2892, %v2894
      %v2904 = vsel %vm2897, %v2894, %v2896
      %v2913 = vsel %vm1555, %v2546, 0
      %2915 = vmatprep.subr.mxu0 %v2899
      %2916 = vmatpush1.msra.mxu0 %v2898
      %2917 = vmatprep.subr.mxu0 0.0
      %2918 = vmatpush1.msra.mxu0 0.0
      %2919 = vmatprep.subr.mxu0 0.0
      %2920 = vmatpush1.msra.mxu0 0.0
      %2921 = vmatprep.subr.mxu0 0.0
      %2922 = vmatpush1.msra.mxu0 0.0
      %2923 = vmatprep.subr.mxu0 0.0
      %2924 = vmatpush1.msra.mxu0 0.0
      %2925 = vmatprep.subr.mxu0 0.0
      %2926 = vmatpush1.msra.mxu0 0.0
      %2927 = vmatprep.subr.mxu0 0.0
      %2928 = vmatpush1.msra.mxu0 0.0
      %2929 = vmatprep.subr.mxu0 0.0
      %2930 = vmatpush1.msra.mxu0 0.0
      %2931 = vmatprep.subr.mxu0 0.0
      %2932 = vmatpush1.msra.mxu0 0.0
      %2933 = vmatprep.subr.mxu0 0.0
      %2934 = vmatpush1.msra.mxu0 0.0
      %2935 = vmatprep.subr.mxu0 0.0
      %2936 = vmatpush1.msra.mxu0 0.0
      %2937 = vmatprep.subr.mxu0 0.0
      %2938 = vmatpush1.msra.mxu0 0.0
      %2939 = vmatprep.subr.mxu0 0.0
      %2940 = vmatpush1.msra.mxu0 0.0
      %2941 = vmatprep.subr.mxu0 0.0
      %2942 = vmatpush1.msra.mxu0 0.0
      %2943 = vmatprep.subr.mxu0 0.0
      %2944 = vmatpush1.msra.mxu0 0.0
      %2945 = vmatprep.subr.mxu0 0.0
      %2946 = vmatpush1.msra.mxu0 0.0
      %2947 = vmatprep.subr.mxu0 0.0
      %2948 = vmatpush1.msra.mxu0 0.0
      %2949 = vmatprep.subr.mxu0 0.0
      %2950 = vmatpush1.msra.mxu0 0.0
      %2951 = vmatprep.subr.mxu0 0.0
      %2952 = vmatpush1.msra.mxu0 0.0
      %2953 = vmatprep.subr.mxu0 0.0
      %2954 = vmatpush1.msra.mxu0 0.0
      %2955 = vmatprep.subr.mxu0 0.0
      %2956 = vmatpush1.msra.mxu0 0.0
      %2957 = vmatprep.subr.mxu0 0.0
      %2958 = vmatpush1.msra.mxu0 0.0
      %2959 = vmatprep.subr.mxu0 0.0
      %2960 = vmatpush1.msra.mxu0 0.0
      %2961 = vmatprep.subr.mxu0 0.0
      %2962 = vmatpush1.msra.mxu0 0.0
      %2963 = vmatprep.subr.mxu0 0.0
      %2964 = vmatpush1.msra.mxu0 0.0
      %2965 = vmatprep.subr.mxu0 0.0
      %2966 = vmatpush1.msra.mxu0 0.0
      %2967 = vmatprep.subr.mxu0 0.0
      %2968 = vmatpush1.msra.mxu0 0.0
      %2969 = vmatprep.subr.mxu0 0.0
      %2970 = vmatpush1.msra.mxu0 0.0
      %2971 = vmatprep.subr.mxu0 0.0
      %2972 = vmatpush1.msra.mxu0 0.0
      %2973 = vmatprep.subr.mxu0 0.0
      %2974 = vmatpush1.msra.mxu0 0.0
      %2975 = vmatprep.subr.mxu0 0.0
      %2976 = vmatpush1.msra.mxu0 0.0
      %2977 = vmatprep.subr.mxu0 0.0
      %2978 = vmatpush1.msra.mxu0 0.0
      %2979 = vmatprep.mubr.f32.mxu0 0.0
      %2980 = vmatmul.mubr.f32.gmra.mrb[0].mxu0 %v2913
      %v2981 = vpop.f32.mrb[0].mxu0
      %v2982 = vadd.f32 %v2665, %v2981
      %v2983 = vpop.f32.mrb[0].mxu0
      %v2984 = vadd.f32 %v2667, %v2983
      %2985 = vdwg.mxu0
      %2986 = vmatprep.subr.mxu0 %v2901
      %2987 = vmatpush1.msra.mxu0 %v2900
      %2988 = vmatprep.subr.mxu0 0.0
      %2989 = vmatpush1.msra.mxu0 0.0
      %2990 = vmatprep.subr.mxu0 0.0
      %2991 = vmatpush1.msra.mxu0 0.0
      %2992 = vmatprep.subr.mxu0 0.0
      %2993 = vmatpush1.msra.mxu0 0.0
      %2994 = vmatprep.subr.mxu0 0.0
      %2995 = vmatpush1.msra.mxu0 0.0
      %2996 = vmatprep.subr.mxu0 0.0
      %2997 = vmatpush1.msra.mxu0 0.0
      %2998 = vmatprep.subr.mxu0 0.0
      %2999 = vmatpush1.msra.mxu0 0.0
      %3000 = vmatprep.subr.mxu0 0.0
      %3001 = vmatpush1.msra.mxu0 0.0
      %3002 = vmatprep.subr.mxu0 0.0
      %3003 = vmatpush1.msra.mxu0 0.0
      %3004 = vmatprep.subr.mxu0 0.0
      %3005 = vmatpush1.msra.mxu0 0.0
      %3006 = vmatprep.subr.mxu0 0.0
      %3007 = vmatpush1.msra.mxu0 0.0
      %3008 = vmatprep.subr.mxu0 0.0
      %3009 = vmatpush1.msra.mxu0 0.0
      %3010 = vmatprep.subr.mxu0 0.0
      %3011 = vmatpush1.msra.mxu0 0.0
      %3012 = vmatprep.subr.mxu0 0.0
      %3013 = vmatpush1.msra.mxu0 0.0
      %3014 = vmatprep.subr.mxu0 0.0
      %3015 = vmatpush1.msra.mxu0 0.0
      %3016 = vmatprep.subr.mxu0 0.0
      %3017 = vmatpush1.msra.mxu0 0.0
      %3018 = vmatprep.subr.mxu0 0.0
      %3019 = vmatpush1.msra.mxu0 0.0
      %3020 = vmatprep.subr.mxu0 0.0
      %3021 = vmatpush1.msra.mxu0 0.0
      %3022 = vmatprep.subr.mxu0 0.0
      %3023 = vmatpush1.msra.mxu0 0.0
      %3024 = vmatprep.subr.mxu0 0.0
      %3025 = vmatpush1.msra.mxu0 0.0
      %3026 = vmatprep.subr.mxu0 0.0
      %3027 = vmatpush1.msra.mxu0 0.0
      %3028 = vmatprep.subr.mxu0 0.0
      %3029 = vmatpush1.msra.mxu0 0.0
      %3030 = vmatprep.subr.mxu0 0.0
      %3031 = vmatpush1.msra.mxu0 0.0
      %3032 = vmatprep.subr.mxu0 0.0
      %3033 = vmatpush1.msra.mxu0 0.0
      %3034 = vmatprep.subr.mxu0 0.0
      %3035 = vmatpush1.msra.mxu0 0.0
      %3036 = vmatprep.subr.mxu0 0.0
      %3037 = vmatpush1.msra.mxu0 0.0
      %3038 = vmatprep.subr.mxu0 0.0
      %3039 = vmatpush1.msra.mxu0 0.0
      %3040 = vmatprep.subr.mxu0 0.0
      %3041 = vmatpush1.msra.mxu0 0.0
      %3042 = vmatprep.subr.mxu0 0.0
      %3043 = vmatpush1.msra.mxu0 0.0
      %3044 = vmatprep.subr.mxu0 0.0
      %3045 = vmatpush1.msra.mxu0 0.0
      %3046 = vmatprep.subr.mxu0 0.0
      %3047 = vmatpush1.msra.mxu0 0.0
      %3048 = vmatprep.subr.mxu0 0.0
      %3049 = vmatpush1.msra.mxu0 0.0
      %3050 = vmatprep.mubr.f32.mxu0 0.0
      %3051 = vmatmul.mubr.f32.gmra.mrb[0].mxu0 %v2913
      %v3052 = vpop.f32.mrb[0].mxu0
      %v3053 = vadd.f32 %v2736, %v3052
      %v3054 = vpop.f32.mrb[0].mxu0
      %v3055 = vadd.f32 %v2738, %v3054
      %3056 = vdwg.mxu0
      %3057 = vmatprep.subr.mxu0 %v2903
      %3058 = vmatpush1.msra.mxu0 %v2902
      %3059 = vmatprep.subr.mxu0 0.0
      %3060 = vmatpush1.msra.mxu0 0.0
      %3061 = vmatprep.subr.mxu0 0.0
      %3062 = vmatpush1.msra.mxu0 0.0
      %3063 = vmatprep.subr.mxu0 0.0
      %3064 = vmatpush1.msra.mxu0 0.0
      %3065 = vmatprep.subr.mxu0 0.0
      %3066 = vmatpush1.msra.mxu0 0.0
      %3067 = vmatprep.subr.mxu0 0.0
      %3068 = vmatpush1.msra.mxu0 0.0
      %3069 = vmatprep.subr.mxu0 0.0
      %3070 = vmatpush1.msra.mxu0 0.0
      %3071 = vmatprep.subr.mxu0 0.0
      %3072 = vmatpush1.msra.mxu0 0.0
      %3073 = vmatprep.subr.mxu0 0.0
      %3074 = vmatpush1.msra.mxu0 0.0
      %3075 = vmatprep.subr.mxu0 0.0
      %3076 = vmatpush1.msra.mxu0 0.0
      %3077 = vmatprep.subr.mxu0 0.0
      %3078 = vmatpush1.msra.mxu0 0.0
      %3079 = vmatprep.subr.mxu0 0.0
      %3080 = vmatpush1.msra.mxu0 0.0
      %3081 = vmatprep.subr.mxu0 0.0
      %3082 = vmatpush1.msra.mxu0 0.0
      %3083 = vmatprep.subr.mxu0 0.0
      %3084 = vmatpush1.msra.mxu0 0.0
      %3085 = vmatprep.subr.mxu0 0.0
      %3086 = vmatpush1.msra.mxu0 0.0
      %3087 = vmatprep.subr.mxu0 0.0
      %3088 = vmatpush1.msra.mxu0 0.0
      %3089 = vmatprep.subr.mxu0 0.0
      %3090 = vmatpush1.msra.mxu0 0.0
      %3091 = vmatprep.subr.mxu0 0.0
      %3092 = vmatpush1.msra.mxu0 0.0
      %3093 = vmatprep.subr.mxu0 0.0
      %3094 = vmatpush1.msra.mxu0 0.0
      %3095 = vmatprep.subr.mxu0 0.0
      %3096 = vmatpush1.msra.mxu0 0.0
      %3097 = vmatprep.subr.mxu0 0.0
      %3098 = vmatpush1.msra.mxu0 0.0
      %3099 = vmatprep.subr.mxu0 0.0
      %3100 = vmatpush1.msra.mxu0 0.0
      %3101 = vmatprep.subr.mxu0 0.0
      %3102 = vmatpush1.msra.mxu0 0.0
      %3103 = vmatprep.subr.mxu0 0.0
      %3104 = vmatpush1.msra.mxu0 0.0
      %3105 = vmatprep.subr.mxu0 0.0
      %3106 = vmatpush1.msra.mxu0 0.0
      %3107 = vmatprep.subr.mxu0 0.0
      %3108 = vmatpush1.msra.mxu0 0.0
      %3109 = vmatprep.subr.mxu0 0.0
      %3110 = vmatpush1.msra.mxu0 0.0
      %3111 = vmatprep.subr.mxu0 0.0
      %3112 = vmatpush1.msra.mxu0 0.0
      %3113 = vmatprep.subr.mxu0 0.0
      %3114 = vmatpush1.msra.mxu0 0.0
      %3115 = vmatprep.subr.mxu0 0.0
      %3116 = vmatpush1.msra.mxu0 0.0
      %3117 = vmatprep.subr.mxu0 0.0
      %3118 = vmatpush1.msra.mxu0 0.0
      %3119 = vmatprep.subr.mxu0 0.0
      %3120 = vmatpush1.msra.mxu0 0.0
      %3121 = vmatprep.mubr.f32.mxu0 0.0
      %3122 = vmatmul.mubr.f32.gmra.mrb[0].mxu0 %v2913
      %v3123 = vpop.f32.mrb[0].mxu0
      %v3124 = vadd.f32 %v2807, %v3123
      %v3125 = vpop.f32.mrb[0].mxu0
      %v3126 = vadd.f32 %v2809, %v3125
      %3127 = vdwg.mxu0
      %3128 = vmatprep.subr.mxu0 0.0
      %3129 = vmatpush1.msra.mxu0 %v2904
      %3130 = vmatprep.subr.mxu0 0.0
      %3131 = vmatpush1.msra.mxu0 0.0
      %3132 = vmatprep.subr.mxu0 0.0
      %3133 = vmatpush1.msra.mxu0 0.0
      %3134 = vmatprep.subr.mxu0 0.0
      %3135 = vmatpush1.msra.mxu0 0.0
      %3136 = vmatprep.subr.mxu0 0.0
      %3137 = vmatpush1.msra.mxu0 0.0
      %3138 = vmatprep.subr.mxu0 0.0
      %3139 = vmatpush1.msra.mxu0 0.0
      %3140 = vmatprep.subr.mxu0 0.0
      %3141 = vmatpush1.msra.mxu0 0.0
      %3142 = vmatprep.subr.mxu0 0.0
      %3143 = vmatpush1.msra.mxu0 0.0
      %3144 = vmatprep.subr.mxu0 0.0
      %3145 = vmatpush1.msra.mxu0 0.0
      %3146 = vmatprep.subr.mxu0 0.0
      %3147 = vmatpush1.msra.mxu0 0.0
      %3148 = vmatprep.subr.mxu0 0.0
      %3149 = vmatpush1.msra.mxu0 0.0
      %3150 = vmatprep.subr.mxu0 0.0
      %3151 = vmatpush1.msra.mxu0 0.0
      %3152 = vmatprep.subr.mxu0 0.0
      %3153 = vmatpush1.msra.mxu0 0.0
      %3154 = vmatprep.subr.mxu0 0.0
      %3155 = vmatpush1.msra.mxu0 0.0
      %3156 = vmatprep.subr.mxu0 0.0
      %3157 = vmatpush1.msra.mxu0 0.0
      %3158 = vmatprep.subr.mxu0 0.0
      %3159 = vmatpush1.msra.mxu0 0.0
      %3160 = vmatprep.subr.mxu0 0.0
      %3161 = vmatpush1.msra.mxu0 0.0
      %3162 = vmatprep.subr.mxu0 0.0
      %3163 = vmatpush1.msra.mxu0 0.0
      %3164 = vmatprep.subr.mxu0 0.0
      %3165 = vmatpush1.msra.mxu0 0.0
      %3166 = vmatprep.subr.mxu0 0.0
      %3167 = vmatpush1.msra.mxu0 0.0
      %3168 = vmatprep.subr.mxu0 0.0
      %3169 = vmatpush1.msra.mxu0 0.0
      %3170 = vmatprep.subr.mxu0 0.0
      %3171 = vmatpush1.msra.mxu0 0.0
      %3172 = vmatprep.subr.mxu0 0.0
      %3173 = vmatpush1.msra.mxu0 0.0
      %3174 = vmatprep.subr.mxu0 0.0
      %3175 = vmatpush1.msra.mxu0 0.0
      %3176 = vmatprep.subr.mxu0 0.0
      %3177 = vmatpush1.msra.mxu0 0.0
      %3178 = vmatprep.subr.mxu0 0.0
      %3179 = vmatpush1.msra.mxu0 0.0
      %3180 = vmatprep.subr.mxu0 0.0
      %3181 = vmatpush1.msra.mxu0 0.0
      %3182 = vmatprep.subr.mxu0 0.0
      %3183 = vmatpush1.msra.mxu0 0.0
      %3184 = vmatprep.subr.mxu0 0.0
      %3185 = vmatpush1.msra.mxu0 0.0
      %3186 = vmatprep.subr.mxu0 0.0
      %3187 = vmatpush1.msra.mxu0 0.0
      %3188 = vmatprep.subr.mxu0 0.0
      %3189 = vmatpush1.msra.mxu0 0.0
      %3190 = vmatprep.subr.mxu0 0.0
      %3191 = vmatpush1.msra.mxu0 0.0
      %3192 = vmatprep.mubr.f32.mxu0 0.0
      %3193 = vmatmul.mubr.f32.gmra.mrb[0].mxu0 %v2913
      %v3194 = vpop.f32.mrb[0].mxu0
      %v3195 = vadd.f32 %v2878, %v3194
      %v3196 = vpop.f32.mrb[0].mxu0
      %3197 = vdwg.mxu0
      %s3198 = scalar_lea.vmem %s3, 16
      %v3199 = vld [vmem:[%s3198] sm:$0xff]
      %3200 = vrot.lane.b32.xlu0 %v2547, 27
      %v3201 = vpop.permute.xlu0 %3200
      %3202 = vrot.lane.b32.xlu0 %v2548, 27
      %v3203 = vpop.permute.xlu0 %3202
      %3204 = vrot.lane.b32.xlu0 %v2549, 27
      %v3205 = vpop.permute.xlu0 %3204
      %3206 = vrot.lane.b32.xlu0 %v2550, 27
      %v3207 = vpop.permute.xlu0 %3206
      %3208 = vrot.lane.b32.xlu0 %v2551, 27
      %v3209 = vpop.permute.xlu0 %3208
      %3210 = vrot.lane.b32.xlu0 %v2552, 27
      %v3211 = vpop.permute.xlu0 %3210
      %3212 = vrot.lane.b32.xlu0 %v2553, 27
      %v3213 = vpop.permute.xlu0 %3212
      %3214 = vrot.lane.b32.xlu0 %v2554, 27
      %v3215 = vpop.permute.xlu0 %3214
      %vm3216 = vcmask 220160
      %v3217 = vsel %vm3216, %v3201, %v3203
      %v3218 = vsel %vm3216, %v3203, %v3205
      %v3219 = vsel %vm3216, %v3205, %v3207
      %v3220 = vsel %vm3216, %v3207, %v3209
      %v3221 = vsel %vm3216, %v3209, %v3211
      %v3222 = vsel %vm3216, %v3211, %v3213
      %v3223 = vsel %vm3216, %v3213, %v3215
      %v3232 = vsel %vm1555, %v3199, 0
      %3234 = vmatprep.subr.mxu0 %v3218
      %3235 = vmatpush1.msra.mxu0 %v3217
      %3236 = vmatprep.subr.mxu0 0.0
      %3237 = vmatpush1.msra.mxu0 0.0
      %3238 = vmatprep.subr.mxu0 0.0
      %3239 = vmatpush1.msra.mxu0 0.0
      %3240 = vmatprep.subr.mxu0 0.0
      %3241 = vmatpush1.msra.mxu0 0.0
      %3242 = vmatprep.subr.mxu0 0.0
      %3243 = vmatpush1.msra.mxu0 0.0
      %3244 = vmatprep.subr.mxu0 0.0
      %3245 = vmatpush1.msra.mxu0 0.0
      %3246 = vmatprep.subr.mxu0 0.0
      %3247 = vmatpush1.msra.mxu0 0.0
      %3248 = vmatprep.subr.mxu0 0.0
      %3249 = vmatpush1.msra.mxu0 0.0
      %3250 = vmatprep.subr.mxu0 0.0
      %3251 = vmatpush1.msra.mxu0 0.0
      %3252 = vmatprep.subr.mxu0 0.0
      %3253 = vmatpush1.msra.mxu0 0.0
      %3254 = vmatprep.subr.mxu0 0.0
      %3255 = vmatpush1.msra.mxu0 0.0
      %3256 = vmatprep.subr.mxu0 0.0
      %3257 = vmatpush1.msra.mxu0 0.0
      %3258 = vmatprep.subr.mxu0 0.0
      %3259 = vmatpush1.msra.mxu0 0.0
      %3260 = vmatprep.subr.mxu0 0.0
      %3261 = vmatpush1.msra.mxu0 0.0
      %3262 = vmatprep.subr.mxu0 0.0
      %3263 = vmatpush1.msra.mxu0 0.0
      %3264 = vmatprep.subr.mxu0 0.0
      %3265 = vmatpush1.msra.mxu0 0.0
      %3266 = vmatprep.subr.mxu0 0.0
      %3267 = vmatpush1.msra.mxu0 0.0
      %3268 = vmatprep.subr.mxu0 0.0
      %3269 = vmatpush1.msra.mxu0 0.0
      %3270 = vmatprep.subr.mxu0 0.0
      %3271 = vmatpush1.msra.mxu0 0.0
      %3272 = vmatprep.subr.mxu0 0.0
      %3273 = vmatpush1.msra.mxu0 0.0
      %3274 = vmatprep.subr.mxu0 0.0
      %3275 = vmatpush1.msra.mxu0 0.0
      %3276 = vmatprep.subr.mxu0 0.0
      %3277 = vmatpush1.msra.mxu0 0.0
      %3278 = vmatprep.subr.mxu0 0.0
      %3279 = vmatpush1.msra.mxu0 0.0
      %3280 = vmatprep.subr.mxu0 0.0
      %3281 = vmatpush1.msra.mxu0 0.0
      %3282 = vmatprep.subr.mxu0 0.0
      %3283 = vmatpush1.msra.mxu0 0.0
      %3284 = vmatprep.subr.mxu0 0.0
      %3285 = vmatpush1.msra.mxu0 0.0
      %3286 = vmatprep.subr.mxu0 0.0
      %3287 = vmatpush1.msra.mxu0 0.0
      %3288 = vmatprep.subr.mxu0 0.0
      %3289 = vmatpush1.msra.mxu0 0.0
      %3290 = vmatprep.subr.mxu0 0.0
      %3291 = vmatpush1.msra.mxu0 0.0
      %3292 = vmatprep.subr.mxu0 0.0
      %3293 = vmatpush1.msra.mxu0 0.0
      %3294 = vmatprep.subr.mxu0 0.0
      %3295 = vmatpush1.msra.mxu0 0.0
      %3296 = vmatprep.subr.mxu0 0.0
      %3297 = vmatpush1.msra.mxu0 0.0
      %3298 = vmatprep.mubr.f32.mxu0 0.0
      %3299 = vmatmul.mubr.f32.gmra.mrb[0].mxu0 %v3232
      %v3300 = vpop.f32.mrb[0].mxu0
      %v3301 = vadd.f32 0.0, %v3300
      %v3302 = vpop.f32.mrb[0].mxu0
      %v3303 = vadd.f32 0.0, %v3302
      %3304 = vdwg.mxu0
      %3305 = vmatprep.subr.mxu0 %v3220
      %3306 = vmatpush1.msra.mxu0 %v3219
      %3307 = vmatprep.subr.mxu0 0.0
      %3308 = vmatpush1.msra.mxu0 0.0
      %3309 = vmatprep.subr.mxu0 0.0
      %3310 = vmatpush1.msra.mxu0 0.0
      %3311 = vmatprep.subr.mxu0 0.0
      %3312 = vmatpush1.msra.mxu0 0.0
      %3313 = vmatprep.subr.mxu0 0.0
      %3314 = vmatpush1.msra.mxu0 0.0
      %3315 = vmatprep.subr.mxu0 0.0
      %3316 = vmatpush1.msra.mxu0 0.0
      %3317 = vmatprep.subr.mxu0 0.0
      %3318 = vmatpush1.msra.mxu0 0.0
      %3319 = vmatprep.subr.mxu0 0.0
      %3320 = vmatpush1.msra.mxu0 0.0
      %3321 = vmatprep.subr.mxu0 0.0
      %3322 = vmatpush1.msra.mxu0 0.0
      %3323 = vmatprep.subr.mxu0 0.0
      %3324 = vmatpush1.msra.mxu0 0.0
      %3325 = vmatprep.subr.mxu0 0.0
      %3326 = vmatpush1.msra.mxu0 0.0
      %3327 = vmatprep.subr.mxu0 0.0
      %3328 = vmatpush1.msra.mxu0 0.0
      %3329 = vmatprep.subr.mxu0 0.0
      %3330 = vmatpush1.msra.mxu0 0.0
      %3331 = vmatprep.subr.mxu0 0.0
      %3332 = vmatpush1.msra.mxu0 0.0
      %3333 = vmatprep.subr.mxu0 0.0
      %3334 = vmatpush1.msra.mxu0 0.0
      %3335 = vmatprep.subr.mxu0 0.0
      %3336 = vmatpush1.msra.mxu0 0.0
      %3337 = vmatprep.subr.mxu0 0.0
      %3338 = vmatpush1.msra.mxu0 0.0
      %3339 = vmatprep.subr.mxu0 0.0
      %3340 = vmatpush1.msra.mxu0 0.0
      %3341 = vmatprep.subr.mxu0 0.0
      %3342 = vmatpush1.msra.mxu0 0.0
      %3343 = vmatprep.subr.mxu0 0.0
      %3344 = vmatpush1.msra.mxu0 0.0
      %3345 = vmatprep.subr.mxu0 0.0
      %3346 = vmatpush1.msra.mxu0 0.0
      %3347 = vmatprep.subr.mxu0 0.0
      %3348 = vmatpush1.msra.mxu0 0.0
      %3349 = vmatprep.subr.mxu0 0.0
      %3350 = vmatpush1.msra.mxu0 0.0
      %3351 = vmatprep.subr.mxu0 0.0
      %3352 = vmatpush1.msra.mxu0 0.0
      %3353 = vmatprep.subr.mxu0 0.0
      %3354 = vmatpush1.msra.mxu0 0.0
      %3355 = vmatprep.subr.mxu0 0.0
      %3356 = vmatpush1.msra.mxu0 0.0
      %3357 = vmatprep.subr.mxu0 0.0
      %3358 = vmatpush1.msra.mxu0 0.0
      %3359 = vmatprep.subr.mxu0 0.0
      %3360 = vmatpush1.msra.mxu0 0.0
      %3361 = vmatprep.subr.mxu0 0.0
      %3362 = vmatpush1.msra.mxu0 0.0
      %3363 = vmatprep.subr.mxu0 0.0
      %3364 = vmatpush1.msra.mxu0 0.0
      %3365 = vmatprep.subr.mxu0 0.0
      %3366 = vmatpush1.msra.mxu0 0.0
      %3367 = vmatprep.subr.mxu0 0.0
      %3368 = vmatpush1.msra.mxu0 0.0
      %3369 = vmatprep.mubr.f32.mxu0 0.0
      %3370 = vmatmul.mubr.f32.gmra.mrb[0].mxu0 %v3232
      %v3371 = vpop.f32.mrb[0].mxu0
      %v3372 = vadd.f32 0.0, %v3371
      %v3373 = vpop.f32.mrb[0].mxu0
      %v3374 = vadd.f32 0.0, %v3373
      %3375 = vdwg.mxu0
      %3376 = vmatprep.subr.mxu0 %v3222
      %3377 = vmatpush1.msra.mxu0 %v3221
      %3378 = vmatprep.subr.mxu0 0.0
      %3379 = vmatpush1.msra.mxu0 0.0
      %3380 = vmatprep.subr.mxu0 0.0
      %3381 = vmatpush1.msra.mxu0 0.0
      %3382 = vmatprep.subr.mxu0 0.0
      %3383 = vmatpush1.msra.mxu0 0.0
      %3384 = vmatprep.subr.mxu0 0.0
      %3385 = vmatpush1.msra.mxu0 0.0
      %3386 = vmatprep.subr.mxu0 0.0
      %3387 = vmatpush1.msra.mxu0 0.0
      %3388 = vmatprep.subr.mxu0 0.0
      %3389 = vmatpush1.msra.mxu0 0.0
      %3390 = vmatprep.subr.mxu0 0.0
      %3391 = vmatpush1.msra.mxu0 0.0
      %3392 = vmatprep.subr.mxu0 0.0
      %3393 = vmatpush1.msra.mxu0 0.0
      %3394 = vmatprep.subr.mxu0 0.0
      %3395 = vmatpush1.msra.mxu0 0.0
      %3396 = vmatprep.subr.mxu0 0.0
      %3397 = vmatpush1.msra.mxu0 0.0
      %3398 = vmatprep.subr.mxu0 0.0
      %3399 = vmatpush1.msra.mxu0 0.0
      %3400 = vmatprep.subr.mxu0 0.0
      %3401 = vmatpush1.msra.mxu0 0.0
      %3402 = vmatprep.subr.mxu0 0.0
      %3403 = vmatpush1.msra.mxu0 0.0
      %3404 = vmatprep.subr.mxu0 0.0
      %3405 = vmatpush1.msra.mxu0 0.0
      %3406 = vmatprep.subr.mxu0 0.0
      %3407 = vmatpush1.msra.mxu0 0.0
      %3408 = vmatprep.subr.mxu0 0.0
      %3409 = vmatpush1.msra.mxu0 0.0
      %3410 = vmatprep.subr.mxu0 0.0
      %3411 = vmatpush1.msra.mxu0 0.0
      %3412 = vmatprep.subr.mxu0 0.0
      %3413 = vmatpush1.msra.mxu0 0.0
      %3414 = vmatprep.subr.mxu0 0.0
      %3415 = vmatpush1.msra.mxu0 0.0
      %3416 = vmatprep.subr.mxu0 0.0
      %3417 = vmatpush1.msra.mxu0 0.0
      %3418 = vmatprep.subr.mxu0 0.0
      %3419 = vmatpush1.msra.mxu0 0.0
      %3420 = vmatprep.subr.mxu0 0.0
      %3421 = vmatpush1.msra.mxu0 0.0
      %3422 = vmatprep.subr.mxu0 0.0
      %3423 = vmatpush1.msra.mxu0 0.0
      %3424 = vmatprep.subr.mxu0 0.0
      %3425 = vmatpush1.msra.mxu0 0.0
      %3426 = vmatprep.subr.mxu0 0.0
      %3427 = vmatpush1.msra.mxu0 0.0
      %3428 = vmatprep.subr.mxu0 0.0
      %3429 = vmatpush1.msra.mxu0 0.0
      %3430 = vmatprep.subr.mxu0 0.0
      %3431 = vmatpush1.msra.mxu0 0.0
      %3432 = vmatprep.subr.mxu0 0.0
      %3433 = vmatpush1.msra.mxu0 0.0
      %3434 = vmatprep.subr.mxu0 0.0
      %3435 = vmatpush1.msra.mxu0 0.0
      %3436 = vmatprep.subr.mxu0 0.0
      %3437 = vmatpush1.msra.mxu0 0.0
      %3438 = vmatprep.subr.mxu0 0.0
      %3439 = vmatpush1.msra.mxu0 0.0
      %3440 = vmatprep.mubr.f32.mxu0 0.0
      %3441 = vmatmul.mubr.f32.gmra.mrb[0].mxu0 %v3232
      %v3442 = vpop.f32.mrb[0].mxu0
      %v3443 = vadd.f32 0.0, %v3442
      %v3444 = vpop.f32.mrb[0].mxu0
      %v3445 = vadd.f32 0.0, %v3444
      %3446 = vdwg.mxu0
      %3447 = vmatprep.subr.mxu0 0.0
      %3448 = vmatpush1.msra.mxu0 %v3223
      %3449 = vmatprep.subr.mxu0 0.0
      %3450 = vmatpush1.msra.mxu0 0.0
      %3451 = vmatprep.subr.mxu0 0.0
      %3452 = vmatpush1.msra.mxu0 0.0
      %3453 = vmatprep.subr.mxu0 0.0
      %3454 = vmatpush1.msra.mxu0 0.0
      %3455 = vmatprep.subr.mxu0 0.0
      %3456 = vmatpush1.msra.mxu0 0.0
      %3457 = vmatprep.subr.mxu0 0.0
      %3458 = vmatpush1.msra.mxu0 0.0
      %3459 = vmatprep.subr.mxu0 0.0
      %3460 = vmatpush1.msra.mxu0 0.0
      %3461 = vmatprep.subr.mxu0 0.0
      %3462 = vmatpush1.msra.mxu0 0.0
      %3463 = vmatprep.subr.mxu0 0.0
      %3464 = vmatpush1.msra.mxu0 0.0
      %3465 = vmatprep.subr.mxu0 0.0
      %3466 = vmatpush1.msra.mxu0 0.0
      %3467 = vmatprep.subr.mxu0 0.0
      %3468 = vmatpush1.msra.mxu0 0.0
      %3469 = vmatprep.subr.mxu0 0.0
      %3470 = vmatpush1.msra.mxu0 0.0
      %3471 = vmatprep.subr.mxu0 0.0
      %3472 = vmatpush1.msra.mxu0 0.0
      %3473 = vmatprep.subr.mxu0 0.0
      %3474 = vmatpush1.msra.mxu0 0.0
      %3475 = vmatprep.subr.mxu0 0.0
      %3476 = vmatpush1.msra.mxu0 0.0
      %3477 = vmatprep.subr.mxu0 0.0
      %3478 = vmatpush1.msra.mxu0 0.0
      %3479 = vmatprep.subr.mxu0 0.0
      %3480 = vmatpush1.msra.mxu0 0.0
      %3481 = vmatprep.subr.mxu0 0.0
      %3482 = vmatpush1.msra.mxu0 0.0
      %3483 = vmatprep.subr.mxu0 0.0
      %3484 = vmatpush1.msra.mxu0 0.0
      %3485 = vmatprep.subr.mxu0 0.0
      %3486 = vmatpush1.msra.mxu0 0.0
      %3487 = vmatprep.subr.mxu0 0.0
      %3488 = vmatpush1.msra.mxu0 0.0
      %3489 = vmatprep.subr.mxu0 0.0
      %3490 = vmatpush1.msra.mxu0 0.0
      %3491 = vmatprep.subr.mxu0 0.0
      %3492 = vmatpush1.msra.mxu0 0.0
      %3493 = vmatprep.subr.mxu0 0.0
      %3494 = vmatpush1.msra.mxu0 0.0
      %3495 = vmatprep.subr.mxu0 0.0
      %3496 = vmatpush1.msra.mxu0 0.0
      %3497 = vmatprep.subr.mxu0 0.0
      %3498 = vmatpush1.msra.mxu0 0.0
      %3499 = vmatprep.subr.mxu0 0.0
      %3500 = vmatpush1.msra.mxu0 0.0
      %3501 = vmatprep.subr.mxu0 0.0
      %3502 = vmatpush1.msra.mxu0 0.0
      %3503 = vmatprep.subr.mxu0 0.0
      %3504 = vmatpush1.msra.mxu0 0.0
      %3505 = vmatprep.subr.mxu0 0.0
      %3506 = vmatpush1.msra.mxu0 0.0
      %3507 = vmatprep.subr.mxu0 0.0
      %3508 = vmatpush1.msra.mxu0 0.0
      %3509 = vmatprep.subr.mxu0 0.0
      %3510 = vmatpush1.msra.mxu0 0.0
      %3511 = vmatprep.mubr.f32.mxu0 0.0
      %3512 = vmatmul.mubr.f32.gmra.mrb[0].mxu0 %v3232
      %v3513 = vpop.f32.mrb[0].mxu0
      %v3514 = vadd.f32 0.0, %v3513
      %v3515 = vpop.f32.mrb[0].mxu0
      %3516 = vdwg.mxu0
      %v3517 = vadd.f32 %v2982, %v3301
      %v3518 = vadd.f32 %v2984, %v3303
      %v3519 = vadd.f32 %v3053, %v3372
      %v3520 = vadd.f32 %v3055, %v3374
      %v3521 = vadd.f32 %v3124, %v3443
      %v3522 = vadd.f32 %v3126, %v3445
      %v3523 = vadd.f32 %v3195, %v3514
      %3525 = vset.pattern.permute.xlu0 0
      %3526 = vperm.xlu0 %3525, %v2545
      %v3527 = vpop.permute.xlu0 %3526
      %v3529 = vadd.f32 %v3517, %v3527
      %v3530 = vadd.f32 %v3518, %v3527
      %v3531 = vadd.f32 %v3519, %v3527
      %v3532 = vadd.f32 %v3520, %v3527
      %v3533 = vadd.f32 %v3521, %v3527
      %v3534 = vadd.f32 %v3522, %v3527
      %v3535 = vadd.f32 %v3523, %v3527
      %v3536 = vadd.f32 %v3529, 0.0
      %v3537 = vadd.f32 %v3530, 0.0
      %v3538 = vadd.f32 %v3531, 0.0
      %v3539 = vadd.f32 %v3532, 0.0
      %v3540 = vadd.f32 %v3533, 0.0
      %v3541 = vadd.f32 %v3534, 0.0
      %v3542 = vadd.f32 %v3535, 0.0
      %s3543 = scalar_lea.vmem %s10, 24
      %v3544 = vld [vmem:[%s3543] sm:$0xff]
      %v3545 = vld [vmem:[%s4] sm:$0xff]
      %s3546 = scalar_lea.vmem %s4, 8
      %v3547 = vld [vmem:[%s3546] sm:$0xff]
      %v3549 = vsel %vm472, %v3547, 0
      %3551 = vmatprep.subr.mxu0 %v479
      %3552 = vmatpush1.msra.mxu0 %v477
      %3553 = vmatprep.subr.mxu0 0.0
      %3554 = vmatpush1.msra.mxu0 0.0
      %3555 = vmatprep.subr.mxu0 0.0
      %3556 = vmatpush1.msra.mxu0 0.0
      %3557 = vmatprep.subr.mxu0 0.0
      %3558 = vmatpush1.msra.mxu0 0.0
      %3559 = vmatprep.subr.mxu0 0.0
      %3560 = vmatpush1.msra.mxu0 0.0
      %3561 = vmatprep.subr.mxu0 0.0
      %3562 = vmatpush1.msra.mxu0 0.0
      %3563 = vmatprep.subr.mxu0 0.0
      %3564 = vmatpush1.msra.mxu0 0.0
      %3565 = vmatprep.subr.mxu0 0.0
      %3566 = vmatpush1.msra.mxu0 0.0
      %3567 = vmatprep.subr.mxu0 0.0
      %3568 = vmatpush1.msra.mxu0 0.0
      %3569 = vmatprep.subr.mxu0 0.0
      %3570 = vmatpush1.msra.mxu0 0.0
      %3571 = vmatprep.subr.mxu0 0.0
      %3572 = vmatpush1.msra.mxu0 0.0
      %3573 = vmatprep.subr.mxu0 0.0
      %3574 = vmatpush1.msra.mxu0 0.0
      %3575 = vmatprep.subr.mxu0 0.0
      %3576 = vmatpush1.msra.mxu0 0.0
      %3577 = vmatprep.subr.mxu0 0.0
      %3578 = vmatpush1.msra.mxu0 0.0
      %3579 = vmatprep.subr.mxu0 0.0
      %3580 = vmatpush1.msra.mxu0 0.0
      %3581 = vmatprep.subr.mxu0 0.0
      %3582 = vmatpush1.msra.mxu0 0.0
      %3583 = vmatprep.subr.mxu0 0.0
      %3584 = vmatpush1.msra.mxu0 0.0
      %3585 = vmatprep.subr.mxu0 0.0
      %3586 = vmatpush1.msra.mxu0 0.0
      %3587 = vmatprep.subr.mxu0 0.0
      %3588 = vmatpush1.msra.mxu0 0.0
      %3589 = vmatprep.subr.mxu0 0.0
      %3590 = vmatpush1.msra.mxu0 0.0
      %3591 = vmatprep.subr.mxu0 0.0
      %3592 = vmatpush1.msra.mxu0 0.0
      %3593 = vmatprep.subr.mxu0 0.0
      %3594 = vmatpush1.msra.mxu0 0.0
      %3595 = vmatprep.subr.mxu0 0.0
      %3596 = vmatpush1.msra.mxu0 0.0
      %3597 = vmatprep.subr.mxu0 0.0
      %3598 = vmatpush1.msra.mxu0 0.0
      %3599 = vmatprep.subr.mxu0 0.0
      %3600 = vmatpush1.msra.mxu0 0.0
      %3601 = vmatprep.subr.mxu0 0.0
      %3602 = vmatpush1.msra.mxu0 0.0
      %3603 = vmatprep.subr.mxu0 0.0
      %3604 = vmatpush1.msra.mxu0 0.0
      %3605 = vmatprep.subr.mxu0 0.0
      %3606 = vmatpush1.msra.mxu0 0.0
      %3607 = vmatprep.subr.mxu0 0.0
      %3608 = vmatpush1.msra.mxu0 0.0
      %3609 = vmatprep.subr.mxu0 0.0
      %3610 = vmatpush1.msra.mxu0 0.0
      %3611 = vmatprep.subr.mxu0 0.0
      %3612 = vmatpush1.msra.mxu0 0.0
      %3613 = vmatprep.subr.mxu0 0.0
      %3614 = vmatpush1.msra.mxu0 0.0
      %3615 = vmatprep.mubr.f32.mxu0 0.0
      %3616 = vmatmul.mubr.f32.gmra.mrb[0].mxu0 %v3549
      %v3617 = vpop.f32.mrb[0].mxu0
      %v3618 = vadd.f32 0.0, %v3617
      %v3619 = vpop.f32.mrb[0].mxu0
      %v3620 = vadd.f32 0.0, %v3619
      %3621 = vdwg.mxu0
      %3622 = vmatprep.subr.mxu0 %v483
      %3623 = vmatpush1.msra.mxu0 %v481
      %3624 = vmatprep.subr.mxu0 0.0
      %3625 = vmatpush1.msra.mxu0 0.0
      %3626 = vmatprep.subr.mxu0 0.0
      %3627 = vmatpush1.msra.mxu0 0.0
      %3628 = vmatprep.subr.mxu0 0.0
      %3629 = vmatpush1.msra.mxu0 0.0
      %3630 = vmatprep.subr.mxu0 0.0
      %3631 = vmatpush1.msra.mxu0 0.0
      %3632 = vmatprep.subr.mxu0 0.0
      %3633 = vmatpush1.msra.mxu0 0.0
      %3634 = vmatprep.subr.mxu0 0.0
      %3635 = vmatpush1.msra.mxu0 0.0
      %3636 = vmatprep.subr.mxu0 0.0
      %3637 = vmatpush1.msra.mxu0 0.0
      %3638 = vmatprep.subr.mxu0 0.0
      %3639 = vmatpush1.msra.mxu0 0.0
      %3640 = vmatprep.subr.mxu0 0.0
      %3641 = vmatpush1.msra.mxu0 0.0
      %3642 = vmatprep.subr.mxu0 0.0
      %3643 = vmatpush1.msra.mxu0 0.0
      %3644 = vmatprep.subr.mxu0 0.0
      %3645 = vmatpush1.msra.mxu0 0.0
      %3646 = vmatprep.subr.mxu0 0.0
      %3647 = vmatpush1.msra.mxu0 0.0
      %3648 = vmatprep.subr.mxu0 0.0
      %3649 = vmatpush1.msra.mxu0 0.0
      %3650 = vmatprep.subr.mxu0 0.0
      %3651 = vmatpush1.msra.mxu0 0.0
      %3652 = vmatprep.subr.mxu0 0.0
      %3653 = vmatpush1.msra.mxu0 0.0
      %3654 = vmatprep.subr.mxu0 0.0
      %3655 = vmatpush1.msra.mxu0 0.0
      %3656 = vmatprep.subr.mxu0 0.0
      %3657 = vmatpush1.msra.mxu0 0.0
      %3658 = vmatprep.subr.mxu0 0.0
      %3659 = vmatpush1.msra.mxu0 0.0
      %3660 = vmatprep.subr.mxu0 0.0
      %3661 = vmatpush1.msra.mxu0 0.0
      %3662 = vmatprep.subr.mxu0 0.0
      %3663 = vmatpush1.msra.mxu0 0.0
      %3664 = vmatprep.subr.mxu0 0.0
      %3665 = vmatpush1.msra.mxu0 0.0
      %3666 = vmatprep.subr.mxu0 0.0
      %3667 = vmatpush1.msra.mxu0 0.0
      %3668 = vmatprep.subr.mxu0 0.0
      %3669 = vmatpush1.msra.mxu0 0.0
      %3670 = vmatprep.subr.mxu0 0.0
      %3671 = vmatpush1.msra.mxu0 0.0
      %3672 = vmatprep.subr.mxu0 0.0
      %3673 = vmatpush1.msra.mxu0 0.0
      %3674 = vmatprep.subr.mxu0 0.0
      %3675 = vmatpush1.msra.mxu0 0.0
      %3676 = vmatprep.subr.mxu0 0.0
      %3677 = vmatpush1.msra.mxu0 0.0
      %3678 = vmatprep.subr.mxu0 0.0
      %3679 = vmatpush1.msra.mxu0 0.0
      %3680 = vmatprep.subr.mxu0 0.0
      %3681 = vmatpush1.msra.mxu0 0.0
      %3682 = vmatprep.subr.mxu0 0.0
      %3683 = vmatpush1.msra.mxu0 0.0
      %3684 = vmatprep.subr.mxu0 0.0
      %3685 = vmatpush1.msra.mxu0 0.0
      %3686 = vmatprep.mubr.f32.mxu0 0.0
      %3687 = vmatmul.mubr.f32.gmra.mrb[0].mxu0 %v3549
      %v3688 = vpop.f32.mrb[0].mxu0
      %v3689 = vadd.f32 0.0, %v3688
      %v3690 = vpop.f32.mrb[0].mxu0
      %v3691 = vadd.f32 0.0, %v3690
      %3692 = vdwg.mxu0
      %3693 = vmatprep.subr.mxu0 %v487
      %3694 = vmatpush1.msra.mxu0 %v485
      %3695 = vmatprep.subr.mxu0 0.0
      %3696 = vmatpush1.msra.mxu0 0.0
      %3697 = vmatprep.subr.mxu0 0.0
      %3698 = vmatpush1.msra.mxu0 0.0
      %3699 = vmatprep.subr.mxu0 0.0
      %3700 = vmatpush1.msra.mxu0 0.0
      %3701 = vmatprep.subr.mxu0 0.0
      %3702 = vmatpush1.msra.mxu0 0.0
      %3703 = vmatprep.subr.mxu0 0.0
      %3704 = vmatpush1.msra.mxu0 0.0
      %3705 = vmatprep.subr.mxu0 0.0
      %3706 = vmatpush1.msra.mxu0 0.0
      %3707 = vmatprep.subr.mxu0 0.0
      %3708 = vmatpush1.msra.mxu0 0.0
      %3709 = vmatprep.subr.mxu0 0.0
      %3710 = vmatpush1.msra.mxu0 0.0
      %3711 = vmatprep.subr.mxu0 0.0
      %3712 = vmatpush1.msra.mxu0 0.0
      %3713 = vmatprep.subr.mxu0 0.0
      %3714 = vmatpush1.msra.mxu0 0.0
      %3715 = vmatprep.subr.mxu0 0.0
      %3716 = vmatpush1.msra.mxu0 0.0
      %3717 = vmatprep.subr.mxu0 0.0
      %3718 = vmatpush1.msra.mxu0 0.0
      %3719 = vmatprep.subr.mxu0 0.0
      %3720 = vmatpush1.msra.mxu0 0.0
      %3721 = vmatprep.subr.mxu0 0.0
      %3722 = vmatpush1.msra.mxu0 0.0
      %3723 = vmatprep.subr.mxu0 0.0
      %3724 = vmatpush1.msra.mxu0 0.0
      %3725 = vmatprep.subr.mxu0 0.0
      %3726 = vmatpush1.msra.mxu0 0.0
      %3727 = vmatprep.subr.mxu0 0.0
      %3728 = vmatpush1.msra.mxu0 0.0
      %3729 = vmatprep.subr.mxu0 0.0
      %3730 = vmatpush1.msra.mxu0 0.0
      %3731 = vmatprep.subr.mxu0 0.0
      %3732 = vmatpush1.msra.mxu0 0.0
      %3733 = vmatprep.subr.mxu0 0.0
      %3734 = vmatpush1.msra.mxu0 0.0
      %3735 = vmatprep.subr.mxu0 0.0
      %3736 = vmatpush1.msra.mxu0 0.0
      %3737 = vmatprep.subr.mxu0 0.0
      %3738 = vmatpush1.msra.mxu0 0.0
      %3739 = vmatprep.subr.mxu0 0.0
      %3740 = vmatpush1.msra.mxu0 0.0
      %3741 = vmatprep.subr.mxu0 0.0
      %3742 = vmatpush1.msra.mxu0 0.0
      %3743 = vmatprep.subr.mxu0 0.0
      %3744 = vmatpush1.msra.mxu0 0.0
      %3745 = vmatprep.subr.mxu0 0.0
      %3746 = vmatpush1.msra.mxu0 0.0
      %3747 = vmatprep.subr.mxu0 0.0
      %3748 = vmatpush1.msra.mxu0 0.0
      %3749 = vmatprep.subr.mxu0 0.0
      %3750 = vmatpush1.msra.mxu0 0.0
      %3751 = vmatprep.subr.mxu0 0.0
      %3752 = vmatpush1.msra.mxu0 0.0
      %3753 = vmatprep.subr.mxu0 0.0
      %3754 = vmatpush1.msra.mxu0 0.0
      %3755 = vmatprep.subr.mxu0 0.0
      %3756 = vmatpush1.msra.mxu0 0.0
      %3757 = vmatprep.mubr.f32.mxu0 0.0
      %3758 = vmatmul.mubr.f32.gmra.mrb[0].mxu0 %v3549
      %v3759 = vpop.f32.mrb[0].mxu0
      %v3760 = vadd.f32 0.0, %v3759
      %v3761 = vpop.f32.mrb[0].mxu0
      %v3762 = vadd.f32 0.0, %v3761
      %3763 = vdwg.mxu0
      %3764 = vmatprep.subr.mxu0 0.0
      %3765 = vmatpush1.msra.mxu0 %v489
      %3766 = vmatprep.subr.mxu0 0.0
      %3767 = vmatpush1.msra.mxu0 0.0
      %3768 = vmatprep.subr.mxu0 0.0
      %3769 = vmatpush1.msra.mxu0 0.0
      %3770 = vmatprep.subr.mxu0 0.0
      %3771 = vmatpush1.msra.mxu0 0.0
      %3772 = vmatprep.subr.mxu0 0.0
      %3773 = vmatpush1.msra.mxu0 0.0
      %3774 = vmatprep.subr.mxu0 0.0
      %3775 = vmatpush1.msra.mxu0 0.0
      %3776 = vmatprep.subr.mxu0 0.0
      %3777 = vmatpush1.msra.mxu0 0.0
      %3778 = vmatprep.subr.mxu0 0.0
      %3779 = vmatpush1.msra.mxu0 0.0
      %3780 = vmatprep.subr.mxu0 0.0
      %3781 = vmatpush1.msra.mxu0 0.0
      %3782 = vmatprep.subr.mxu0 0.0
      %3783 = vmatpush1.msra.mxu0 0.0
      %3784 = vmatprep.subr.mxu0 0.0
      %3785 = vmatpush1.msra.mxu0 0.0
      %3786 = vmatprep.subr.mxu0 0.0
      %3787 = vmatpush1.msra.mxu0 0.0
      %3788 = vmatprep.subr.mxu0 0.0
      %3789 = vmatpush1.msra.mxu0 0.0
      %3790 = vmatprep.subr.mxu0 0.0
      %3791 = vmatpush1.msra.mxu0 0.0
      %3792 = vmatprep.subr.mxu0 0.0
      %3793 = vmatpush1.msra.mxu0 0.0
      %3794 = vmatprep.subr.mxu0 0.0
      %3795 = vmatpush1.msra.mxu0 0.0
      %3796 = vmatprep.subr.mxu0 0.0
      %3797 = vmatpush1.msra.mxu0 0.0
      %3798 = vmatprep.subr.mxu0 0.0
      %3799 = vmatpush1.msra.mxu0 0.0
      %3800 = vmatprep.subr.mxu0 0.0
      %3801 = vmatpush1.msra.mxu0 0.0
      %3802 = vmatprep.subr.mxu0 0.0
      %3803 = vmatpush1.msra.mxu0 0.0
      %3804 = vmatprep.subr.mxu0 0.0
      %3805 = vmatpush1.msra.mxu0 0.0
      %3806 = vmatprep.subr.mxu0 0.0
      %3807 = vmatpush1.msra.mxu0 0.0
      %3808 = vmatprep.subr.mxu0 0.0
      %3809 = vmatpush1.msra.mxu0 0.0
      %3810 = vmatprep.subr.mxu0 0.0
      %3811 = vmatpush1.msra.mxu0 0.0
      %3812 = vmatprep.subr.mxu0 0.0
      %3813 = vmatpush1.msra.mxu0 0.0
      %3814 = vmatprep.subr.mxu0 0.0
      %3815 = vmatpush1.msra.mxu0 0.0
      %3816 = vmatprep.subr.mxu0 0.0
      %3817 = vmatpush1.msra.mxu0 0.0
      %3818 = vmatprep.subr.mxu0 0.0
      %3819 = vmatpush1.msra.mxu0 0.0
      %3820 = vmatprep.subr.mxu0 0.0
      %3821 = vmatpush1.msra.mxu0 0.0
      %3822 = vmatprep.subr.mxu0 0.0
      %3823 = vmatpush1.msra.mxu0 0.0
      %3824 = vmatprep.subr.mxu0 0.0
      %3825 = vmatpush1.msra.mxu0 0.0
      %3826 = vmatprep.subr.mxu0 0.0
      %3827 = vmatpush1.msra.mxu0 0.0
      %3828 = vmatprep.mubr.f32.mxu0 0.0
      %3829 = vmatmul.mubr.f32.gmra.mrb[0].mxu0 %v3549
      %v3830 = vpop.f32.mrb[0].mxu0
      %v3831 = vadd.f32 0.0, %v3830
      %v3832 = vpop.f32.mrb[0].mxu0
      %3833 = vdwg.mxu0
      %3834 = vrot.lane.b32.xlu0 %v431, 38
      %v3835 = vpop.permute.xlu0 %3834
      %3836 = vrot.lane.b32.xlu0 %v444, 38
      %v3837 = vpop.permute.xlu0 %3836
      %3838 = vrot.lane.b32.xlu0 %v432, 38
      %v3839 = vpop.permute.xlu0 %3838
      %3840 = vrot.lane.b32.xlu0 %v445, 38
      %v3841 = vpop.permute.xlu0 %3840
      %3842 = vrot.lane.b32.xlu0 %v433, 38
      %v3843 = vpop.permute.xlu0 %3842
      %3844 = vrot.lane.b32.xlu0 %v446, 38
      %v3845 = vpop.permute.xlu0 %3844
      %3846 = vrot.lane.b32.xlu0 %v434, 38
      %v3847 = vpop.permute.xlu0 %3846
      %v3848 = vsel %vm1856, %v3835, %v3837
      %v3849 = vsel %vm1856, %v3837, %v3839
      %v3850 = vsel %vm1856, %v3839, %v3841
      %v3851 = vsel %vm1856, %v3841, %v3843
      %v3852 = vsel %vm1856, %v3843, %v3845
      %v3853 = vsel %vm1856, %v3845, %v3847
      %v3855 = vsel %vm472, %v3545, 0
      %v3857 = vsel %vm476, %v3848, 0
      %v3859 = vsel %vm476, %v3849, 0
      %v3861 = vsel %vm476, %v3850, 0
      %v3863 = vsel %vm476, %v3851, 0
      %v3865 = vsel %vm476, %v3852, 0
      %v3867 = vsel %vm476, %v3853, 0
      %v3869 = vsel %vm476, %v3847, 0
      %3871 = vmatprep.subr.mxu0 %v3859
      %3872 = vmatpush1.msra.mxu0 %v3857
      %3873 = vmatprep.subr.mxu0 0.0
      %3874 = vmatpush1.msra.mxu0 0.0
      %3875 = vmatprep.subr.mxu0 0.0
      %3876 = vmatpush1.msra.mxu0 0.0
      %3877 = vmatprep.subr.mxu0 0.0
      %3878 = vmatpush1.msra.mxu0 0.0
      %3879 = vmatprep.subr.mxu0 0.0
      %3880 = vmatpush1.msra.mxu0 0.0
      %3881 = vmatprep.subr.mxu0 0.0
      %3882 = vmatpush1.msra.mxu0 0.0
      %3883 = vmatprep.subr.mxu0 0.0
      %3884 = vmatpush1.msra.mxu0 0.0
      %3885 = vmatprep.subr.mxu0 0.0
      %3886 = vmatpush1.msra.mxu0 0.0
      %3887 = vmatprep.subr.mxu0 0.0
      %3888 = vmatpush1.msra.mxu0 0.0
      %3889 = vmatprep.subr.mxu0 0.0
      %3890 = vmatpush1.msra.mxu0 0.0
      %3891 = vmatprep.subr.mxu0 0.0
      %3892 = vmatpush1.msra.mxu0 0.0
      %3893 = vmatprep.subr.mxu0 0.0
      %3894 = vmatpush1.msra.mxu0 0.0
      %3895 = vmatprep.subr.mxu0 0.0
      %3896 = vmatpush1.msra.mxu0 0.0
      %3897 = vmatprep.subr.mxu0 0.0
      %3898 = vmatpush1.msra.mxu0 0.0
      %3899 = vmatprep.subr.mxu0 0.0
      %3900 = vmatpush1.msra.mxu0 0.0
      %3901 = vmatprep.subr.mxu0 0.0
      %3902 = vmatpush1.msra.mxu0 0.0
      %3903 = vmatprep.subr.mxu0 0.0
      %3904 = vmatpush1.msra.mxu0 0.0
      %3905 = vmatprep.subr.mxu0 0.0
      %3906 = vmatpush1.msra.mxu0 0.0
      %3907 = vmatprep.subr.mxu0 0.0
      %3908 = vmatpush1.msra.mxu0 0.0
      %3909 = vmatprep.subr.mxu0 0.0
      %3910 = vmatpush1.msra.mxu0 0.0
      %3911 = vmatprep.subr.mxu0 0.0
      %3912 = vmatpush1.msra.mxu0 0.0
      %3913 = vmatprep.subr.mxu0 0.0
      %3914 = vmatpush1.msra.mxu0 0.0
      %3915 = vmatprep.subr.mxu0 0.0
      %3916 = vmatpush1.msra.mxu0 0.0
      %3917 = vmatprep.subr.mxu0 0.0
      %3918 = vmatpush1.msra.mxu0 0.0
      %3919 = vmatprep.subr.mxu0 0.0
      %3920 = vmatpush1.msra.mxu0 0.0
      %3921 = vmatprep.subr.mxu0 0.0
      %3922 = vmatpush1.msra.mxu0 0.0
      %3923 = vmatprep.subr.mxu0 0.0
      %3924 = vmatpush1.msra.mxu0 0.0
      %3925 = vmatprep.subr.mxu0 0.0
      %3926 = vmatpush1.msra.mxu0 0.0
      %3927 = vmatprep.subr.mxu0 0.0
      %3928 = vmatpush1.msra.mxu0 0.0
      %3929 = vmatprep.subr.mxu0 0.0
      %3930 = vmatpush1.msra.mxu0 0.0
      %3931 = vmatprep.subr.mxu0 0.0
      %3932 = vmatpush1.msra.mxu0 0.0
      %3933 = vmatprep.subr.mxu0 0.0
      %3934 = vmatpush1.msra.mxu0 0.0
      %3935 = vmatprep.mubr.f32.mxu0 0.0
      %3936 = vmatmul.mubr.f32.gmra.mrb[0].mxu0 %v3855
      %v3937 = vpop.f32.mrb[0].mxu0
      %v3938 = vadd.f32 %v3618, %v3937
      %v3939 = vpop.f32.mrb[0].mxu0
      %v3940 = vadd.f32 %v3620, %v3939
      %3941 = vdwg.mxu0
      %3942 = vmatprep.subr.mxu0 %v3863
      %3943 = vmatpush1.msra.mxu0 %v3861
      %3944 = vmatprep.subr.mxu0 0.0
      %3945 = vmatpush1.msra.mxu0 0.0
      %3946 = vmatprep.subr.mxu0 0.0
      %3947 = vmatpush1.msra.mxu0 0.0
      %3948 = vmatprep.subr.mxu0 0.0
      %3949 = vmatpush1.msra.mxu0 0.0
      %3950 = vmatprep.subr.mxu0 0.0
      %3951 = vmatpush1.msra.mxu0 0.0
      %3952 = vmatprep.subr.mxu0 0.0
      %3953 = vmatpush1.msra.mxu0 0.0
      %3954 = vmatprep.subr.mxu0 0.0
      %3955 = vmatpush1.msra.mxu0 0.0
      %3956 = vmatprep.subr.mxu0 0.0
      %3957 = vmatpush1.msra.mxu0 0.0
      %3958 = vmatprep.subr.mxu0 0.0
      %3959 = vmatpush1.msra.mxu0 0.0
      %3960 = vmatprep.subr.mxu0 0.0
      %3961 = vmatpush1.msra.mxu0 0.0
      %3962 = vmatprep.subr.mxu0 0.0
      %3963 = vmatpush1.msra.mxu0 0.0
      %3964 = vmatprep.subr.mxu0 0.0
      %3965 = vmatpush1.msra.mxu0 0.0
      %3966 = vmatprep.subr.mxu0 0.0
      %3967 = vmatpush1.msra.mxu0 0.0
      %3968 = vmatprep.subr.mxu0 0.0
      %3969 = vmatpush1.msra.mxu0 0.0
      %3970 = vmatprep.subr.mxu0 0.0
      %3971 = vmatpush1.msra.mxu0 0.0
      %3972 = vmatprep.subr.mxu0 0.0
      %3973 = vmatpush1.msra.mxu0 0.0
      %3974 = vmatprep.subr.mxu0 0.0
      %3975 = vmatpush1.msra.mxu0 0.0
      %3976 = vmatprep.subr.mxu0 0.0
      %3977 = vmatpush1.msra.mxu0 0.0
      %3978 = vmatprep.subr.mxu0 0.0
      %3979 = vmatpush1.msra.mxu0 0.0
      %3980 = vmatprep.subr.mxu0 0.0
      %3981 = vmatpush1.msra.mxu0 0.0
      %3982 = vmatprep.subr.mxu0 0.0
      %3983 = vmatpush1.msra.mxu0 0.0
      %3984 = vmatprep.subr.mxu0 0.0
      %3985 = vmatpush1.msra.mxu0 0.0
      %3986 = vmatprep.subr.mxu0 0.0
      %3987 = vmatpush1.msra.mxu0 0.0
      %3988 = vmatprep.subr.mxu0 0.0
      %3989 = vmatpush1.msra.mxu0 0.0
      %3990 = vmatprep.subr.mxu0 0.0
      %3991 = vmatpush1.msra.mxu0 0.0
      %3992 = vmatprep.subr.mxu0 0.0
      %3993 = vmatpush1.msra.mxu0 0.0
      %3994 = vmatprep.subr.mxu0 0.0
      %3995 = vmatpush1.msra.mxu0 0.0
      %3996 = vmatprep.subr.mxu0 0.0
      %3997 = vmatpush1.msra.mxu0 0.0
      %3998 = vmatprep.subr.mxu0 0.0
      %3999 = vmatpush1.msra.mxu0 0.0
      %4000 = vmatprep.subr.mxu0 0.0
      %4001 = vmatpush1.msra.mxu0 0.0
      %4002 = vmatprep.subr.mxu0 0.0
      %4003 = vmatpush1.msra.mxu0 0.0
      %4004 = vmatprep.subr.mxu0 0.0
      %4005 = vmatpush1.msra.mxu0 0.0
      %4006 = vmatprep.mubr.f32.mxu0 0.0
      %4007 = vmatmul.mubr.f32.gmra.mrb[0].mxu0 %v3855
      %v4008 = vpop.f32.mrb[0].mxu0
      %v4009 = vadd.f32 %v3689, %v4008
      %v4010 = vpop.f32.mrb[0].mxu0
      %v4011 = vadd.f32 %v3691, %v4010
      %4012 = vdwg.mxu0
      %4013 = vmatprep.subr.mxu0 %v3867
      %4014 = vmatpush1.msra.mxu0 %v3865
      %4015 = vmatprep.subr.mxu0 0.0
      %4016 = vmatpush1.msra.mxu0 0.0
      %4017 = vmatprep.subr.mxu0 0.0
      %4018 = vmatpush1.msra.mxu0 0.0
      %4019 = vmatprep.subr.mxu0 0.0
      %4020 = vmatpush1.msra.mxu0 0.0
      %4021 = vmatprep.subr.mxu0 0.0
      %4022 = vmatpush1.msra.mxu0 0.0
      %4023 = vmatprep.subr.mxu0 0.0
      %4024 = vmatpush1.msra.mxu0 0.0
      %4025 = vmatprep.subr.mxu0 0.0
      %4026 = vmatpush1.msra.mxu0 0.0
      %4027 = vmatprep.subr.mxu0 0.0
      %4028 = vmatpush1.msra.mxu0 0.0
      %4029 = vmatprep.subr.mxu0 0.0
      %4030 = vmatpush1.msra.mxu0 0.0
      %4031 = vmatprep.subr.mxu0 0.0
      %4032 = vmatpush1.msra.mxu0 0.0
      %4033 = vmatprep.subr.mxu0 0.0
      %4034 = vmatpush1.msra.mxu0 0.0
      %4035 = vmatprep.subr.mxu0 0.0
      %4036 = vmatpush1.msra.mxu0 0.0
      %4037 = vmatprep.subr.mxu0 0.0
      %4038 = vmatpush1.msra.mxu0 0.0
      %4039 = vmatprep.subr.mxu0 0.0
      %4040 = vmatpush1.msra.mxu0 0.0
      %4041 = vmatprep.subr.mxu0 0.0
      %4042 = vmatpush1.msra.mxu0 0.0
      %4043 = vmatprep.subr.mxu0 0.0
      %4044 = vmatpush1.msra.mxu0 0.0
      %4045 = vmatprep.subr.mxu0 0.0
      %4046 = vmatpush1.msra.mxu0 0.0
      %4047 = vmatprep.subr.mxu0 0.0
      %4048 = vmatpush1.msra.mxu0 0.0
      %4049 = vmatprep.subr.mxu0 0.0
      %4050 = vmatpush1.msra.mxu0 0.0
      %4051 = vmatprep.subr.mxu0 0.0
      %4052 = vmatpush1.msra.mxu0 0.0
      %4053 = vmatprep.subr.mxu0 0.0
      %4054 = vmatpush1.msra.mxu0 0.0
      %4055 = vmatprep.subr.mxu0 0.0
      %4056 = vmatpush1.msra.mxu0 0.0
      %4057 = vmatprep.subr.mxu0 0.0
      %4058 = vmatpush1.msra.mxu0 0.0
      %4059 = vmatprep.subr.mxu0 0.0
      %4060 = vmatpush1.msra.mxu0 0.0
      %4061 = vmatprep.subr.mxu0 0.0
      %4062 = vmatpush1.msra.mxu0 0.0
      %4063 = vmatprep.subr.mxu0 0.0
      %4064 = vmatpush1.msra.mxu0 0.0
      %4065 = vmatprep.subr.mxu0 0.0
      %4066 = vmatpush1.msra.mxu0 0.0
      %4067 = vmatprep.subr.mxu0 0.0
      %4068 = vmatpush1.msra.mxu0 0.0
      %4069 = vmatprep.subr.mxu0 0.0
      %4070 = vmatpush1.msra.mxu0 0.0
      %4071 = vmatprep.subr.mxu0 0.0
      %4072 = vmatpush1.msra.mxu0 0.0
      %4073 = vmatprep.subr.mxu0 0.0
      %4074 = vmatpush1.msra.mxu0 0.0
      %4075 = vmatprep.subr.mxu0 0.0
      %4076 = vmatpush1.msra.mxu0 0.0
      %4077 = vmatprep.mubr.f32.mxu0 0.0
      %4078 = vmatmul.mubr.f32.gmra.mrb[0].mxu0 %v3855
      %v4079 = vpop.f32.mrb[0].mxu0
      %v4080 = vadd.f32 %v3760, %v4079
      %v4081 = vpop.f32.mrb[0].mxu0
      %v4082 = vadd.f32 %v3762, %v4081
      %4083 = vdwg.mxu0
      %4084 = vmatprep.subr.mxu0 0.0
      %4085 = vmatpush1.msra.mxu0 %v3869
      %4086 = vmatprep.subr.mxu0 0.0
      %4087 = vmatpush1.msra.mxu0 0.0
      %4088 = vmatprep.subr.mxu0 0.0
      %4089 = vmatpush1.msra.mxu0 0.0
      %4090 = vmatprep.subr.mxu0 0.0
      %4091 = vmatpush1.msra.mxu0 0.0
      %4092 = vmatprep.subr.mxu0 0.0
      %4093 = vmatpush1.msra.mxu0 0.0
      %4094 = vmatprep.subr.mxu0 0.0
      %4095 = vmatpush1.msra.mxu0 0.0
      %4096 = vmatprep.subr.mxu0 0.0
      %4097 = vmatpush1.msra.mxu0 0.0
      %4098 = vmatprep.subr.mxu0 0.0
      %4099 = vmatpush1.msra.mxu0 0.0
      %4100 = vmatprep.subr.mxu0 0.0
      %4101 = vmatpush1.msra.mxu0 0.0
      %4102 = vmatprep.subr.mxu0 0.0
      %4103 = vmatpush1.msra.mxu0 0.0
      %4104 = vmatprep.subr.mxu0 0.0
      %4105 = vmatpush1.msra.mxu0 0.0
      %4106 = vmatprep.subr.mxu0 0.0
      %4107 = vmatpush1.msra.mxu0 0.0
      %4108 = vmatprep.subr.mxu0 0.0
      %4109 = vmatpush1.msra.mxu0 0.0
      %4110 = vmatprep.subr.mxu0 0.0
      %4111 = vmatpush1.msra.mxu0 0.0
      %4112 = vmatprep.subr.mxu0 0.0
      %4113 = vmatpush1.msra.mxu0 0.0
      %4114 = vmatprep.subr.mxu0 0.0
      %4115 = vmatpush1.msra.mxu0 0.0
      %4116 = vmatprep.subr.mxu0 0.0
      %4117 = vmatpush1.msra.mxu0 0.0
      %4118 = vmatprep.subr.mxu0 0.0
      %4119 = vmatpush1.msra.mxu0 0.0
      %4120 = vmatprep.subr.mxu0 0.0
      %4121 = vmatpush1.msra.mxu0 0.0
      %4122 = vmatprep.subr.mxu0 0.0
      %4123 = vmatpush1.msra.mxu0 0.0
      %4124 = vmatprep.subr.mxu0 0.0
      %4125 = vmatpush1.msra.mxu0 0.0
      %4126 = vmatprep.subr.mxu0 0.0
      %4127 = vmatpush1.msra.mxu0 0.0
      %4128 = vmatprep.subr.mxu0 0.0
      %4129 = vmatpush1.msra.mxu0 0.0
      %4130 = vmatprep.subr.mxu0 0.0
      %4131 = vmatpush1.msra.mxu0 0.0
      %4132 = vmatprep.subr.mxu0 0.0
      %4133 = vmatpush1.msra.mxu0 0.0
      %4134 = vmatprep.subr.mxu0 0.0
      %4135 = vmatpush1.msra.mxu0 0.0
      %4136 = vmatprep.subr.mxu0 0.0
      %4137 = vmatpush1.msra.mxu0 0.0
      %4138 = vmatprep.subr.mxu0 0.0
      %4139 = vmatpush1.msra.mxu0 0.0
      %4140 = vmatprep.subr.mxu0 0.0
      %4141 = vmatpush1.msra.mxu0 0.0
      %4142 = vmatprep.subr.mxu0 0.0
      %4143 = vmatpush1.msra.mxu0 0.0
      %4144 = vmatprep.subr.mxu0 0.0
      %4145 = vmatpush1.msra.mxu0 0.0
      %4146 = vmatprep.subr.mxu0 0.0
      %4147 = vmatpush1.msra.mxu0 0.0
      %4148 = vmatprep.mubr.f32.mxu0 0.0
      %4149 = vmatmul.mubr.f32.gmra.mrb[0].mxu0 %v3855
      %v4150 = vpop.f32.mrb[0].mxu0
      %v4151 = vadd.f32 %v3831, %v4150
      %v4152 = vpop.f32.mrb[0].mxu0
      %4153 = vdwg.mxu0
      %s4154 = scalar_lea.vmem %s4, 16
      %v4155 = vld [vmem:[%s4154] sm:$0xff]
      %4156 = vrot.lane.b32.xlu0 %v431, 18
      %v4157 = vpop.permute.xlu0 %4156
      %4158 = vrot.lane.b32.xlu0 %v444, 18
      %v4159 = vpop.permute.xlu0 %4158
      %4160 = vrot.lane.b32.xlu0 %v432, 18
      %v4161 = vpop.permute.xlu0 %4160
      %4162 = vrot.lane.b32.xlu0 %v445, 18
      %v4163 = vpop.permute.xlu0 %4162
      %4164 = vrot.lane.b32.xlu0 %v433, 18
      %v4165 = vpop.permute.xlu0 %4164
      %4166 = vrot.lane.b32.xlu0 %v446, 18
      %v4167 = vpop.permute.xlu0 %4166
      %4168 = vrot.lane.b32.xlu0 %v434, 18
      %v4169 = vpop.permute.xlu0 %4168
      %4170 = vrot.lane.b32.xlu0 %v447, 18
      %v4171 = vpop.permute.xlu0 %4170
      %v4172 = vsel %vm2174, %v4157, %v4159
      %v4173 = vsel %vm2174, %v4159, %v4161
      %v4174 = vsel %vm2174, %v4161, %v4163
      %v4175 = vsel %vm2174, %v4163, %v4165
      %v4176 = vsel %vm2174, %v4165, %v4167
      %v4177 = vsel %vm2174, %v4167, %v4169
      %v4178 = vsel %vm2174, %v4169, %v4171
      %v4180 = vsel %vm472, %v4155, 0
      %v4182 = vsel %vm476, %v4172, 0
      %v4184 = vsel %vm476, %v4173, 0
      %v4186 = vsel %vm476, %v4174, 0
      %v4188 = vsel %vm476, %v4175, 0
      %v4190 = vsel %vm476, %v4176, 0
      %v4192 = vsel %vm476, %v4177, 0
      %v4194 = vsel %vm476, %v4178, 0
      %4196 = vmatprep.subr.mxu0 %v4184
      %4197 = vmatpush1.msra.mxu0 %v4182
      %4198 = vmatprep.subr.mxu0 0.0
      %4199 = vmatpush1.msra.mxu0 0.0
      %4200 = vmatprep.subr.mxu0 0.0
      %4201 = vmatpush1.msra.mxu0 0.0
      %4202 = vmatprep.subr.mxu0 0.0
      %4203 = vmatpush1.msra.mxu0 0.0
      %4204 = vmatprep.subr.mxu0 0.0
      %4205 = vmatpush1.msra.mxu0 0.0
      %4206 = vmatprep.subr.mxu0 0.0
      %4207 = vmatpush1.msra.mxu0 0.0
      %4208 = vmatprep.subr.mxu0 0.0
      %4209 = vmatpush1.msra.mxu0 0.0
      %4210 = vmatprep.subr.mxu0 0.0
      %4211 = vmatpush1.msra.mxu0 0.0
      %4212 = vmatprep.subr.mxu0 0.0
      %4213 = vmatpush1.msra.mxu0 0.0
      %4214 = vmatprep.subr.mxu0 0.0
      %4215 = vmatpush1.msra.mxu0 0.0
      %4216 = vmatprep.subr.mxu0 0.0
      %4217 = vmatpush1.msra.mxu0 0.0
      %4218 = vmatprep.subr.mxu0 0.0
      %4219 = vmatpush1.msra.mxu0 0.0
      %4220 = vmatprep.subr.mxu0 0.0
      %4221 = vmatpush1.msra.mxu0 0.0
      %4222 = vmatprep.subr.mxu0 0.0
      %4223 = vmatpush1.msra.mxu0 0.0
      %4224 = vmatprep.subr.mxu0 0.0
      %4225 = vmatpush1.msra.mxu0 0.0
      %4226 = vmatprep.subr.mxu0 0.0
      %4227 = vmatpush1.msra.mxu0 0.0
      %4228 = vmatprep.subr.mxu0 0.0
      %4229 = vmatpush1.msra.mxu0 0.0
      %4230 = vmatprep.subr.mxu0 0.0
      %4231 = vmatpush1.msra.mxu0 0.0
      %4232 = vmatprep.subr.mxu0 0.0
      %4233 = vmatpush1.msra.mxu0 0.0
      %4234 = vmatprep.subr.mxu0 0.0
      %4235 = vmatpush1.msra.mxu0 0.0
      %4236 = vmatprep.subr.mxu0 0.0
      %4237 = vmatpush1.msra.mxu0 0.0
      %4238 = vmatprep.subr.mxu0 0.0
      %4239 = vmatpush1.msra.mxu0 0.0
      %4240 = vmatprep.subr.mxu0 0.0
      %4241 = vmatpush1.msra.mxu0 0.0
      %4242 = vmatprep.subr.mxu0 0.0
      %4243 = vmatpush1.msra.mxu0 0.0
      %4244 = vmatprep.subr.mxu0 0.0
      %4245 = vmatpush1.msra.mxu0 0.0
      %4246 = vmatprep.subr.mxu0 0.0
      %4247 = vmatpush1.msra.mxu0 0.0
      %4248 = vmatprep.subr.mxu0 0.0
      %4249 = vmatpush1.msra.mxu0 0.0
      %4250 = vmatprep.subr.mxu0 0.0
      %4251 = vmatpush1.msra.mxu0 0.0
      %4252 = vmatprep.subr.mxu0 0.0
      %4253 = vmatpush1.msra.mxu0 0.0
      %4254 = vmatprep.subr.mxu0 0.0
      %4255 = vmatpush1.msra.mxu0 0.0
      %4256 = vmatprep.subr.mxu0 0.0
      %4257 = vmatpush1.msra.mxu0 0.0
      %4258 = vmatprep.subr.mxu0 0.0
      %4259 = vmatpush1.msra.mxu0 0.0
      %4260 = vmatprep.mubr.f32.mxu0 0.0
      %4261 = vmatmul.mubr.f32.gmra.mrb[0].mxu0 %v4180
      %v4262 = vpop.f32.mrb[0].mxu0
      %v4263 = vadd.f32 0.0, %v4262
      %v4264 = vpop.f32.mrb[0].mxu0
      %v4265 = vadd.f32 0.0, %v4264
      %4266 = vdwg.mxu0
      %4267 = vmatprep.subr.mxu0 %v4188
      %4268 = vmatpush1.msra.mxu0 %v4186
      %4269 = vmatprep.subr.mxu0 0.0
      %4270 = vmatpush1.msra.mxu0 0.0
      %4271 = vmatprep.subr.mxu0 0.0
      %4272 = vmatpush1.msra.mxu0 0.0
      %4273 = vmatprep.subr.mxu0 0.0
      %4274 = vmatpush1.msra.mxu0 0.0
      %4275 = vmatprep.subr.mxu0 0.0
      %4276 = vmatpush1.msra.mxu0 0.0
      %4277 = vmatprep.subr.mxu0 0.0
      %4278 = vmatpush1.msra.mxu0 0.0
      %4279 = vmatprep.subr.mxu0 0.0
      %4280 = vmatpush1.msra.mxu0 0.0
      %4281 = vmatprep.subr.mxu0 0.0
      %4282 = vmatpush1.msra.mxu0 0.0
      %4283 = vmatprep.subr.mxu0 0.0
      %4284 = vmatpush1.msra.mxu0 0.0
      %4285 = vmatprep.subr.mxu0 0.0
      %4286 = vmatpush1.msra.mxu0 0.0
      %4287 = vmatprep.subr.mxu0 0.0
      %4288 = vmatpush1.msra.mxu0 0.0
      %4289 = vmatprep.subr.mxu0 0.0
      %4290 = vmatpush1.msra.mxu0 0.0
      %4291 = vmatprep.subr.mxu0 0.0
      %4292 = vmatpush1.msra.mxu0 0.0
      %4293 = vmatprep.subr.mxu0 0.0
      %4294 = vmatpush1.msra.mxu0 0.0
      %4295 = vmatprep.subr.mxu0 0.0
      %4296 = vmatpush1.msra.mxu0 0.0
      %4297 = vmatprep.subr.mxu0 0.0
      %4298 = vmatpush1.msra.mxu0 0.0
      %4299 = vmatprep.subr.mxu0 0.0
      %4300 = vmatpush1.msra.mxu0 0.0
      %4301 = vmatprep.subr.mxu0 0.0
      %4302 = vmatpush1.msra.mxu0 0.0
      %4303 = vmatprep.subr.mxu0 0.0
      %4304 = vmatpush1.msra.mxu0 0.0
      %4305 = vmatprep.subr.mxu0 0.0
      %4306 = vmatpush1.msra.mxu0 0.0
      %4307 = vmatprep.subr.mxu0 0.0
      %4308 = vmatpush1.msra.mxu0 0.0
      %4309 = vmatprep.subr.mxu0 0.0
      %4310 = vmatpush1.msra.mxu0 0.0
      %4311 = vmatprep.subr.mxu0 0.0
      %4312 = vmatpush1.msra.mxu0 0.0
      %4313 = vmatprep.subr.mxu0 0.0
      %4314 = vmatpush1.msra.mxu0 0.0
      %4315 = vmatprep.subr.mxu0 0.0
      %4316 = vmatpush1.msra.mxu0 0.0
      %4317 = vmatprep.subr.mxu0 0.0
      %4318 = vmatpush1.msra.mxu0 0.0
      %4319 = vmatprep.subr.mxu0 0.0
      %4320 = vmatpush1.msra.mxu0 0.0
      %4321 = vmatprep.subr.mxu0 0.0
      %4322 = vmatpush1.msra.mxu0 0.0
      %4323 = vmatprep.subr.mxu0 0.0
      %4324 = vmatpush1.msra.mxu0 0.0
      %4325 = vmatprep.subr.mxu0 0.0
      %4326 = vmatpush1.msra.mxu0 0.0
      %4327 = vmatprep.subr.mxu0 0.0
      %4328 = vmatpush1.msra.mxu0 0.0
      %4329 = vmatprep.subr.mxu0 0.0
      %4330 = vmatpush1.msra.mxu0 0.0
      %4331 = vmatprep.mubr.f32.mxu0 0.0
      %4332 = vmatmul.mubr.f32.gmra.mrb[0].mxu0 %v4180
      %v4333 = vpop.f32.mrb[0].mxu0
      %v4334 = vadd.f32 0.0, %v4333
      %v4335 = vpop.f32.mrb[0].mxu0
      %v4336 = vadd.f32 0.0, %v4335
      %4337 = vdwg.mxu0
      %4338 = vmatprep.subr.mxu0 %v4192
      %4339 = vmatpush1.msra.mxu0 %v4190
      %4340 = vmatprep.subr.mxu0 0.0
      %4341 = vmatpush1.msra.mxu0 0.0
      %4342 = vmatprep.subr.mxu0 0.0
      %4343 = vmatpush1.msra.mxu0 0.0
      %4344 = vmatprep.subr.mxu0 0.0
      %4345 = vmatpush1.msra.mxu0 0.0
      %4346 = vmatprep.subr.mxu0 0.0
      %4347 = vmatpush1.msra.mxu0 0.0
      %4348 = vmatprep.subr.mxu0 0.0
      %4349 = vmatpush1.msra.mxu0 0.0
      %4350 = vmatprep.subr.mxu0 0.0
      %4351 = vmatpush1.msra.mxu0 0.0
      %4352 = vmatprep.subr.mxu0 0.0
      %4353 = vmatpush1.msra.mxu0 0.0
      %4354 = vmatprep.subr.mxu0 0.0
      %4355 = vmatpush1.msra.mxu0 0.0
      %4356 = vmatprep.subr.mxu0 0.0
      %4357 = vmatpush1.msra.mxu0 0.0
      %4358 = vmatprep.subr.mxu0 0.0
      %4359 = vmatpush1.msra.mxu0 0.0
      %4360 = vmatprep.subr.mxu0 0.0
      %4361 = vmatpush1.msra.mxu0 0.0
      %4362 = vmatprep.subr.mxu0 0.0
      %4363 = vmatpush1.msra.mxu0 0.0
      %4364 = vmatprep.subr.mxu0 0.0
      %4365 = vmatpush1.msra.mxu0 0.0
      %4366 = vmatprep.subr.mxu0 0.0
      %4367 = vmatpush1.msra.mxu0 0.0
      %4368 = vmatprep.subr.mxu0 0.0
      %4369 = vmatpush1.msra.mxu0 0.0
      %4370 = vmatprep.subr.mxu0 0.0
      %4371 = vmatpush1.msra.mxu0 0.0
      %4372 = vmatprep.subr.mxu0 0.0
      %4373 = vmatpush1.msra.mxu0 0.0
      %4374 = vmatprep.subr.mxu0 0.0
      %4375 = vmatpush1.msra.mxu0 0.0
      %4376 = vmatprep.subr.mxu0 0.0
      %4377 = vmatpush1.msra.mxu0 0.0
      %4378 = vmatprep.subr.mxu0 0.0
      %4379 = vmatpush1.msra.mxu0 0.0
      %4380 = vmatprep.subr.mxu0 0.0
      %4381 = vmatpush1.msra.mxu0 0.0
      %4382 = vmatprep.subr.mxu0 0.0
      %4383 = vmatpush1.msra.mxu0 0.0
      %4384 = vmatprep.subr.mxu0 0.0
      %4385 = vmatpush1.msra.mxu0 0.0
      %4386 = vmatprep.subr.mxu0 0.0
      %4387 = vmatpush1.msra.mxu0 0.0
      %4388 = vmatprep.subr.mxu0 0.0
      %4389 = vmatpush1.msra.mxu0 0.0
      %4390 = vmatprep.subr.mxu0 0.0
      %4391 = vmatpush1.msra.mxu0 0.0
      %4392 = vmatprep.subr.mxu0 0.0
      %4393 = vmatpush1.msra.mxu0 0.0
      %4394 = vmatprep.subr.mxu0 0.0
      %4395 = vmatpush1.msra.mxu0 0.0
      %4396 = vmatprep.subr.mxu0 0.0
      %4397 = vmatpush1.msra.mxu0 0.0
      %4398 = vmatprep.subr.mxu0 0.0
      %4399 = vmatpush1.msra.mxu0 0.0
      %4400 = vmatprep.subr.mxu0 0.0
      %4401 = vmatpush1.msra.mxu0 0.0
      %4402 = vmatprep.mubr.f32.mxu0 0.0
      %4403 = vmatmul.mubr.f32.gmra.mrb[0].mxu0 %v4180
      %v4404 = vpop.f32.mrb[0].mxu0
      %v4405 = vadd.f32 0.0, %v4404
      %v4406 = vpop.f32.mrb[0].mxu0
      %v4407 = vadd.f32 0.0, %v4406
      %4408 = vdwg.mxu0
      %4409 = vmatprep.subr.mxu0 0.0
      %4410 = vmatpush1.msra.mxu0 %v4194
      %4411 = vmatprep.subr.mxu0 0.0
      %4412 = vmatpush1.msra.mxu0 0.0
      %4413 = vmatprep.subr.mxu0 0.0
      %4414 = vmatpush1.msra.mxu0 0.0
      %4415 = vmatprep.subr.mxu0 0.0
      %4416 = vmatpush1.msra.mxu0 0.0
      %4417 = vmatprep.subr.mxu0 0.0
      %4418 = vmatpush1.msra.mxu0 0.0
      %4419 = vmatprep.subr.mxu0 0.0
      %4420 = vmatpush1.msra.mxu0 0.0
      %4421 = vmatprep.subr.mxu0 0.0
      %4422 = vmatpush1.msra.mxu0 0.0
      %4423 = vmatprep.subr.mxu0 0.0
      %4424 = vmatpush1.msra.mxu0 0.0
      %4425 = vmatprep.subr.mxu0 0.0
      %4426 = vmatpush1.msra.mxu0 0.0
      %4427 = vmatprep.subr.mxu0 0.0
      %4428 = vmatpush1.msra.mxu0 0.0
      %4429 = vmatprep.subr.mxu0 0.0
      %4430 = vmatpush1.msra.mxu0 0.0
      %4431 = vmatprep.subr.mxu0 0.0
      %4432 = vmatpush1.msra.mxu0 0.0
      %4433 = vmatprep.subr.mxu0 0.0
      %4434 = vmatpush1.msra.mxu0 0.0
      %4435 = vmatprep.subr.mxu0 0.0
      %4436 = vmatpush1.msra.mxu0 0.0
      %4437 = vmatprep.subr.mxu0 0.0
      %4438 = vmatpush1.msra.mxu0 0.0
      %4439 = vmatprep.subr.mxu0 0.0
      %4440 = vmatpush1.msra.mxu0 0.0
      %4441 = vmatprep.subr.mxu0 0.0
      %4442 = vmatpush1.msra.mxu0 0.0
      %4443 = vmatprep.subr.mxu0 0.0
      %4444 = vmatpush1.msra.mxu0 0.0
      %4445 = vmatprep.subr.mxu0 0.0
      %4446 = vmatpush1.msra.mxu0 0.0
      %4447 = vmatprep.subr.mxu0 0.0
      %4448 = vmatpush1.msra.mxu0 0.0
      %4449 = vmatprep.subr.mxu0 0.0
      %4450 = vmatpush1.msra.mxu0 0.0
      %4451 = vmatprep.subr.mxu0 0.0
      %4452 = vmatpush1.msra.mxu0 0.0
      %4453 = vmatprep.subr.mxu0 0.0
      %4454 = vmatpush1.msra.mxu0 0.0
      %4455 = vmatprep.subr.mxu0 0.0
      %4456 = vmatpush1.msra.mxu0 0.0
      %4457 = vmatprep.subr.mxu0 0.0
      %4458 = vmatpush1.msra.mxu0 0.0
      %4459 = vmatprep.subr.mxu0 0.0
      %4460 = vmatpush1.msra.mxu0 0.0
      %4461 = vmatprep.subr.mxu0 0.0
      %4462 = vmatpush1.msra.mxu0 0.0
      %4463 = vmatprep.subr.mxu0 0.0
      %4464 = vmatpush1.msra.mxu0 0.0
      %4465 = vmatprep.subr.mxu0 0.0
      %4466 = vmatpush1.msra.mxu0 0.0
      %4467 = vmatprep.subr.mxu0 0.0
      %4468 = vmatpush1.msra.mxu0 0.0
      %4469 = vmatprep.subr.mxu0 0.0
      %4470 = vmatpush1.msra.mxu0 0.0
      %4471 = vmatprep.subr.mxu0 0.0
      %4472 = vmatpush1.msra.mxu0 0.0
      %4473 = vmatprep.mubr.f32.mxu0 0.0
      %4474 = vmatmul.mubr.f32.gmra.mrb[0].mxu0 %v4180
      %v4475 = vpop.f32.mrb[0].mxu0
      %v4476 = vadd.f32 0.0, %v4475
      %v4477 = vpop.f32.mrb[0].mxu0
      %4478 = vdwg.mxu0
      %v4479 = vadd.f32 %v3938, %v4263
      %v4480 = vadd.f32 %v3940, %v4265
      %v4481 = vadd.f32 %v4009, %v4334
      %v4482 = vadd.f32 %v4011, %v4336
      %v4483 = vadd.f32 %v4080, %v4405
      %v4484 = vadd.f32 %v4082, %v4407
      %v4485 = vadd.f32 %v4151, %v4476
      %4487 = vset.pattern.permute.xlu0 0
      %4488 = vperm.xlu0 %4487, %v3544
      %v4489 = vpop.permute.xlu0 %4488
      %v4491 = vadd.f32 %v4479, %v4489
      %v4492 = vadd.f32 %v4480, %v4489
      %v4493 = vadd.f32 %v4481, %v4489
      %v4494 = vadd.f32 %v4482, %v4489
      %v4495 = vadd.f32 %v4483, %v4489
      %v4496 = vadd.f32 %v4484, %v4489
      %v4497 = vadd.f32 %v4485, %v4489
      %v4498 = vmul.f32 %v4491, %v1420
      %v4499 = vmul.f32 %v4492, %v1424
      %v4500 = vmul.f32 %v4493, %v1428
      %v4501 = vmul.f32 %v4494, %v1432
      %v4502 = vmul.f32 %v4495, %v1436
      %v4503 = vmul.f32 %v4496, %v1440
      %v4504 = vmul.f32 %v4497, %v1444
      %4512 = vrot.lane.b32.xlu0 %v4498, 100
      %v4513 = vpop.permute.xlu0 %4512
      %4514 = vrot.lane.b32.xlu0 %v4499, 100
      %v4515 = vpop.permute.xlu0 %4514
      %4516 = vrot.lane.b32.xlu0 %v4500, 100
      %v4517 = vpop.permute.xlu0 %4516
      %4518 = vrot.lane.b32.xlu0 %v4501, 100
      %v4519 = vpop.permute.xlu0 %4518
      %4520 = vrot.lane.b32.xlu0 %v4502, 100
      %v4521 = vpop.permute.xlu0 %4520
      %4522 = vrot.lane.b32.xlu0 %v4503, 100
      %v4523 = vpop.permute.xlu0 %4522
      %4524 = vrot.lane.b32.xlu0 %v4504, 100
      %v4525 = vpop.permute.xlu0 %4524
      %v4526 = vsel %vm1480, %v4513, %v4515
      %v4527 = vsel %vm1480, %v4515, %v4517
      %v4528 = vsel %vm1480, %v4517, %v4519
      %v4529 = vsel %vm1480, %v4519, %v4521
      %v4530 = vsel %vm1480, %v4521, %v4523
      %v4531 = vsel %vm1480, %v4523, %v4525
      %4540 = vst.msk [vmem:[#allocation2] sm:$0xff] %vm1495, %v4513
      %4541 = vst [vmem:[#allocation2 + $0x8] sm:$0xff] %v4526
      %4542 = vst [vmem:[#allocation2 + $0x10] sm:$0xff] %v4527
      %4543 = vst [vmem:[#allocation2 + $0x18] sm:$0xff] %v4528
      %4544 = vst [vmem:[#allocation2 + $0x20] sm:$0xff] %v4529
      %4545 = vst [vmem:[#allocation2 + $0x28] sm:$0xff] %v4530
      %4546 = vst [vmem:[#allocation2 + $0x30] sm:$0xff] %v4531
      %4547 = vst.msk [vmem:[#allocation2 + $0x38] sm:$0xff] %vm472, %v4525
      %s4548 = scalar_lea.vmem %s10, 32
      %v4549 = vld [vmem:[%s4548] sm:$0xff]
      %v4550 = vld [vmem:[%s5] sm:$0xff]
      %v4551 = vld [vmem:[#allocation2] sm:$0xff]
      %v4552 = vld [vmem:[#allocation2 + $0x8] sm:$0xff]
      %v4553 = vld [vmem:[#allocation2 + $0x10] sm:$0xff]
      %v4554 = vld [vmem:[#allocation2 + $0x18] sm:$0xff]
      %v4555 = vld [vmem:[#allocation2 + $0x20] sm:$0xff]
      %v4556 = vld [vmem:[#allocation2 + $0x28] sm:$0xff]
      %v4557 = vld [vmem:[#allocation2 + $0x30] sm:$0xff]
      %s4558 = scalar_lea.vmem %s5, 8
      %v4559 = vld [vmem:[%s4558] sm:$0xff]
      %v4560 = vld [vmem:[#allocation2 + $0x38] sm:$0xff]
      %4569 = vrot.lane.b32.xlu0 %v4551, 28
      %v4570 = vpop.permute.xlu0 %4569
      %4571 = vrot.lane.b32.xlu0 %v4552, 28
      %v4572 = vpop.permute.xlu0 %4571
      %4573 = vrot.lane.b32.xlu0 %v4553, 28
      %v4574 = vpop.permute.xlu0 %4573
      %4575 = vrot.lane.b32.xlu0 %v4554, 28
      %v4576 = vpop.permute.xlu0 %4575
      %4577 = vrot.lane.b32.xlu0 %v4555, 28
      %v4578 = vpop.permute.xlu0 %4577
      %4579 = vrot.lane.b32.xlu0 %v4556, 28
      %v4580 = vpop.permute.xlu0 %4579
      %4581 = vrot.lane.b32.xlu0 %v4557, 28
      %v4582 = vpop.permute.xlu0 %4581
      %4583 = vrot.lane.b32.xlu0 %v4560, 28
      %v4584 = vpop.permute.xlu0 %4583
      %v4585 = vsel %vm464, %v4570, %v4572
      %v4586 = vsel %vm464, %v4572, %v4574
      %v4587 = vsel %vm464, %v4574, %v4576
      %v4588 = vsel %vm464, %v4576, %v4578
      %v4589 = vsel %vm464, %v4578, %v4580
      %v4590 = vsel %vm464, %v4580, %v4582
      %v4591 = vsel %vm464, %v4582, %v4584
      %v4600 = vsel %vm1555, %v4559, 0
      %4602 = vmatprep.subr.mxu0 %v4586
      %4603 = vmatpush1.msra.mxu0 %v4585
      %4604 = vmatprep.subr.mxu0 0.0
      %4605 = vmatpush1.msra.mxu0 0.0
      %4606 = vmatprep.subr.mxu0 0.0
      %4607 = vmatpush1.msra.mxu0 0.0
      %4608 = vmatprep.subr.mxu0 0.0
      %4609 = vmatpush1.msra.mxu0 0.0
      %4610 = vmatprep.subr.mxu0 0.0
      %4611 = vmatpush1.msra.mxu0 0.0
      %4612 = vmatprep.subr.mxu0 0.0
      %4613 = vmatpush1.msra.mxu0 0.0
      %4614 = vmatprep.subr.mxu0 0.0
      %4615 = vmatpush1.msra.mxu0 0.0
      %4616 = vmatprep.subr.mxu0 0.0
      %4617 = vmatpush1.msra.mxu0 0.0
      %4618 = vmatprep.subr.mxu0 0.0
      %4619 = vmatpush1.msra.mxu0 0.0
      %4620 = vmatprep.subr.mxu0 0.0
      %4621 = vmatpush1.msra.mxu0 0.0
      %4622 = vmatprep.subr.mxu0 0.0
      %4623 = vmatpush1.msra.mxu0 0.0
      %4624 = vmatprep.subr.mxu0 0.0
      %4625 = vmatpush1.msra.mxu0 0.0
      %4626 = vmatprep.subr.mxu0 0.0
      %4627 = vmatpush1.msra.mxu0 0.0
      %4628 = vmatprep.subr.mxu0 0.0
      %4629 = vmatpush1.msra.mxu0 0.0
      %4630 = vmatprep.subr.mxu0 0.0
      %4631 = vmatpush1.msra.mxu0 0.0
      %4632 = vmatprep.subr.mxu0 0.0
      %4633 = vmatpush1.msra.mxu0 0.0
      %4634 = vmatprep.subr.mxu0 0.0
      %4635 = vmatpush1.msra.mxu0 0.0
      %4636 = vmatprep.subr.mxu0 0.0
      %4637 = vmatpush1.msra.mxu0 0.0
      %4638 = vmatprep.subr.mxu0 0.0
      %4639 = vmatpush1.msra.mxu0 0.0
      %4640 = vmatprep.subr.mxu0 0.0
      %4641 = vmatpush1.msra.mxu0 0.0
      %4642 = vmatprep.subr.mxu0 0.0
      %4643 = vmatpush1.msra.mxu0 0.0
      %4644 = vmatprep.subr.mxu0 0.0
      %4645 = vmatpush1.msra.mxu0 0.0
      %4646 = vmatprep.subr.mxu0 0.0
      %4647 = vmatpush1.msra.mxu0 0.0
      %4648 = vmatprep.subr.mxu0 0.0
      %4649 = vmatpush1.msra.mxu0 0.0
      %4650 = vmatprep.subr.mxu0 0.0
      %4651 = vmatpush1.msra.mxu0 0.0
      %4652 = vmatprep.subr.mxu0 0.0
      %4653 = vmatpush1.msra.mxu0 0.0
      %4654 = vmatprep.subr.mxu0 0.0
      %4655 = vmatpush1.msra.mxu0 0.0
      %4656 = vmatprep.subr.mxu0 0.0
      %4657 = vmatpush1.msra.mxu0 0.0
      %4658 = vmatprep.subr.mxu0 0.0
      %4659 = vmatpush1.msra.mxu0 0.0
      %4660 = vmatprep.subr.mxu0 0.0
      %4661 = vmatpush1.msra.mxu0 0.0
      %4662 = vmatprep.subr.mxu0 0.0
      %4663 = vmatpush1.msra.mxu0 0.0
      %4664 = vmatprep.subr.mxu0 0.0
      %4665 = vmatpush1.msra.mxu0 0.0
      %4666 = vmatprep.mubr.f32.mxu0 0.0
      %4667 = vmatmul.mubr.f32.gmra.mrb[0].mxu0 %v4600
      %v4668 = vpop.f32.mrb[0].mxu0
      %v4669 = vadd.f32 0.0, %v4668
      %v4670 = vpop.f32.mrb[0].mxu0
      %v4671 = vadd.f32 0.0, %v4670
      %4672 = vdwg.mxu0
      %4673 = vmatprep.subr.mxu0 %v4588
      %4674 = vmatpush1.msra.mxu0 %v4587
      %4675 = vmatprep.subr.mxu0 0.0
      %4676 = vmatpush1.msra.mxu0 0.0
      %4677 = vmatprep.subr.mxu0 0.0
      %4678 = vmatpush1.msra.mxu0 0.0
      %4679 = vmatprep.subr.mxu0 0.0
      %4680 = vmatpush1.msra.mxu0 0.0
      %4681 = vmatprep.subr.mxu0 0.0
      %4682 = vmatpush1.msra.mxu0 0.0
      %4683 = vmatprep.subr.mxu0 0.0
      %4684 = vmatpush1.msra.mxu0 0.0
      %4685 = vmatprep.subr.mxu0 0.0
      %4686 = vmatpush1.msra.mxu0 0.0
      %4687 = vmatprep.subr.mxu0 0.0
      %4688 = vmatpush1.msra.mxu0 0.0
      %4689 = vmatprep.subr.mxu0 0.0
      %4690 = vmatpush1.msra.mxu0 0.0
      %4691 = vmatprep.subr.mxu0 0.0
      %4692 = vmatpush1.msra.mxu0 0.0
      %4693 = vmatprep.subr.mxu0 0.0
      %4694 = vmatpush1.msra.mxu0 0.0
      %4695 = vmatprep.subr.mxu0 0.0
      %4696 = vmatpush1.msra.mxu0 0.0
      %4697 = vmatprep.subr.mxu0 0.0
      %4698 = vmatpush1.msra.mxu0 0.0
      %4699 = vmatprep.subr.mxu0 0.0
      %4700 = vmatpush1.msra.mxu0 0.0
      %4701 = vmatprep.subr.mxu0 0.0
      %4702 = vmatpush1.msra.mxu0 0.0
      %4703 = vmatprep.subr.mxu0 0.0
      %4704 = vmatpush1.msra.mxu0 0.0
      %4705 = vmatprep.subr.mxu0 0.0
      %4706 = vmatpush1.msra.mxu0 0.0
      %4707 = vmatprep.subr.mxu0 0.0
      %4708 = vmatpush1.msra.mxu0 0.0
      %4709 = vmatprep.subr.mxu0 0.0
      %4710 = vmatpush1.msra.mxu0 0.0
      %4711 = vmatprep.subr.mxu0 0.0
      %4712 = vmatpush1.msra.mxu0 0.0
      %4713 = vmatprep.subr.mxu0 0.0
      %4714 = vmatpush1.msra.mxu0 0.0
      %4715 = vmatprep.subr.mxu0 0.0
      %4716 = vmatpush1.msra.mxu0 0.0
      %4717 = vmatprep.subr.mxu0 0.0
      %4718 = vmatpush1.msra.mxu0 0.0
      %4719 = vmatprep.subr.mxu0 0.0
      %4720 = vmatpush1.msra.mxu0 0.0
      %4721 = vmatprep.subr.mxu0 0.0
      %4722 = vmatpush1.msra.mxu0 0.0
      %4723 = vmatprep.subr.mxu0 0.0
      %4724 = vmatpush1.msra.mxu0 0.0
      %4725 = vmatprep.subr.mxu0 0.0
      %4726 = vmatpush1.msra.mxu0 0.0
      %4727 = vmatprep.subr.mxu0 0.0
      %4728 = vmatpush1.msra.mxu0 0.0
      %4729 = vmatprep.subr.mxu0 0.0
      %4730 = vmatpush1.msra.mxu0 0.0
      %4731 = vmatprep.subr.mxu0 0.0
      %4732 = vmatpush1.msra.mxu0 0.0
      %4733 = vmatprep.subr.mxu0 0.0
      %4734 = vmatpush1.msra.mxu0 0.0
      %4735 = vmatprep.subr.mxu0 0.0
      %4736 = vmatpush1.msra.mxu0 0.0
      %4737 = vmatprep.mubr.f32.mxu0 0.0
      %4738 = vmatmul.mubr.f32.gmra.mrb[0].mxu0 %v4600
      %v4739 = vpop.f32.mrb[0].mxu0
      %v4740 = vadd.f32 0.0, %v4739
      %v4741 = vpop.f32.mrb[0].mxu0
      %v4742 = vadd.f32 0.0, %v4741
      %4743 = vdwg.mxu0
      %4744 = vmatprep.subr.mxu0 %v4590
      %4745 = vmatpush1.msra.mxu0 %v4589
      %4746 = vmatprep.subr.mxu0 0.0
      %4747 = vmatpush1.msra.mxu0 0.0
      %4748 = vmatprep.subr.mxu0 0.0
      %4749 = vmatpush1.msra.mxu0 0.0
      %4750 = vmatprep.subr.mxu0 0.0
      %4751 = vmatpush1.msra.mxu0 0.0
      %4752 = vmatprep.subr.mxu0 0.0
      %4753 = vmatpush1.msra.mxu0 0.0
      %4754 = vmatprep.subr.mxu0 0.0
      %4755 = vmatpush1.msra.mxu0 0.0
      %4756 = vmatprep.subr.mxu0 0.0
      %4757 = vmatpush1.msra.mxu0 0.0
      %4758 = vmatprep.subr.mxu0 0.0
      %4759 = vmatpush1.msra.mxu0 0.0
      %4760 = vmatprep.subr.mxu0 0.0
      %4761 = vmatpush1.msra.mxu0 0.0
      %4762 = vmatprep.subr.mxu0 0.0
      %4763 = vmatpush1.msra.mxu0 0.0
      %4764 = vmatprep.subr.mxu0 0.0
      %4765 = vmatpush1.msra.mxu0 0.0
      %4766 = vmatprep.subr.mxu0 0.0
      %4767 = vmatpush1.msra.mxu0 0.0
      %4768 = vmatprep.subr.mxu0 0.0
      %4769 = vmatpush1.msra.mxu0 0.0
      %4770 = vmatprep.subr.mxu0 0.0
      %4771 = vmatpush1.msra.mxu0 0.0
      %4772 = vmatprep.subr.mxu0 0.0
      %4773 = vmatpush1.msra.mxu0 0.0
      %4774 = vmatprep.subr.mxu0 0.0
      %4775 = vmatpush1.msra.mxu0 0.0
      %4776 = vmatprep.subr.mxu0 0.0
      %4777 = vmatpush1.msra.mxu0 0.0
      %4778 = vmatprep.subr.mxu0 0.0
      %4779 = vmatpush1.msra.mxu0 0.0
      %4780 = vmatprep.subr.mxu0 0.0
      %4781 = vmatpush1.msra.mxu0 0.0
      %4782 = vmatprep.subr.mxu0 0.0
      %4783 = vmatpush1.msra.mxu0 0.0
      %4784 = vmatprep.subr.mxu0 0.0
      %4785 = vmatpush1.msra.mxu0 0.0
      %4786 = vmatprep.subr.mxu0 0.0
      %4787 = vmatpush1.msra.mxu0 0.0
      %4788 = vmatprep.subr.mxu0 0.0
      %4789 = vmatpush1.msra.mxu0 0.0
      %4790 = vmatprep.subr.mxu0 0.0
      %4791 = vmatpush1.msra.mxu0 0.0
      %4792 = vmatprep.subr.mxu0 0.0
      %4793 = vmatpush1.msra.mxu0 0.0
      %4794 = vmatprep.subr.mxu0 0.0
      %4795 = vmatpush1.msra.mxu0 0.0
      %4796 = vmatprep.subr.mxu0 0.0
      %4797 = vmatpush1.msra.mxu0 0.0
      %4798 = vmatprep.subr.mxu0 0.0
      %4799 = vmatpush1.msra.mxu0 0.0
      %4800 = vmatprep.subr.mxu0 0.0
      %4801 = vmatpush1.msra.mxu0 0.0
      %4802 = vmatprep.subr.mxu0 0.0
      %4803 = vmatpush1.msra.mxu0 0.0
      %4804 = vmatprep.subr.mxu0 0.0
      %4805 = vmatpush1.msra.mxu0 0.0
      %4806 = vmatprep.subr.mxu0 0.0
      %4807 = vmatpush1.msra.mxu0 0.0
      %4808 = vmatprep.mubr.f32.mxu0 0.0
      %4809 = vmatmul.mubr.f32.gmra.mrb[0].mxu0 %v4600
      %v4810 = vpop.f32.mrb[0].mxu0
      %v4811 = vadd.f32 0.0, %v4810
      %v4812 = vpop.f32.mrb[0].mxu0
      %v4813 = vadd.f32 0.0, %v4812
      %4814 = vdwg.mxu0
      %4815 = vmatprep.subr.mxu0 0.0
      %4816 = vmatpush1.msra.mxu0 %v4591
      %4817 = vmatprep.subr.mxu0 0.0
      %4818 = vmatpush1.msra.mxu0 0.0
      %4819 = vmatprep.subr.mxu0 0.0
      %4820 = vmatpush1.msra.mxu0 0.0
      %4821 = vmatprep.subr.mxu0 0.0
      %4822 = vmatpush1.msra.mxu0 0.0
      %4823 = vmatprep.subr.mxu0 0.0
      %4824 = vmatpush1.msra.mxu0 0.0
      %4825 = vmatprep.subr.mxu0 0.0
      %4826 = vmatpush1.msra.mxu0 0.0
      %4827 = vmatprep.subr.mxu0 0.0
      %4828 = vmatpush1.msra.mxu0 0.0
      %4829 = vmatprep.subr.mxu0 0.0
      %4830 = vmatpush1.msra.mxu0 0.0
      %4831 = vmatprep.subr.mxu0 0.0
      %4832 = vmatpush1.msra.mxu0 0.0
      %4833 = vmatprep.subr.mxu0 0.0
      %4834 = vmatpush1.msra.mxu0 0.0
      %4835 = vmatprep.subr.mxu0 0.0
      %4836 = vmatpush1.msra.mxu0 0.0
      %4837 = vmatprep.subr.mxu0 0.0
      %4838 = vmatpush1.msra.mxu0 0.0
      %4839 = vmatprep.subr.mxu0 0.0
      %4840 = vmatpush1.msra.mxu0 0.0
      %4841 = vmatprep.subr.mxu0 0.0
      %4842 = vmatpush1.msra.mxu0 0.0
      %4843 = vmatprep.subr.mxu0 0.0
      %4844 = vmatpush1.msra.mxu0 0.0
      %4845 = vmatprep.subr.mxu0 0.0
      %4846 = vmatpush1.msra.mxu0 0.0
      %4847 = vmatprep.subr.mxu0 0.0
      %4848 = vmatpush1.msra.mxu0 0.0
      %4849 = vmatprep.subr.mxu0 0.0
      %4850 = vmatpush1.msra.mxu0 0.0
      %4851 = vmatprep.subr.mxu0 0.0
      %4852 = vmatpush1.msra.mxu0 0.0
      %4853 = vmatprep.subr.mxu0 0.0
      %4854 = vmatpush1.msra.mxu0 0.0
      %4855 = vmatprep.subr.mxu0 0.0
      %4856 = vmatpush1.msra.mxu0 0.0
      %4857 = vmatprep.subr.mxu0 0.0
      %4858 = vmatpush1.msra.mxu0 0.0
      %4859 = vmatprep.subr.mxu0 0.0
      %4860 = vmatpush1.msra.mxu0 0.0
      %4861 = vmatprep.subr.mxu0 0.0
      %4862 = vmatpush1.msra.mxu0 0.0
      %4863 = vmatprep.subr.mxu0 0.0
      %4864 = vmatpush1.msra.mxu0 0.0
      %4865 = vmatprep.subr.mxu0 0.0
      %4866 = vmatpush1.msra.mxu0 0.0
      %4867 = vmatprep.subr.mxu0 0.0
      %4868 = vmatpush1.msra.mxu0 0.0
      %4869 = vmatprep.subr.mxu0 0.0
      %4870 = vmatpush1.msra.mxu0 0.0
      %4871 = vmatprep.subr.mxu0 0.0
      %4872 = vmatpush1.msra.mxu0 0.0
      %4873 = vmatprep.subr.mxu0 0.0
      %4874 = vmatpush1.msra.mxu0 0.0
      %4875 = vmatprep.subr.mxu0 0.0
      %4876 = vmatpush1.msra.mxu0 0.0
      %4877 = vmatprep.subr.mxu0 0.0
      %4878 = vmatpush1.msra.mxu0 0.0
      %4879 = vmatprep.mubr.f32.mxu0 0.0
      %4880 = vmatmul.mubr.f32.gmra.mrb[0].mxu0 %v4600
      %v4881 = vpop.f32.mrb[0].mxu0
      %v4882 = vadd.f32 0.0, %v4881
      %v4883 = vpop.f32.mrb[0].mxu0
      %4884 = vdwg.mxu0
      %v4886 = vsel %vm1555, %v4550, 0
      %4888 = vmatprep.subr.mxu0 %v4552
      %4889 = vmatpush1.msra.mxu0 %v4551
      %4890 = vmatprep.subr.mxu0 0.0
      %4891 = vmatpush1.msra.mxu0 0.0
      %4892 = vmatprep.subr.mxu0 0.0
      %4893 = vmatpush1.msra.mxu0 0.0
      %4894 = vmatprep.subr.mxu0 0.0
      %4895 = vmatpush1.msra.mxu0 0.0
      %4896 = vmatprep.subr.mxu0 0.0
      %4897 = vmatpush1.msra.mxu0 0.0
      %4898 = vmatprep.subr.mxu0 0.0
      %4899 = vmatpush1.msra.mxu0 0.0
      %4900 = vmatprep.subr.mxu0 0.0
      %4901 = vmatpush1.msra.mxu0 0.0
      %4902 = vmatprep.subr.mxu0 0.0
      %4903 = vmatpush1.msra.mxu0 0.0
      %4904 = vmatprep.subr.mxu0 0.0
      %4905 = vmatpush1.msra.mxu0 0.0
      %4906 = vmatprep.subr.mxu0 0.0
      %4907 = vmatpush1.msra.mxu0 0.0
      %4908 = vmatprep.subr.mxu0 0.0
      %4909 = vmatpush1.msra.mxu0 0.0
      %4910 = vmatprep.subr.mxu0 0.0
      %4911 = vmatpush1.msra.mxu0 0.0
      %4912 = vmatprep.subr.mxu0 0.0
      %4913 = vmatpush1.msra.mxu0 0.0
      %4914 = vmatprep.subr.mxu0 0.0
      %4915 = vmatpush1.msra.mxu0 0.0
      %4916 = vmatprep.subr.mxu0 0.0
      %4917 = vmatpush1.msra.mxu0 0.0
      %4918 = vmatprep.subr.mxu0 0.0
      %4919 = vmatpush1.msra.mxu0 0.0
      %4920 = vmatprep.subr.mxu0 0.0
      %4921 = vmatpush1.msra.mxu0 0.0
      %4922 = vmatprep.subr.mxu0 0.0
      %4923 = vmatpush1.msra.mxu0 0.0
      %4924 = vmatprep.subr.mxu0 0.0
      %4925 = vmatpush1.msra.mxu0 0.0
      %4926 = vmatprep.subr.mxu0 0.0
      %4927 = vmatpush1.msra.mxu0 0.0
      %4928 = vmatprep.subr.mxu0 0.0
      %4929 = vmatpush1.msra.mxu0 0.0
      %4930 = vmatprep.subr.mxu0 0.0
      %4931 = vmatpush1.msra.mxu0 0.0
      %4932 = vmatprep.subr.mxu0 0.0
      %4933 = vmatpush1.msra.mxu0 0.0
      %4934 = vmatprep.subr.mxu0 0.0
      %4935 = vmatpush1.msra.mxu0 0.0
      %4936 = vmatprep.subr.mxu0 0.0
      %4937 = vmatpush1.msra.mxu0 0.0
      %4938 = vmatprep.subr.mxu0 0.0
      %4939 = vmatpush1.msra.mxu0 0.0
      %4940 = vmatprep.subr.mxu0 0.0
      %4941 = vmatpush1.msra.mxu0 0.0
      %4942 = vmatprep.subr.mxu0 0.0
      %4943 = vmatpush1.msra.mxu0 0.0
      %4944 = vmatprep.subr.mxu0 0.0
      %4945 = vmatpush1.msra.mxu0 0.0
      %4946 = vmatprep.subr.mxu0 0.0
      %4947 = vmatpush1.msra.mxu0 0.0
      %4948 = vmatprep.subr.mxu0 0.0
      %4949 = vmatpush1.msra.mxu0 0.0
      %4950 = vmatprep.subr.mxu0 0.0
      %4951 = vmatpush1.msra.mxu0 0.0
      %4952 = vmatprep.mubr.f32.mxu0 0.0
      %4953 = vmatmul.mubr.f32.gmra.mrb[0].mxu0 %v4886
      %v4954 = vpop.f32.mrb[0].mxu0
      %v4955 = vadd.f32 %v4669, %v4954
      %v4956 = vpop.f32.mrb[0].mxu0
      %v4957 = vadd.f32 %v4671, %v4956
      %4958 = vdwg.mxu0
      %4959 = vmatprep.subr.mxu0 %v4554
      %4960 = vmatpush1.msra.mxu0 %v4553
      %4961 = vmatprep.subr.mxu0 0.0
      %4962 = vmatpush1.msra.mxu0 0.0
      %4963 = vmatprep.subr.mxu0 0.0
      %4964 = vmatpush1.msra.mxu0 0.0
      %4965 = vmatprep.subr.mxu0 0.0
      %4966 = vmatpush1.msra.mxu0 0.0
      %4967 = vmatprep.subr.mxu0 0.0
      %4968 = vmatpush1.msra.mxu0 0.0
      %4969 = vmatprep.subr.mxu0 0.0
      %4970 = vmatpush1.msra.mxu0 0.0
      %4971 = vmatprep.subr.mxu0 0.0
      %4972 = vmatpush1.msra.mxu0 0.0
      %4973 = vmatprep.subr.mxu0 0.0
      %4974 = vmatpush1.msra.mxu0 0.0
      %4975 = vmatprep.subr.mxu0 0.0
      %4976 = vmatpush1.msra.mxu0 0.0
      %4977 = vmatprep.subr.mxu0 0.0
      %4978 = vmatpush1.msra.mxu0 0.0
      %4979 = vmatprep.subr.mxu0 0.0
      %4980 = vmatpush1.msra.mxu0 0.0
      %4981 = vmatprep.subr.mxu0 0.0
      %4982 = vmatpush1.msra.mxu0 0.0
      %4983 = vmatprep.subr.mxu0 0.0
      %4984 = vmatpush1.msra.mxu0 0.0
      %4985 = vmatprep.subr.mxu0 0.0
      %4986 = vmatpush1.msra.mxu0 0.0
      %4987 = vmatprep.subr.mxu0 0.0
      %4988 = vmatpush1.msra.mxu0 0.0
      %4989 = vmatprep.subr.mxu0 0.0
      %4990 = vmatpush1.msra.mxu0 0.0
      %4991 = vmatprep.subr.mxu0 0.0
      %4992 = vmatpush1.msra.mxu0 0.0
      %4993 = vmatprep.subr.mxu0 0.0
      %4994 = vmatpush1.msra.mxu0 0.0
      %4995 = vmatprep.subr.mxu0 0.0
      %4996 = vmatpush1.msra.mxu0 0.0
      %4997 = vmatprep.subr.mxu0 0.0
      %4998 = vmatpush1.msra.mxu0 0.0
      %4999 = vmatprep.subr.mxu0 0.0
      %5000 = vmatpush1.msra.mxu0 0.0
      %5001 = vmatprep.subr.mxu0 0.0
      %5002 = vmatpush1.msra.mxu0 0.0
      %5003 = vmatprep.subr.mxu0 0.0
      %5004 = vmatpush1.msra.mxu0 0.0
      %5005 = vmatprep.subr.mxu0 0.0
      %5006 = vmatpush1.msra.mxu0 0.0
      %5007 = vmatprep.subr.mxu0 0.0
      %5008 = vmatpush1.msra.mxu0 0.0
      %5009 = vmatprep.subr.mxu0 0.0
      %5010 = vmatpush1.msra.mxu0 0.0
      %5011 = vmatprep.subr.mxu0 0.0
      %5012 = vmatpush1.msra.mxu0 0.0
      %5013 = vmatprep.subr.mxu0 0.0
      %5014 = vmatpush1.msra.mxu0 0.0
      %5015 = vmatprep.subr.mxu0 0.0
      %5016 = vmatpush1.msra.mxu0 0.0
      %5017 = vmatprep.subr.mxu0 0.0
      %5018 = vmatpush1.msra.mxu0 0.0
      %5019 = vmatprep.subr.mxu0 0.0
      %5020 = vmatpush1.msra.mxu0 0.0
      %5021 = vmatprep.subr.mxu0 0.0
      %5022 = vmatpush1.msra.mxu0 0.0
      %5023 = vmatprep.mubr.f32.mxu0 0.0
      %5024 = vmatmul.mubr.f32.gmra.mrb[0].mxu0 %v4886
      %v5025 = vpop.f32.mrb[0].mxu0
      %v5026 = vadd.f32 %v4740, %v5025
      %v5027 = vpop.f32.mrb[0].mxu0
      %v5028 = vadd.f32 %v4742, %v5027
      %5029 = vdwg.mxu0
      %5030 = vmatprep.subr.mxu0 %v4556
      %5031 = vmatpush1.msra.mxu0 %v4555
      %5032 = vmatprep.subr.mxu0 0.0
      %5033 = vmatpush1.msra.mxu0 0.0
      %5034 = vmatprep.subr.mxu0 0.0
      %5035 = vmatpush1.msra.mxu0 0.0
      %5036 = vmatprep.subr.mxu0 0.0
      %5037 = vmatpush1.msra.mxu0 0.0
      %5038 = vmatprep.subr.mxu0 0.0
      %5039 = vmatpush1.msra.mxu0 0.0
      %5040 = vmatprep.subr.mxu0 0.0
      %5041 = vmatpush1.msra.mxu0 0.0
      %5042 = vmatprep.subr.mxu0 0.0
      %5043 = vmatpush1.msra.mxu0 0.0
      %5044 = vmatprep.subr.mxu0 0.0
      %5045 = vmatpush1.msra.mxu0 0.0
      %5046 = vmatprep.subr.mxu0 0.0
      %5047 = vmatpush1.msra.mxu0 0.0
      %5048 = vmatprep.subr.mxu0 0.0
      %5049 = vmatpush1.msra.mxu0 0.0
      %5050 = vmatprep.subr.mxu0 0.0
      %5051 = vmatpush1.msra.mxu0 0.0
      %5052 = vmatprep.subr.mxu0 0.0
      %5053 = vmatpush1.msra.mxu0 0.0
      %5054 = vmatprep.subr.mxu0 0.0
      %5055 = vmatpush1.msra.mxu0 0.0
      %5056 = vmatprep.subr.mxu0 0.0
      %5057 = vmatpush1.msra.mxu0 0.0
      %5058 = vmatprep.subr.mxu0 0.0
      %5059 = vmatpush1.msra.mxu0 0.0
      %5060 = vmatprep.subr.mxu0 0.0
      %5061 = vmatpush1.msra.mxu0 0.0
      %5062 = vmatprep.subr.mxu0 0.0
      %5063 = vmatpush1.msra.mxu0 0.0
      %5064 = vmatprep.subr.mxu0 0.0
      %5065 = vmatpush1.msra.mxu0 0.0
      %5066 = vmatprep.subr.mxu0 0.0
      %5067 = vmatpush1.msra.mxu0 0.0
      %5068 = vmatprep.subr.mxu0 0.0
      %5069 = vmatpush1.msra.mxu0 0.0
      %5070 = vmatprep.subr.mxu0 0.0
      %5071 = vmatpush1.msra.mxu0 0.0
      %5072 = vmatprep.subr.mxu0 0.0
      %5073 = vmatpush1.msra.mxu0 0.0
      %5074 = vmatprep.subr.mxu0 0.0
      %5075 = vmatpush1.msra.mxu0 0.0
      %5076 = vmatprep.subr.mxu0 0.0
      %5077 = vmatpush1.msra.mxu0 0.0
      %5078 = vmatprep.subr.mxu0 0.0
      %5079 = vmatpush1.msra.mxu0 0.0
      %5080 = vmatprep.subr.mxu0 0.0
      %5081 = vmatpush1.msra.mxu0 0.0
      %5082 = vmatprep.subr.mxu0 0.0
      %5083 = vmatpush1.msra.mxu0 0.0
      %5084 = vmatprep.subr.mxu0 0.0
      %5085 = vmatpush1.msra.mxu0 0.0
      %5086 = vmatprep.subr.mxu0 0.0
      %5087 = vmatpush1.msra.mxu0 0.0
      %5088 = vmatprep.subr.mxu0 0.0
      %5089 = vmatpush1.msra.mxu0 0.0
      %5090 = vmatprep.subr.mxu0 0.0
      %5091 = vmatpush1.msra.mxu0 0.0
      %5092 = vmatprep.subr.mxu0 0.0
      %5093 = vmatpush1.msra.mxu0 0.0
      %5094 = vmatprep.mubr.f32.mxu0 0.0
      %5095 = vmatmul.mubr.f32.gmra.mrb[0].mxu0 %v4886
      %v5096 = vpop.f32.mrb[0].mxu0
      %v5097 = vadd.f32 %v4811, %v5096
      %v5098 = vpop.f32.mrb[0].mxu0
      %v5099 = vadd.f32 %v4813, %v5098
      %5100 = vdwg.mxu0
      %5101 = vmatprep.subr.mxu0 0.0
      %5102 = vmatpush1.msra.mxu0 %v4557
      %5103 = vmatprep.subr.mxu0 0.0
      %5104 = vmatpush1.msra.mxu0 0.0
      %5105 = vmatprep.subr.mxu0 0.0
      %5106 = vmatpush1.msra.mxu0 0.0
      %5107 = vmatprep.subr.mxu0 0.0
      %5108 = vmatpush1.msra.mxu0 0.0
      %5109 = vmatprep.subr.mxu0 0.0
      %5110 = vmatpush1.msra.mxu0 0.0
      %5111 = vmatprep.subr.mxu0 0.0
      %5112 = vmatpush1.msra.mxu0 0.0
      %5113 = vmatprep.subr.mxu0 0.0
      %5114 = vmatpush1.msra.mxu0 0.0
      %5115 = vmatprep.subr.mxu0 0.0
      %5116 = vmatpush1.msra.mxu0 0.0
      %5117 = vmatprep.subr.mxu0 0.0
      %5118 = vmatpush1.msra.mxu0 0.0
      %5119 = vmatprep.subr.mxu0 0.0
      %5120 = vmatpush1.msra.mxu0 0.0
      %5121 = vmatprep.subr.mxu0 0.0
      %5122 = vmatpush1.msra.mxu0 0.0
      %5123 = vmatprep.subr.mxu0 0.0
      %5124 = vmatpush1.msra.mxu0 0.0
      %5125 = vmatprep.subr.mxu0 0.0
      %5126 = vmatpush1.msra.mxu0 0.0
      %5127 = vmatprep.subr.mxu0 0.0
      %5128 = vmatpush1.msra.mxu0 0.0
      %5129 = vmatprep.subr.mxu0 0.0
      %5130 = vmatpush1.msra.mxu0 0.0
      %5131 = vmatprep.subr.mxu0 0.0
      %5132 = vmatpush1.msra.mxu0 0.0
      %5133 = vmatprep.subr.mxu0 0.0
      %5134 = vmatpush1.msra.mxu0 0.0
      %5135 = vmatprep.subr.mxu0 0.0
      %5136 = vmatpush1.msra.mxu0 0.0
      %5137 = vmatprep.subr.mxu0 0.0
      %5138 = vmatpush1.msra.mxu0 0.0
      %5139 = vmatprep.subr.mxu0 0.0
      %5140 = vmatpush1.msra.mxu0 0.0
      %5141 = vmatprep.subr.mxu0 0.0
      %5142 = vmatpush1.msra.mxu0 0.0
      %5143 = vmatprep.subr.mxu0 0.0
      %5144 = vmatpush1.msra.mxu0 0.0
      %5145 = vmatprep.subr.mxu0 0.0
      %5146 = vmatpush1.msra.mxu0 0.0
      %5147 = vmatprep.subr.mxu0 0.0
      %5148 = vmatpush1.msra.mxu0 0.0
      %5149 = vmatprep.subr.mxu0 0.0
      %5150 = vmatpush1.msra.mxu0 0.0
      %5151 = vmatprep.subr.mxu0 0.0
      %5152 = vmatpush1.msra.mxu0 0.0
      %5153 = vmatprep.subr.mxu0 0.0
      %5154 = vmatpush1.msra.mxu0 0.0
      %5155 = vmatprep.subr.mxu0 0.0
      %5156 = vmatpush1.msra.mxu0 0.0
      %5157 = vmatprep.subr.mxu0 0.0
      %5158 = vmatpush1.msra.mxu0 0.0
      %5159 = vmatprep.subr.mxu0 0.0
      %5160 = vmatpush1.msra.mxu0 0.0
      %5161 = vmatprep.subr.mxu0 0.0
      %5162 = vmatpush1.msra.mxu0 0.0
      %5163 = vmatprep.subr.mxu0 0.0
      %5164 = vmatpush1.msra.mxu0 0.0
      %5165 = vmatprep.mubr.f32.mxu0 0.0
      %5166 = vmatmul.mubr.f32.gmra.mrb[0].mxu0 %v4886
      %v5167 = vpop.f32.mrb[0].mxu0
      %v5168 = vadd.f32 %v4882, %v5167
      %v5169 = vpop.f32.mrb[0].mxu0
      %5170 = vdwg.mxu0
      %s5171 = scalar_lea.vmem %s5, 16
      %v5172 = vld [vmem:[%s5171] sm:$0xff]
      %5173 = vrot.lane.b32.xlu0 %v4552, 56
      %v5174 = vpop.permute.xlu0 %5173
      %5175 = vrot.lane.b32.xlu0 %v4553, 56
      %v5176 = vpop.permute.xlu0 %5175
      %5177 = vrot.lane.b32.xlu0 %v4554, 56
      %v5178 = vpop.permute.xlu0 %5177
      %5179 = vrot.lane.b32.xlu0 %v4555, 56
      %v5180 = vpop.permute.xlu0 %5179
      %5181 = vrot.lane.b32.xlu0 %v4556, 56
      %v5182 = vpop.permute.xlu0 %5181
      %5183 = vrot.lane.b32.xlu0 %v4557, 56
      %v5184 = vpop.permute.xlu0 %5183
      %5185 = vrot.lane.b32.xlu0 %v4560, 56
      %v5186 = vpop.permute.xlu0 %5185
      %v5187 = vsel %vm1090, %v5174, %v5176
      %v5188 = vsel %vm1090, %v5176, %v5178
      %v5189 = vsel %vm1090, %v5178, %v5180
      %v5190 = vsel %vm1090, %v5180, %v5182
      %v5191 = vsel %vm1090, %v5182, %v5184
      %v5192 = vsel %vm1090, %v5184, %v5186
      %v5201 = vsel %vm1555, %v5172, 0
      %5203 = vmatprep.subr.mxu0 %v5188
      %5204 = vmatpush1.msra.mxu0 %v5187
      %5205 = vmatprep.subr.mxu0 0.0
      %5206 = vmatpush1.msra.mxu0 0.0
      %5207 = vmatprep.subr.mxu0 0.0
      %5208 = vmatpush1.msra.mxu0 0.0
      %5209 = vmatprep.subr.mxu0 0.0
      %5210 = vmatpush1.msra.mxu0 0.0
      %5211 = vmatprep.subr.mxu0 0.0
      %5212 = vmatpush1.msra.mxu0 0.0
      %5213 = vmatprep.subr.mxu0 0.0
      %5214 = vmatpush1.msra.mxu0 0.0
      %5215 = vmatprep.subr.mxu0 0.0
      %5216 = vmatpush1.msra.mxu0 0.0
      %5217 = vmatprep.subr.mxu0 0.0
      %5218 = vmatpush1.msra.mxu0 0.0
      %5219 = vmatprep.subr.mxu0 0.0
      %5220 = vmatpush1.msra.mxu0 0.0
      %5221 = vmatprep.subr.mxu0 0.0
      %5222 = vmatpush1.msra.mxu0 0.0
      %5223 = vmatprep.subr.mxu0 0.0
      %5224 = vmatpush1.msra.mxu0 0.0
      %5225 = vmatprep.subr.mxu0 0.0
      %5226 = vmatpush1.msra.mxu0 0.0
      %5227 = vmatprep.subr.mxu0 0.0
      %5228 = vmatpush1.msra.mxu0 0.0
      %5229 = vmatprep.subr.mxu0 0.0
      %5230 = vmatpush1.msra.mxu0 0.0
      %5231 = vmatprep.subr.mxu0 0.0
      %5232 = vmatpush1.msra.mxu0 0.0
      %5233 = vmatprep.subr.mxu0 0.0
      %5234 = vmatpush1.msra.mxu0 0.0
      %5235 = vmatprep.subr.mxu0 0.0
      %5236 = vmatpush1.msra.mxu0 0.0
      %5237 = vmatprep.subr.mxu0 0.0
      %5238 = vmatpush1.msra.mxu0 0.0
      %5239 = vmatprep.subr.mxu0 0.0
      %5240 = vmatpush1.msra.mxu0 0.0
      %5241 = vmatprep.subr.mxu0 0.0
      %5242 = vmatpush1.msra.mxu0 0.0
      %5243 = vmatprep.subr.mxu0 0.0
      %5244 = vmatpush1.msra.mxu0 0.0
      %5245 = vmatprep.subr.mxu0 0.0
      %5246 = vmatpush1.msra.mxu0 0.0
      %5247 = vmatprep.subr.mxu0 0.0
      %5248 = vmatpush1.msra.mxu0 0.0
      %5249 = vmatprep.subr.mxu0 0.0
      %5250 = vmatpush1.msra.mxu0 0.0
      %5251 = vmatprep.subr.mxu0 0.0
      %5252 = vmatpush1.msra.mxu0 0.0
      %5253 = vmatprep.subr.mxu0 0.0
      %5254 = vmatpush1.msra.mxu0 0.0
      %5255 = vmatprep.subr.mxu0 0.0
      %5256 = vmatpush1.msra.mxu0 0.0
      %5257 = vmatprep.subr.mxu0 0.0
      %5258 = vmatpush1.msra.mxu0 0.0
      %5259 = vmatprep.subr.mxu0 0.0
      %5260 = vmatpush1.msra.mxu0 0.0
      %5261 = vmatprep.subr.mxu0 0.0
      %5262 = vmatpush1.msra.mxu0 0.0
      %5263 = vmatprep.subr.mxu0 0.0
      %5264 = vmatpush1.msra.mxu0 0.0
      %5265 = vmatprep.subr.mxu0 0.0
      %5266 = vmatpush1.msra.mxu0 0.0
      %5267 = vmatprep.mubr.f32.mxu0 0.0
      %5268 = vmatmul.mubr.f32.gmra.mrb[0].mxu0 %v5201
      %v5269 = vpop.f32.mrb[0].mxu0
      %v5270 = vadd.f32 0.0, %v5269
      %v5271 = vpop.f32.mrb[0].mxu0
      %v5272 = vadd.f32 0.0, %v5271
      %5273 = vdwg.mxu0
      %5274 = vmatprep.subr.mxu0 %v5190
      %5275 = vmatpush1.msra.mxu0 %v5189
      %5276 = vmatprep.subr.mxu0 0.0
      %5277 = vmatpush1.msra.mxu0 0.0
      %5278 = vmatprep.subr.mxu0 0.0
      %5279 = vmatpush1.msra.mxu0 0.0
      %5280 = vmatprep.subr.mxu0 0.0
      %5281 = vmatpush1.msra.mxu0 0.0
      %5282 = vmatprep.subr.mxu0 0.0
      %5283 = vmatpush1.msra.mxu0 0.0
      %5284 = vmatprep.subr.mxu0 0.0
      %5285 = vmatpush1.msra.mxu0 0.0
      %5286 = vmatprep.subr.mxu0 0.0
      %5287 = vmatpush1.msra.mxu0 0.0
      %5288 = vmatprep.subr.mxu0 0.0
      %5289 = vmatpush1.msra.mxu0 0.0
      %5290 = vmatprep.subr.mxu0 0.0
      %5291 = vmatpush1.msra.mxu0 0.0
      %5292 = vmatprep.subr.mxu0 0.0
      %5293 = vmatpush1.msra.mxu0 0.0
      %5294 = vmatprep.subr.mxu0 0.0
      %5295 = vmatpush1.msra.mxu0 0.0
      %5296 = vmatprep.subr.mxu0 0.0
      %5297 = vmatpush1.msra.mxu0 0.0
      %5298 = vmatprep.subr.mxu0 0.0
      %5299 = vmatpush1.msra.mxu0 0.0
      %5300 = vmatprep.subr.mxu0 0.0
      %5301 = vmatpush1.msra.mxu0 0.0
      %5302 = vmatprep.subr.mxu0 0.0
      %5303 = vmatpush1.msra.mxu0 0.0
      %5304 = vmatprep.subr.mxu0 0.0
      %5305 = vmatpush1.msra.mxu0 0.0
      %5306 = vmatprep.subr.mxu0 0.0
      %5307 = vmatpush1.msra.mxu0 0.0
      %5308 = vmatprep.subr.mxu0 0.0
      %5309 = vmatpush1.msra.mxu0 0.0
      %5310 = vmatprep.subr.mxu0 0.0
      %5311 = vmatpush1.msra.mxu0 0.0
      %5312 = vmatprep.subr.mxu0 0.0
      %5313 = vmatpush1.msra.mxu0 0.0
      %5314 = vmatprep.subr.mxu0 0.0
      %5315 = vmatpush1.msra.mxu0 0.0
      %5316 = vmatprep.subr.mxu0 0.0
      %5317 = vmatpush1.msra.mxu0 0.0
      %5318 = vmatprep.subr.mxu0 0.0
      %5319 = vmatpush1.msra.mxu0 0.0
      %5320 = vmatprep.subr.mxu0 0.0
      %5321 = vmatpush1.msra.mxu0 0.0
      %5322 = vmatprep.subr.mxu0 0.0
      %5323 = vmatpush1.msra.mxu0 0.0
      %5324 = vmatprep.subr.mxu0 0.0
      %5325 = vmatpush1.msra.mxu0 0.0
      %5326 = vmatprep.subr.mxu0 0.0
      %5327 = vmatpush1.msra.mxu0 0.0
      %5328 = vmatprep.subr.mxu0 0.0
      %5329 = vmatpush1.msra.mxu0 0.0
      %5330 = vmatprep.subr.mxu0 0.0
      %5331 = vmatpush1.msra.mxu0 0.0
      %5332 = vmatprep.subr.mxu0 0.0
      %5333 = vmatpush1.msra.mxu0 0.0
      %5334 = vmatprep.subr.mxu0 0.0
      %5335 = vmatpush1.msra.mxu0 0.0
      %5336 = vmatprep.subr.mxu0 0.0
      %5337 = vmatpush1.msra.mxu0 0.0
      %5338 = vmatprep.mubr.f32.mxu0 0.0
      %5339 = vmatmul.mubr.f32.gmra.mrb[0].mxu0 %v5201
      %v5340 = vpop.f32.mrb[0].mxu0
      %v5341 = vadd.f32 0.0, %v5340
      %v5342 = vpop.f32.mrb[0].mxu0
      %v5343 = vadd.f32 0.0, %v5342
      %5344 = vdwg.mxu0
      %5345 = vmatprep.subr.mxu0 %v5192
      %5346 = vmatpush1.msra.mxu0 %v5191
      %5347 = vmatprep.subr.mxu0 0.0
      %5348 = vmatpush1.msra.mxu0 0.0
      %5349 = vmatprep.subr.mxu0 0.0
      %5350 = vmatpush1.msra.mxu0 0.0
      %5351 = vmatprep.subr.mxu0 0.0
      %5352 = vmatpush1.msra.mxu0 0.0
      %5353 = vmatprep.subr.mxu0 0.0
      %5354 = vmatpush1.msra.mxu0 0.0
      %5355 = vmatprep.subr.mxu0 0.0
      %5356 = vmatpush1.msra.mxu0 0.0
      %5357 = vmatprep.subr.mxu0 0.0
      %5358 = vmatpush1.msra.mxu0 0.0
      %5359 = vmatprep.subr.mxu0 0.0
      %5360 = vmatpush1.msra.mxu0 0.0
      %5361 = vmatprep.subr.mxu0 0.0
      %5362 = vmatpush1.msra.mxu0 0.0
      %5363 = vmatprep.subr.mxu0 0.0
      %5364 = vmatpush1.msra.mxu0 0.0
      %5365 = vmatprep.subr.mxu0 0.0
      %5366 = vmatpush1.msra.mxu0 0.0
      %5367 = vmatprep.subr.mxu0 0.0
      %5368 = vmatpush1.msra.mxu0 0.0
      %5369 = vmatprep.subr.mxu0 0.0
      %5370 = vmatpush1.msra.mxu0 0.0
      %5371 = vmatprep.subr.mxu0 0.0
      %5372 = vmatpush1.msra.mxu0 0.0
      %5373 = vmatprep.subr.mxu0 0.0
      %5374 = vmatpush1.msra.mxu0 0.0
      %5375 = vmatprep.subr.mxu0 0.0
      %5376 = vmatpush1.msra.mxu0 0.0
      %5377 = vmatprep.subr.mxu0 0.0
      %5378 = vmatpush1.msra.mxu0 0.0
      %5379 = vmatprep.subr.mxu0 0.0
      %5380 = vmatpush1.msra.mxu0 0.0
      %5381 = vmatprep.subr.mxu0 0.0
      %5382 = vmatpush1.msra.mxu0 0.0
      %5383 = vmatprep.subr.mxu0 0.0
      %5384 = vmatpush1.msra.mxu0 0.0
      %5385 = vmatprep.subr.mxu0 0.0
      %5386 = vmatpush1.msra.mxu0 0.0
      %5387 = vmatprep.subr.mxu0 0.0
      %5388 = vmatpush1.msra.mxu0 0.0
      %5389 = vmatprep.subr.mxu0 0.0
      %5390 = vmatpush1.msra.mxu0 0.0
      %5391 = vmatprep.subr.mxu0 0.0
      %5392 = vmatpush1.msra.mxu0 0.0
      %5393 = vmatprep.subr.mxu0 0.0
      %5394 = vmatpush1.msra.mxu0 0.0
      %5395 = vmatprep.subr.mxu0 0.0
      %5396 = vmatpush1.msra.mxu0 0.0
      %5397 = vmatprep.subr.mxu0 0.0
      %5398 = vmatpush1.msra.mxu0 0.0
      %5399 = vmatprep.subr.mxu0 0.0
      %5400 = vmatpush1.msra.mxu0 0.0
      %5401 = vmatprep.subr.mxu0 0.0
      %5402 = vmatpush1.msra.mxu0 0.0
      %5403 = vmatprep.subr.mxu0 0.0
      %5404 = vmatpush1.msra.mxu0 0.0
      %5405 = vmatprep.subr.mxu0 0.0
      %5406 = vmatpush1.msra.mxu0 0.0
      %5407 = vmatprep.subr.mxu0 0.0
      %5408 = vmatpush1.msra.mxu0 0.0
      %5409 = vmatprep.mubr.f32.mxu0 0.0
      %5410 = vmatmul.mubr.f32.gmra.mrb[0].mxu0 %v5201
      %v5411 = vpop.f32.mrb[0].mxu0
      %v5412 = vadd.f32 0.0, %v5411
      %v5413 = vpop.f32.mrb[0].mxu0
      %v5414 = vadd.f32 0.0, %v5413
      %5415 = vdwg.mxu0
      %5416 = vmatprep.subr.mxu0 0.0
      %5417 = vmatpush1.msra.mxu0 %v5186
      %5418 = vmatprep.subr.mxu0 0.0
      %5419 = vmatpush1.msra.mxu0 0.0
      %5420 = vmatprep.subr.mxu0 0.0
      %5421 = vmatpush1.msra.mxu0 0.0
      %5422 = vmatprep.subr.mxu0 0.0
      %5423 = vmatpush1.msra.mxu0 0.0
      %5424 = vmatprep.subr.mxu0 0.0
      %5425 = vmatpush1.msra.mxu0 0.0
      %5426 = vmatprep.subr.mxu0 0.0
      %5427 = vmatpush1.msra.mxu0 0.0
      %5428 = vmatprep.subr.mxu0 0.0
      %5429 = vmatpush1.msra.mxu0 0.0
      %5430 = vmatprep.subr.mxu0 0.0
      %5431 = vmatpush1.msra.mxu0 0.0
      %5432 = vmatprep.subr.mxu0 0.0
      %5433 = vmatpush1.msra.mxu0 0.0
      %5434 = vmatprep.subr.mxu0 0.0
      %5435 = vmatpush1.msra.mxu0 0.0
      %5436 = vmatprep.subr.mxu0 0.0
      %5437 = vmatpush1.msra.mxu0 0.0
      %5438 = vmatprep.subr.mxu0 0.0
      %5439 = vmatpush1.msra.mxu0 0.0
      %5440 = vmatprep.subr.mxu0 0.0
      %5441 = vmatpush1.msra.mxu0 0.0
      %5442 = vmatprep.subr.mxu0 0.0
      %5443 = vmatpush1.msra.mxu0 0.0
      %5444 = vmatprep.subr.mxu0 0.0
      %5445 = vmatpush1.msra.mxu0 0.0
      %5446 = vmatprep.subr.mxu0 0.0
      %5447 = vmatpush1.msra.mxu0 0.0
      %5448 = vmatprep.subr.mxu0 0.0
      %5449 = vmatpush1.msra.mxu0 0.0
      %5450 = vmatprep.subr.mxu0 0.0
      %5451 = vmatpush1.msra.mxu0 0.0
      %5452 = vmatprep.subr.mxu0 0.0
      %5453 = vmatpush1.msra.mxu0 0.0
      %5454 = vmatprep.subr.mxu0 0.0
      %5455 = vmatpush1.msra.mxu0 0.0
      %5456 = vmatprep.subr.mxu0 0.0
      %5457 = vmatpush1.msra.mxu0 0.0
      %5458 = vmatprep.subr.mxu0 0.0
      %5459 = vmatpush1.msra.mxu0 0.0
      %5460 = vmatprep.subr.mxu0 0.0
      %5461 = vmatpush1.msra.mxu0 0.0
      %5462 = vmatprep.subr.mxu0 0.0
      %5463 = vmatpush1.msra.mxu0 0.0
      %5464 = vmatprep.subr.mxu0 0.0
      %5465 = vmatpush1.msra.mxu0 0.0
      %5466 = vmatprep.subr.mxu0 0.0
      %5467 = vmatpush1.msra.mxu0 0.0
      %5468 = vmatprep.subr.mxu0 0.0
      %5469 = vmatpush1.msra.mxu0 0.0
      %5470 = vmatprep.subr.mxu0 0.0
      %5471 = vmatpush1.msra.mxu0 0.0
      %5472 = vmatprep.subr.mxu0 0.0
      %5473 = vmatpush1.msra.mxu0 0.0
      %5474 = vmatprep.subr.mxu0 0.0
      %5475 = vmatpush1.msra.mxu0 0.0
      %5476 = vmatprep.subr.mxu0 0.0
      %5477 = vmatpush1.msra.mxu0 0.0
      %5478 = vmatprep.subr.mxu0 0.0
      %5479 = vmatpush1.msra.mxu0 0.0
      %5480 = vmatprep.mubr.f32.mxu0 0.0
      %5481 = vmatmul.mubr.f32.gmra.mrb[0].mxu0 %v5201
      %v5482 = vpop.f32.mrb[0].mxu0
      %v5483 = vadd.f32 0.0, %v5482
      %v5484 = vpop.f32.mrb[0].mxu0
      %5485 = vdwg.mxu0
      %v5486 = vadd.f32 %v4955, %v5270
      %v5487 = vadd.f32 %v4957, %v5272
      %v5488 = vadd.f32 %v5026, %v5341
      %v5489 = vadd.f32 %v5028, %v5343
      %v5490 = vadd.f32 %v5097, %v5412
      %v5491 = vadd.f32 %v5099, %v5414
      %v5492 = vadd.f32 %v5168, %v5483
      %5494 = vset.pattern.permute.xlu0 0
      %5495 = vperm.xlu0 %5494, %v4549
      %v5496 = vpop.permute.xlu0 %5495
      %v5498 = vadd.f32 %v5486, %v5496
      %v5499 = vadd.f32 %v5487, %v5496
      %v5500 = vadd.f32 %v5488, %v5496
      %v5501 = vadd.f32 %v5489, %v5496
      %v5502 = vadd.f32 %v5490, %v5496
      %v5503 = vadd.f32 %v5491, %v5496
      %v5504 = vadd.f32 %v5492, %v5496
      %v5505 = vmul.f32 %v5498, %v1420
      %v5506 = vmul.f32 %v5499, %v1424
      %v5507 = vmul.f32 %v5500, %v1428
      %v5508 = vmul.f32 %v5501, %v1432
      %v5509 = vmul.f32 %v5502, %v1436
      %v5510 = vmul.f32 %v5503, %v1440
      %v5511 = vmul.f32 %v5504, %v1444
      %5519 = vrot.lane.b32.xlu0 %v5505, 100
      %v5520 = vpop.permute.xlu0 %5519
      %5521 = vrot.lane.b32.xlu0 %v5506, 100
      %v5522 = vpop.permute.xlu0 %5521
      %5523 = vrot.lane.b32.xlu0 %v5507, 100
      %v5524 = vpop.permute.xlu0 %5523
      %5525 = vrot.lane.b32.xlu0 %v5508, 100
      %v5526 = vpop.permute.xlu0 %5525
      %5527 = vrot.lane.b32.xlu0 %v5509, 100
      %v5528 = vpop.permute.xlu0 %5527
      %5529 = vrot.lane.b32.xlu0 %v5510, 100
      %v5530 = vpop.permute.xlu0 %5529
      %5531 = vrot.lane.b32.xlu0 %v5511, 100
      %v5532 = vpop.permute.xlu0 %5531
      %v5533 = vsel %vm1480, %v5520, %v5522
      %v5534 = vsel %vm1480, %v5522, %v5524
      %v5535 = vsel %vm1480, %v5524, %v5526
      %v5536 = vsel %vm1480, %v5526, %v5528
      %v5537 = vsel %vm1480, %v5528, %v5530
      %v5538 = vsel %vm1480, %v5530, %v5532
      %5547 = vst.msk [vmem:[#allocation3] sm:$0xff] %vm1495, %v5520
      %5548 = vst [vmem:[#allocation3 + $0x8] sm:$0xff] %v5533
      %5549 = vst [vmem:[#allocation3 + $0x10] sm:$0xff] %v5534
      %5550 = vst [vmem:[#allocation3 + $0x18] sm:$0xff] %v5535
      %5551 = vst [vmem:[#allocation3 + $0x20] sm:$0xff] %v5536
      %5552 = vst [vmem:[#allocation3 + $0x28] sm:$0xff] %v5537
      %5553 = vst [vmem:[#allocation3 + $0x30] sm:$0xff] %v5538
      %5554 = vst.msk [vmem:[#allocation3 + $0x38] sm:$0xff] %vm472, %v5532
      %s5555 = scalar_lea.vmem %s10, 40
      %v5556 = vld [vmem:[%s5555] sm:$0xff]
      %v5557 = vld [vmem:[%s6] sm:$0xff]
      %v5558 = vld [vmem:[#allocation3] sm:$0xff]
      %v5559 = vld [vmem:[#allocation3 + $0x8] sm:$0xff]
      %v5560 = vld [vmem:[#allocation3 + $0x10] sm:$0xff]
      %v5561 = vld [vmem:[#allocation3 + $0x18] sm:$0xff]
      %v5562 = vld [vmem:[#allocation3 + $0x20] sm:$0xff]
      %v5563 = vld [vmem:[#allocation3 + $0x28] sm:$0xff]
      %v5564 = vld [vmem:[#allocation3 + $0x30] sm:$0xff]
      %v5565 = vld [vmem:[#allocation3 + $0x38] sm:$0xff]
      %s5566 = scalar_lea.vmem %s6, 8
      %v5567 = vld [vmem:[%s5566] sm:$0xff]
      %5576 = vrot.lane.b32.xlu0 %v5558, 28
      %v5577 = vpop.permute.xlu0 %5576
      %5578 = vrot.lane.b32.xlu0 %v5559, 28
      %v5579 = vpop.permute.xlu0 %5578
      %5580 = vrot.lane.b32.xlu0 %v5560, 28
      %v5581 = vpop.permute.xlu0 %5580
      %5582 = vrot.lane.b32.xlu0 %v5561, 28
      %v5583 = vpop.permute.xlu0 %5582
      %5584 = vrot.lane.b32.xlu0 %v5562, 28
      %v5585 = vpop.permute.xlu0 %5584
      %5586 = vrot.lane.b32.xlu0 %v5563, 28
      %v5587 = vpop.permute.xlu0 %5586
      %5588 = vrot.lane.b32.xlu0 %v5564, 28
      %v5589 = vpop.permute.xlu0 %5588
      %5590 = vrot.lane.b32.xlu0 %v5565, 28
      %v5591 = vpop.permute.xlu0 %5590
      %v5592 = vsel %vm464, %v5577, %v5579
      %v5593 = vsel %vm464, %v5579, %v5581
      %v5594 = vsel %vm464, %v5581, %v5583
      %v5595 = vsel %vm464, %v5583, %v5585
      %v5596 = vsel %vm464, %v5585, %v5587
      %v5597 = vsel %vm464, %v5587, %v5589
      %v5598 = vsel %vm464, %v5589, %v5591
      %v5607 = vsel %vm1555, %v5567, 0
      %5609 = vmatprep.subr.mxu0 %v5593
      %5610 = vmatpush1.msra.mxu0 %v5592
      %5611 = vmatprep.subr.mxu0 0.0
      %5612 = vmatpush1.msra.mxu0 0.0
      %5613 = vmatprep.subr.mxu0 0.0
      %5614 = vmatpush1.msra.mxu0 0.0
      %5615 = vmatprep.subr.mxu0 0.0
      %5616 = vmatpush1.msra.mxu0 0.0
      %5617 = vmatprep.subr.mxu0 0.0
      %5618 = vmatpush1.msra.mxu0 0.0
      %5619 = vmatprep.subr.mxu0 0.0
      %5620 = vmatpush1.msra.mxu0 0.0
      %5621 = vmatprep.subr.mxu0 0.0
      %5622 = vmatpush1.msra.mxu0 0.0
      %5623 = vmatprep.subr.mxu0 0.0
      %5624 = vmatpush1.msra.mxu0 0.0
      %5625 = vmatprep.subr.mxu0 0.0
      %5626 = vmatpush1.msra.mxu0 0.0
      %5627 = vmatprep.subr.mxu0 0.0
      %5628 = vmatpush1.msra.mxu0 0.0
      %5629 = vmatprep.subr.mxu0 0.0
      %5630 = vmatpush1.msra.mxu0 0.0
      %5631 = vmatprep.subr.mxu0 0.0
      %5632 = vmatpush1.msra.mxu0 0.0
      %5633 = vmatprep.subr.mxu0 0.0
      %5634 = vmatpush1.msra.mxu0 0.0
      %5635 = vmatprep.subr.mxu0 0.0
      %5636 = vmatpush1.msra.mxu0 0.0
      %5637 = vmatprep.subr.mxu0 0.0
      %5638 = vmatpush1.msra.mxu0 0.0
      %5639 = vmatprep.subr.mxu0 0.0
      %5640 = vmatpush1.msra.mxu0 0.0
      %5641 = vmatprep.subr.mxu0 0.0
      %5642 = vmatpush1.msra.mxu0 0.0
      %5643 = vmatprep.subr.mxu0 0.0
      %5644 = vmatpush1.msra.mxu0 0.0
      %5645 = vmatprep.subr.mxu0 0.0
      %5646 = vmatpush1.msra.mxu0 0.0
      %5647 = vmatprep.subr.mxu0 0.0
      %5648 = vmatpush1.msra.mxu0 0.0
      %5649 = vmatprep.subr.mxu0 0.0
      %5650 = vmatpush1.msra.mxu0 0.0
      %5651 = vmatprep.subr.mxu0 0.0
      %5652 = vmatpush1.msra.mxu0 0.0
      %5653 = vmatprep.subr.mxu0 0.0
      %5654 = vmatpush1.msra.mxu0 0.0
      %5655 = vmatprep.subr.mxu0 0.0
      %5656 = vmatpush1.msra.mxu0 0.0
      %5657 = vmatprep.subr.mxu0 0.0
      %5658 = vmatpush1.msra.mxu0 0.0
      %5659 = vmatprep.subr.mxu0 0.0
      %5660 = vmatpush1.msra.mxu0 0.0
      %5661 = vmatprep.subr.mxu0 0.0
      %5662 = vmatpush1.msra.mxu0 0.0
      %5663 = vmatprep.subr.mxu0 0.0
      %5664 = vmatpush1.msra.mxu0 0.0
      %5665 = vmatprep.subr.mxu0 0.0
      %5666 = vmatpush1.msra.mxu0 0.0
      %5667 = vmatprep.subr.mxu0 0.0
      %5668 = vmatpush1.msra.mxu0 0.0
      %5669 = vmatprep.subr.mxu0 0.0
      %5670 = vmatpush1.msra.mxu0 0.0
      %5671 = vmatprep.subr.mxu0 0.0
      %5672 = vmatpush1.msra.mxu0 0.0
      %5673 = vmatprep.mubr.f32.mxu0 0.0
      %5674 = vmatmul.mubr.f32.gmra.mrb[0].mxu0 %v5607
      %v5675 = vpop.f32.mrb[0].mxu0
      %v5676 = vadd.f32 0.0, %v5675
      %v5677 = vpop.f32.mrb[0].mxu0
      %v5678 = vadd.f32 0.0, %v5677
      %5679 = vdwg.mxu0
      %5680 = vmatprep.subr.mxu0 %v5595
      %5681 = vmatpush1.msra.mxu0 %v5594
      %5682 = vmatprep.subr.mxu0 0.0
      %5683 = vmatpush1.msra.mxu0 0.0
      %5684 = vmatprep.subr.mxu0 0.0
      %5685 = vmatpush1.msra.mxu0 0.0
      %5686 = vmatprep.subr.mxu0 0.0
      %5687 = vmatpush1.msra.mxu0 0.0
      %5688 = vmatprep.subr.mxu0 0.0
      %5689 = vmatpush1.msra.mxu0 0.0
      %5690 = vmatprep.subr.mxu0 0.0
      %5691 = vmatpush1.msra.mxu0 0.0
      %5692 = vmatprep.subr.mxu0 0.0
      %5693 = vmatpush1.msra.mxu0 0.0
      %5694 = vmatprep.subr.mxu0 0.0
      %5695 = vmatpush1.msra.mxu0 0.0
      %5696 = vmatprep.subr.mxu0 0.0
      %5697 = vmatpush1.msra.mxu0 0.0
      %5698 = vmatprep.subr.mxu0 0.0
      %5699 = vmatpush1.msra.mxu0 0.0
      %5700 = vmatprep.subr.mxu0 0.0
      %5701 = vmatpush1.msra.mxu0 0.0
      %5702 = vmatprep.subr.mxu0 0.0
      %5703 = vmatpush1.msra.mxu0 0.0
      %5704 = vmatprep.subr.mxu0 0.0
      %5705 = vmatpush1.msra.mxu0 0.0
      %5706 = vmatprep.subr.mxu0 0.0
      %5707 = vmatpush1.msra.mxu0 0.0
      %5708 = vmatprep.subr.mxu0 0.0
      %5709 = vmatpush1.msra.mxu0 0.0
      %5710 = vmatprep.subr.mxu0 0.0
      %5711 = vmatpush1.msra.mxu0 0.0
      %5712 = vmatprep.subr.mxu0 0.0
      %5713 = vmatpush1.msra.mxu0 0.0
      %5714 = vmatprep.subr.mxu0 0.0
      %5715 = vmatpush1.msra.mxu0 0.0
      %5716 = vmatprep.subr.mxu0 0.0
      %5717 = vmatpush1.msra.mxu0 0.0
      %5718 = vmatprep.subr.mxu0 0.0
      %5719 = vmatpush1.msra.mxu0 0.0
      %5720 = vmatprep.subr.mxu0 0.0
      %5721 = vmatpush1.msra.mxu0 0.0
      %5722 = vmatprep.subr.mxu0 0.0
      %5723 = vmatpush1.msra.mxu0 0.0
      %5724 = vmatprep.subr.mxu0 0.0
      %5725 = vmatpush1.msra.mxu0 0.0
      %5726 = vmatprep.subr.mxu0 0.0
      %5727 = vmatpush1.msra.mxu0 0.0
      %5728 = vmatprep.subr.mxu0 0.0
      %5729 = vmatpush1.msra.mxu0 0.0
      %5730 = vmatprep.subr.mxu0 0.0
      %5731 = vmatpush1.msra.mxu0 0.0
      %5732 = vmatprep.subr.mxu0 0.0
      %5733 = vmatpush1.msra.mxu0 0.0
      %5734 = vmatprep.subr.mxu0 0.0
      %5735 = vmatpush1.msra.mxu0 0.0
      %5736 = vmatprep.subr.mxu0 0.0
      %5737 = vmatpush1.msra.mxu0 0.0
      %5738 = vmatprep.subr.mxu0 0.0
      %5739 = vmatpush1.msra.mxu0 0.0
      %5740 = vmatprep.subr.mxu0 0.0
      %5741 = vmatpush1.msra.mxu0 0.0
      %5742 = vmatprep.subr.mxu0 0.0
      %5743 = vmatpush1.msra.mxu0 0.0
      %5744 = vmatprep.mubr.f32.mxu0 0.0
      %5745 = vmatmul.mubr.f32.gmra.mrb[0].mxu0 %v5607
      %v5746 = vpop.f32.mrb[0].mxu0
      %v5747 = vadd.f32 0.0, %v5746
      %v5748 = vpop.f32.mrb[0].mxu0
      %v5749 = vadd.f32 0.0, %v5748
      %5750 = vdwg.mxu0
      %5751 = vmatprep.subr.mxu0 %v5597
      %5752 = vmatpush1.msra.mxu0 %v5596
      %5753 = vmatprep.subr.mxu0 0.0
      %5754 = vmatpush1.msra.mxu0 0.0
      %5755 = vmatprep.subr.mxu0 0.0
      %5756 = vmatpush1.msra.mxu0 0.0
      %5757 = vmatprep.subr.mxu0 0.0
      %5758 = vmatpush1.msra.mxu0 0.0
      %5759 = vmatprep.subr.mxu0 0.0
      %5760 = vmatpush1.msra.mxu0 0.0
      %5761 = vmatprep.subr.mxu0 0.0
      %5762 = vmatpush1.msra.mxu0 0.0
      %5763 = vmatprep.subr.mxu0 0.0
      %5764 = vmatpush1.msra.mxu0 0.0
      %5765 = vmatprep.subr.mxu0 0.0
      %5766 = vmatpush1.msra.mxu0 0.0
      %5767 = vmatprep.subr.mxu0 0.0
      %5768 = vmatpush1.msra.mxu0 0.0
      %5769 = vmatprep.subr.mxu0 0.0
      %5770 = vmatpush1.msra.mxu0 0.0
      %5771 = vmatprep.subr.mxu0 0.0
      %5772 = vmatpush1.msra.mxu0 0.0
      %5773 = vmatprep.subr.mxu0 0.0
      %5774 = vmatpush1.msra.mxu0 0.0
      %5775 = vmatprep.subr.mxu0 0.0
      %5776 = vmatpush1.msra.mxu0 0.0
      %5777 = vmatprep.subr.mxu0 0.0
      %5778 = vmatpush1.msra.mxu0 0.0
      %5779 = vmatprep.subr.mxu0 0.0
      %5780 = vmatpush1.msra.mxu0 0.0
      %5781 = vmatprep.subr.mxu0 0.0
      %5782 = vmatpush1.msra.mxu0 0.0
      %5783 = vmatprep.subr.mxu0 0.0
      %5784 = vmatpush1.msra.mxu0 0.0
      %5785 = vmatprep.subr.mxu0 0.0
      %5786 = vmatpush1.msra.mxu0 0.0
      %5787 = vmatprep.subr.mxu0 0.0
      %5788 = vmatpush1.msra.mxu0 0.0
      %5789 = vmatprep.subr.mxu0 0.0
      %5790 = vmatpush1.msra.mxu0 0.0
      %5791 = vmatprep.subr.mxu0 0.0
      %5792 = vmatpush1.msra.mxu0 0.0
      %5793 = vmatprep.subr.mxu0 0.0
      %5794 = vmatpush1.msra.mxu0 0.0
      %5795 = vmatprep.subr.mxu0 0.0
      %5796 = vmatpush1.msra.mxu0 0.0
      %5797 = vmatprep.subr.mxu0 0.0
      %5798 = vmatpush1.msra.mxu0 0.0
      %5799 = vmatprep.subr.mxu0 0.0
      %5800 = vmatpush1.msra.mxu0 0.0
      %5801 = vmatprep.subr.mxu0 0.0
      %5802 = vmatpush1.msra.mxu0 0.0
      %5803 = vmatprep.subr.mxu0 0.0
      %5804 = vmatpush1.msra.mxu0 0.0
      %5805 = vmatprep.subr.mxu0 0.0
      %5806 = vmatpush1.msra.mxu0 0.0
      %5807 = vmatprep.subr.mxu0 0.0
      %5808 = vmatpush1.msra.mxu0 0.0
      %5809 = vmatprep.subr.mxu0 0.0
      %5810 = vmatpush1.msra.mxu0 0.0
      %5811 = vmatprep.subr.mxu0 0.0
      %5812 = vmatpush1.msra.mxu0 0.0
      %5813 = vmatprep.subr.mxu0 0.0
      %5814 = vmatpush1.msra.mxu0 0.0
      %5815 = vmatprep.mubr.f32.mxu0 0.0
      %5816 = vmatmul.mubr.f32.gmra.mrb[0].mxu0 %v5607
      %v5817 = vpop.f32.mrb[0].mxu0
      %v5818 = vadd.f32 0.0, %v5817
      %v5819 = vpop.f32.mrb[0].mxu0
      %v5820 = vadd.f32 0.0, %v5819
      %5821 = vdwg.mxu0
      %5822 = vmatprep.subr.mxu0 0.0
      %5823 = vmatpush1.msra.mxu0 %v5598
      %5824 = vmatprep.subr.mxu0 0.0
      %5825 = vmatpush1.msra.mxu0 0.0
      %5826 = vmatprep.subr.mxu0 0.0
      %5827 = vmatpush1.msra.mxu0 0.0
      %5828 = vmatprep.subr.mxu0 0.0
      %5829 = vmatpush1.msra.mxu0 0.0
      %5830 = vmatprep.subr.mxu0 0.0
      %5831 = vmatpush1.msra.mxu0 0.0
      %5832 = vmatprep.subr.mxu0 0.0
      %5833 = vmatpush1.msra.mxu0 0.0
      %5834 = vmatprep.subr.mxu0 0.0
      %5835 = vmatpush1.msra.mxu0 0.0
      %5836 = vmatprep.subr.mxu0 0.0
      %5837 = vmatpush1.msra.mxu0 0.0
      %5838 = vmatprep.subr.mxu0 0.0
      %5839 = vmatpush1.msra.mxu0 0.0
      %5840 = vmatprep.subr.mxu0 0.0
      %5841 = vmatpush1.msra.mxu0 0.0
      %5842 = vmatprep.subr.mxu0 0.0
      %5843 = vmatpush1.msra.mxu0 0.0
      %5844 = vmatprep.subr.mxu0 0.0
      %5845 = vmatpush1.msra.mxu0 0.0
      %5846 = vmatprep.subr.mxu0 0.0
      %5847 = vmatpush1.msra.mxu0 0.0
      %5848 = vmatprep.subr.mxu0 0.0
      %5849 = vmatpush1.msra.mxu0 0.0
      %5850 = vmatprep.subr.mxu0 0.0
      %5851 = vmatpush1.msra.mxu0 0.0
      %5852 = vmatprep.subr.mxu0 0.0
      %5853 = vmatpush1.msra.mxu0 0.0
      %5854 = vmatprep.subr.mxu0 0.0
      %5855 = vmatpush1.msra.mxu0 0.0
      %5856 = vmatprep.subr.mxu0 0.0
      %5857 = vmatpush1.msra.mxu0 0.0
      %5858 = vmatprep.subr.mxu0 0.0
      %5859 = vmatpush1.msra.mxu0 0.0
      %5860 = vmatprep.subr.mxu0 0.0
      %5861 = vmatpush1.msra.mxu0 0.0
      %5862 = vmatprep.subr.mxu0 0.0
      %5863 = vmatpush1.msra.mxu0 0.0
      %5864 = vmatprep.subr.mxu0 0.0
      %5865 = vmatpush1.msra.mxu0 0.0
      %5866 = vmatprep.subr.mxu0 0.0
      %5867 = vmatpush1.msra.mxu0 0.0
      %5868 = vmatprep.subr.mxu0 0.0
      %5869 = vmatpush1.msra.mxu0 0.0
      %5870 = vmatprep.subr.mxu0 0.0
      %5871 = vmatpush1.msra.mxu0 0.0
      %5872 = vmatprep.subr.mxu0 0.0
      %5873 = vmatpush1.msra.mxu0 0.0
      %5874 = vmatprep.subr.mxu0 0.0
      %5875 = vmatpush1.msra.mxu0 0.0
      %5876 = vmatprep.subr.mxu0 0.0
      %5877 = vmatpush1.msra.mxu0 0.0
      %5878 = vmatprep.subr.mxu0 0.0
      %5879 = vmatpush1.msra.mxu0 0.0
      %5880 = vmatprep.subr.mxu0 0.0
      %5881 = vmatpush1.msra.mxu0 0.0
      %5882 = vmatprep.subr.mxu0 0.0
      %5883 = vmatpush1.msra.mxu0 0.0
      %5884 = vmatprep.subr.mxu0 0.0
      %5885 = vmatpush1.msra.mxu0 0.0
      %5886 = vmatprep.mubr.f32.mxu0 0.0
      %5887 = vmatmul.mubr.f32.gmra.mrb[0].mxu0 %v5607
      %v5888 = vpop.f32.mrb[0].mxu0
      %v5889 = vadd.f32 0.0, %v5888
      %v5890 = vpop.f32.mrb[0].mxu0
      %5891 = vdwg.mxu0
      %5892 = vrot.lane.b32.xlu0 %v5558, 29
      %v5893 = vpop.permute.xlu0 %5892
      %5894 = vrot.lane.b32.xlu0 %v5559, 29
      %v5895 = vpop.permute.xlu0 %5894
      %5896 = vrot.lane.b32.xlu0 %v5560, 29
      %v5897 = vpop.permute.xlu0 %5896
      %5898 = vrot.lane.b32.xlu0 %v5561, 29
      %v5899 = vpop.permute.xlu0 %5898
      %5900 = vrot.lane.b32.xlu0 %v5562, 29
      %v5901 = vpop.permute.xlu0 %5900
      %5902 = vrot.lane.b32.xlu0 %v5563, 29
      %v5903 = vpop.permute.xlu0 %5902
      %5904 = vrot.lane.b32.xlu0 %v5564, 29
      %v5905 = vpop.permute.xlu0 %5904
      %5906 = vrot.lane.b32.xlu0 %v5565, 29
      %v5907 = vpop.permute.xlu0 %5906
      %v5908 = vsel %vm2897, %v5893, %v5895
      %v5909 = vsel %vm2897, %v5895, %v5897
      %v5910 = vsel %vm2897, %v5897, %v5899
      %v5911 = vsel %vm2897, %v5899, %v5901
      %v5912 = vsel %vm2897, %v5901, %v5903
      %v5913 = vsel %vm2897, %v5903, %v5905
      %v5914 = vsel %vm2897, %v5905, %v5907
      %v5923 = vsel %vm1555, %v5557, 0
      %5925 = vmatprep.subr.mxu0 %v5909
      %5926 = vmatpush1.msra.mxu0 %v5908
      %5927 = vmatprep.subr.mxu0 0.0
      %5928 = vmatpush1.msra.mxu0 0.0
      %5929 = vmatprep.subr.mxu0 0.0
      %5930 = vmatpush1.msra.mxu0 0.0
      %5931 = vmatprep.subr.mxu0 0.0
      %5932 = vmatpush1.msra.mxu0 0.0
      %5933 = vmatprep.subr.mxu0 0.0
      %5934 = vmatpush1.msra.mxu0 0.0
      %5935 = vmatprep.subr.mxu0 0.0
      %5936 = vmatpush1.msra.mxu0 0.0
      %5937 = vmatprep.subr.mxu0 0.0
      %5938 = vmatpush1.msra.mxu0 0.0
      %5939 = vmatprep.subr.mxu0 0.0
      %5940 = vmatpush1.msra.mxu0 0.0
      %5941 = vmatprep.subr.mxu0 0.0
      %5942 = vmatpush1.msra.mxu0 0.0
      %5943 = vmatprep.subr.mxu0 0.0
      %5944 = vmatpush1.msra.mxu0 0.0
      %5945 = vmatprep.subr.mxu0 0.0
      %5946 = vmatpush1.msra.mxu0 0.0
      %5947 = vmatprep.subr.mxu0 0.0
      %5948 = vmatpush1.msra.mxu0 0.0
      %5949 = vmatprep.subr.mxu0 0.0
      %5950 = vmatpush1.msra.mxu0 0.0
      %5951 = vmatprep.subr.mxu0 0.0
      %5952 = vmatpush1.msra.mxu0 0.0
      %5953 = vmatprep.subr.mxu0 0.0
      %5954 = vmatpush1.msra.mxu0 0.0
      %5955 = vmatprep.subr.mxu0 0.0
      %5956 = vmatpush1.msra.mxu0 0.0
      %5957 = vmatprep.subr.mxu0 0.0
      %5958 = vmatpush1.msra.mxu0 0.0
      %5959 = vmatprep.subr.mxu0 0.0
      %5960 = vmatpush1.msra.mxu0 0.0
      %5961 = vmatprep.subr.mxu0 0.0
      %5962 = vmatpush1.msra.mxu0 0.0
      %5963 = vmatprep.subr.mxu0 0.0
      %5964 = vmatpush1.msra.mxu0 0.0
      %5965 = vmatprep.subr.mxu0 0.0
      %5966 = vmatpush1.msra.mxu0 0.0
      %5967 = vmatprep.subr.mxu0 0.0
      %5968 = vmatpush1.msra.mxu0 0.0
      %5969 = vmatprep.subr.mxu0 0.0
      %5970 = vmatpush1.msra.mxu0 0.0
      %5971 = vmatprep.subr.mxu0 0.0
      %5972 = vmatpush1.msra.mxu0 0.0
      %5973 = vmatprep.subr.mxu0 0.0
      %5974 = vmatpush1.msra.mxu0 0.0
      %5975 = vmatprep.subr.mxu0 0.0
      %5976 = vmatpush1.msra.mxu0 0.0
      %5977 = vmatprep.subr.mxu0 0.0
      %5978 = vmatpush1.msra.mxu0 0.0
      %5979 = vmatprep.subr.mxu0 0.0
      %5980 = vmatpush1.msra.mxu0 0.0
      %5981 = vmatprep.subr.mxu0 0.0
      %5982 = vmatpush1.msra.mxu0 0.0
      %5983 = vmatprep.subr.mxu0 0.0
      %5984 = vmatpush1.msra.mxu0 0.0
      %5985 = vmatprep.subr.mxu0 0.0
      %5986 = vmatpush1.msra.mxu0 0.0
      %5987 = vmatprep.subr.mxu0 0.0
      %5988 = vmatpush1.msra.mxu0 0.0
      %5989 = vmatprep.mubr.f32.mxu0 0.0
      %5990 = vmatmul.mubr.f32.gmra.mrb[0].mxu0 %v5923
      %v5991 = vpop.f32.mrb[0].mxu0
      %v5992 = vadd.f32 %v5676, %v5991
      %v5993 = vpop.f32.mrb[0].mxu0
      %v5994 = vadd.f32 %v5678, %v5993
      %5995 = vdwg.mxu0
      %5996 = vmatprep.subr.mxu0 %v5911
      %5997 = vmatpush1.msra.mxu0 %v5910
      %5998 = vmatprep.subr.mxu0 0.0
      %5999 = vmatpush1.msra.mxu0 0.0
      %6000 = vmatprep.subr.mxu0 0.0
      %6001 = vmatpush1.msra.mxu0 0.0
      %6002 = vmatprep.subr.mxu0 0.0
      %6003 = vmatpush1.msra.mxu0 0.0
      %6004 = vmatprep.subr.mxu0 0.0
      %6005 = vmatpush1.msra.mxu0 0.0
      %6006 = vmatprep.subr.mxu0 0.0
      %6007 = vmatpush1.msra.mxu0 0.0
      %6008 = vmatprep.subr.mxu0 0.0
      %6009 = vmatpush1.msra.mxu0 0.0
      %6010 = vmatprep.subr.mxu0 0.0
      %6011 = vmatpush1.msra.mxu0 0.0
      %6012 = vmatprep.subr.mxu0 0.0
      %6013 = vmatpush1.msra.mxu0 0.0
      %6014 = vmatprep.subr.mxu0 0.0
      %6015 = vmatpush1.msra.mxu0 0.0
      %6016 = vmatprep.subr.mxu0 0.0
      %6017 = vmatpush1.msra.mxu0 0.0
      %6018 = vmatprep.subr.mxu0 0.0
      %6019 = vmatpush1.msra.mxu0 0.0
      %6020 = vmatprep.subr.mxu0 0.0
      %6021 = vmatpush1.msra.mxu0 0.0
      %6022 = vmatprep.subr.mxu0 0.0
      %6023 = vmatpush1.msra.mxu0 0.0
      %6024 = vmatprep.subr.mxu0 0.0
      %6025 = vmatpush1.msra.mxu0 0.0
      %6026 = vmatprep.subr.mxu0 0.0
      %6027 = vmatpush1.msra.mxu0 0.0
      %6028 = vmatprep.subr.mxu0 0.0
      %6029 = vmatpush1.msra.mxu0 0.0
      %6030 = vmatprep.subr.mxu0 0.0
      %6031 = vmatpush1.msra.mxu0 0.0
      %6032 = vmatprep.subr.mxu0 0.0
      %6033 = vmatpush1.msra.mxu0 0.0
      %6034 = vmatprep.subr.mxu0 0.0
      %6035 = vmatpush1.msra.mxu0 0.0
      %6036 = vmatprep.subr.mxu0 0.0
      %6037 = vmatpush1.msra.mxu0 0.0
      %6038 = vmatprep.subr.mxu0 0.0
      %6039 = vmatpush1.msra.mxu0 0.0
      %6040 = vmatprep.subr.mxu0 0.0
      %6041 = vmatpush1.msra.mxu0 0.0
      %6042 = vmatprep.subr.mxu0 0.0
      %6043 = vmatpush1.msra.mxu0 0.0
      %6044 = vmatprep.subr.mxu0 0.0
      %6045 = vmatpush1.msra.mxu0 0.0
      %6046 = vmatprep.subr.mxu0 0.0
      %6047 = vmatpush1.msra.mxu0 0.0
      %6048 = vmatprep.subr.mxu0 0.0
      %6049 = vmatpush1.msra.mxu0 0.0
      %6050 = vmatprep.subr.mxu0 0.0
      %6051 = vmatpush1.msra.mxu0 0.0
      %6052 = vmatprep.subr.mxu0 0.0
      %6053 = vmatpush1.msra.mxu0 0.0
      %6054 = vmatprep.subr.mxu0 0.0
      %6055 = vmatpush1.msra.mxu0 0.0
      %6056 = vmatprep.subr.mxu0 0.0
      %6057 = vmatpush1.msra.mxu0 0.0
      %6058 = vmatprep.subr.mxu0 0.0
      %6059 = vmatpush1.msra.mxu0 0.0
      %6060 = vmatprep.mubr.f32.mxu0 0.0
      %6061 = vmatmul.mubr.f32.gmra.mrb[0].mxu0 %v5923
      %v6062 = vpop.f32.mrb[0].mxu0
      %v6063 = vadd.f32 %v5747, %v6062
      %v6064 = vpop.f32.mrb[0].mxu0
      %v6065 = vadd.f32 %v5749, %v6064
      %6066 = vdwg.mxu0
      %6067 = vmatprep.subr.mxu0 %v5913
      %6068 = vmatpush1.msra.mxu0 %v5912
      %6069 = vmatprep.subr.mxu0 0.0
      %6070 = vmatpush1.msra.mxu0 0.0
      %6071 = vmatprep.subr.mxu0 0.0
      %6072 = vmatpush1.msra.mxu0 0.0
      %6073 = vmatprep.subr.mxu0 0.0
      %6074 = vmatpush1.msra.mxu0 0.0
      %6075 = vmatprep.subr.mxu0 0.0
      %6076 = vmatpush1.msra.mxu0 0.0
      %6077 = vmatprep.subr.mxu0 0.0
      %6078 = vmatpush1.msra.mxu0 0.0
      %6079 = vmatprep.subr.mxu0 0.0
      %6080 = vmatpush1.msra.mxu0 0.0
      %6081 = vmatprep.subr.mxu0 0.0
      %6082 = vmatpush1.msra.mxu0 0.0
      %6083 = vmatprep.subr.mxu0 0.0
      %6084 = vmatpush1.msra.mxu0 0.0
      %6085 = vmatprep.subr.mxu0 0.0
      %6086 = vmatpush1.msra.mxu0 0.0
      %6087 = vmatprep.subr.mxu0 0.0
      %6088 = vmatpush1.msra.mxu0 0.0
      %6089 = vmatprep.subr.mxu0 0.0
      %6090 = vmatpush1.msra.mxu0 0.0
      %6091 = vmatprep.subr.mxu0 0.0
      %6092 = vmatpush1.msra.mxu0 0.0
      %6093 = vmatprep.subr.mxu0 0.0
      %6094 = vmatpush1.msra.mxu0 0.0
      %6095 = vmatprep.subr.mxu0 0.0
      %6096 = vmatpush1.msra.mxu0 0.0
      %6097 = vmatprep.subr.mxu0 0.0
      %6098 = vmatpush1.msra.mxu0 0.0
      %6099 = vmatprep.subr.mxu0 0.0
      %6100 = vmatpush1.msra.mxu0 0.0
      %6101 = vmatprep.subr.mxu0 0.0
      %6102 = vmatpush1.msra.mxu0 0.0
      %6103 = vmatprep.subr.mxu0 0.0
      %6104 = vmatpush1.msra.mxu0 0.0
      %6105 = vmatprep.subr.mxu0 0.0
      %6106 = vmatpush1.msra.mxu0 0.0
      %6107 = vmatprep.subr.mxu0 0.0
      %6108 = vmatpush1.msra.mxu0 0.0
      %6109 = vmatprep.subr.mxu0 0.0
      %6110 = vmatpush1.msra.mxu0 0.0
      %6111 = vmatprep.subr.mxu0 0.0
      %6112 = vmatpush1.msra.mxu0 0.0
      %6113 = vmatprep.subr.mxu0 0.0
      %6114 = vmatpush1.msra.mxu0 0.0
      %6115 = vmatprep.subr.mxu0 0.0
      %6116 = vmatpush1.msra.mxu0 0.0
      %6117 = vmatprep.subr.mxu0 0.0
      %6118 = vmatpush1.msra.mxu0 0.0
      %6119 = vmatprep.subr.mxu0 0.0
      %6120 = vmatpush1.msra.mxu0 0.0
      %6121 = vmatprep.subr.mxu0 0.0
      %6122 = vmatpush1.msra.mxu0 0.0
      %6123 = vmatprep.subr.mxu0 0.0
      %6124 = vmatpush1.msra.mxu0 0.0
      %6125 = vmatprep.subr.mxu0 0.0
      %6126 = vmatpush1.msra.mxu0 0.0
      %6127 = vmatprep.subr.mxu0 0.0
      %6128 = vmatpush1.msra.mxu0 0.0
      %6129 = vmatprep.subr.mxu0 0.0
      %6130 = vmatpush1.msra.mxu0 0.0
      %6131 = vmatprep.mubr.f32.mxu0 0.0
      %6132 = vmatmul.mubr.f32.gmra.mrb[0].mxu0 %v5923
      %v6133 = vpop.f32.mrb[0].mxu0
      %v6134 = vadd.f32 %v5818, %v6133
      %v6135 = vpop.f32.mrb[0].mxu0
      %v6136 = vadd.f32 %v5820, %v6135
      %6137 = vdwg.mxu0
      %6138 = vmatprep.subr.mxu0 0.0
      %6139 = vmatpush1.msra.mxu0 %v5914
      %6140 = vmatprep.subr.mxu0 0.0
      %6141 = vmatpush1.msra.mxu0 0.0
      %6142 = vmatprep.subr.mxu0 0.0
      %6143 = vmatpush1.msra.mxu0 0.0
      %6144 = vmatprep.subr.mxu0 0.0
      %6145 = vmatpush1.msra.mxu0 0.0
      %6146 = vmatprep.subr.mxu0 0.0
      %6147 = vmatpush1.msra.mxu0 0.0
      %6148 = vmatprep.subr.mxu0 0.0
      %6149 = vmatpush1.msra.mxu0 0.0
      %6150 = vmatprep.subr.mxu0 0.0
      %6151 = vmatpush1.msra.mxu0 0.0
      %6152 = vmatprep.subr.mxu0 0.0
      %6153 = vmatpush1.msra.mxu0 0.0
      %6154 = vmatprep.subr.mxu0 0.0
      %6155 = vmatpush1.msra.mxu0 0.0
      %6156 = vmatprep.subr.mxu0 0.0
      %6157 = vmatpush1.msra.mxu0 0.0
      %6158 = vmatprep.subr.mxu0 0.0
      %6159 = vmatpush1.msra.mxu0 0.0
      %6160 = vmatprep.subr.mxu0 0.0
      %6161 = vmatpush1.msra.mxu0 0.0
      %6162 = vmatprep.subr.mxu0 0.0
      %6163 = vmatpush1.msra.mxu0 0.0
      %6164 = vmatprep.subr.mxu0 0.0
      %6165 = vmatpush1.msra.mxu0 0.0
      %6166 = vmatprep.subr.mxu0 0.0
      %6167 = vmatpush1.msra.mxu0 0.0
      %6168 = vmatprep.subr.mxu0 0.0
      %6169 = vmatpush1.msra.mxu0 0.0
      %6170 = vmatprep.subr.mxu0 0.0
      %6171 = vmatpush1.msra.mxu0 0.0
      %6172 = vmatprep.subr.mxu0 0.0
      %6173 = vmatpush1.msra.mxu0 0.0
      %6174 = vmatprep.subr.mxu0 0.0
      %6175 = vmatpush1.msra.mxu0 0.0
      %6176 = vmatprep.subr.mxu0 0.0
      %6177 = vmatpush1.msra.mxu0 0.0
      %6178 = vmatprep.subr.mxu0 0.0
      %6179 = vmatpush1.msra.mxu0 0.0
      %6180 = vmatprep.subr.mxu0 0.0
      %6181 = vmatpush1.msra.mxu0 0.0
      %6182 = vmatprep.subr.mxu0 0.0
      %6183 = vmatpush1.msra.mxu0 0.0
      %6184 = vmatprep.subr.mxu0 0.0
      %6185 = vmatpush1.msra.mxu0 0.0
      %6186 = vmatprep.subr.mxu0 0.0
      %6187 = vmatpush1.msra.mxu0 0.0
      %6188 = vmatprep.subr.mxu0 0.0
      %6189 = vmatpush1.msra.mxu0 0.0
      %6190 = vmatprep.subr.mxu0 0.0
      %6191 = vmatpush1.msra.mxu0 0.0
      %6192 = vmatprep.subr.mxu0 0.0
      %6193 = vmatpush1.msra.mxu0 0.0
      %6194 = vmatprep.subr.mxu0 0.0
      %6195 = vmatpush1.msra.mxu0 0.0
      %6196 = vmatprep.subr.mxu0 0.0
      %6197 = vmatpush1.msra.mxu0 0.0
      %6198 = vmatprep.subr.mxu0 0.0
      %6199 = vmatpush1.msra.mxu0 0.0
      %6200 = vmatprep.subr.mxu0 0.0
      %6201 = vmatpush1.msra.mxu0 0.0
      %6202 = vmatprep.mubr.f32.mxu0 0.0
      %6203 = vmatmul.mubr.f32.gmra.mrb[0].mxu0 %v5923
      %v6204 = vpop.f32.mrb[0].mxu0
      %v6205 = vadd.f32 %v5889, %v6204
      %v6206 = vpop.f32.mrb[0].mxu0
      %6207 = vdwg.mxu0
      %s6208 = scalar_lea.vmem %s6, 16
      %v6209 = vld [vmem:[%s6208] sm:$0xff]
      %6210 = vrot.lane.b32.xlu0 %v5558, 27
      %v6211 = vpop.permute.xlu0 %6210
      %6212 = vrot.lane.b32.xlu0 %v5559, 27
      %v6213 = vpop.permute.xlu0 %6212
      %6214 = vrot.lane.b32.xlu0 %v5560, 27
      %v6215 = vpop.permute.xlu0 %6214
      %6216 = vrot.lane.b32.xlu0 %v5561, 27
      %v6217 = vpop.permute.xlu0 %6216
      %6218 = vrot.lane.b32.xlu0 %v5562, 27
      %v6219 = vpop.permute.xlu0 %6218
      %6220 = vrot.lane.b32.xlu0 %v5563, 27
      %v6221 = vpop.permute.xlu0 %6220
      %6222 = vrot.lane.b32.xlu0 %v5564, 27
      %v6223 = vpop.permute.xlu0 %6222
      %6224 = vrot.lane.b32.xlu0 %v5565, 27
      %v6225 = vpop.permute.xlu0 %6224
      %v6226 = vsel %vm3216, %v6211, %v6213
      %v6227 = vsel %vm3216, %v6213, %v6215
      %v6228 = vsel %vm3216, %v6215, %v6217
      %v6229 = vsel %vm3216, %v6217, %v6219
      %v6230 = vsel %vm3216, %v6219, %v6221
      %v6231 = vsel %vm3216, %v6221, %v6223
      %v6232 = vsel %vm3216, %v6223, %v6225
      %v6241 = vsel %vm1555, %v6209, 0
      %6243 = vmatprep.subr.mxu0 %v6227
      %6244 = vmatpush1.msra.mxu0 %v6226
      %6245 = vmatprep.subr.mxu0 0.0
      %6246 = vmatpush1.msra.mxu0 0.0
      %6247 = vmatprep.subr.mxu0 0.0
      %6248 = vmatpush1.msra.mxu0 0.0
      %6249 = vmatprep.subr.mxu0 0.0
      %6250 = vmatpush1.msra.mxu0 0.0
      %6251 = vmatprep.subr.mxu0 0.0
      %6252 = vmatpush1.msra.mxu0 0.0
      %6253 = vmatprep.subr.mxu0 0.0
      %6254 = vmatpush1.msra.mxu0 0.0
      %6255 = vmatprep.subr.mxu0 0.0
      %6256 = vmatpush1.msra.mxu0 0.0
      %6257 = vmatprep.subr.mxu0 0.0
      %6258 = vmatpush1.msra.mxu0 0.0
      %6259 = vmatprep.subr.mxu0 0.0
      %6260 = vmatpush1.msra.mxu0 0.0
      %6261 = vmatprep.subr.mxu0 0.0
      %6262 = vmatpush1.msra.mxu0 0.0
      %6263 = vmatprep.subr.mxu0 0.0
      %6264 = vmatpush1.msra.mxu0 0.0
      %6265 = vmatprep.subr.mxu0 0.0
      %6266 = vmatpush1.msra.mxu0 0.0
      %6267 = vmatprep.subr.mxu0 0.0
      %6268 = vmatpush1.msra.mxu0 0.0
      %6269 = vmatprep.subr.mxu0 0.0
      %6270 = vmatpush1.msra.mxu0 0.0
      %6271 = vmatprep.subr.mxu0 0.0
      %6272 = vmatpush1.msra.mxu0 0.0
      %6273 = vmatprep.subr.mxu0 0.0
      %6274 = vmatpush1.msra.mxu0 0.0
      %6275 = vmatprep.subr.mxu0 0.0
      %6276 = vmatpush1.msra.mxu0 0.0
      %6277 = vmatprep.subr.mxu0 0.0
      %6278 = vmatpush1.msra.mxu0 0.0
      %6279 = vmatprep.subr.mxu0 0.0
      %6280 = vmatpush1.msra.mxu0 0.0
      %6281 = vmatprep.subr.mxu0 0.0
      %6282 = vmatpush1.msra.mxu0 0.0
      %6283 = vmatprep.subr.mxu0 0.0
      %6284 = vmatpush1.msra.mxu0 0.0
      %6285 = vmatprep.subr.mxu0 0.0
      %6286 = vmatpush1.msra.mxu0 0.0
      %6287 = vmatprep.subr.mxu0 0.0
      %6288 = vmatpush1.msra.mxu0 0.0
      %6289 = vmatprep.subr.mxu0 0.0
      %6290 = vmatpush1.msra.mxu0 0.0
      %6291 = vmatprep.subr.mxu0 0.0
      %6292 = vmatpush1.msra.mxu0 0.0
      %6293 = vmatprep.subr.mxu0 0.0
      %6294 = vmatpush1.msra.mxu0 0.0
      %6295 = vmatprep.subr.mxu0 0.0
      %6296 = vmatpush1.msra.mxu0 0.0
      %6297 = vmatprep.subr.mxu0 0.0
      %6298 = vmatpush1.msra.mxu0 0.0
      %6299 = vmatprep.subr.mxu0 0.0
      %6300 = vmatpush1.msra.mxu0 0.0
      %6301 = vmatprep.subr.mxu0 0.0
      %6302 = vmatpush1.msra.mxu0 0.0
      %6303 = vmatprep.subr.mxu0 0.0
      %6304 = vmatpush1.msra.mxu0 0.0
      %6305 = vmatprep.subr.mxu0 0.0
      %6306 = vmatpush1.msra.mxu0 0.0
      %6307 = vmatprep.mubr.f32.mxu0 0.0
      %6308 = vmatmul.mubr.f32.gmra.mrb[0].mxu0 %v6241
      %v6309 = vpop.f32.mrb[0].mxu0
      %v6310 = vadd.f32 0.0, %v6309
      %v6311 = vpop.f32.mrb[0].mxu0
      %v6312 = vadd.f32 0.0, %v6311
      %6313 = vdwg.mxu0
      %6314 = vmatprep.subr.mxu0 %v6229
      %6315 = vmatpush1.msra.mxu0 %v6228
      %6316 = vmatprep.subr.mxu0 0.0
      %6317 = vmatpush1.msra.mxu0 0.0
      %6318 = vmatprep.subr.mxu0 0.0
      %6319 = vmatpush1.msra.mxu0 0.0
      %6320 = vmatprep.subr.mxu0 0.0
      %6321 = vmatpush1.msra.mxu0 0.0
      %6322 = vmatprep.subr.mxu0 0.0
      %6323 = vmatpush1.msra.mxu0 0.0
      %6324 = vmatprep.subr.mxu0 0.0
      %6325 = vmatpush1.msra.mxu0 0.0
      %6326 = vmatprep.subr.mxu0 0.0
      %6327 = vmatpush1.msra.mxu0 0.0
      %6328 = vmatprep.subr.mxu0 0.0
      %6329 = vmatpush1.msra.mxu0 0.0
      %6330 = vmatprep.subr.mxu0 0.0
      %6331 = vmatpush1.msra.mxu0 0.0
      %6332 = vmatprep.subr.mxu0 0.0
      %6333 = vmatpush1.msra.mxu0 0.0
      %6334 = vmatprep.subr.mxu0 0.0
      %6335 = vmatpush1.msra.mxu0 0.0
      %6336 = vmatprep.subr.mxu0 0.0
      %6337 = vmatpush1.msra.mxu0 0.0
      %6338 = vmatprep.subr.mxu0 0.0
      %6339 = vmatpush1.msra.mxu0 0.0
      %6340 = vmatprep.subr.mxu0 0.0
      %6341 = vmatpush1.msra.mxu0 0.0
      %6342 = vmatprep.subr.mxu0 0.0
      %6343 = vmatpush1.msra.mxu0 0.0
      %6344 = vmatprep.subr.mxu0 0.0
      %6345 = vmatpush1.msra.mxu0 0.0
      %6346 = vmatprep.subr.mxu0 0.0
      %6347 = vmatpush1.msra.mxu0 0.0
      %6348 = vmatprep.subr.mxu0 0.0
      %6349 = vmatpush1.msra.mxu0 0.0
      %6350 = vmatprep.subr.mxu0 0.0
      %6351 = vmatpush1.msra.mxu0 0.0
      %6352 = vmatprep.subr.mxu0 0.0
      %6353 = vmatpush1.msra.mxu0 0.0
      %6354 = vmatprep.subr.mxu0 0.0
      %6355 = vmatpush1.msra.mxu0 0.0
      %6356 = vmatprep.subr.mxu0 0.0
      %6357 = vmatpush1.msra.mxu0 0.0
      %6358 = vmatprep.subr.mxu0 0.0
      %6359 = vmatpush1.msra.mxu0 0.0
      %6360 = vmatprep.subr.mxu0 0.0
      %6361 = vmatpush1.msra.mxu0 0.0
      %6362 = vmatprep.subr.mxu0 0.0
      %6363 = vmatpush1.msra.mxu0 0.0
      %6364 = vmatprep.subr.mxu0 0.0
      %6365 = vmatpush1.msra.mxu0 0.0
      %6366 = vmatprep.subr.mxu0 0.0
      %6367 = vmatpush1.msra.mxu0 0.0
      %6368 = vmatprep.subr.mxu0 0.0
      %6369 = vmatpush1.msra.mxu0 0.0
      %6370 = vmatprep.subr.mxu0 0.0
      %6371 = vmatpush1.msra.mxu0 0.0
      %6372 = vmatprep.subr.mxu0 0.0
      %6373 = vmatpush1.msra.mxu0 0.0
      %6374 = vmatprep.subr.mxu0 0.0
      %6375 = vmatpush1.msra.mxu0 0.0
      %6376 = vmatprep.subr.mxu0 0.0
      %6377 = vmatpush1.msra.mxu0 0.0
      %6378 = vmatprep.mubr.f32.mxu0 0.0
      %6379 = vmatmul.mubr.f32.gmra.mrb[0].mxu0 %v6241
      %v6380 = vpop.f32.mrb[0].mxu0
      %v6381 = vadd.f32 0.0, %v6380
      %v6382 = vpop.f32.mrb[0].mxu0
      %v6383 = vadd.f32 0.0, %v6382
      %6384 = vdwg.mxu0
      %6385 = vmatprep.subr.mxu0 %v6231
      %6386 = vmatpush1.msra.mxu0 %v6230
      %6387 = vmatprep.subr.mxu0 0.0
      %6388 = vmatpush1.msra.mxu0 0.0
      %6389 = vmatprep.subr.mxu0 0.0
      %6390 = vmatpush1.msra.mxu0 0.0
      %6391 = vmatprep.subr.mxu0 0.0
      %6392 = vmatpush1.msra.mxu0 0.0
      %6393 = vmatprep.subr.mxu0 0.0
      %6394 = vmatpush1.msra.mxu0 0.0
      %6395 = vmatprep.subr.mxu0 0.0
      %6396 = vmatpush1.msra.mxu0 0.0
      %6397 = vmatprep.subr.mxu0 0.0
      %6398 = vmatpush1.msra.mxu0 0.0
      %6399 = vmatprep.subr.mxu0 0.0
      %6400 = vmatpush1.msra.mxu0 0.0
      %6401 = vmatprep.subr.mxu0 0.0
      %6402 = vmatpush1.msra.mxu0 0.0
      %6403 = vmatprep.subr.mxu0 0.0
      %6404 = vmatpush1.msra.mxu0 0.0
      %6405 = vmatprep.subr.mxu0 0.0
      %6406 = vmatpush1.msra.mxu0 0.0
      %6407 = vmatprep.subr.mxu0 0.0
      %6408 = vmatpush1.msra.mxu0 0.0
      %6409 = vmatprep.subr.mxu0 0.0
      %6410 = vmatpush1.msra.mxu0 0.0
      %6411 = vmatprep.subr.mxu0 0.0
      %6412 = vmatpush1.msra.mxu0 0.0
      %6413 = vmatprep.subr.mxu0 0.0
      %6414 = vmatpush1.msra.mxu0 0.0
      %6415 = vmatprep.subr.mxu0 0.0
      %6416 = vmatpush1.msra.mxu0 0.0
      %6417 = vmatprep.subr.mxu0 0.0
      %6418 = vmatpush1.msra.mxu0 0.0
      %6419 = vmatprep.subr.mxu0 0.0
      %6420 = vmatpush1.msra.mxu0 0.0
      %6421 = vmatprep.subr.mxu0 0.0
      %6422 = vmatpush1.msra.mxu0 0.0
      %6423 = vmatprep.subr.mxu0 0.0
      %6424 = vmatpush1.msra.mxu0 0.0
      %6425 = vmatprep.subr.mxu0 0.0
      %6426 = vmatpush1.msra.mxu0 0.0
      %6427 = vmatprep.subr.mxu0 0.0
      %6428 = vmatpush1.msra.mxu0 0.0
      %6429 = vmatprep.subr.mxu0 0.0
      %6430 = vmatpush1.msra.mxu0 0.0
      %6431 = vmatprep.subr.mxu0 0.0
      %6432 = vmatpush1.msra.mxu0 0.0
      %6433 = vmatprep.subr.mxu0 0.0
      %6434 = vmatpush1.msra.mxu0 0.0
      %6435 = vmatprep.subr.mxu0 0.0
      %6436 = vmatpush1.msra.mxu0 0.0
      %6437 = vmatprep.subr.mxu0 0.0
      %6438 = vmatpush1.msra.mxu0 0.0
      %6439 = vmatprep.subr.mxu0 0.0
      %6440 = vmatpush1.msra.mxu0 0.0
      %6441 = vmatprep.subr.mxu0 0.0
      %6442 = vmatpush1.msra.mxu0 0.0
      %6443 = vmatprep.subr.mxu0 0.0
      %6444 = vmatpush1.msra.mxu0 0.0
      %6445 = vmatprep.subr.mxu0 0.0
      %6446 = vmatpush1.msra.mxu0 0.0
      %6447 = vmatprep.subr.mxu0 0.0
      %6448 = vmatpush1.msra.mxu0 0.0
      %6449 = vmatprep.mubr.f32.mxu0 0.0
      %6450 = vmatmul.mubr.f32.gmra.mrb[0].mxu0 %v6241
      %v6451 = vpop.f32.mrb[0].mxu0
      %v6452 = vadd.f32 0.0, %v6451
      %v6453 = vpop.f32.mrb[0].mxu0
      %v6454 = vadd.f32 0.0, %v6453
      %6455 = vdwg.mxu0
      %6456 = vmatprep.subr.mxu0 0.0
      %6457 = vmatpush1.msra.mxu0 %v6232
      %6458 = vmatprep.subr.mxu0 0.0
      %6459 = vmatpush1.msra.mxu0 0.0
      %6460 = vmatprep.subr.mxu0 0.0
      %6461 = vmatpush1.msra.mxu0 0.0
      %6462 = vmatprep.subr.mxu0 0.0
      %6463 = vmatpush1.msra.mxu0 0.0
      %6464 = vmatprep.subr.mxu0 0.0
      %6465 = vmatpush1.msra.mxu0 0.0
      %6466 = vmatprep.subr.mxu0 0.0
      %6467 = vmatpush1.msra.mxu0 0.0
      %6468 = vmatprep.subr.mxu0 0.0
      %6469 = vmatpush1.msra.mxu0 0.0
      %6470 = vmatprep.subr.mxu0 0.0
      %6471 = vmatpush1.msra.mxu0 0.0
      %6472 = vmatprep.subr.mxu0 0.0
      %6473 = vmatpush1.msra.mxu0 0.0
      %6474 = vmatprep.subr.mxu0 0.0
      %6475 = vmatpush1.msra.mxu0 0.0
      %6476 = vmatprep.subr.mxu0 0.0
      %6477 = vmatpush1.msra.mxu0 0.0
      %6478 = vmatprep.subr.mxu0 0.0
      %6479 = vmatpush1.msra.mxu0 0.0
      %6480 = vmatprep.subr.mxu0 0.0
      %6481 = vmatpush1.msra.mxu0 0.0
      %6482 = vmatprep.subr.mxu0 0.0
      %6483 = vmatpush1.msra.mxu0 0.0
      %6484 = vmatprep.subr.mxu0 0.0
      %6485 = vmatpush1.msra.mxu0 0.0
      %6486 = vmatprep.subr.mxu0 0.0
      %6487 = vmatpush1.msra.mxu0 0.0
      %6488 = vmatprep.subr.mxu0 0.0
      %6489 = vmatpush1.msra.mxu0 0.0
      %6490 = vmatprep.subr.mxu0 0.0
      %6491 = vmatpush1.msra.mxu0 0.0
      %6492 = vmatprep.subr.mxu0 0.0
      %6493 = vmatpush1.msra.mxu0 0.0
      %6494 = vmatprep.subr.mxu0 0.0
      %6495 = vmatpush1.msra.mxu0 0.0
      %6496 = vmatprep.subr.mxu0 0.0
      %6497 = vmatpush1.msra.mxu0 0.0
      %6498 = vmatprep.subr.mxu0 0.0
      %6499 = vmatpush1.msra.mxu0 0.0
      %6500 = vmatprep.subr.mxu0 0.0
      %6501 = vmatpush1.msra.mxu0 0.0
      %6502 = vmatprep.subr.mxu0 0.0
      %6503 = vmatpush1.msra.mxu0 0.0
      %6504 = vmatprep.subr.mxu0 0.0
      %6505 = vmatpush1.msra.mxu0 0.0
      %6506 = vmatprep.subr.mxu0 0.0
      %6507 = vmatpush1.msra.mxu0 0.0
      %6508 = vmatprep.subr.mxu0 0.0
      %6509 = vmatpush1.msra.mxu0 0.0
      %6510 = vmatprep.subr.mxu0 0.0
      %6511 = vmatpush1.msra.mxu0 0.0
      %6512 = vmatprep.subr.mxu0 0.0
      %6513 = vmatpush1.msra.mxu0 0.0
      %6514 = vmatprep.subr.mxu0 0.0
      %6515 = vmatpush1.msra.mxu0 0.0
      %6516 = vmatprep.subr.mxu0 0.0
      %6517 = vmatpush1.msra.mxu0 0.0
      %6518 = vmatprep.subr.mxu0 0.0
      %6519 = vmatpush1.msra.mxu0 0.0
      %6520 = vmatprep.mubr.f32.mxu0 0.0
      %6521 = vmatmul.mubr.f32.gmra.mrb[0].mxu0 %v6241
      %v6522 = vpop.f32.mrb[0].mxu0
      %v6523 = vadd.f32 0.0, %v6522
      %v6524 = vpop.f32.mrb[0].mxu0
      %6525 = vdwg.mxu0
      %v6526 = vadd.f32 %v5992, %v6310
      %v6527 = vadd.f32 %v5994, %v6312
      %v6528 = vadd.f32 %v6063, %v6381
      %v6529 = vadd.f32 %v6065, %v6383
      %v6530 = vadd.f32 %v6134, %v6452
      %v6531 = vadd.f32 %v6136, %v6454
      %v6532 = vadd.f32 %v6205, %v6523
      %6534 = vset.pattern.permute.xlu0 0
      %6535 = vperm.xlu0 %6534, %v5556
      %v6536 = vpop.permute.xlu0 %6535
      %v6538 = vadd.f32 %v6526, %v6536
      %v6539 = vadd.f32 %v6527, %v6536
      %v6540 = vadd.f32 %v6528, %v6536
      %v6541 = vadd.f32 %v6529, %v6536
      %v6542 = vadd.f32 %v6530, %v6536
      %v6543 = vadd.f32 %v6531, %v6536
      %v6544 = vadd.f32 %v6532, %v6536
      %v6545 = vadd.f32 %v3536, %v6538
      %v6546 = vadd.f32 %v3537, %v6539
      %v6547 = vadd.f32 %v3538, %v6540
      %v6548 = vadd.f32 %v3539, %v6541
      %v6549 = vadd.f32 %v3540, %v6542
      %v6550 = vadd.f32 %v3541, %v6543
      %v6551 = vadd.f32 %v3542, %v6544
      %s6552 = scalar_lea.vmem %s10, 48
      %v6553 = vld [vmem:[%s6552] sm:$0xff]
      %v6554 = vld [vmem:[%s7] sm:$0xff]
      %s6555 = scalar_lea.vmem %s7, 8
      %v6556 = vld [vmem:[%s6555] sm:$0xff]
      %v6558 = vsel %vm472, %v6556, 0
      %6560 = vmatprep.subr.mxu0 %v479
      %6561 = vmatpush1.msra.mxu0 %v477
      %6562 = vmatprep.subr.mxu0 0.0
      %6563 = vmatpush1.msra.mxu0 0.0
      %6564 = vmatprep.subr.mxu0 0.0
      %6565 = vmatpush1.msra.mxu0 0.0
      %6566 = vmatprep.subr.mxu0 0.0
      %6567 = vmatpush1.msra.mxu0 0.0
      %6568 = vmatprep.subr.mxu0 0.0
      %6569 = vmatpush1.msra.mxu0 0.0
      %6570 = vmatprep.subr.mxu0 0.0
      %6571 = vmatpush1.msra.mxu0 0.0
      %6572 = vmatprep.subr.mxu0 0.0
      %6573 = vmatpush1.msra.mxu0 0.0
      %6574 = vmatprep.subr.mxu0 0.0
      %6575 = vmatpush1.msra.mxu0 0.0
      %6576 = vmatprep.subr.mxu0 0.0
      %6577 = vmatpush1.msra.mxu0 0.0
      %6578 = vmatprep.subr.mxu0 0.0
      %6579 = vmatpush1.msra.mxu0 0.0
      %6580 = vmatprep.subr.mxu0 0.0
      %6581 = vmatpush1.msra.mxu0 0.0
      %6582 = vmatprep.subr.mxu0 0.0
      %6583 = vmatpush1.msra.mxu0 0.0
      %6584 = vmatprep.subr.mxu0 0.0
      %6585 = vmatpush1.msra.mxu0 0.0
      %6586 = vmatprep.subr.mxu0 0.0
      %6587 = vmatpush1.msra.mxu0 0.0
      %6588 = vmatprep.subr.mxu0 0.0
      %6589 = vmatpush1.msra.mxu0 0.0
      %6590 = vmatprep.subr.mxu0 0.0
      %6591 = vmatpush1.msra.mxu0 0.0
      %6592 = vmatprep.subr.mxu0 0.0
      %6593 = vmatpush1.msra.mxu0 0.0
      %6594 = vmatprep.subr.mxu0 0.0
      %6595 = vmatpush1.msra.mxu0 0.0
      %6596 = vmatprep.subr.mxu0 0.0
      %6597 = vmatpush1.msra.mxu0 0.0
      %6598 = vmatprep.subr.mxu0 0.0
      %6599 = vmatpush1.msra.mxu0 0.0
      %6600 = vmatprep.subr.mxu0 0.0
      %6601 = vmatpush1.msra.mxu0 0.0
      %6602 = vmatprep.subr.mxu0 0.0
      %6603 = vmatpush1.msra.mxu0 0.0
      %6604 = vmatprep.subr.mxu0 0.0
      %6605 = vmatpush1.msra.mxu0 0.0
      %6606 = vmatprep.subr.mxu0 0.0
      %6607 = vmatpush1.msra.mxu0 0.0
      %6608 = vmatprep.subr.mxu0 0.0
      %6609 = vmatpush1.msra.mxu0 0.0
      %6610 = vmatprep.subr.mxu0 0.0
      %6611 = vmatpush1.msra.mxu0 0.0
      %6612 = vmatprep.subr.mxu0 0.0
      %6613 = vmatpush1.msra.mxu0 0.0
      %6614 = vmatprep.subr.mxu0 0.0
      %6615 = vmatpush1.msra.mxu0 0.0
      %6616 = vmatprep.subr.mxu0 0.0
      %6617 = vmatpush1.msra.mxu0 0.0
      %6618 = vmatprep.subr.mxu0 0.0
      %6619 = vmatpush1.msra.mxu0 0.0
      %6620 = vmatprep.subr.mxu0 0.0
      %6621 = vmatpush1.msra.mxu0 0.0
      %6622 = vmatprep.subr.mxu0 0.0
      %6623 = vmatpush1.msra.mxu0 0.0
      %6624 = vmatprep.mubr.f32.mxu0 0.0
      %6625 = vmatmul.mubr.f32.gmra.mrb[0].mxu0 %v6558
      %v6626 = vpop.f32.mrb[0].mxu0
      %v6627 = vadd.f32 0.0, %v6626
      %v6628 = vpop.f32.mrb[0].mxu0
      %v6629 = vadd.f32 0.0, %v6628
      %6630 = vdwg.mxu0
      %6631 = vmatprep.subr.mxu0 %v483
      %6632 = vmatpush1.msra.mxu0 %v481
      %6633 = vmatprep.subr.mxu0 0.0
      %6634 = vmatpush1.msra.mxu0 0.0
      %6635 = vmatprep.subr.mxu0 0.0
      %6636 = vmatpush1.msra.mxu0 0.0
      %6637 = vmatprep.subr.mxu0 0.0
      %6638 = vmatpush1.msra.mxu0 0.0
      %6639 = vmatprep.subr.mxu0 0.0
      %6640 = vmatpush1.msra.mxu0 0.0
      %6641 = vmatprep.subr.mxu0 0.0
      %6642 = vmatpush1.msra.mxu0 0.0
      %6643 = vmatprep.subr.mxu0 0.0
      %6644 = vmatpush1.msra.mxu0 0.0
      %6645 = vmatprep.subr.mxu0 0.0
      %6646 = vmatpush1.msra.mxu0 0.0
      %6647 = vmatprep.subr.mxu0 0.0
      %6648 = vmatpush1.msra.mxu0 0.0
      %6649 = vmatprep.subr.mxu0 0.0
      %6650 = vmatpush1.msra.mxu0 0.0
      %6651 = vmatprep.subr.mxu0 0.0
      %6652 = vmatpush1.msra.mxu0 0.0
      %6653 = vmatprep.subr.mxu0 0.0
      %6654 = vmatpush1.msra.mxu0 0.0
      %6655 = vmatprep.subr.mxu0 0.0
      %6656 = vmatpush1.msra.mxu0 0.0
      %6657 = vmatprep.subr.mxu0 0.0
      %6658 = vmatpush1.msra.mxu0 0.0
      %6659 = vmatprep.subr.mxu0 0.0
      %6660 = vmatpush1.msra.mxu0 0.0
      %6661 = vmatprep.subr.mxu0 0.0
      %6662 = vmatpush1.msra.mxu0 0.0
      %6663 = vmatprep.subr.mxu0 0.0
      %6664 = vmatpush1.msra.mxu0 0.0
      %6665 = vmatprep.subr.mxu0 0.0
      %6666 = vmatpush1.msra.mxu0 0.0
      %6667 = vmatprep.subr.mxu0 0.0
      %6668 = vmatpush1.msra.mxu0 0.0
      %6669 = vmatprep.subr.mxu0 0.0
      %6670 = vmatpush1.msra.mxu0 0.0
      %6671 = vmatprep.subr.mxu0 0.0
      %6672 = vmatpush1.msra.mxu0 0.0
      %6673 = vmatprep.subr.mxu0 0.0
      %6674 = vmatpush1.msra.mxu0 0.0
      %6675 = vmatprep.subr.mxu0 0.0
      %6676 = vmatpush1.msra.mxu0 0.0
      %6677 = vmatprep.subr.mxu0 0.0
      %6678 = vmatpush1.msra.mxu0 0.0
      %6679 = vmatprep.subr.mxu0 0.0
      %6680 = vmatpush1.msra.mxu0 0.0
      %6681 = vmatprep.subr.mxu0 0.0
      %6682 = vmatpush1.msra.mxu0 0.0
      %6683 = vmatprep.subr.mxu0 0.0
      %6684 = vmatpush1.msra.mxu0 0.0
      %6685 = vmatprep.subr.mxu0 0.0
      %6686 = vmatpush1.msra.mxu0 0.0
      %6687 = vmatprep.subr.mxu0 0.0
      %6688 = vmatpush1.msra.mxu0 0.0
      %6689 = vmatprep.subr.mxu0 0.0
      %6690 = vmatpush1.msra.mxu0 0.0
      %6691 = vmatprep.subr.mxu0 0.0
      %6692 = vmatpush1.msra.mxu0 0.0
      %6693 = vmatprep.subr.mxu0 0.0
      %6694 = vmatpush1.msra.mxu0 0.0
      %6695 = vmatprep.mubr.f32.mxu0 0.0
      %6696 = vmatmul.mubr.f32.gmra.mrb[0].mxu0 %v6558
      %v6697 = vpop.f32.mrb[0].mxu0
      %v6698 = vadd.f32 0.0, %v6697
      %v6699 = vpop.f32.mrb[0].mxu0
      %v6700 = vadd.f32 0.0, %v6699
      %6701 = vdwg.mxu0
      %6702 = vmatprep.subr.mxu0 %v487
      %6703 = vmatpush1.msra.mxu0 %v485
      %6704 = vmatprep.subr.mxu0 0.0
      %6705 = vmatpush1.msra.mxu0 0.0
      %6706 = vmatprep.subr.mxu0 0.0
      %6707 = vmatpush1.msra.mxu0 0.0
      %6708 = vmatprep.subr.mxu0 0.0
      %6709 = vmatpush1.msra.mxu0 0.0
      %6710 = vmatprep.subr.mxu0 0.0
      %6711 = vmatpush1.msra.mxu0 0.0
      %6712 = vmatprep.subr.mxu0 0.0
      %6713 = vmatpush1.msra.mxu0 0.0
      %6714 = vmatprep.subr.mxu0 0.0
      %6715 = vmatpush1.msra.mxu0 0.0
      %6716 = vmatprep.subr.mxu0 0.0
      %6717 = vmatpush1.msra.mxu0 0.0
      %6718 = vmatprep.subr.mxu0 0.0
      %6719 = vmatpush1.msra.mxu0 0.0
      %6720 = vmatprep.subr.mxu0 0.0
      %6721 = vmatpush1.msra.mxu0 0.0
      %6722 = vmatprep.subr.mxu0 0.0
      %6723 = vmatpush1.msra.mxu0 0.0
      %6724 = vmatprep.subr.mxu0 0.0
      %6725 = vmatpush1.msra.mxu0 0.0
      %6726 = vmatprep.subr.mxu0 0.0
      %6727 = vmatpush1.msra.mxu0 0.0
      %6728 = vmatprep.subr.mxu0 0.0
      %6729 = vmatpush1.msra.mxu0 0.0
      %6730 = vmatprep.subr.mxu0 0.0
      %6731 = vmatpush1.msra.mxu0 0.0
      %6732 = vmatprep.subr.mxu0 0.0
      %6733 = vmatpush1.msra.mxu0 0.0
      %6734 = vmatprep.subr.mxu0 0.0
      %6735 = vmatpush1.msra.mxu0 0.0
      %6736 = vmatprep.subr.mxu0 0.0
      %6737 = vmatpush1.msra.mxu0 0.0
      %6738 = vmatprep.subr.mxu0 0.0
      %6739 = vmatpush1.msra.mxu0 0.0
      %6740 = vmatprep.subr.mxu0 0.0
      %6741 = vmatpush1.msra.mxu0 0.0
      %6742 = vmatprep.subr.mxu0 0.0
      %6743 = vmatpush1.msra.mxu0 0.0
      %6744 = vmatprep.subr.mxu0 0.0
      %6745 = vmatpush1.msra.mxu0 0.0
      %6746 = vmatprep.subr.mxu0 0.0
      %6747 = vmatpush1.msra.mxu0 0.0
      %6748 = vmatprep.subr.mxu0 0.0
      %6749 = vmatpush1.msra.mxu0 0.0
      %6750 = vmatprep.subr.mxu0 0.0
      %6751 = vmatpush1.msra.mxu0 0.0
      %6752 = vmatprep.subr.mxu0 0.0
      %6753 = vmatpush1.msra.mxu0 0.0
      %6754 = vmatprep.subr.mxu0 0.0
      %6755 = vmatpush1.msra.mxu0 0.0
      %6756 = vmatprep.subr.mxu0 0.0
      %6757 = vmatpush1.msra.mxu0 0.0
      %6758 = vmatprep.subr.mxu0 0.0
      %6759 = vmatpush1.msra.mxu0 0.0
      %6760 = vmatprep.subr.mxu0 0.0
      %6761 = vmatpush1.msra.mxu0 0.0
      %6762 = vmatprep.subr.mxu0 0.0
      %6763 = vmatpush1.msra.mxu0 0.0
      %6764 = vmatprep.subr.mxu0 0.0
      %6765 = vmatpush1.msra.mxu0 0.0
      %6766 = vmatprep.mubr.f32.mxu0 0.0
      %6767 = vmatmul.mubr.f32.gmra.mrb[0].mxu0 %v6558
      %v6768 = vpop.f32.mrb[0].mxu0
      %v6769 = vadd.f32 0.0, %v6768
      %v6770 = vpop.f32.mrb[0].mxu0
      %v6771 = vadd.f32 0.0, %v6770
      %6772 = vdwg.mxu0
      %6773 = vmatprep.subr.mxu0 0.0
      %6774 = vmatpush1.msra.mxu0 %v489
      %6775 = vmatprep.subr.mxu0 0.0
      %6776 = vmatpush1.msra.mxu0 0.0
      %6777 = vmatprep.subr.mxu0 0.0
      %6778 = vmatpush1.msra.mxu0 0.0
      %6779 = vmatprep.subr.mxu0 0.0
      %6780 = vmatpush1.msra.mxu0 0.0
      %6781 = vmatprep.subr.mxu0 0.0
      %6782 = vmatpush1.msra.mxu0 0.0
      %6783 = vmatprep.subr.mxu0 0.0
      %6784 = vmatpush1.msra.mxu0 0.0
      %6785 = vmatprep.subr.mxu0 0.0
      %6786 = vmatpush1.msra.mxu0 0.0
      %6787 = vmatprep.subr.mxu0 0.0
      %6788 = vmatpush1.msra.mxu0 0.0
      %6789 = vmatprep.subr.mxu0 0.0
      %6790 = vmatpush1.msra.mxu0 0.0
      %6791 = vmatprep.subr.mxu0 0.0
      %6792 = vmatpush1.msra.mxu0 0.0
      %6793 = vmatprep.subr.mxu0 0.0
      %6794 = vmatpush1.msra.mxu0 0.0
      %6795 = vmatprep.subr.mxu0 0.0
      %6796 = vmatpush1.msra.mxu0 0.0
      %6797 = vmatprep.subr.mxu0 0.0
      %6798 = vmatpush1.msra.mxu0 0.0
      %6799 = vmatprep.subr.mxu0 0.0
      %6800 = vmatpush1.msra.mxu0 0.0
      %6801 = vmatprep.subr.mxu0 0.0
      %6802 = vmatpush1.msra.mxu0 0.0
      %6803 = vmatprep.subr.mxu0 0.0
      %6804 = vmatpush1.msra.mxu0 0.0
      %6805 = vmatprep.subr.mxu0 0.0
      %6806 = vmatpush1.msra.mxu0 0.0
      %6807 = vmatprep.subr.mxu0 0.0
      %6808 = vmatpush1.msra.mxu0 0.0
      %6809 = vmatprep.subr.mxu0 0.0
      %6810 = vmatpush1.msra.mxu0 0.0
      %6811 = vmatprep.subr.mxu0 0.0
      %6812 = vmatpush1.msra.mxu0 0.0
      %6813 = vmatprep.subr.mxu0 0.0
      %6814 = vmatpush1.msra.mxu0 0.0
      %6815 = vmatprep.subr.mxu0 0.0
      %6816 = vmatpush1.msra.mxu0 0.0
      %6817 = vmatprep.subr.mxu0 0.0
      %6818 = vmatpush1.msra.mxu0 0.0
      %6819 = vmatprep.subr.mxu0 0.0
      %6820 = vmatpush1.msra.mxu0 0.0
      %6821 = vmatprep.subr.mxu0 0.0
      %6822 = vmatpush1.msra.mxu0 0.0
      %6823 = vmatprep.subr.mxu0 0.0
      %6824 = vmatpush1.msra.mxu0 0.0
      %6825 = vmatprep.subr.mxu0 0.0
      %6826 = vmatpush1.msra.mxu0 0.0
      %6827 = vmatprep.subr.mxu0 0.0
      %6828 = vmatpush1.msra.mxu0 0.0
      %6829 = vmatprep.subr.mxu0 0.0
      %6830 = vmatpush1.msra.mxu0 0.0
      %6831 = vmatprep.subr.mxu0 0.0
      %6832 = vmatpush1.msra.mxu0 0.0
      %6833 = vmatprep.subr.mxu0 0.0
      %6834 = vmatpush1.msra.mxu0 0.0
      %6835 = vmatprep.subr.mxu0 0.0
      %6836 = vmatpush1.msra.mxu0 0.0
      %6837 = vmatprep.mubr.f32.mxu0 0.0
      %6838 = vmatmul.mubr.f32.gmra.mrb[0].mxu0 %v6558
      %v6839 = vpop.f32.mrb[0].mxu0
      %v6840 = vadd.f32 0.0, %v6839
      %v6841 = vpop.f32.mrb[0].mxu0
      %6842 = vdwg.mxu0
      %6843 = vrot.lane.b32.xlu0 %v431, 29
      %v6844 = vpop.permute.xlu0 %6843
      %6845 = vrot.lane.b32.xlu0 %v444, 29
      %v6846 = vpop.permute.xlu0 %6845
      %6847 = vrot.lane.b32.xlu0 %v432, 29
      %v6848 = vpop.permute.xlu0 %6847
      %6849 = vrot.lane.b32.xlu0 %v445, 29
      %v6850 = vpop.permute.xlu0 %6849
      %6851 = vrot.lane.b32.xlu0 %v433, 29
      %v6852 = vpop.permute.xlu0 %6851
      %6853 = vrot.lane.b32.xlu0 %v446, 29
      %v6854 = vpop.permute.xlu0 %6853
      %6855 = vrot.lane.b32.xlu0 %v434, 29
      %v6856 = vpop.permute.xlu0 %6855
      %6857 = vrot.lane.b32.xlu0 %v447, 29
      %v6858 = vpop.permute.xlu0 %6857
      %v6859 = vsel %vm2897, %v6844, %v6846
      %v6860 = vsel %vm2897, %v6846, %v6848
      %v6861 = vsel %vm2897, %v6848, %v6850
      %v6862 = vsel %vm2897, %v6850, %v6852
      %v6863 = vsel %vm2897, %v6852, %v6854
      %v6864 = vsel %vm2897, %v6854, %v6856
      %v6865 = vsel %vm2897, %v6856, %v6858
      %v6867 = vsel %vm472, %v6554, 0
      %v6869 = vsel %vm476, %v6859, 0
      %v6871 = vsel %vm476, %v6860, 0
      %v6873 = vsel %vm476, %v6861, 0
      %v6875 = vsel %vm476, %v6862, 0
      %v6877 = vsel %vm476, %v6863, 0
      %v6879 = vsel %vm476, %v6864, 0
      %v6881 = vsel %vm476, %v6865, 0
      %6883 = vmatprep.subr.mxu0 %v6871
      %6884 = vmatpush1.msra.mxu0 %v6869
      %6885 = vmatprep.subr.mxu0 0.0
      %6886 = vmatpush1.msra.mxu0 0.0
      %6887 = vmatprep.subr.mxu0 0.0
      %6888 = vmatpush1.msra.mxu0 0.0
      %6889 = vmatprep.subr.mxu0 0.0
      %6890 = vmatpush1.msra.mxu0 0.0
      %6891 = vmatprep.subr.mxu0 0.0
      %6892 = vmatpush1.msra.mxu0 0.0
      %6893 = vmatprep.subr.mxu0 0.0
      %6894 = vmatpush1.msra.mxu0 0.0
      %6895 = vmatprep.subr.mxu0 0.0
      %6896 = vmatpush1.msra.mxu0 0.0
      %6897 = vmatprep.subr.mxu0 0.0
      %6898 = vmatpush1.msra.mxu0 0.0
      %6899 = vmatprep.subr.mxu0 0.0
      %6900 = vmatpush1.msra.mxu0 0.0
      %6901 = vmatprep.subr.mxu0 0.0
      %6902 = vmatpush1.msra.mxu0 0.0
      %6903 = vmatprep.subr.mxu0 0.0
      %6904 = vmatpush1.msra.mxu0 0.0
      %6905 = vmatprep.subr.mxu0 0.0
      %6906 = vmatpush1.msra.mxu0 0.0
      %6907 = vmatprep.subr.mxu0 0.0
      %6908 = vmatpush1.msra.mxu0 0.0
      %6909 = vmatprep.subr.mxu0 0.0
      %6910 = vmatpush1.msra.mxu0 0.0
      %6911 = vmatprep.subr.mxu0 0.0
      %6912 = vmatpush1.msra.mxu0 0.0
      %6913 = vmatprep.subr.mxu0 0.0
      %6914 = vmatpush1.msra.mxu0 0.0
      %6915 = vmatprep.subr.mxu0 0.0
      %6916 = vmatpush1.msra.mxu0 0.0
      %6917 = vmatprep.subr.mxu0 0.0
      %6918 = vmatpush1.msra.mxu0 0.0
      %6919 = vmatprep.subr.mxu0 0.0
      %6920 = vmatpush1.msra.mxu0 0.0
      %6921 = vmatprep.subr.mxu0 0.0
      %6922 = vmatpush1.msra.mxu0 0.0
      %6923 = vmatprep.subr.mxu0 0.0
      %6924 = vmatpush1.msra.mxu0 0.0
      %6925 = vmatprep.subr.mxu0 0.0
      %6926 = vmatpush1.msra.mxu0 0.0
      %6927 = vmatprep.subr.mxu0 0.0
      %6928 = vmatpush1.msra.mxu0 0.0
      %6929 = vmatprep.subr.mxu0 0.0
      %6930 = vmatpush1.msra.mxu0 0.0
      %6931 = vmatprep.subr.mxu0 0.0
      %6932 = vmatpush1.msra.mxu0 0.0
      %6933 = vmatprep.subr.mxu0 0.0
      %6934 = vmatpush1.msra.mxu0 0.0
      %6935 = vmatprep.subr.mxu0 0.0
      %6936 = vmatpush1.msra.mxu0 0.0
      %6937 = vmatprep.subr.mxu0 0.0
      %6938 = vmatpush1.msra.mxu0 0.0
      %6939 = vmatprep.subr.mxu0 0.0
      %6940 = vmatpush1.msra.mxu0 0.0
      %6941 = vmatprep.subr.mxu0 0.0
      %6942 = vmatpush1.msra.mxu0 0.0
      %6943 = vmatprep.subr.mxu0 0.0
      %6944 = vmatpush1.msra.mxu0 0.0
      %6945 = vmatprep.subr.mxu0 0.0
      %6946 = vmatpush1.msra.mxu0 0.0
      %6947 = vmatprep.mubr.f32.mxu0 0.0
      %6948 = vmatmul.mubr.f32.gmra.mrb[0].mxu0 %v6867
      %v6949 = vpop.f32.mrb[0].mxu0
      %v6950 = vadd.f32 %v6627, %v6949
      %v6951 = vpop.f32.mrb[0].mxu0
      %v6952 = vadd.f32 %v6629, %v6951
      %6953 = vdwg.mxu0
      %6954 = vmatprep.subr.mxu0 %v6875
      %6955 = vmatpush1.msra.mxu0 %v6873
      %6956 = vmatprep.subr.mxu0 0.0
      %6957 = vmatpush1.msra.mxu0 0.0
      %6958 = vmatprep.subr.mxu0 0.0
      %6959 = vmatpush1.msra.mxu0 0.0
      %6960 = vmatprep.subr.mxu0 0.0
      %6961 = vmatpush1.msra.mxu0 0.0
      %6962 = vmatprep.subr.mxu0 0.0
      %6963 = vmatpush1.msra.mxu0 0.0
      %6964 = vmatprep.subr.mxu0 0.0
      %6965 = vmatpush1.msra.mxu0 0.0
      %6966 = vmatprep.subr.mxu0 0.0
      %6967 = vmatpush1.msra.mxu0 0.0
      %6968 = vmatprep.subr.mxu0 0.0
      %6969 = vmatpush1.msra.mxu0 0.0
      %6970 = vmatprep.subr.mxu0 0.0
      %6971 = vmatpush1.msra.mxu0 0.0
      %6972 = vmatprep.subr.mxu0 0.0
      %6973 = vmatpush1.msra.mxu0 0.0
      %6974 = vmatprep.subr.mxu0 0.0
      %6975 = vmatpush1.msra.mxu0 0.0
      %6976 = vmatprep.subr.mxu0 0.0
      %6977 = vmatpush1.msra.mxu0 0.0
      %6978 = vmatprep.subr.mxu0 0.0
      %6979 = vmatpush1.msra.mxu0 0.0
      %6980 = vmatprep.subr.mxu0 0.0
      %6981 = vmatpush1.msra.mxu0 0.0
      %6982 = vmatprep.subr.mxu0 0.0
      %6983 = vmatpush1.msra.mxu0 0.0
      %6984 = vmatprep.subr.mxu0 0.0
      %6985 = vmatpush1.msra.mxu0 0.0
      %6986 = vmatprep.subr.mxu0 0.0
      %6987 = vmatpush1.msra.mxu0 0.0
      %6988 = vmatprep.subr.mxu0 0.0
      %6989 = vmatpush1.msra.mxu0 0.0
      %6990 = vmatprep.subr.mxu0 0.0
      %6991 = vmatpush1.msra.mxu0 0.0
      %6992 = vmatprep.subr.mxu0 0.0
      %6993 = vmatpush1.msra.mxu0 0.0
      %6994 = vmatprep.subr.mxu0 0.0
      %6995 = vmatpush1.msra.mxu0 0.0
      %6996 = vmatprep.subr.mxu0 0.0
      %6997 = vmatpush1.msra.mxu0 0.0
      %6998 = vmatprep.subr.mxu0 0.0
      %6999 = vmatpush1.msra.mxu0 0.0
      %7000 = vmatprep.subr.mxu0 0.0
      %7001 = vmatpush1.msra.mxu0 0.0
      %7002 = vmatprep.subr.mxu0 0.0
      %7003 = vmatpush1.msra.mxu0 0.0
      %7004 = vmatprep.subr.mxu0 0.0
      %7005 = vmatpush1.msra.mxu0 0.0
      %7006 = vmatprep.subr.mxu0 0.0
      %7007 = vmatpush1.msra.mxu0 0.0
      %7008 = vmatprep.subr.mxu0 0.0
      %7009 = vmatpush1.msra.mxu0 0.0
      %7010 = vmatprep.subr.mxu0 0.0
      %7011 = vmatpush1.msra.mxu0 0.0
      %7012 = vmatprep.subr.mxu0 0.0
      %7013 = vmatpush1.msra.mxu0 0.0
      %7014 = vmatprep.subr.mxu0 0.0
      %7015 = vmatpush1.msra.mxu0 0.0
      %7016 = vmatprep.subr.mxu0 0.0
      %7017 = vmatpush1.msra.mxu0 0.0
      %7018 = vmatprep.mubr.f32.mxu0 0.0
      %7019 = vmatmul.mubr.f32.gmra.mrb[0].mxu0 %v6867
      %v7020 = vpop.f32.mrb[0].mxu0
      %v7021 = vadd.f32 %v6698, %v7020
      %v7022 = vpop.f32.mrb[0].mxu0
      %v7023 = vadd.f32 %v6700, %v7022
      %7024 = vdwg.mxu0
      %7025 = vmatprep.subr.mxu0 %v6879
      %7026 = vmatpush1.msra.mxu0 %v6877
      %7027 = vmatprep.subr.mxu0 0.0
      %7028 = vmatpush1.msra.mxu0 0.0
      %7029 = vmatprep.subr.mxu0 0.0
      %7030 = vmatpush1.msra.mxu0 0.0
      %7031 = vmatprep.subr.mxu0 0.0
      %7032 = vmatpush1.msra.mxu0 0.0
      %7033 = vmatprep.subr.mxu0 0.0
      %7034 = vmatpush1.msra.mxu0 0.0
      %7035 = vmatprep.subr.mxu0 0.0
      %7036 = vmatpush1.msra.mxu0 0.0
      %7037 = vmatprep.subr.mxu0 0.0
      %7038 = vmatpush1.msra.mxu0 0.0
      %7039 = vmatprep.subr.mxu0 0.0
      %7040 = vmatpush1.msra.mxu0 0.0
      %7041 = vmatprep.subr.mxu0 0.0
      %7042 = vmatpush1.msra.mxu0 0.0
      %7043 = vmatprep.subr.mxu0 0.0
      %7044 = vmatpush1.msra.mxu0 0.0
      %7045 = vmatprep.subr.mxu0 0.0
      %7046 = vmatpush1.msra.mxu0 0.0
      %7047 = vmatprep.subr.mxu0 0.0
      %7048 = vmatpush1.msra.mxu0 0.0
      %7049 = vmatprep.subr.mxu0 0.0
      %7050 = vmatpush1.msra.mxu0 0.0
      %7051 = vmatprep.subr.mxu0 0.0
      %7052 = vmatpush1.msra.mxu0 0.0
      %7053 = vmatprep.subr.mxu0 0.0
      %7054 = vmatpush1.msra.mxu0 0.0
      %7055 = vmatprep.subr.mxu0 0.0
      %7056 = vmatpush1.msra.mxu0 0.0
      %7057 = vmatprep.subr.mxu0 0.0
      %7058 = vmatpush1.msra.mxu0 0.0
      %7059 = vmatprep.subr.mxu0 0.0
      %7060 = vmatpush1.msra.mxu0 0.0
      %7061 = vmatprep.subr.mxu0 0.0
      %7062 = vmatpush1.msra.mxu0 0.0
      %7063 = vmatprep.subr.mxu0 0.0
      %7064 = vmatpush1.msra.mxu0 0.0
      %7065 = vmatprep.subr.mxu0 0.0
      %7066 = vmatpush1.msra.mxu0 0.0
      %7067 = vmatprep.subr.mxu0 0.0
      %7068 = vmatpush1.msra.mxu0 0.0
      %7069 = vmatprep.subr.mxu0 0.0
      %7070 = vmatpush1.msra.mxu0 0.0
      %7071 = vmatprep.subr.mxu0 0.0
      %7072 = vmatpush1.msra.mxu0 0.0
      %7073 = vmatprep.subr.mxu0 0.0
      %7074 = vmatpush1.msra.mxu0 0.0
      %7075 = vmatprep.subr.mxu0 0.0
      %7076 = vmatpush1.msra.mxu0 0.0
      %7077 = vmatprep.subr.mxu0 0.0
      %7078 = vmatpush1.msra.mxu0 0.0
      %7079 = vmatprep.subr.mxu0 0.0
      %7080 = vmatpush1.msra.mxu0 0.0
      %7081 = vmatprep.subr.mxu0 0.0
      %7082 = vmatpush1.msra.mxu0 0.0
      %7083 = vmatprep.subr.mxu0 0.0
      %7084 = vmatpush1.msra.mxu0 0.0
      %7085 = vmatprep.subr.mxu0 0.0
      %7086 = vmatpush1.msra.mxu0 0.0
      %7087 = vmatprep.subr.mxu0 0.0
      %7088 = vmatpush1.msra.mxu0 0.0
      %7089 = vmatprep.mubr.f32.mxu0 0.0
      %7090 = vmatmul.mubr.f32.gmra.mrb[0].mxu0 %v6867
      %v7091 = vpop.f32.mrb[0].mxu0
      %v7092 = vadd.f32 %v6769, %v7091
      %v7093 = vpop.f32.mrb[0].mxu0
      %v7094 = vadd.f32 %v6771, %v7093
      %7095 = vdwg.mxu0
      %7096 = vmatprep.subr.mxu0 0.0
      %7097 = vmatpush1.msra.mxu0 %v6881
      %7098 = vmatprep.subr.mxu0 0.0
      %7099 = vmatpush1.msra.mxu0 0.0
      %7100 = vmatprep.subr.mxu0 0.0
      %7101 = vmatpush1.msra.mxu0 0.0
      %7102 = vmatprep.subr.mxu0 0.0
      %7103 = vmatpush1.msra.mxu0 0.0
      %7104 = vmatprep.subr.mxu0 0.0
      %7105 = vmatpush1.msra.mxu0 0.0
      %7106 = vmatprep.subr.mxu0 0.0
      %7107 = vmatpush1.msra.mxu0 0.0
      %7108 = vmatprep.subr.mxu0 0.0
      %7109 = vmatpush1.msra.mxu0 0.0
      %7110 = vmatprep.subr.mxu0 0.0
      %7111 = vmatpush1.msra.mxu0 0.0
      %7112 = vmatprep.subr.mxu0 0.0
      %7113 = vmatpush1.msra.mxu0 0.0
      %7114 = vmatprep.subr.mxu0 0.0
      %7115 = vmatpush1.msra.mxu0 0.0
      %7116 = vmatprep.subr.mxu0 0.0
      %7117 = vmatpush1.msra.mxu0 0.0
      %7118 = vmatprep.subr.mxu0 0.0
      %7119 = vmatpush1.msra.mxu0 0.0
      %7120 = vmatprep.subr.mxu0 0.0
      %7121 = vmatpush1.msra.mxu0 0.0
      %7122 = vmatprep.subr.mxu0 0.0
      %7123 = vmatpush1.msra.mxu0 0.0
      %7124 = vmatprep.subr.mxu0 0.0
      %7125 = vmatpush1.msra.mxu0 0.0
      %7126 = vmatprep.subr.mxu0 0.0
      %7127 = vmatpush1.msra.mxu0 0.0
      %7128 = vmatprep.subr.mxu0 0.0
      %7129 = vmatpush1.msra.mxu0 0.0
      %7130 = vmatprep.subr.mxu0 0.0
      %7131 = vmatpush1.msra.mxu0 0.0
      %7132 = vmatprep.subr.mxu0 0.0
      %7133 = vmatpush1.msra.mxu0 0.0
      %7134 = vmatprep.subr.mxu0 0.0
      %7135 = vmatpush1.msra.mxu0 0.0
      %7136 = vmatprep.subr.mxu0 0.0
      %7137 = vmatpush1.msra.mxu0 0.0
      %7138 = vmatprep.subr.mxu0 0.0
      %7139 = vmatpush1.msra.mxu0 0.0
      %7140 = vmatprep.subr.mxu0 0.0
      %7141 = vmatpush1.msra.mxu0 0.0
      %7142 = vmatprep.subr.mxu0 0.0
      %7143 = vmatpush1.msra.mxu0 0.0
      %7144 = vmatprep.subr.mxu0 0.0
      %7145 = vmatpush1.msra.mxu0 0.0
      %7146 = vmatprep.subr.mxu0 0.0
      %7147 = vmatpush1.msra.mxu0 0.0
      %7148 = vmatprep.subr.mxu0 0.0
      %7149 = vmatpush1.msra.mxu0 0.0
      %7150 = vmatprep.subr.mxu0 0.0
      %7151 = vmatpush1.msra.mxu0 0.0
      %7152 = vmatprep.subr.mxu0 0.0
      %7153 = vmatpush1.msra.mxu0 0.0
      %7154 = vmatprep.subr.mxu0 0.0
      %7155 = vmatpush1.msra.mxu0 0.0
      %7156 = vmatprep.subr.mxu0 0.0
      %7157 = vmatpush1.msra.mxu0 0.0
      %7158 = vmatprep.subr.mxu0 0.0
      %7159 = vmatpush1.msra.mxu0 0.0
      %7160 = vmatprep.mubr.f32.mxu0 0.0
      %7161 = vmatmul.mubr.f32.gmra.mrb[0].mxu0 %v6867
      %v7162 = vpop.f32.mrb[0].mxu0
      %v7163 = vadd.f32 %v6840, %v7162
      %v7164 = vpop.f32.mrb[0].mxu0
      %7165 = vdwg.mxu0
      %s7166 = scalar_lea.vmem %s7, 16
      %v7167 = vld [vmem:[%s7166] sm:$0xff]
      %7168 = vrot.lane.b32.xlu0 %v431, 27
      %v7169 = vpop.permute.xlu0 %7168
      %7170 = vrot.lane.b32.xlu0 %v444, 27
      %v7171 = vpop.permute.xlu0 %7170
      %7172 = vrot.lane.b32.xlu0 %v432, 27
      %v7173 = vpop.permute.xlu0 %7172
      %7174 = vrot.lane.b32.xlu0 %v445, 27
      %v7175 = vpop.permute.xlu0 %7174
      %7176 = vrot.lane.b32.xlu0 %v433, 27
      %v7177 = vpop.permute.xlu0 %7176
      %7178 = vrot.lane.b32.xlu0 %v446, 27
      %v7179 = vpop.permute.xlu0 %7178
      %7180 = vrot.lane.b32.xlu0 %v434, 27
      %v7181 = vpop.permute.xlu0 %7180
      %7182 = vrot.lane.b32.xlu0 %v447, 27
      %v7183 = vpop.permute.xlu0 %7182
      %v7184 = vsel %vm3216, %v7169, %v7171
      %v7185 = vsel %vm3216, %v7171, %v7173
      %v7186 = vsel %vm3216, %v7173, %v7175
      %v7187 = vsel %vm3216, %v7175, %v7177
      %v7188 = vsel %vm3216, %v7177, %v7179
      %v7189 = vsel %vm3216, %v7179, %v7181
      %v7190 = vsel %vm3216, %v7181, %v7183
      %v7192 = vsel %vm472, %v7167, 0
      %v7194 = vsel %vm476, %v7184, 0
      %v7196 = vsel %vm476, %v7185, 0
      %v7198 = vsel %vm476, %v7186, 0
      %v7200 = vsel %vm476, %v7187, 0
      %v7202 = vsel %vm476, %v7188, 0
      %v7204 = vsel %vm476, %v7189, 0
      %v7206 = vsel %vm476, %v7190, 0
      %7208 = vmatprep.subr.mxu0 %v7196
      %7209 = vmatpush1.msra.mxu0 %v7194
      %7210 = vmatprep.subr.mxu0 0.0
      %7211 = vmatpush1.msra.mxu0 0.0
      %7212 = vmatprep.subr.mxu0 0.0
      %7213 = vmatpush1.msra.mxu0 0.0
      %7214 = vmatprep.subr.mxu0 0.0
      %7215 = vmatpush1.msra.mxu0 0.0
      %7216 = vmatprep.subr.mxu0 0.0
      %7217 = vmatpush1.msra.mxu0 0.0
      %7218 = vmatprep.subr.mxu0 0.0
      %7219 = vmatpush1.msra.mxu0 0.0
      %7220 = vmatprep.subr.mxu0 0.0
      %7221 = vmatpush1.msra.mxu0 0.0
      %7222 = vmatprep.subr.mxu0 0.0
      %7223 = vmatpush1.msra.mxu0 0.0
      %7224 = vmatprep.subr.mxu0 0.0
      %7225 = vmatpush1.msra.mxu0 0.0
      %7226 = vmatprep.subr.mxu0 0.0
      %7227 = vmatpush1.msra.mxu0 0.0
      %7228 = vmatprep.subr.mxu0 0.0
      %7229 = vmatpush1.msra.mxu0 0.0
      %7230 = vmatprep.subr.mxu0 0.0
      %7231 = vmatpush1.msra.mxu0 0.0
      %7232 = vmatprep.subr.mxu0 0.0
      %7233 = vmatpush1.msra.mxu0 0.0
      %7234 = vmatprep.subr.mxu0 0.0
      %7235 = vmatpush1.msra.mxu0 0.0
      %7236 = vmatprep.subr.mxu0 0.0
      %7237 = vmatpush1.msra.mxu0 0.0
      %7238 = vmatprep.subr.mxu0 0.0
      %7239 = vmatpush1.msra.mxu0 0.0
      %7240 = vmatprep.subr.mxu0 0.0
      %7241 = vmatpush1.msra.mxu0 0.0
      %7242 = vmatprep.subr.mxu0 0.0
      %7243 = vmatpush1.msra.mxu0 0.0
      %7244 = vmatprep.subr.mxu0 0.0
      %7245 = vmatpush1.msra.mxu0 0.0
      %7246 = vmatprep.subr.mxu0 0.0
      %7247 = vmatpush1.msra.mxu0 0.0
      %7248 = vmatprep.subr.mxu0 0.0
      %7249 = vmatpush1.msra.mxu0 0.0
      %7250 = vmatprep.subr.mxu0 0.0
      %7251 = vmatpush1.msra.mxu0 0.0
      %7252 = vmatprep.subr.mxu0 0.0
      %7253 = vmatpush1.msra.mxu0 0.0
      %7254 = vmatprep.subr.mxu0 0.0
      %7255 = vmatpush1.msra.mxu0 0.0
      %7256 = vmatprep.subr.mxu0 0.0
      %7257 = vmatpush1.msra.mxu0 0.0
      %7258 = vmatprep.subr.mxu0 0.0
      %7259 = vmatpush1.msra.mxu0 0.0
      %7260 = vmatprep.subr.mxu0 0.0
      %7261 = vmatpush1.msra.mxu0 0.0
      %7262 = vmatprep.subr.mxu0 0.0
      %7263 = vmatpush1.msra.mxu0 0.0
      %7264 = vmatprep.subr.mxu0 0.0
      %7265 = vmatpush1.msra.mxu0 0.0
      %7266 = vmatprep.subr.mxu0 0.0
      %7267 = vmatpush1.msra.mxu0 0.0
      %7268 = vmatprep.subr.mxu0 0.0
      %7269 = vmatpush1.msra.mxu0 0.0
      %7270 = vmatprep.subr.mxu0 0.0
      %7271 = vmatpush1.msra.mxu0 0.0
      %7272 = vmatprep.mubr.f32.mxu0 0.0
      %7273 = vmatmul.mubr.f32.gmra.mrb[0].mxu0 %v7192
      %v7274 = vpop.f32.mrb[0].mxu0
      %v7275 = vadd.f32 0.0, %v7274
      %v7276 = vpop.f32.mrb[0].mxu0
      %v7277 = vadd.f32 0.0, %v7276
      %7278 = vdwg.mxu0
      %7279 = vmatprep.subr.mxu0 %v7200
      %7280 = vmatpush1.msra.mxu0 %v7198
      %7281 = vmatprep.subr.mxu0 0.0
      %7282 = vmatpush1.msra.mxu0 0.0
      %7283 = vmatprep.subr.mxu0 0.0
      %7284 = vmatpush1.msra.mxu0 0.0
      %7285 = vmatprep.subr.mxu0 0.0
      %7286 = vmatpush1.msra.mxu0 0.0
      %7287 = vmatprep.subr.mxu0 0.0
      %7288 = vmatpush1.msra.mxu0 0.0
      %7289 = vmatprep.subr.mxu0 0.0
      %7290 = vmatpush1.msra.mxu0 0.0
      %7291 = vmatprep.subr.mxu0 0.0
      %7292 = vmatpush1.msra.mxu0 0.0
      %7293 = vmatprep.subr.mxu0 0.0
      %7294 = vmatpush1.msra.mxu0 0.0
      %7295 = vmatprep.subr.mxu0 0.0
      %7296 = vmatpush1.msra.mxu0 0.0
      %7297 = vmatprep.subr.mxu0 0.0
      %7298 = vmatpush1.msra.mxu0 0.0
      %7299 = vmatprep.subr.mxu0 0.0
      %7300 = vmatpush1.msra.mxu0 0.0
      %7301 = vmatprep.subr.mxu0 0.0
      %7302 = vmatpush1.msra.mxu0 0.0
      %7303 = vmatprep.subr.mxu0 0.0
      %7304 = vmatpush1.msra.mxu0 0.0
      %7305 = vmatprep.subr.mxu0 0.0
      %7306 = vmatpush1.msra.mxu0 0.0
      %7307 = vmatprep.subr.mxu0 0.0
      %7308 = vmatpush1.msra.mxu0 0.0
      %7309 = vmatprep.subr.mxu0 0.0
      %7310 = vmatpush1.msra.mxu0 0.0
      %7311 = vmatprep.subr.mxu0 0.0
      %7312 = vmatpush1.msra.mxu0 0.0
      %7313 = vmatprep.subr.mxu0 0.0
      %7314 = vmatpush1.msra.mxu0 0.0
      %7315 = vmatprep.subr.mxu0 0.0
      %7316 = vmatpush1.msra.mxu0 0.0
      %7317 = vmatprep.subr.mxu0 0.0
      %7318 = vmatpush1.msra.mxu0 0.0
      %7319 = vmatprep.subr.mxu0 0.0
      %7320 = vmatpush1.msra.mxu0 0.0
      %7321 = vmatprep.subr.mxu0 0.0
      %7322 = vmatpush1.msra.mxu0 0.0
      %7323 = vmatprep.subr.mxu0 0.0
      %7324 = vmatpush1.msra.mxu0 0.0
      %7325 = vmatprep.subr.mxu0 0.0
      %7326 = vmatpush1.msra.mxu0 0.0
      %7327 = vmatprep.subr.mxu0 0.0
      %7328 = vmatpush1.msra.mxu0 0.0
      %7329 = vmatprep.subr.mxu0 0.0
      %7330 = vmatpush1.msra.mxu0 0.0
      %7331 = vmatprep.subr.mxu0 0.0
      %7332 = vmatpush1.msra.mxu0 0.0
      %7333 = vmatprep.subr.mxu0 0.0
      %7334 = vmatpush1.msra.mxu0 0.0
      %7335 = vmatprep.subr.mxu0 0.0
      %7336 = vmatpush1.msra.mxu0 0.0
      %7337 = vmatprep.subr.mxu0 0.0
      %7338 = vmatpush1.msra.mxu0 0.0
      %7339 = vmatprep.subr.mxu0 0.0
      %7340 = vmatpush1.msra.mxu0 0.0
      %7341 = vmatprep.subr.mxu0 0.0
      %7342 = vmatpush1.msra.mxu0 0.0
      %7343 = vmatprep.mubr.f32.mxu0 0.0
      %7344 = vmatmul.mubr.f32.gmra.mrb[0].mxu0 %v7192
      %v7345 = vpop.f32.mrb[0].mxu0
      %v7346 = vadd.f32 0.0, %v7345
      %v7347 = vpop.f32.mrb[0].mxu0
      %v7348 = vadd.f32 0.0, %v7347
      %7349 = vdwg.mxu0
      %7350 = vmatprep.subr.mxu0 %v7204
      %7351 = vmatpush1.msra.mxu0 %v7202
      %7352 = vmatprep.subr.mxu0 0.0
      %7353 = vmatpush1.msra.mxu0 0.0
      %7354 = vmatprep.subr.mxu0 0.0
      %7355 = vmatpush1.msra.mxu0 0.0
      %7356 = vmatprep.subr.mxu0 0.0
      %7357 = vmatpush1.msra.mxu0 0.0
      %7358 = vmatprep.subr.mxu0 0.0
      %7359 = vmatpush1.msra.mxu0 0.0
      %7360 = vmatprep.subr.mxu0 0.0
      %7361 = vmatpush1.msra.mxu0 0.0
      %7362 = vmatprep.subr.mxu0 0.0
      %7363 = vmatpush1.msra.mxu0 0.0
      %7364 = vmatprep.subr.mxu0 0.0
      %7365 = vmatpush1.msra.mxu0 0.0
      %7366 = vmatprep.subr.mxu0 0.0
      %7367 = vmatpush1.msra.mxu0 0.0
      %7368 = vmatprep.subr.mxu0 0.0
      %7369 = vmatpush1.msra.mxu0 0.0
      %7370 = vmatprep.subr.mxu0 0.0
      %7371 = vmatpush1.msra.mxu0 0.0
      %7372 = vmatprep.subr.mxu0 0.0
      %7373 = vmatpush1.msra.mxu0 0.0
      %7374 = vmatprep.subr.mxu0 0.0
      %7375 = vmatpush1.msra.mxu0 0.0
      %7376 = vmatprep.subr.mxu0 0.0
      %7377 = vmatpush1.msra.mxu0 0.0
      %7378 = vmatprep.subr.mxu0 0.0
      %7379 = vmatpush1.msra.mxu0 0.0
      %7380 = vmatprep.subr.mxu0 0.0
      %7381 = vmatpush1.msra.mxu0 0.0
      %7382 = vmatprep.subr.mxu0 0.0
      %7383 = vmatpush1.msra.mxu0 0.0
      %7384 = vmatprep.subr.mxu0 0.0
      %7385 = vmatpush1.msra.mxu0 0.0
      %7386 = vmatprep.subr.mxu0 0.0
      %7387 = vmatpush1.msra.mxu0 0.0
      %7388 = vmatprep.subr.mxu0 0.0
      %7389 = vmatpush1.msra.mxu0 0.0
      %7390 = vmatprep.subr.mxu0 0.0
      %7391 = vmatpush1.msra.mxu0 0.0
      %7392 = vmatprep.subr.mxu0 0.0
      %7393 = vmatpush1.msra.mxu0 0.0
      %7394 = vmatprep.subr.mxu0 0.0
      %7395 = vmatpush1.msra.mxu0 0.0
      %7396 = vmatprep.subr.mxu0 0.0
      %7397 = vmatpush1.msra.mxu0 0.0
      %7398 = vmatprep.subr.mxu0 0.0
      %7399 = vmatpush1.msra.mxu0 0.0
      %7400 = vmatprep.subr.mxu0 0.0
      %7401 = vmatpush1.msra.mxu0 0.0
      %7402 = vmatprep.subr.mxu0 0.0
      %7403 = vmatpush1.msra.mxu0 0.0
      %7404 = vmatprep.subr.mxu0 0.0
      %7405 = vmatpush1.msra.mxu0 0.0
      %7406 = vmatprep.subr.mxu0 0.0
      %7407 = vmatpush1.msra.mxu0 0.0
      %7408 = vmatprep.subr.mxu0 0.0
      %7409 = vmatpush1.msra.mxu0 0.0
      %7410 = vmatprep.subr.mxu0 0.0
      %7411 = vmatpush1.msra.mxu0 0.0
      %7412 = vmatprep.subr.mxu0 0.0
      %7413 = vmatpush1.msra.mxu0 0.0
      %7414 = vmatprep.mubr.f32.mxu0 0.0
      %7415 = vmatmul.mubr.f32.gmra.mrb[0].mxu0 %v7192
      %v7416 = vpop.f32.mrb[0].mxu0
      %v7417 = vadd.f32 0.0, %v7416
      %v7418 = vpop.f32.mrb[0].mxu0
      %v7419 = vadd.f32 0.0, %v7418
      %7420 = vdwg.mxu0
      %7421 = vmatprep.subr.mxu0 0.0
      %7422 = vmatpush1.msra.mxu0 %v7206
      %7423 = vmatprep.subr.mxu0 0.0
      %7424 = vmatpush1.msra.mxu0 0.0
      %7425 = vmatprep.subr.mxu0 0.0
      %7426 = vmatpush1.msra.mxu0 0.0
      %7427 = vmatprep.subr.mxu0 0.0
      %7428 = vmatpush1.msra.mxu0 0.0
      %7429 = vmatprep.subr.mxu0 0.0
      %7430 = vmatpush1.msra.mxu0 0.0
      %7431 = vmatprep.subr.mxu0 0.0
      %7432 = vmatpush1.msra.mxu0 0.0
      %7433 = vmatprep.subr.mxu0 0.0
      %7434 = vmatpush1.msra.mxu0 0.0
      %7435 = vmatprep.subr.mxu0 0.0
      %7436 = vmatpush1.msra.mxu0 0.0
      %7437 = vmatprep.subr.mxu0 0.0
      %7438 = vmatpush1.msra.mxu0 0.0
      %7439 = vmatprep.subr.mxu0 0.0
      %7440 = vmatpush1.msra.mxu0 0.0
      %7441 = vmatprep.subr.mxu0 0.0
      %7442 = vmatpush1.msra.mxu0 0.0
      %7443 = vmatprep.subr.mxu0 0.0
      %7444 = vmatpush1.msra.mxu0 0.0
      %7445 = vmatprep.subr.mxu0 0.0
      %7446 = vmatpush1.msra.mxu0 0.0
      %7447 = vmatprep.subr.mxu0 0.0
      %7448 = vmatpush1.msra.mxu0 0.0
      %7449 = vmatprep.subr.mxu0 0.0
      %7450 = vmatpush1.msra.mxu0 0.0
      %7451 = vmatprep.subr.mxu0 0.0
      %7452 = vmatpush1.msra.mxu0 0.0
      %7453 = vmatprep.subr.mxu0 0.0
      %7454 = vmatpush1.msra.mxu0 0.0
      %7455 = vmatprep.subr.mxu0 0.0
      %7456 = vmatpush1.msra.mxu0 0.0
      %7457 = vmatprep.subr.mxu0 0.0
      %7458 = vmatpush1.msra.mxu0 0.0
      %7459 = vmatprep.subr.mxu0 0.0
      %7460 = vmatpush1.msra.mxu0 0.0
      %7461 = vmatprep.subr.mxu0 0.0
      %7462 = vmatpush1.msra.mxu0 0.0
      %7463 = vmatprep.subr.mxu0 0.0
      %7464 = vmatpush1.msra.mxu0 0.0
      %7465 = vmatprep.subr.mxu0 0.0
      %7466 = vmatpush1.msra.mxu0 0.0
      %7467 = vmatprep.subr.mxu0 0.0
      %7468 = vmatpush1.msra.mxu0 0.0
      %7469 = vmatprep.subr.mxu0 0.0
      %7470 = vmatpush1.msra.mxu0 0.0
      %7471 = vmatprep.subr.mxu0 0.0
      %7472 = vmatpush1.msra.mxu0 0.0
      %7473 = vmatprep.subr.mxu0 0.0
      %7474 = vmatpush1.msra.mxu0 0.0
      %7475 = vmatprep.subr.mxu0 0.0
      %7476 = vmatpush1.msra.mxu0 0.0
      %7477 = vmatprep.subr.mxu0 0.0
      %7478 = vmatpush1.msra.mxu0 0.0
      %7479 = vmatprep.subr.mxu0 0.0
      %7480 = vmatpush1.msra.mxu0 0.0
      %7481 = vmatprep.subr.mxu0 0.0
      %7482 = vmatpush1.msra.mxu0 0.0
      %7483 = vmatprep.subr.mxu0 0.0
      %7484 = vmatpush1.msra.mxu0 0.0
      %7485 = vmatprep.mubr.f32.mxu0 0.0
      %7486 = vmatmul.mubr.f32.gmra.mrb[0].mxu0 %v7192
      %v7487 = vpop.f32.mrb[0].mxu0
      %v7488 = vadd.f32 0.0, %v7487
      %v7489 = vpop.f32.mrb[0].mxu0
      %7490 = vdwg.mxu0
      %v7491 = vadd.f32 %v6950, %v7275
      %v7492 = vadd.f32 %v6952, %v7277
      %v7493 = vadd.f32 %v7021, %v7346
      %v7494 = vadd.f32 %v7023, %v7348
      %v7495 = vadd.f32 %v7092, %v7417
      %v7496 = vadd.f32 %v7094, %v7419
      %v7497 = vadd.f32 %v7163, %v7488
      %7499 = vset.pattern.permute.xlu0 0
      %7500 = vperm.xlu0 %7499, %v6553
      %v7501 = vpop.permute.xlu0 %7500
      %v7503 = vadd.f32 %v7491, %v7501
      %v7504 = vadd.f32 %v7492, %v7501
      %v7505 = vadd.f32 %v7493, %v7501
      %v7506 = vadd.f32 %v7494, %v7501
      %v7507 = vadd.f32 %v7495, %v7501
      %v7508 = vadd.f32 %v7496, %v7501
      %v7509 = vadd.f32 %v7497, %v7501
      %v7510 = vmul.f32 %v7503, %v1420
      %v7511 = vmul.f32 %v7504, %v1424
      %v7512 = vmul.f32 %v7505, %v1428
      %v7513 = vmul.f32 %v7506, %v1432
      %v7514 = vmul.f32 %v7507, %v1436
      %v7515 = vmul.f32 %v7508, %v1440
      %v7516 = vmul.f32 %v7509, %v1444
      %7524 = vrot.lane.b32.xlu0 %v7510, 100
      %v7525 = vpop.permute.xlu0 %7524
      %7526 = vrot.lane.b32.xlu0 %v7511, 100
      %v7527 = vpop.permute.xlu0 %7526
      %7528 = vrot.lane.b32.xlu0 %v7512, 100
      %v7529 = vpop.permute.xlu0 %7528
      %7530 = vrot.lane.b32.xlu0 %v7513, 100
      %v7531 = vpop.permute.xlu0 %7530
      %7532 = vrot.lane.b32.xlu0 %v7514, 100
      %v7533 = vpop.permute.xlu0 %7532
      %7534 = vrot.lane.b32.xlu0 %v7515, 100
      %v7535 = vpop.permute.xlu0 %7534
      %7536 = vrot.lane.b32.xlu0 %v7516, 100
      %v7537 = vpop.permute.xlu0 %7536
      %v7538 = vsel %vm1480, %v7525, %v7527
      %v7539 = vsel %vm1480, %v7527, %v7529
      %v7540 = vsel %vm1480, %v7529, %v7531
      %v7541 = vsel %vm1480, %v7531, %v7533
      %v7542 = vsel %vm1480, %v7533, %v7535
      %v7543 = vsel %vm1480, %v7535, %v7537
      %7552 = vst.msk [vmem:[#allocation2] sm:$0xff] %vm1495, %v7525
      %7553 = vst [vmem:[#allocation2 + $0x8] sm:$0xff] %v7538
      %7554 = vst [vmem:[#allocation2 + $0x10] sm:$0xff] %v7539
      %7555 = vst [vmem:[#allocation2 + $0x18] sm:$0xff] %v7540
      %7556 = vst [vmem:[#allocation2 + $0x20] sm:$0xff] %v7541
      %7557 = vst [vmem:[#allocation2 + $0x28] sm:$0xff] %v7542
      %7558 = vst [vmem:[#allocation2 + $0x30] sm:$0xff] %v7543
      %7559 = vst.msk [vmem:[#allocation2 + $0x38] sm:$0xff] %vm472, %v7537
      %s7560 = scalar_lea.vmem %s10, 56
      %v7561 = vld [vmem:[%s7560] sm:$0xff]
      %v7562 = vld [vmem:[%s8] sm:$0xff]
      %v7563 = vld [vmem:[#allocation2] sm:$0xff]
      %v7564 = vld [vmem:[#allocation2 + $0x8] sm:$0xff]
      %v7565 = vld [vmem:[#allocation2 + $0x10] sm:$0xff]
      %v7566 = vld [vmem:[#allocation2 + $0x18] sm:$0xff]
      %v7567 = vld [vmem:[#allocation2 + $0x20] sm:$0xff]
      %v7568 = vld [vmem:[#allocation2 + $0x28] sm:$0xff]
      %v7569 = vld [vmem:[#allocation2 + $0x30] sm:$0xff]
      %s7570 = scalar_lea.vmem %s8, 8
      %v7571 = vld [vmem:[%s7570] sm:$0xff]
      %v7572 = vld [vmem:[#allocation2 + $0x38] sm:$0xff]
      %7581 = vrot.lane.b32.xlu0 %v7563, 28
      %v7582 = vpop.permute.xlu0 %7581
      %7583 = vrot.lane.b32.xlu0 %v7564, 28
      %v7584 = vpop.permute.xlu0 %7583
      %7585 = vrot.lane.b32.xlu0 %v7565, 28
      %v7586 = vpop.permute.xlu0 %7585
      %7587 = vrot.lane.b32.xlu0 %v7566, 28
      %v7588 = vpop.permute.xlu0 %7587
      %7589 = vrot.lane.b32.xlu0 %v7567, 28
      %v7590 = vpop.permute.xlu0 %7589
      %7591 = vrot.lane.b32.xlu0 %v7568, 28
      %v7592 = vpop.permute.xlu0 %7591
      %7593 = vrot.lane.b32.xlu0 %v7569, 28
      %v7594 = vpop.permute.xlu0 %7593
      %7595 = vrot.lane.b32.xlu0 %v7572, 28
      %v7596 = vpop.permute.xlu0 %7595
      %v7597 = vsel %vm464, %v7582, %v7584
      %v7598 = vsel %vm464, %v7584, %v7586
      %v7599 = vsel %vm464, %v7586, %v7588
      %v7600 = vsel %vm464, %v7588, %v7590
      %v7601 = vsel %vm464, %v7590, %v7592
      %v7602 = vsel %vm464, %v7592, %v7594
      %v7603 = vsel %vm464, %v7594, %v7596
      %v7612 = vsel %vm1555, %v7571, 0
      %7614 = vmatprep.subr.mxu0 %v7598
      %7615 = vmatpush1.msra.mxu0 %v7597
      %7616 = vmatprep.subr.mxu0 0.0
      %7617 = vmatpush1.msra.mxu0 0.0
      %7618 = vmatprep.subr.mxu0 0.0
      %7619 = vmatpush1.msra.mxu0 0.0
      %7620 = vmatprep.subr.mxu0 0.0
      %7621 = vmatpush1.msra.mxu0 0.0
      %7622 = vmatprep.subr.mxu0 0.0
      %7623 = vmatpush1.msra.mxu0 0.0
      %7624 = vmatprep.subr.mxu0 0.0
      %7625 = vmatpush1.msra.mxu0 0.0
      %7626 = vmatprep.subr.mxu0 0.0
      %7627 = vmatpush1.msra.mxu0 0.0
      %7628 = vmatprep.subr.mxu0 0.0
      %7629 = vmatpush1.msra.mxu0 0.0
      %7630 = vmatprep.subr.mxu0 0.0
      %7631 = vmatpush1.msra.mxu0 0.0
      %7632 = vmatprep.subr.mxu0 0.0
      %7633 = vmatpush1.msra.mxu0 0.0
      %7634 = vmatprep.subr.mxu0 0.0
      %7635 = vmatpush1.msra.mxu0 0.0
      %7636 = vmatprep.subr.mxu0 0.0
      %7637 = vmatpush1.msra.mxu0 0.0
      %7638 = vmatprep.subr.mxu0 0.0
      %7639 = vmatpush1.msra.mxu0 0.0
      %7640 = vmatprep.subr.mxu0 0.0
      %7641 = vmatpush1.msra.mxu0 0.0
      %7642 = vmatprep.subr.mxu0 0.0
      %7643 = vmatpush1.msra.mxu0 0.0
      %7644 = vmatprep.subr.mxu0 0.0
      %7645 = vmatpush1.msra.mxu0 0.0
      %7646 = vmatprep.subr.mxu0 0.0
      %7647 = vmatpush1.msra.mxu0 0.0
      %7648 = vmatprep.subr.mxu0 0.0
      %7649 = vmatpush1.msra.mxu0 0.0
      %7650 = vmatprep.subr.mxu0 0.0
      %7651 = vmatpush1.msra.mxu0 0.0
      %7652 = vmatprep.subr.mxu0 0.0
      %7653 = vmatpush1.msra.mxu0 0.0
      %7654 = vmatprep.subr.mxu0 0.0
      %7655 = vmatpush1.msra.mxu0 0.0
      %7656 = vmatprep.subr.mxu0 0.0
      %7657 = vmatpush1.msra.mxu0 0.0
      %7658 = vmatprep.subr.mxu0 0.0
      %7659 = vmatpush1.msra.mxu0 0.0
      %7660 = vmatprep.subr.mxu0 0.0
      %7661 = vmatpush1.msra.mxu0 0.0
      %7662 = vmatprep.subr.mxu0 0.0
      %7663 = vmatpush1.msra.mxu0 0.0
      %7664 = vmatprep.subr.mxu0 0.0
      %7665 = vmatpush1.msra.mxu0 0.0
      %7666 = vmatprep.subr.mxu0 0.0
      %7667 = vmatpush1.msra.mxu0 0.0
      %7668 = vmatprep.subr.mxu0 0.0
      %7669 = vmatpush1.msra.mxu0 0.0
      %7670 = vmatprep.subr.mxu0 0.0
      %7671 = vmatpush1.msra.mxu0 0.0
      %7672 = vmatprep.subr.mxu0 0.0
      %7673 = vmatpush1.msra.mxu0 0.0
      %7674 = vmatprep.subr.mxu0 0.0
      %7675 = vmatpush1.msra.mxu0 0.0
      %7676 = vmatprep.subr.mxu0 0.0
      %7677 = vmatpush1.msra.mxu0 0.0
      %7678 = vmatprep.mubr.f32.mxu0 0.0
      %7679 = vmatmul.mubr.f32.gmra.mrb[0].mxu0 %v7612
      %v7680 = vpop.f32.mrb[0].mxu0
      %v7681 = vadd.f32 0.0, %v7680
      %v7682 = vpop.f32.mrb[0].mxu0
      %v7683 = vadd.f32 0.0, %v7682
      %7684 = vdwg.mxu0
      %7685 = vmatprep.subr.mxu0 %v7600
      %7686 = vmatpush1.msra.mxu0 %v7599
      %7687 = vmatprep.subr.mxu0 0.0
      %7688 = vmatpush1.msra.mxu0 0.0
      %7689 = vmatprep.subr.mxu0 0.0
      %7690 = vmatpush1.msra.mxu0 0.0
      %7691 = vmatprep.subr.mxu0 0.0
      %7692 = vmatpush1.msra.mxu0 0.0
      %7693 = vmatprep.subr.mxu0 0.0
      %7694 = vmatpush1.msra.mxu0 0.0
      %7695 = vmatprep.subr.mxu0 0.0
      %7696 = vmatpush1.msra.mxu0 0.0
      %7697 = vmatprep.subr.mxu0 0.0
      %7698 = vmatpush1.msra.mxu0 0.0
      %7699 = vmatprep.subr.mxu0 0.0
      %7700 = vmatpush1.msra.mxu0 0.0
      %7701 = vmatprep.subr.mxu0 0.0
      %7702 = vmatpush1.msra.mxu0 0.0
      %7703 = vmatprep.subr.mxu0 0.0
      %7704 = vmatpush1.msra.mxu0 0.0
      %7705 = vmatprep.subr.mxu0 0.0
      %7706 = vmatpush1.msra.mxu0 0.0
      %7707 = vmatprep.subr.mxu0 0.0
      %7708 = vmatpush1.msra.mxu0 0.0
      %7709 = vmatprep.subr.mxu0 0.0
      %7710 = vmatpush1.msra.mxu0 0.0
      %7711 = vmatprep.subr.mxu0 0.0
      %7712 = vmatpush1.msra.mxu0 0.0
      %7713 = vmatprep.subr.mxu0 0.0
      %7714 = vmatpush1.msra.mxu0 0.0
      %7715 = vmatprep.subr.mxu0 0.0
      %7716 = vmatpush1.msra.mxu0 0.0
      %7717 = vmatprep.subr.mxu0 0.0
      %7718 = vmatpush1.msra.mxu0 0.0
      %7719 = vmatprep.subr.mxu0 0.0
      %7720 = vmatpush1.msra.mxu0 0.0
      %7721 = vmatprep.subr.mxu0 0.0
      %7722 = vmatpush1.msra.mxu0 0.0
      %7723 = vmatprep.subr.mxu0 0.0
      %7724 = vmatpush1.msra.mxu0 0.0
      %7725 = vmatprep.subr.mxu0 0.0
      %7726 = vmatpush1.msra.mxu0 0.0
      %7727 = vmatprep.subr.mxu0 0.0
      %7728 = vmatpush1.msra.mxu0 0.0
      %7729 = vmatprep.subr.mxu0 0.0
      %7730 = vmatpush1.msra.mxu0 0.0
      %7731 = vmatprep.subr.mxu0 0.0
      %7732 = vmatpush1.msra.mxu0 0.0
      %7733 = vmatprep.subr.mxu0 0.0
      %7734 = vmatpush1.msra.mxu0 0.0
      %7735 = vmatprep.subr.mxu0 0.0
      %7736 = vmatpush1.msra.mxu0 0.0
      %7737 = vmatprep.subr.mxu0 0.0
      %7738 = vmatpush1.msra.mxu0 0.0
      %7739 = vmatprep.subr.mxu0 0.0
      %7740 = vmatpush1.msra.mxu0 0.0
      %7741 = vmatprep.subr.mxu0 0.0
      %7742 = vmatpush1.msra.mxu0 0.0
      %7743 = vmatprep.subr.mxu0 0.0
      %7744 = vmatpush1.msra.mxu0 0.0
      %7745 = vmatprep.subr.mxu0 0.0
      %7746 = vmatpush1.msra.mxu0 0.0
      %7747 = vmatprep.subr.mxu0 0.0
      %7748 = vmatpush1.msra.mxu0 0.0
      %7749 = vmatprep.mubr.f32.mxu0 0.0
      %7750 = vmatmul.mubr.f32.gmra.mrb[0].mxu0 %v7612
      %v7751 = vpop.f32.mrb[0].mxu0
      %v7752 = vadd.f32 0.0, %v7751
      %v7753 = vpop.f32.mrb[0].mxu0
      %v7754 = vadd.f32 0.0, %v7753
      %7755 = vdwg.mxu0
      %7756 = vmatprep.subr.mxu0 %v7602
      %7757 = vmatpush1.msra.mxu0 %v7601
      %7758 = vmatprep.subr.mxu0 0.0
      %7759 = vmatpush1.msra.mxu0 0.0
      %7760 = vmatprep.subr.mxu0 0.0
      %7761 = vmatpush1.msra.mxu0 0.0
      %7762 = vmatprep.subr.mxu0 0.0
      %7763 = vmatpush1.msra.mxu0 0.0
      %7764 = vmatprep.subr.mxu0 0.0
      %7765 = vmatpush1.msra.mxu0 0.0
      %7766 = vmatprep.subr.mxu0 0.0
      %7767 = vmatpush1.msra.mxu0 0.0
      %7768 = vmatprep.subr.mxu0 0.0
      %7769 = vmatpush1.msra.mxu0 0.0
      %7770 = vmatprep.subr.mxu0 0.0
      %7771 = vmatpush1.msra.mxu0 0.0
      %7772 = vmatprep.subr.mxu0 0.0
      %7773 = vmatpush1.msra.mxu0 0.0
      %7774 = vmatprep.subr.mxu0 0.0
      %7775 = vmatpush1.msra.mxu0 0.0
      %7776 = vmatprep.subr.mxu0 0.0
      %7777 = vmatpush1.msra.mxu0 0.0
      %7778 = vmatprep.subr.mxu0 0.0
      %7779 = vmatpush1.msra.mxu0 0.0
      %7780 = vmatprep.subr.mxu0 0.0
      %7781 = vmatpush1.msra.mxu0 0.0
      %7782 = vmatprep.subr.mxu0 0.0
      %7783 = vmatpush1.msra.mxu0 0.0
      %7784 = vmatprep.subr.mxu0 0.0
      %7785 = vmatpush1.msra.mxu0 0.0
      %7786 = vmatprep.subr.mxu0 0.0
      %7787 = vmatpush1.msra.mxu0 0.0
      %7788 = vmatprep.subr.mxu0 0.0
      %7789 = vmatpush1.msra.mxu0 0.0
      %7790 = vmatprep.subr.mxu0 0.0
      %7791 = vmatpush1.msra.mxu0 0.0
      %7792 = vmatprep.subr.mxu0 0.0
      %7793 = vmatpush1.msra.mxu0 0.0
      %7794 = vmatprep.subr.mxu0 0.0
      %7795 = vmatpush1.msra.mxu0 0.0
      %7796 = vmatprep.subr.mxu0 0.0
      %7797 = vmatpush1.msra.mxu0 0.0
      %7798 = vmatprep.subr.mxu0 0.0
      %7799 = vmatpush1.msra.mxu0 0.0
      %7800 = vmatprep.subr.mxu0 0.0
      %7801 = vmatpush1.msra.mxu0 0.0
      %7802 = vmatprep.subr.mxu0 0.0
      %7803 = vmatpush1.msra.mxu0 0.0
      %7804 = vmatprep.subr.mxu0 0.0
      %7805 = vmatpush1.msra.mxu0 0.0
      %7806 = vmatprep.subr.mxu0 0.0
      %7807 = vmatpush1.msra.mxu0 0.0
      %7808 = vmatprep.subr.mxu0 0.0
      %7809 = vmatpush1.msra.mxu0 0.0
      %7810 = vmatprep.subr.mxu0 0.0
      %7811 = vmatpush1.msra.mxu0 0.0
      %7812 = vmatprep.subr.mxu0 0.0
      %7813 = vmatpush1.msra.mxu0 0.0
      %7814 = vmatprep.subr.mxu0 0.0
      %7815 = vmatpush1.msra.mxu0 0.0
      %7816 = vmatprep.subr.mxu0 0.0
      %7817 = vmatpush1.msra.mxu0 0.0
      %7818 = vmatprep.subr.mxu0 0.0
      %7819 = vmatpush1.msra.mxu0 0.0
      %7820 = vmatprep.mubr.f32.mxu0 0.0
      %7821 = vmatmul.mubr.f32.gmra.mrb[0].mxu0 %v7612
      %v7822 = vpop.f32.mrb[0].mxu0
      %v7823 = vadd.f32 0.0, %v7822
      %v7824 = vpop.f32.mrb[0].mxu0
      %v7825 = vadd.f32 0.0, %v7824
      %7826 = vdwg.mxu0
      %7827 = vmatprep.subr.mxu0 0.0
      %7828 = vmatpush1.msra.mxu0 %v7603
      %7829 = vmatprep.subr.mxu0 0.0
      %7830 = vmatpush1.msra.mxu0 0.0
      %7831 = vmatprep.subr.mxu0 0.0
      %7832 = vmatpush1.msra.mxu0 0.0
      %7833 = vmatprep.subr.mxu0 0.0
      %7834 = vmatpush1.msra.mxu0 0.0
      %7835 = vmatprep.subr.mxu0 0.0
      %7836 = vmatpush1.msra.mxu0 0.0
      %7837 = vmatprep.subr.mxu0 0.0
      %7838 = vmatpush1.msra.mxu0 0.0
      %7839 = vmatprep.subr.mxu0 0.0
      %7840 = vmatpush1.msra.mxu0 0.0
      %7841 = vmatprep.subr.mxu0 0.0
      %7842 = vmatpush1.msra.mxu0 0.0
      %7843 = vmatprep.subr.mxu0 0.0
      %7844 = vmatpush1.msra.mxu0 0.0
      %7845 = vmatprep.subr.mxu0 0.0
      %7846 = vmatpush1.msra.mxu0 0.0
      %7847 = vmatprep.subr.mxu0 0.0
      %7848 = vmatpush1.msra.mxu0 0.0
      %7849 = vmatprep.subr.mxu0 0.0
      %7850 = vmatpush1.msra.mxu0 0.0
      %7851 = vmatprep.subr.mxu0 0.0
      %7852 = vmatpush1.msra.mxu0 0.0
      %7853 = vmatprep.subr.mxu0 0.0
      %7854 = vmatpush1.msra.mxu0 0.0
      %7855 = vmatprep.subr.mxu0 0.0
      %7856 = vmatpush1.msra.mxu0 0.0
      %7857 = vmatprep.subr.mxu0 0.0
      %7858 = vmatpush1.msra.mxu0 0.0
      %7859 = vmatprep.subr.mxu0 0.0
      %7860 = vmatpush1.msra.mxu0 0.0
      %7861 = vmatprep.subr.mxu0 0.0
      %7862 = vmatpush1.msra.mxu0 0.0
      %7863 = vmatprep.subr.mxu0 0.0
      %7864 = vmatpush1.msra.mxu0 0.0
      %7865 = vmatprep.subr.mxu0 0.0
      %7866 = vmatpush1.msra.mxu0 0.0
      %7867 = vmatprep.subr.mxu0 0.0
      %7868 = vmatpush1.msra.mxu0 0.0
      %7869 = vmatprep.subr.mxu0 0.0
      %7870 = vmatpush1.msra.mxu0 0.0
      %7871 = vmatprep.subr.mxu0 0.0
      %7872 = vmatpush1.msra.mxu0 0.0
      %7873 = vmatprep.subr.mxu0 0.0
      %7874 = vmatpush1.msra.mxu0 0.0
      %7875 = vmatprep.subr.mxu0 0.0
      %7876 = vmatpush1.msra.mxu0 0.0
      %7877 = vmatprep.subr.mxu0 0.0
      %7878 = vmatpush1.msra.mxu0 0.0
      %7879 = vmatprep.subr.mxu0 0.0
      %7880 = vmatpush1.msra.mxu0 0.0
      %7881 = vmatprep.subr.mxu0 0.0
      %7882 = vmatpush1.msra.mxu0 0.0
      %7883 = vmatprep.subr.mxu0 0.0
      %7884 = vmatpush1.msra.mxu0 0.0
      %7885 = vmatprep.subr.mxu0 0.0
      %7886 = vmatpush1.msra.mxu0 0.0
      %7887 = vmatprep.subr.mxu0 0.0
      %7888 = vmatpush1.msra.mxu0 0.0
      %7889 = vmatprep.subr.mxu0 0.0
      %7890 = vmatpush1.msra.mxu0 0.0
      %7891 = vmatprep.mubr.f32.mxu0 0.0
      %7892 = vmatmul.mubr.f32.gmra.mrb[0].mxu0 %v7612
      %v7893 = vpop.f32.mrb[0].mxu0
      %v7894 = vadd.f32 0.0, %v7893
      %v7895 = vpop.f32.mrb[0].mxu0
      %7896 = vdwg.mxu0
      %v7898 = vsel %vm1555, %v7562, 0
      %7900 = vmatprep.subr.mxu0 %v7564
      %7901 = vmatpush1.msra.mxu0 %v7563
      %7902 = vmatprep.subr.mxu0 0.0
      %7903 = vmatpush1.msra.mxu0 0.0
      %7904 = vmatprep.subr.mxu0 0.0
      %7905 = vmatpush1.msra.mxu0 0.0
      %7906 = vmatprep.subr.mxu0 0.0
      %7907 = vmatpush1.msra.mxu0 0.0
      %7908 = vmatprep.subr.mxu0 0.0
      %7909 = vmatpush1.msra.mxu0 0.0
      %7910 = vmatprep.subr.mxu0 0.0
      %7911 = vmatpush1.msra.mxu0 0.0
      %7912 = vmatprep.subr.mxu0 0.0
      %7913 = vmatpush1.msra.mxu0 0.0
      %7914 = vmatprep.subr.mxu0 0.0
      %7915 = vmatpush1.msra.mxu0 0.0
      %7916 = vmatprep.subr.mxu0 0.0
      %7917 = vmatpush1.msra.mxu0 0.0
      %7918 = vmatprep.subr.mxu0 0.0
      %7919 = vmatpush1.msra.mxu0 0.0
      %7920 = vmatprep.subr.mxu0 0.0
      %7921 = vmatpush1.msra.mxu0 0.0
      %7922 = vmatprep.subr.mxu0 0.0
      %7923 = vmatpush1.msra.mxu0 0.0
      %7924 = vmatprep.subr.mxu0 0.0
      %7925 = vmatpush1.msra.mxu0 0.0
      %7926 = vmatprep.subr.mxu0 0.0
      %7927 = vmatpush1.msra.mxu0 0.0
      %7928 = vmatprep.subr.mxu0 0.0
      %7929 = vmatpush1.msra.mxu0 0.0
      %7930 = vmatprep.subr.mxu0 0.0
      %7931 = vmatpush1.msra.mxu0 0.0
      %7932 = vmatprep.subr.mxu0 0.0
      %7933 = vmatpush1.msra.mxu0 0.0
      %7934 = vmatprep.subr.mxu0 0.0
      %7935 = vmatpush1.msra.mxu0 0.0
      %7936 = vmatprep.subr.mxu0 0.0
      %7937 = vmatpush1.msra.mxu0 0.0
      %7938 = vmatprep.subr.mxu0 0.0
      %7939 = vmatpush1.msra.mxu0 0.0
      %7940 = vmatprep.subr.mxu0 0.0
      %7941 = vmatpush1.msra.mxu0 0.0
      %7942 = vmatprep.subr.mxu0 0.0
      %7943 = vmatpush1.msra.mxu0 0.0
      %7944 = vmatprep.subr.mxu0 0.0
      %7945 = vmatpush1.msra.mxu0 0.0
      %7946 = vmatprep.subr.mxu0 0.0
      %7947 = vmatpush1.msra.mxu0 0.0
      %7948 = vmatprep.subr.mxu0 0.0
      %7949 = vmatpush1.msra.mxu0 0.0
      %7950 = vmatprep.subr.mxu0 0.0
      %7951 = vmatpush1.msra.mxu0 0.0
      %7952 = vmatprep.subr.mxu0 0.0
      %7953 = vmatpush1.msra.mxu0 0.0
      %7954 = vmatprep.subr.mxu0 0.0
      %7955 = vmatpush1.msra.mxu0 0.0
      %7956 = vmatprep.subr.mxu0 0.0
      %7957 = vmatpush1.msra.mxu0 0.0
      %7958 = vmatprep.subr.mxu0 0.0
      %7959 = vmatpush1.msra.mxu0 0.0
      %7960 = vmatprep.subr.mxu0 0.0
      %7961 = vmatpush1.msra.mxu0 0.0
      %7962 = vmatprep.subr.mxu0 0.0
      %7963 = vmatpush1.msra.mxu0 0.0
      %7964 = vmatprep.mubr.f32.mxu0 0.0
      %7965 = vmatmul.mubr.f32.gmra.mrb[0].mxu0 %v7898
      %v7966 = vpop.f32.mrb[0].mxu0
      %v7967 = vadd.f32 %v7681, %v7966
      %v7968 = vpop.f32.mrb[0].mxu0
      %v7969 = vadd.f32 %v7683, %v7968
      %7970 = vdwg.mxu0
      %7971 = vmatprep.subr.mxu0 %v7566
      %7972 = vmatpush1.msra.mxu0 %v7565
      %7973 = vmatprep.subr.mxu0 0.0
      %7974 = vmatpush1.msra.mxu0 0.0
      %7975 = vmatprep.subr.mxu0 0.0
      %7976 = vmatpush1.msra.mxu0 0.0
      %7977 = vmatprep.subr.mxu0 0.0
      %7978 = vmatpush1.msra.mxu0 0.0
      %7979 = vmatprep.subr.mxu0 0.0
      %7980 = vmatpush1.msra.mxu0 0.0
      %7981 = vmatprep.subr.mxu0 0.0
      %7982 = vmatpush1.msra.mxu0 0.0
      %7983 = vmatprep.subr.mxu0 0.0
      %7984 = vmatpush1.msra.mxu0 0.0
      %7985 = vmatprep.subr.mxu0 0.0
      %7986 = vmatpush1.msra.mxu0 0.0
      %7987 = vmatprep.subr.mxu0 0.0
      %7988 = vmatpush1.msra.mxu0 0.0
      %7989 = vmatprep.subr.mxu0 0.0
      %7990 = vmatpush1.msra.mxu0 0.0
      %7991 = vmatprep.subr.mxu0 0.0
      %7992 = vmatpush1.msra.mxu0 0.0
      %7993 = vmatprep.subr.mxu0 0.0
      %7994 = vmatpush1.msra.mxu0 0.0
      %7995 = vmatprep.subr.mxu0 0.0
      %7996 = vmatpush1.msra.mxu0 0.0
      %7997 = vmatprep.subr.mxu0 0.0
      %7998 = vmatpush1.msra.mxu0 0.0
      %7999 = vmatprep.subr.mxu0 0.0
      %8000 = vmatpush1.msra.mxu0 0.0
      %8001 = vmatprep.subr.mxu0 0.0
      %8002 = vmatpush1.msra.mxu0 0.0
      %8003 = vmatprep.subr.mxu0 0.0
      %8004 = vmatpush1.msra.mxu0 0.0
      %8005 = vmatprep.subr.mxu0 0.0
      %8006 = vmatpush1.msra.mxu0 0.0
      %8007 = vmatprep.subr.mxu0 0.0
      %8008 = vmatpush1.msra.mxu0 0.0
      %8009 = vmatprep.subr.mxu0 0.0
      %8010 = vmatpush1.msra.mxu0 0.0
      %8011 = vmatprep.subr.mxu0 0.0
      %8012 = vmatpush1.msra.mxu0 0.0
      %8013 = vmatprep.subr.mxu0 0.0
      %8014 = vmatpush1.msra.mxu0 0.0
      %8015 = vmatprep.subr.mxu0 0.0
      %8016 = vmatpush1.msra.mxu0 0.0
      %8017 = vmatprep.subr.mxu0 0.0
      %8018 = vmatpush1.msra.mxu0 0.0
      %8019 = vmatprep.subr.mxu0 0.0
      %8020 = vmatpush1.msra.mxu0 0.0
      %8021 = vmatprep.subr.mxu0 0.0
      %8022 = vmatpush1.msra.mxu0 0.0
      %8023 = vmatprep.subr.mxu0 0.0
      %8024 = vmatpush1.msra.mxu0 0.0
      %8025 = vmatprep.subr.mxu0 0.0
      %8026 = vmatpush1.msra.mxu0 0.0
      %8027 = vmatprep.subr.mxu0 0.0
      %8028 = vmatpush1.msra.mxu0 0.0
      %8029 = vmatprep.subr.mxu0 0.0
      %8030 = vmatpush1.msra.mxu0 0.0
      %8031 = vmatprep.subr.mxu0 0.0
      %8032 = vmatpush1.msra.mxu0 0.0
      %8033 = vmatprep.subr.mxu0 0.0
      %8034 = vmatpush1.msra.mxu0 0.0
      %8035 = vmatprep.mubr.f32.mxu0 0.0
      %8036 = vmatmul.mubr.f32.gmra.mrb[0].mxu0 %v7898
      %v8037 = vpop.f32.mrb[0].mxu0
      %v8038 = vadd.f32 %v7752, %v8037
      %v8039 = vpop.f32.mrb[0].mxu0
      %v8040 = vadd.f32 %v7754, %v8039
      %8041 = vdwg.mxu0
      %8042 = vmatprep.subr.mxu0 %v7568
      %8043 = vmatpush1.msra.mxu0 %v7567
      %8044 = vmatprep.subr.mxu0 0.0
      %8045 = vmatpush1.msra.mxu0 0.0
      %8046 = vmatprep.subr.mxu0 0.0
      %8047 = vmatpush1.msra.mxu0 0.0
      %8048 = vmatprep.subr.mxu0 0.0
      %8049 = vmatpush1.msra.mxu0 0.0
      %8050 = vmatprep.subr.mxu0 0.0
      %8051 = vmatpush1.msra.mxu0 0.0
      %8052 = vmatprep.subr.mxu0 0.0
      %8053 = vmatpush1.msra.mxu0 0.0
      %8054 = vmatprep.subr.mxu0 0.0
      %8055 = vmatpush1.msra.mxu0 0.0
      %8056 = vmatprep.subr.mxu0 0.0
      %8057 = vmatpush1.msra.mxu0 0.0
      %8058 = vmatprep.subr.mxu0 0.0
      %8059 = vmatpush1.msra.mxu0 0.0
      %8060 = vmatprep.subr.mxu0 0.0
      %8061 = vmatpush1.msra.mxu0 0.0
      %8062 = vmatprep.subr.mxu0 0.0
      %8063 = vmatpush1.msra.mxu0 0.0
      %8064 = vmatprep.subr.mxu0 0.0
      %8065 = vmatpush1.msra.mxu0 0.0
      %8066 = vmatprep.subr.mxu0 0.0
      %8067 = vmatpush1.msra.mxu0 0.0
      %8068 = vmatprep.subr.mxu0 0.0
      %8069 = vmatpush1.msra.mxu0 0.0
      %8070 = vmatprep.subr.mxu0 0.0
      %8071 = vmatpush1.msra.mxu0 0.0
      %8072 = vmatprep.subr.mxu0 0.0
      %8073 = vmatpush1.msra.mxu0 0.0
      %8074 = vmatprep.subr.mxu0 0.0
      %8075 = vmatpush1.msra.mxu0 0.0
      %8076 = vmatprep.subr.mxu0 0.0
      %8077 = vmatpush1.msra.mxu0 0.0
      %8078 = vmatprep.subr.mxu0 0.0
      %8079 = vmatpush1.msra.mxu0 0.0
      %8080 = vmatprep.subr.mxu0 0.0
      %8081 = vmatpush1.msra.mxu0 0.0
      %8082 = vmatprep.subr.mxu0 0.0
      %8083 = vmatpush1.msra.mxu0 0.0
      %8084 = vmatprep.subr.mxu0 0.0
      %8085 = vmatpush1.msra.mxu0 0.0
      %8086 = vmatprep.subr.mxu0 0.0
      %8087 = vmatpush1.msra.mxu0 0.0
      %8088 = vmatprep.subr.mxu0 0.0
      %8089 = vmatpush1.msra.mxu0 0.0
      %8090 = vmatprep.subr.mxu0 0.0
      %8091 = vmatpush1.msra.mxu0 0.0
      %8092 = vmatprep.subr.mxu0 0.0
      %8093 = vmatpush1.msra.mxu0 0.0
      %8094 = vmatprep.subr.mxu0 0.0
      %8095 = vmatpush1.msra.mxu0 0.0
      %8096 = vmatprep.subr.mxu0 0.0
      %8097 = vmatpush1.msra.mxu0 0.0
      %8098 = vmatprep.subr.mxu0 0.0
      %8099 = vmatpush1.msra.mxu0 0.0
      %8100 = vmatprep.subr.mxu0 0.0
      %8101 = vmatpush1.msra.mxu0 0.0
      %8102 = vmatprep.subr.mxu0 0.0
      %8103 = vmatpush1.msra.mxu0 0.0
      %8104 = vmatprep.subr.mxu0 0.0
      %8105 = vmatpush1.msra.mxu0 0.0
      %8106 = vmatprep.mubr.f32.mxu0 0.0
      %8107 = vmatmul.mubr.f32.gmra.mrb[0].mxu0 %v7898
      %v8108 = vpop.f32.mrb[0].mxu0
      %v8109 = vadd.f32 %v7823, %v8108
      %v8110 = vpop.f32.mrb[0].mxu0
      %v8111 = vadd.f32 %v7825, %v8110
      %8112 = vdwg.mxu0
      %8113 = vmatprep.subr.mxu0 0.0
      %8114 = vmatpush1.msra.mxu0 %v7569
      %8115 = vmatprep.subr.mxu0 0.0
      %8116 = vmatpush1.msra.mxu0 0.0
      %8117 = vmatprep.subr.mxu0 0.0
      %8118 = vmatpush1.msra.mxu0 0.0
      %8119 = vmatprep.subr.mxu0 0.0
      %8120 = vmatpush1.msra.mxu0 0.0
      %8121 = vmatprep.subr.mxu0 0.0
      %8122 = vmatpush1.msra.mxu0 0.0
      %8123 = vmatprep.subr.mxu0 0.0
      %8124 = vmatpush1.msra.mxu0 0.0
      %8125 = vmatprep.subr.mxu0 0.0
      %8126 = vmatpush1.msra.mxu0 0.0
      %8127 = vmatprep.subr.mxu0 0.0
      %8128 = vmatpush1.msra.mxu0 0.0
      %8129 = vmatprep.subr.mxu0 0.0
      %8130 = vmatpush1.msra.mxu0 0.0
      %8131 = vmatprep.subr.mxu0 0.0
      %8132 = vmatpush1.msra.mxu0 0.0
      %8133 = vmatprep.subr.mxu0 0.0
      %8134 = vmatpush1.msra.mxu0 0.0
      %8135 = vmatprep.subr.mxu0 0.0
      %8136 = vmatpush1.msra.mxu0 0.0
      %8137 = vmatprep.subr.mxu0 0.0
      %8138 = vmatpush1.msra.mxu0 0.0
      %8139 = vmatprep.subr.mxu0 0.0
      %8140 = vmatpush1.msra.mxu0 0.0
      %8141 = vmatprep.subr.mxu0 0.0
      %8142 = vmatpush1.msra.mxu0 0.0
      %8143 = vmatprep.subr.mxu0 0.0
      %8144 = vmatpush1.msra.mxu0 0.0
      %8145 = vmatprep.subr.mxu0 0.0
      %8146 = vmatpush1.msra.mxu0 0.0
      %8147 = vmatprep.subr.mxu0 0.0
      %8148 = vmatpush1.msra.mxu0 0.0
      %8149 = vmatprep.subr.mxu0 0.0
      %8150 = vmatpush1.msra.mxu0 0.0
      %8151 = vmatprep.subr.mxu0 0.0
      %8152 = vmatpush1.msra.mxu0 0.0
      %8153 = vmatprep.subr.mxu0 0.0
      %8154 = vmatpush1.msra.mxu0 0.0
      %8155 = vmatprep.subr.mxu0 0.0
      %8156 = vmatpush1.msra.mxu0 0.0
      %8157 = vmatprep.subr.mxu0 0.0
      %8158 = vmatpush1.msra.mxu0 0.0
      %8159 = vmatprep.subr.mxu0 0.0
      %8160 = vmatpush1.msra.mxu0 0.0
      %8161 = vmatprep.subr.mxu0 0.0
      %8162 = vmatpush1.msra.mxu0 0.0
      %8163 = vmatprep.subr.mxu0 0.0
      %8164 = vmatpush1.msra.mxu0 0.0
      %8165 = vmatprep.subr.mxu0 0.0
      %8166 = vmatpush1.msra.mxu0 0.0
      %8167 = vmatprep.subr.mxu0 0.0
      %8168 = vmatpush1.msra.mxu0 0.0
      %8169 = vmatprep.subr.mxu0 0.0
      %8170 = vmatpush1.msra.mxu0 0.0
      %8171 = vmatprep.subr.mxu0 0.0
      %8172 = vmatpush1.msra.mxu0 0.0
      %8173 = vmatprep.subr.mxu0 0.0
      %8174 = vmatpush1.msra.mxu0 0.0
      %8175 = vmatprep.subr.mxu0 0.0
      %8176 = vmatpush1.msra.mxu0 0.0
      %8177 = vmatprep.mubr.f32.mxu0 0.0
      %8178 = vmatmul.mubr.f32.gmra.mrb[0].mxu0 %v7898
      %v8179 = vpop.f32.mrb[0].mxu0
      %v8180 = vadd.f32 %v7894, %v8179
      %v8181 = vpop.f32.mrb[0].mxu0
      %8182 = vdwg.mxu0
      %s8183 = scalar_lea.vmem %s8, 16
      %v8184 = vld [vmem:[%s8183] sm:$0xff]
      %8185 = vrot.lane.b32.xlu0 %v7564, 56
      %v8186 = vpop.permute.xlu0 %8185
      %8187 = vrot.lane.b32.xlu0 %v7565, 56
      %v8188 = vpop.permute.xlu0 %8187
      %8189 = vrot.lane.b32.xlu0 %v7566, 56
      %v8190 = vpop.permute.xlu0 %8189
      %8191 = vrot.lane.b32.xlu0 %v7567, 56
      %v8192 = vpop.permute.xlu0 %8191
      %8193 = vrot.lane.b32.xlu0 %v7568, 56
      %v8194 = vpop.permute.xlu0 %8193
      %8195 = vrot.lane.b32.xlu0 %v7569, 56
      %v8196 = vpop.permute.xlu0 %8195
      %8197 = vrot.lane.b32.xlu0 %v7572, 56
      %v8198 = vpop.permute.xlu0 %8197
      %v8199 = vsel %vm1090, %v8186, %v8188
      %v8200 = vsel %vm1090, %v8188, %v8190
      %v8201 = vsel %vm1090, %v8190, %v8192
      %v8202 = vsel %vm1090, %v8192, %v8194
      %v8203 = vsel %vm1090, %v8194, %v8196
      %v8204 = vsel %vm1090, %v8196, %v8198
      %v8213 = vsel %vm1555, %v8184, 0
      %8215 = vmatprep.subr.mxu0 %v8200
      %8216 = vmatpush1.msra.mxu0 %v8199
      %8217 = vmatprep.subr.mxu0 0.0
      %8218 = vmatpush1.msra.mxu0 0.0
      %8219 = vmatprep.subr.mxu0 0.0
      %8220 = vmatpush1.msra.mxu0 0.0
      %8221 = vmatprep.subr.mxu0 0.0
      %8222 = vmatpush1.msra.mxu0 0.0
      %8223 = vmatprep.subr.mxu0 0.0
      %8224 = vmatpush1.msra.mxu0 0.0
      %8225 = vmatprep.subr.mxu0 0.0
      %8226 = vmatpush1.msra.mxu0 0.0
      %8227 = vmatprep.subr.mxu0 0.0
      %8228 = vmatpush1.msra.mxu0 0.0
      %8229 = vmatprep.subr.mxu0 0.0
      %8230 = vmatpush1.msra.mxu0 0.0
      %8231 = vmatprep.subr.mxu0 0.0
      %8232 = vmatpush1.msra.mxu0 0.0
      %8233 = vmatprep.subr.mxu0 0.0
      %8234 = vmatpush1.msra.mxu0 0.0
      %8235 = vmatprep.subr.mxu0 0.0
      %8236 = vmatpush1.msra.mxu0 0.0
      %8237 = vmatprep.subr.mxu0 0.0
      %8238 = vmatpush1.msra.mxu0 0.0
      %8239 = vmatprep.subr.mxu0 0.0
      %8240 = vmatpush1.msra.mxu0 0.0
      %8241 = vmatprep.subr.mxu0 0.0
      %8242 = vmatpush1.msra.mxu0 0.0
      %8243 = vmatprep.subr.mxu0 0.0
      %8244 = vmatpush1.msra.mxu0 0.0
      %8245 = vmatprep.subr.mxu0 0.0
      %8246 = vmatpush1.msra.mxu0 0.0
      %8247 = vmatprep.subr.mxu0 0.0
      %8248 = vmatpush1.msra.mxu0 0.0
      %8249 = vmatprep.subr.mxu0 0.0
      %8250 = vmatpush1.msra.mxu0 0.0
      %8251 = vmatprep.subr.mxu0 0.0
      %8252 = vmatpush1.msra.mxu0 0.0
      %8253 = vmatprep.subr.mxu0 0.0
      %8254 = vmatpush1.msra.mxu0 0.0
      %8255 = vmatprep.subr.mxu0 0.0
      %8256 = vmatpush1.msra.mxu0 0.0
      %8257 = vmatprep.subr.mxu0 0.0
      %8258 = vmatpush1.msra.mxu0 0.0
      %8259 = vmatprep.subr.mxu0 0.0
      %8260 = vmatpush1.msra.mxu0 0.0
      %8261 = vmatprep.subr.mxu0 0.0
      %8262 = vmatpush1.msra.mxu0 0.0
      %8263 = vmatprep.subr.mxu0 0.0
      %8264 = vmatpush1.msra.mxu0 0.0
      %8265 = vmatprep.subr.mxu0 0.0
      %8266 = vmatpush1.msra.mxu0 0.0
      %8267 = vmatprep.subr.mxu0 0.0
      %8268 = vmatpush1.msra.mxu0 0.0
      %8269 = vmatprep.subr.mxu0 0.0
      %8270 = vmatpush1.msra.mxu0 0.0
      %8271 = vmatprep.subr.mxu0 0.0
      %8272 = vmatpush1.msra.mxu0 0.0
      %8273 = vmatprep.subr.mxu0 0.0
      %8274 = vmatpush1.msra.mxu0 0.0
      %8275 = vmatprep.subr.mxu0 0.0
      %8276 = vmatpush1.msra.mxu0 0.0
      %8277 = vmatprep.subr.mxu0 0.0
      %8278 = vmatpush1.msra.mxu0 0.0
      %8279 = vmatprep.mubr.f32.mxu0 0.0
      %8280 = vmatmul.mubr.f32.gmra.mrb[0].mxu0 %v8213
      %v8281 = vpop.f32.mrb[0].mxu0
      %v8282 = vadd.f32 0.0, %v8281
      %v8283 = vpop.f32.mrb[0].mxu0
      %v8284 = vadd.f32 0.0, %v8283
      %8285 = vdwg.mxu0
      %8286 = vmatprep.subr.mxu0 %v8202
      %8287 = vmatpush1.msra.mxu0 %v8201
      %8288 = vmatprep.subr.mxu0 0.0
      %8289 = vmatpush1.msra.mxu0 0.0
      %8290 = vmatprep.subr.mxu0 0.0
      %8291 = vmatpush1.msra.mxu0 0.0
      %8292 = vmatprep.subr.mxu0 0.0
      %8293 = vmatpush1.msra.mxu0 0.0
      %8294 = vmatprep.subr.mxu0 0.0
      %8295 = vmatpush1.msra.mxu0 0.0
      %8296 = vmatprep.subr.mxu0 0.0
      %8297 = vmatpush1.msra.mxu0 0.0
      %8298 = vmatprep.subr.mxu0 0.0
      %8299 = vmatpush1.msra.mxu0 0.0
      %8300 = vmatprep.subr.mxu0 0.0
      %8301 = vmatpush1.msra.mxu0 0.0
      %8302 = vmatprep.subr.mxu0 0.0
      %8303 = vmatpush1.msra.mxu0 0.0
      %8304 = vmatprep.subr.mxu0 0.0
      %8305 = vmatpush1.msra.mxu0 0.0
      %8306 = vmatprep.subr.mxu0 0.0
      %8307 = vmatpush1.msra.mxu0 0.0
      %8308 = vmatprep.subr.mxu0 0.0
      %8309 = vmatpush1.msra.mxu0 0.0
      %8310 = vmatprep.subr.mxu0 0.0
      %8311 = vmatpush1.msra.mxu0 0.0
      %8312 = vmatprep.subr.mxu0 0.0
      %8313 = vmatpush1.msra.mxu0 0.0
      %8314 = vmatprep.subr.mxu0 0.0
      %8315 = vmatpush1.msra.mxu0 0.0
      %8316 = vmatprep.subr.mxu0 0.0
      %8317 = vmatpush1.msra.mxu0 0.0
      %8318 = vmatprep.subr.mxu0 0.0
      %8319 = vmatpush1.msra.mxu0 0.0
      %8320 = vmatprep.subr.mxu0 0.0
      %8321 = vmatpush1.msra.mxu0 0.0
      %8322 = vmatprep.subr.mxu0 0.0
      %8323 = vmatpush1.msra.mxu0 0.0
      %8324 = vmatprep.subr.mxu0 0.0
      %8325 = vmatpush1.msra.mxu0 0.0
      %8326 = vmatprep.subr.mxu0 0.0
      %8327 = vmatpush1.msra.mxu0 0.0
      %8328 = vmatprep.subr.mxu0 0.0
      %8329 = vmatpush1.msra.mxu0 0.0
      %8330 = vmatprep.subr.mxu0 0.0
      %8331 = vmatpush1.msra.mxu0 0.0
      %8332 = vmatprep.subr.mxu0 0.0
      %8333 = vmatpush1.msra.mxu0 0.0
      %8334 = vmatprep.subr.mxu0 0.0
      %8335 = vmatpush1.msra.mxu0 0.0
      %8336 = vmatprep.subr.mxu0 0.0
      %8337 = vmatpush1.msra.mxu0 0.0
      %8338 = vmatprep.subr.mxu0 0.0
      %8339 = vmatpush1.msra.mxu0 0.0
      %8340 = vmatprep.subr.mxu0 0.0
      %8341 = vmatpush1.msra.mxu0 0.0
      %8342 = vmatprep.subr.mxu0 0.0
      %8343 = vmatpush1.msra.mxu0 0.0
      %8344 = vmatprep.subr.mxu0 0.0
      %8345 = vmatpush1.msra.mxu0 0.0
      %8346 = vmatprep.subr.mxu0 0.0
      %8347 = vmatpush1.msra.mxu0 0.0
      %8348 = vmatprep.subr.mxu0 0.0
      %8349 = vmatpush1.msra.mxu0 0.0
      %8350 = vmatprep.mubr.f32.mxu0 0.0
      %8351 = vmatmul.mubr.f32.gmra.mrb[0].mxu0 %v8213
      %v8352 = vpop.f32.mrb[0].mxu0
      %v8353 = vadd.f32 0.0, %v8352
      %v8354 = vpop.f32.mrb[0].mxu0
      %v8355 = vadd.f32 0.0, %v8354
      %8356 = vdwg.mxu0
      %8357 = vmatprep.subr.mxu0 %v8204
      %8358 = vmatpush1.msra.mxu0 %v8203
      %8359 = vmatprep.subr.mxu0 0.0
      %8360 = vmatpush1.msra.mxu0 0.0
      %8361 = vmatprep.subr.mxu0 0.0
      %8362 = vmatpush1.msra.mxu0 0.0
      %8363 = vmatprep.subr.mxu0 0.0
      %8364 = vmatpush1.msra.mxu0 0.0
      %8365 = vmatprep.subr.mxu0 0.0
      %8366 = vmatpush1.msra.mxu0 0.0
      %8367 = vmatprep.subr.mxu0 0.0
      %8368 = vmatpush1.msra.mxu0 0.0
      %8369 = vmatprep.subr.mxu0 0.0
      %8370 = vmatpush1.msra.mxu0 0.0
      %8371 = vmatprep.subr.mxu0 0.0
      %8372 = vmatpush1.msra.mxu0 0.0
      %8373 = vmatprep.subr.mxu0 0.0
      %8374 = vmatpush1.msra.mxu0 0.0
      %8375 = vmatprep.subr.mxu0 0.0
      %8376 = vmatpush1.msra.mxu0 0.0
      %8377 = vmatprep.subr.mxu0 0.0
      %8378 = vmatpush1.msra.mxu0 0.0
      %8379 = vmatprep.subr.mxu0 0.0
      %8380 = vmatpush1.msra.mxu0 0.0
      %8381 = vmatprep.subr.mxu0 0.0
      %8382 = vmatpush1.msra.mxu0 0.0
      %8383 = vmatprep.subr.mxu0 0.0
      %8384 = vmatpush1.msra.mxu0 0.0
      %8385 = vmatprep.subr.mxu0 0.0
      %8386 = vmatpush1.msra.mxu0 0.0
      %8387 = vmatprep.subr.mxu0 0.0
      %8388 = vmatpush1.msra.mxu0 0.0
      %8389 = vmatprep.subr.mxu0 0.0
      %8390 = vmatpush1.msra.mxu0 0.0
      %8391 = vmatprep.subr.mxu0 0.0
      %8392 = vmatpush1.msra.mxu0 0.0
      %8393 = vmatprep.subr.mxu0 0.0
      %8394 = vmatpush1.msra.mxu0 0.0
      %8395 = vmatprep.subr.mxu0 0.0
      %8396 = vmatpush1.msra.mxu0 0.0
      %8397 = vmatprep.subr.mxu0 0.0
      %8398 = vmatpush1.msra.mxu0 0.0
      %8399 = vmatprep.subr.mxu0 0.0
      %8400 = vmatpush1.msra.mxu0 0.0
      %8401 = vmatprep.subr.mxu0 0.0
      %8402 = vmatpush1.msra.mxu0 0.0
      %8403 = vmatprep.subr.mxu0 0.0
      %8404 = vmatpush1.msra.mxu0 0.0
      %8405 = vmatprep.subr.mxu0 0.0
      %8406 = vmatpush1.msra.mxu0 0.0
      %8407 = vmatprep.subr.mxu0 0.0
      %8408 = vmatpush1.msra.mxu0 0.0
      %8409 = vmatprep.subr.mxu0 0.0
      %8410 = vmatpush1.msra.mxu0 0.0
      %8411 = vmatprep.subr.mxu0 0.0
      %8412 = vmatpush1.msra.mxu0 0.0
      %8413 = vmatprep.subr.mxu0 0.0
      %8414 = vmatpush1.msra.mxu0 0.0
      %8415 = vmatprep.subr.mxu0 0.0
      %8416 = vmatpush1.msra.mxu0 0.0
      %8417 = vmatprep.subr.mxu0 0.0
      %8418 = vmatpush1.msra.mxu0 0.0
      %8419 = vmatprep.subr.mxu0 0.0
      %8420 = vmatpush1.msra.mxu0 0.0
      %8421 = vmatprep.mubr.f32.mxu0 0.0
      %8422 = vmatmul.mubr.f32.gmra.mrb[0].mxu0 %v8213
      %v8423 = vpop.f32.mrb[0].mxu0
      %v8424 = vadd.f32 0.0, %v8423
      %v8425 = vpop.f32.mrb[0].mxu0
      %v8426 = vadd.f32 0.0, %v8425
      %8427 = vdwg.mxu0
      %8428 = vmatprep.subr.mxu0 0.0
      %8429 = vmatpush1.msra.mxu0 %v8198
      %8430 = vmatprep.subr.mxu0 0.0
      %8431 = vmatpush1.msra.mxu0 0.0
      %8432 = vmatprep.subr.mxu0 0.0
      %8433 = vmatpush1.msra.mxu0 0.0
      %8434 = vmatprep.subr.mxu0 0.0
      %8435 = vmatpush1.msra.mxu0 0.0
      %8436 = vmatprep.subr.mxu0 0.0
      %8437 = vmatpush1.msra.mxu0 0.0
      %8438 = vmatprep.subr.mxu0 0.0
      %8439 = vmatpush1.msra.mxu0 0.0
      %8440 = vmatprep.subr.mxu0 0.0
      %8441 = vmatpush1.msra.mxu0 0.0
      %8442 = vmatprep.subr.mxu0 0.0
      %8443 = vmatpush1.msra.mxu0 0.0
      %8444 = vmatprep.subr.mxu0 0.0
      %8445 = vmatpush1.msra.mxu0 0.0
      %8446 = vmatprep.subr.mxu0 0.0
      %8447 = vmatpush1.msra.mxu0 0.0
      %8448 = vmatprep.subr.mxu0 0.0
      %8449 = vmatpush1.msra.mxu0 0.0
      %8450 = vmatprep.subr.mxu0 0.0
      %8451 = vmatpush1.msra.mxu0 0.0
      %8452 = vmatprep.subr.mxu0 0.0
      %8453 = vmatpush1.msra.mxu0 0.0
      %8454 = vmatprep.subr.mxu0 0.0
      %8455 = vmatpush1.msra.mxu0 0.0
      %8456 = vmatprep.subr.mxu0 0.0
      %8457 = vmatpush1.msra.mxu0 0.0
      %8458 = vmatprep.subr.mxu0 0.0
      %8459 = vmatpush1.msra.mxu0 0.0
      %8460 = vmatprep.subr.mxu0 0.0
      %8461 = vmatpush1.msra.mxu0 0.0
      %8462 = vmatprep.subr.mxu0 0.0
      %8463 = vmatpush1.msra.mxu0 0.0
      %8464 = vmatprep.subr.mxu0 0.0
      %8465 = vmatpush1.msra.mxu0 0.0
      %8466 = vmatprep.subr.mxu0 0.0
      %8467 = vmatpush1.msra.mxu0 0.0
      %8468 = vmatprep.subr.mxu0 0.0
      %8469 = vmatpush1.msra.mxu0 0.0
      %8470 = vmatprep.subr.mxu0 0.0
      %8471 = vmatpush1.msra.mxu0 0.0
      %8472 = vmatprep.subr.mxu0 0.0
      %8473 = vmatpush1.msra.mxu0 0.0
      %8474 = vmatprep.subr.mxu0 0.0
      %8475 = vmatpush1.msra.mxu0 0.0
      %8476 = vmatprep.subr.mxu0 0.0
      %8477 = vmatpush1.msra.mxu0 0.0
      %8478 = vmatprep.subr.mxu0 0.0
      %8479 = vmatpush1.msra.mxu0 0.0
      %8480 = vmatprep.subr.mxu0 0.0
      %8481 = vmatpush1.msra.mxu0 0.0
      %8482 = vmatprep.subr.mxu0 0.0
      %8483 = vmatpush1.msra.mxu0 0.0
      %8484 = vmatprep.subr.mxu0 0.0
      %8485 = vmatpush1.msra.mxu0 0.0
      %8486 = vmatprep.subr.mxu0 0.0
      %8487 = vmatpush1.msra.mxu0 0.0
      %8488 = vmatprep.subr.mxu0 0.0
      %8489 = vmatpush1.msra.mxu0 0.0
      %8490 = vmatprep.subr.mxu0 0.0
      %8491 = vmatpush1.msra.mxu0 0.0
      %8492 = vmatprep.mubr.f32.mxu0 0.0
      %8493 = vmatmul.mubr.f32.gmra.mrb[0].mxu0 %v8213
      %v8494 = vpop.f32.mrb[0].mxu0
      %v8495 = vadd.f32 0.0, %v8494
      %v8496 = vpop.f32.mrb[0].mxu0
      %8497 = vdwg.mxu0
      %v8498 = vadd.f32 %v7967, %v8282
      %v8499 = vadd.f32 %v7969, %v8284
      %v8500 = vadd.f32 %v8038, %v8353
      %v8501 = vadd.f32 %v8040, %v8355
      %v8502 = vadd.f32 %v8109, %v8424
      %v8503 = vadd.f32 %v8111, %v8426
      %v8504 = vadd.f32 %v8180, %v8495
      %8506 = vset.pattern.permute.xlu0 0
      %8507 = vperm.xlu0 %8506, %v7561
      %v8508 = vpop.permute.xlu0 %8507
      %v8510 = vadd.f32 %v8498, %v8508
      %v8511 = vadd.f32 %v8499, %v8508
      %v8512 = vadd.f32 %v8500, %v8508
      %v8513 = vadd.f32 %v8501, %v8508
      %v8514 = vadd.f32 %v8502, %v8508
      %v8515 = vadd.f32 %v8503, %v8508
      %v8516 = vadd.f32 %v8504, %v8508
      %v8517 = vmul.f32 %v8510, %v1420
      %v8518 = vmul.f32 %v8511, %v1424
      %v8519 = vmul.f32 %v8512, %v1428
      %v8520 = vmul.f32 %v8513, %v1432
      %v8521 = vmul.f32 %v8514, %v1436
      %v8522 = vmul.f32 %v8515, %v1440
      %v8523 = vmul.f32 %v8516, %v1444
      %8531 = vrot.lane.b32.xlu0 %v8517, 100
      %v8532 = vpop.permute.xlu0 %8531
      %8533 = vrot.lane.b32.xlu0 %v8518, 100
      %v8534 = vpop.permute.xlu0 %8533
      %8535 = vrot.lane.b32.xlu0 %v8519, 100
      %v8536 = vpop.permute.xlu0 %8535
      %8537 = vrot.lane.b32.xlu0 %v8520, 100
      %v8538 = vpop.permute.xlu0 %8537
      %8539 = vrot.lane.b32.xlu0 %v8521, 100
      %v8540 = vpop.permute.xlu0 %8539
      %8541 = vrot.lane.b32.xlu0 %v8522, 100
      %v8542 = vpop.permute.xlu0 %8541
      %8543 = vrot.lane.b32.xlu0 %v8523, 100
      %v8544 = vpop.permute.xlu0 %8543
      %v8545 = vsel %vm1480, %v8532, %v8534
      %v8546 = vsel %vm1480, %v8534, %v8536
      %v8547 = vsel %vm1480, %v8536, %v8538
      %v8548 = vsel %vm1480, %v8538, %v8540
      %v8549 = vsel %vm1480, %v8540, %v8542
      %v8550 = vsel %vm1480, %v8542, %v8544
      %8559 = vst.msk [vmem:[#allocation3] sm:$0xff] %vm1495, %v8532
      %8560 = vst [vmem:[#allocation3 + $0x8] sm:$0xff] %v8545
      %8561 = vst [vmem:[#allocation3 + $0x10] sm:$0xff] %v8546
      %8562 = vst [vmem:[#allocation3 + $0x18] sm:$0xff] %v8547
      %8563 = vst [vmem:[#allocation3 + $0x20] sm:$0xff] %v8548
      %8564 = vst [vmem:[#allocation3 + $0x28] sm:$0xff] %v8549
      %8565 = vst [vmem:[#allocation3 + $0x30] sm:$0xff] %v8550
      %8566 = vst.msk [vmem:[#allocation3 + $0x38] sm:$0xff] %vm472, %v8544
      %s8567 = scalar_lea.vmem %s10, 64
      %v8568 = vld [vmem:[%s8567] sm:$0xff]
      %v8569 = vld [vmem:[%s9] sm:$0xff]
      %v8570 = vld [vmem:[#allocation3] sm:$0xff]
      %v8571 = vld [vmem:[#allocation3 + $0x8] sm:$0xff]
      %v8572 = vld [vmem:[#allocation3 + $0x10] sm:$0xff]
      %v8573 = vld [vmem:[#allocation3 + $0x18] sm:$0xff]
      %v8574 = vld [vmem:[#allocation3 + $0x20] sm:$0xff]
      %v8575 = vld [vmem:[#allocation3 + $0x28] sm:$0xff]
      %v8576 = vld [vmem:[#allocation3 + $0x30] sm:$0xff]
      %s8577 = scalar_lea.vmem %s9, 8
      %v8578 = vld [vmem:[%s8577] sm:$0xff]
      %v8579 = vld [vmem:[#allocation3 + $0x38] sm:$0xff]
      %8588 = vrot.lane.b32.xlu0 %v8570, 28
      %v8589 = vpop.permute.xlu0 %8588
      %8590 = vrot.lane.b32.xlu0 %v8571, 28
      %v8591 = vpop.permute.xlu0 %8590
      %8592 = vrot.lane.b32.xlu0 %v8572, 28
      %v8593 = vpop.permute.xlu0 %8592
      %8594 = vrot.lane.b32.xlu0 %v8573, 28
      %v8595 = vpop.permute.xlu0 %8594
      %8596 = vrot.lane.b32.xlu0 %v8574, 28
      %v8597 = vpop.permute.xlu0 %8596
      %8598 = vrot.lane.b32.xlu0 %v8575, 28
      %v8599 = vpop.permute.xlu0 %8598
      %8600 = vrot.lane.b32.xlu0 %v8576, 28
      %v8601 = vpop.permute.xlu0 %8600
      %8602 = vrot.lane.b32.xlu0 %v8579, 28
      %v8603 = vpop.permute.xlu0 %8602
      %v8604 = vsel %vm464, %v8589, %v8591
      %v8605 = vsel %vm464, %v8591, %v8593
      %v8606 = vsel %vm464, %v8593, %v8595
      %v8607 = vsel %vm464, %v8595, %v8597
      %v8608 = vsel %vm464, %v8597, %v8599
      %v8609 = vsel %vm464, %v8599, %v8601
      %v8610 = vsel %vm464, %v8601, %v8603
      %v8619 = vsel %vm1555, %v8578, 0
      %8621 = vmatprep.subr.mxu0 %v8605
      %8622 = vmatpush1.msra.mxu0 %v8604
      %8623 = vmatprep.subr.mxu0 0.0
      %8624 = vmatpush1.msra.mxu0 0.0
      %8625 = vmatprep.subr.mxu0 0.0
      %8626 = vmatpush1.msra.mxu0 0.0
      %8627 = vmatprep.subr.mxu0 0.0
      %8628 = vmatpush1.msra.mxu0 0.0
      %8629 = vmatprep.subr.mxu0 0.0
      %8630 = vmatpush1.msra.mxu0 0.0
      %8631 = vmatprep.subr.mxu0 0.0
      %8632 = vmatpush1.msra.mxu0 0.0
      %8633 = vmatprep.subr.mxu0 0.0
      %8634 = vmatpush1.msra.mxu0 0.0
      %8635 = vmatprep.subr.mxu0 0.0
      %8636 = vmatpush1.msra.mxu0 0.0
      %8637 = vmatprep.subr.mxu0 0.0
      %8638 = vmatpush1.msra.mxu0 0.0
      %8639 = vmatprep.subr.mxu0 0.0
      %8640 = vmatpush1.msra.mxu0 0.0
      %8641 = vmatprep.subr.mxu0 0.0
      %8642 = vmatpush1.msra.mxu0 0.0
      %8643 = vmatprep.subr.mxu0 0.0
      %8644 = vmatpush1.msra.mxu0 0.0
      %8645 = vmatprep.subr.mxu0 0.0
      %8646 = vmatpush1.msra.mxu0 0.0
      %8647 = vmatprep.subr.mxu0 0.0
      %8648 = vmatpush1.msra.mxu0 0.0
      %8649 = vmatprep.subr.mxu0 0.0
      %8650 = vmatpush1.msra.mxu0 0.0
      %8651 = vmatprep.subr.mxu0 0.0
      %8652 = vmatpush1.msra.mxu0 0.0
      %8653 = vmatprep.subr.mxu0 0.0
      %8654 = vmatpush1.msra.mxu0 0.0
      %8655 = vmatprep.subr.mxu0 0.0
      %8656 = vmatpush1.msra.mxu0 0.0
      %8657 = vmatprep.subr.mxu0 0.0
      %8658 = vmatpush1.msra.mxu0 0.0
      %8659 = vmatprep.subr.mxu0 0.0
      %8660 = vmatpush1.msra.mxu0 0.0
      %8661 = vmatprep.subr.mxu0 0.0
      %8662 = vmatpush1.msra.mxu0 0.0
      %8663 = vmatprep.subr.mxu0 0.0
      %8664 = vmatpush1.msra.mxu0 0.0
      %8665 = vmatprep.subr.mxu0 0.0
      %8666 = vmatpush1.msra.mxu0 0.0
      %8667 = vmatprep.subr.mxu0 0.0
      %8668 = vmatpush1.msra.mxu0 0.0
      %8669 = vmatprep.subr.mxu0 0.0
      %8670 = vmatpush1.msra.mxu0 0.0
      %8671 = vmatprep.subr.mxu0 0.0
      %8672 = vmatpush1.msra.mxu0 0.0
      %8673 = vmatprep.subr.mxu0 0.0
      %8674 = vmatpush1.msra.mxu0 0.0
      %8675 = vmatprep.subr.mxu0 0.0
      %8676 = vmatpush1.msra.mxu0 0.0
      %8677 = vmatprep.subr.mxu0 0.0
      %8678 = vmatpush1.msra.mxu0 0.0
      %8679 = vmatprep.subr.mxu0 0.0
      %8680 = vmatpush1.msra.mxu0 0.0
      %8681 = vmatprep.subr.mxu0 0.0
      %8682 = vmatpush1.msra.mxu0 0.0
      %8683 = vmatprep.subr.mxu0 0.0
      %8684 = vmatpush1.msra.mxu0 0.0
      %8685 = vmatprep.mubr.f32.mxu0 0.0
      %8686 = vmatmul.mubr.f32.gmra.mrb[0].mxu0 %v8619
      %v8687 = vpop.f32.mrb[0].mxu0
      %v8688 = vadd.f32 0.0, %v8687
      %v8689 = vpop.f32.mrb[0].mxu0
      %v8690 = vadd.f32 0.0, %v8689
      %8691 = vdwg.mxu0
      %8692 = vmatprep.subr.mxu0 %v8607
      %8693 = vmatpush1.msra.mxu0 %v8606
      %8694 = vmatprep.subr.mxu0 0.0
      %8695 = vmatpush1.msra.mxu0 0.0
      %8696 = vmatprep.subr.mxu0 0.0
      %8697 = vmatpush1.msra.mxu0 0.0
      %8698 = vmatprep.subr.mxu0 0.0
      %8699 = vmatpush1.msra.mxu0 0.0
      %8700 = vmatprep.subr.mxu0 0.0
      %8701 = vmatpush1.msra.mxu0 0.0
      %8702 = vmatprep.subr.mxu0 0.0
      %8703 = vmatpush1.msra.mxu0 0.0
      %8704 = vmatprep.subr.mxu0 0.0
      %8705 = vmatpush1.msra.mxu0 0.0
      %8706 = vmatprep.subr.mxu0 0.0
      %8707 = vmatpush1.msra.mxu0 0.0
      %8708 = vmatprep.subr.mxu0 0.0
      %8709 = vmatpush1.msra.mxu0 0.0
      %8710 = vmatprep.subr.mxu0 0.0
      %8711 = vmatpush1.msra.mxu0 0.0
      %8712 = vmatprep.subr.mxu0 0.0
      %8713 = vmatpush1.msra.mxu0 0.0
      %8714 = vmatprep.subr.mxu0 0.0
      %8715 = vmatpush1.msra.mxu0 0.0
      %8716 = vmatprep.subr.mxu0 0.0
      %8717 = vmatpush1.msra.mxu0 0.0
      %8718 = vmatprep.subr.mxu0 0.0
      %8719 = vmatpush1.msra.mxu0 0.0
      %8720 = vmatprep.subr.mxu0 0.0
      %8721 = vmatpush1.msra.mxu0 0.0
      %8722 = vmatprep.subr.mxu0 0.0
      %8723 = vmatpush1.msra.mxu0 0.0
      %8724 = vmatprep.subr.mxu0 0.0
      %8725 = vmatpush1.msra.mxu0 0.0
      %8726 = vmatprep.subr.mxu0 0.0
      %8727 = vmatpush1.msra.mxu0 0.0
      %8728 = vmatprep.subr.mxu0 0.0
      %8729 = vmatpush1.msra.mxu0 0.0
      %8730 = vmatprep.subr.mxu0 0.0
      %8731 = vmatpush1.msra.mxu0 0.0
      %8732 = vmatprep.subr.mxu0 0.0
      %8733 = vmatpush1.msra.mxu0 0.0
      %8734 = vmatprep.subr.mxu0 0.0
      %8735 = vmatpush1.msra.mxu0 0.0
      %8736 = vmatprep.subr.mxu0 0.0
      %8737 = vmatpush1.msra.mxu0 0.0
      %8738 = vmatprep.subr.mxu0 0.0
      %8739 = vmatpush1.msra.mxu0 0.0
      %8740 = vmatprep.subr.mxu0 0.0
      %8741 = vmatpush1.msra.mxu0 0.0
      %8742 = vmatprep.subr.mxu0 0.0
      %8743 = vmatpush1.msra.mxu0 0.0
      %8744 = vmatprep.subr.mxu0 0.0
      %8745 = vmatpush1.msra.mxu0 0.0
      %8746 = vmatprep.subr.mxu0 0.0
      %8747 = vmatpush1.msra.mxu0 0.0
      %8748 = vmatprep.subr.mxu0 0.0
      %8749 = vmatpush1.msra.mxu0 0.0
      %8750 = vmatprep.subr.mxu0 0.0
      %8751 = vmatpush1.msra.mxu0 0.0
      %8752 = vmatprep.subr.mxu0 0.0
      %8753 = vmatpush1.msra.mxu0 0.0
      %8754 = vmatprep.subr.mxu0 0.0
      %8755 = vmatpush1.msra.mxu0 0.0
      %8756 = vmatprep.mubr.f32.mxu0 0.0
      %8757 = vmatmul.mubr.f32.gmra.mrb[0].mxu0 %v8619
      %v8758 = vpop.f32.mrb[0].mxu0
      %v8759 = vadd.f32 0.0, %v8758
      %v8760 = vpop.f32.mrb[0].mxu0
      %v8761 = vadd.f32 0.0, %v8760
      %8762 = vdwg.mxu0
      %8763 = vmatprep.subr.mxu0 %v8609
      %8764 = vmatpush1.msra.mxu0 %v8608
      %8765 = vmatprep.subr.mxu0 0.0
      %8766 = vmatpush1.msra.mxu0 0.0
      %8767 = vmatprep.subr.mxu0 0.0
      %8768 = vmatpush1.msra.mxu0 0.0
      %8769 = vmatprep.subr.mxu0 0.0
      %8770 = vmatpush1.msra.mxu0 0.0
      %8771 = vmatprep.subr.mxu0 0.0
      %8772 = vmatpush1.msra.mxu0 0.0
      %8773 = vmatprep.subr.mxu0 0.0
      %8774 = vmatpush1.msra.mxu0 0.0
      %8775 = vmatprep.subr.mxu0 0.0
      %8776 = vmatpush1.msra.mxu0 0.0
      %8777 = vmatprep.subr.mxu0 0.0
      %8778 = vmatpush1.msra.mxu0 0.0
      %8779 = vmatprep.subr.mxu0 0.0
      %8780 = vmatpush1.msra.mxu0 0.0
      %8781 = vmatprep.subr.mxu0 0.0
      %8782 = vmatpush1.msra.mxu0 0.0
      %8783 = vmatprep.subr.mxu0 0.0
      %8784 = vmatpush1.msra.mxu0 0.0
      %8785 = vmatprep.subr.mxu0 0.0
      %8786 = vmatpush1.msra.mxu0 0.0
      %8787 = vmatprep.subr.mxu0 0.0
      %8788 = vmatpush1.msra.mxu0 0.0
      %8789 = vmatprep.subr.mxu0 0.0
      %8790 = vmatpush1.msra.mxu0 0.0
      %8791 = vmatprep.subr.mxu0 0.0
      %8792 = vmatpush1.msra.mxu0 0.0
      %8793 = vmatprep.subr.mxu0 0.0
      %8794 = vmatpush1.msra.mxu0 0.0
      %8795 = vmatprep.subr.mxu0 0.0
      %8796 = vmatpush1.msra.mxu0 0.0
      %8797 = vmatprep.subr.mxu0 0.0
      %8798 = vmatpush1.msra.mxu0 0.0
      %8799 = vmatprep.subr.mxu0 0.0
      %8800 = vmatpush1.msra.mxu0 0.0
      %8801 = vmatprep.subr.mxu0 0.0
      %8802 = vmatpush1.msra.mxu0 0.0
      %8803 = vmatprep.subr.mxu0 0.0
      %8804 = vmatpush1.msra.mxu0 0.0
      %8805 = vmatprep.subr.mxu0 0.0
      %8806 = vmatpush1.msra.mxu0 0.0
      %8807 = vmatprep.subr.mxu0 0.0
      %8808 = vmatpush1.msra.mxu0 0.0
      %8809 = vmatprep.subr.mxu0 0.0
      %8810 = vmatpush1.msra.mxu0 0.0
      %8811 = vmatprep.subr.mxu0 0.0
      %8812 = vmatpush1.msra.mxu0 0.0
      %8813 = vmatprep.subr.mxu0 0.0
      %8814 = vmatpush1.msra.mxu0 0.0
      %8815 = vmatprep.subr.mxu0 0.0
      %8816 = vmatpush1.msra.mxu0 0.0
      %8817 = vmatprep.subr.mxu0 0.0
      %8818 = vmatpush1.msra.mxu0 0.0
      %8819 = vmatprep.subr.mxu0 0.0
      %8820 = vmatpush1.msra.mxu0 0.0
      %8821 = vmatprep.subr.mxu0 0.0
      %8822 = vmatpush1.msra.mxu0 0.0
      %8823 = vmatprep.subr.mxu0 0.0
      %8824 = vmatpush1.msra.mxu0 0.0
      %8825 = vmatprep.subr.mxu0 0.0
      %8826 = vmatpush1.msra.mxu0 0.0
      %8827 = vmatprep.mubr.f32.mxu0 0.0
      %8828 = vmatmul.mubr.f32.gmra.mrb[0].mxu0 %v8619
      %v8829 = vpop.f32.mrb[0].mxu0
      %v8830 = vadd.f32 0.0, %v8829
      %v8831 = vpop.f32.mrb[0].mxu0
      %v8832 = vadd.f32 0.0, %v8831
      %8833 = vdwg.mxu0
      %8834 = vmatprep.subr.mxu0 0.0
      %8835 = vmatpush1.msra.mxu0 %v8610
      %8836 = vmatprep.subr.mxu0 0.0
      %8837 = vmatpush1.msra.mxu0 0.0
      %8838 = vmatprep.subr.mxu0 0.0
      %8839 = vmatpush1.msra.mxu0 0.0
      %8840 = vmatprep.subr.mxu0 0.0
      %8841 = vmatpush1.msra.mxu0 0.0
      %8842 = vmatprep.subr.mxu0 0.0
      %8843 = vmatpush1.msra.mxu0 0.0
      %8844 = vmatprep.subr.mxu0 0.0
      %8845 = vmatpush1.msra.mxu0 0.0
      %8846 = vmatprep.subr.mxu0 0.0
      %8847 = vmatpush1.msra.mxu0 0.0
      %8848 = vmatprep.subr.mxu0 0.0
      %8849 = vmatpush1.msra.mxu0 0.0
      %8850 = vmatprep.subr.mxu0 0.0
      %8851 = vmatpush1.msra.mxu0 0.0
      %8852 = vmatprep.subr.mxu0 0.0
      %8853 = vmatpush1.msra.mxu0 0.0
      %8854 = vmatprep.subr.mxu0 0.0
      %8855 = vmatpush1.msra.mxu0 0.0
      %8856 = vmatprep.subr.mxu0 0.0
      %8857 = vmatpush1.msra.mxu0 0.0
      %8858 = vmatprep.subr.mxu0 0.0
      %8859 = vmatpush1.msra.mxu0 0.0
      %8860 = vmatprep.subr.mxu0 0.0
      %8861 = vmatpush1.msra.mxu0 0.0
      %8862 = vmatprep.subr.mxu0 0.0
      %8863 = vmatpush1.msra.mxu0 0.0
      %8864 = vmatprep.subr.mxu0 0.0
      %8865 = vmatpush1.msra.mxu0 0.0
      %8866 = vmatprep.subr.mxu0 0.0
      %8867 = vmatpush1.msra.mxu0 0.0
      %8868 = vmatprep.subr.mxu0 0.0
      %8869 = vmatpush1.msra.mxu0 0.0
      %8870 = vmatprep.subr.mxu0 0.0
      %8871 = vmatpush1.msra.mxu0 0.0
      %8872 = vmatprep.subr.mxu0 0.0
      %8873 = vmatpush1.msra.mxu0 0.0
      %8874 = vmatprep.subr.mxu0 0.0
      %8875 = vmatpush1.msra.mxu0 0.0
      %8876 = vmatprep.subr.mxu0 0.0
      %8877 = vmatpush1.msra.mxu0 0.0
      %8878 = vmatprep.subr.mxu0 0.0
      %8879 = vmatpush1.msra.mxu0 0.0
      %8880 = vmatprep.subr.mxu0 0.0
      %8881 = vmatpush1.msra.mxu0 0.0
      %8882 = vmatprep.subr.mxu0 0.0
      %8883 = vmatpush1.msra.mxu0 0.0
      %8884 = vmatprep.subr.mxu0 0.0
      %8885 = vmatpush1.msra.mxu0 0.0
      %8886 = vmatprep.subr.mxu0 0.0
      %8887 = vmatpush1.msra.mxu0 0.0
      %8888 = vmatprep.subr.mxu0 0.0
      %8889 = vmatpush1.msra.mxu0 0.0
      %8890 = vmatprep.subr.mxu0 0.0
      %8891 = vmatpush1.msra.mxu0 0.0
      %8892 = vmatprep.subr.mxu0 0.0
      %8893 = vmatpush1.msra.mxu0 0.0
      %8894 = vmatprep.subr.mxu0 0.0
      %8895 = vmatpush1.msra.mxu0 0.0
      %8896 = vmatprep.subr.mxu0 0.0
      %8897 = vmatpush1.msra.mxu0 0.0
      %8898 = vmatprep.mubr.f32.mxu0 0.0
      %8899 = vmatmul.mubr.f32.gmra.mrb[0].mxu0 %v8619
      %v8900 = vpop.f32.mrb[0].mxu0
      %v8901 = vadd.f32 0.0, %v8900
      %v8902 = vpop.f32.mrb[0].mxu0
      %8903 = vdwg.mxu0
      %8904 = vrot.lane.b32.xlu0 %v8570, 38
      %v8905 = vpop.permute.xlu0 %8904
      %8906 = vrot.lane.b32.xlu0 %v8571, 38
      %v8907 = vpop.permute.xlu0 %8906
      %8908 = vrot.lane.b32.xlu0 %v8572, 38
      %v8909 = vpop.permute.xlu0 %8908
      %8910 = vrot.lane.b32.xlu0 %v8573, 38
      %v8911 = vpop.permute.xlu0 %8910
      %8912 = vrot.lane.b32.xlu0 %v8574, 38
      %v8913 = vpop.permute.xlu0 %8912
      %8914 = vrot.lane.b32.xlu0 %v8575, 38
      %v8915 = vpop.permute.xlu0 %8914
      %8916 = vrot.lane.b32.xlu0 %v8576, 38
      %v8917 = vpop.permute.xlu0 %8916
      %v8918 = vsel %vm1856, %v8905, %v8907
      %v8919 = vsel %vm1856, %v8907, %v8909
      %v8920 = vsel %vm1856, %v8909, %v8911
      %v8921 = vsel %vm1856, %v8911, %v8913
      %v8922 = vsel %vm1856, %v8913, %v8915
      %v8923 = vsel %vm1856, %v8915, %v8917
      %v8932 = vsel %vm1555, %v8569, 0
      %8934 = vmatprep.subr.mxu0 %v8919
      %8935 = vmatpush1.msra.mxu0 %v8918
      %8936 = vmatprep.subr.mxu0 0.0
      %8937 = vmatpush1.msra.mxu0 0.0
      %8938 = vmatprep.subr.mxu0 0.0
      %8939 = vmatpush1.msra.mxu0 0.0
      %8940 = vmatprep.subr.mxu0 0.0
      %8941 = vmatpush1.msra.mxu0 0.0
      %8942 = vmatprep.subr.mxu0 0.0
      %8943 = vmatpush1.msra.mxu0 0.0
      %8944 = vmatprep.subr.mxu0 0.0
      %8945 = vmatpush1.msra.mxu0 0.0
      %8946 = vmatprep.subr.mxu0 0.0
      %8947 = vmatpush1.msra.mxu0 0.0
      %8948 = vmatprep.subr.mxu0 0.0
      %8949 = vmatpush1.msra.mxu0 0.0
      %8950 = vmatprep.subr.mxu0 0.0
      %8951 = vmatpush1.msra.mxu0 0.0
      %8952 = vmatprep.subr.mxu0 0.0
      %8953 = vmatpush1.msra.mxu0 0.0
      %8954 = vmatprep.subr.mxu0 0.0
      %8955 = vmatpush1.msra.mxu0 0.0
      %8956 = vmatprep.subr.mxu0 0.0
      %8957 = vmatpush1.msra.mxu0 0.0
      %8958 = vmatprep.subr.mxu0 0.0
      %8959 = vmatpush1.msra.mxu0 0.0
      %8960 = vmatprep.subr.mxu0 0.0
      %8961 = vmatpush1.msra.mxu0 0.0
      %8962 = vmatprep.subr.mxu0 0.0
      %8963 = vmatpush1.msra.mxu0 0.0
      %8964 = vmatprep.subr.mxu0 0.0
      %8965 = vmatpush1.msra.mxu0 0.0
      %8966 = vmatprep.subr.mxu0 0.0
      %8967 = vmatpush1.msra.mxu0 0.0
      %8968 = vmatprep.subr.mxu0 0.0
      %8969 = vmatpush1.msra.mxu0 0.0
      %8970 = vmatprep.subr.mxu0 0.0
      %8971 = vmatpush1.msra.mxu0 0.0
      %8972 = vmatprep.subr.mxu0 0.0
      %8973 = vmatpush1.msra.mxu0 0.0
      %8974 = vmatprep.subr.mxu0 0.0
      %8975 = vmatpush1.msra.mxu0 0.0
      %8976 = vmatprep.subr.mxu0 0.0
      %8977 = vmatpush1.msra.mxu0 0.0
      %8978 = vmatprep.subr.mxu0 0.0
      %8979 = vmatpush1.msra.mxu0 0.0
      %8980 = vmatprep.subr.mxu0 0.0
      %8981 = vmatpush1.msra.mxu0 0.0
      %8982 = vmatprep.subr.mxu0 0.0
      %8983 = vmatpush1.msra.mxu0 0.0
      %8984 = vmatprep.subr.mxu0 0.0
      %8985 = vmatpush1.msra.mxu0 0.0
      %8986 = vmatprep.subr.mxu0 0.0
      %8987 = vmatpush1.msra.mxu0 0.0
      %8988 = vmatprep.subr.mxu0 0.0
      %8989 = vmatpush1.msra.mxu0 0.0
      %8990 = vmatprep.subr.mxu0 0.0
      %8991 = vmatpush1.msra.mxu0 0.0
      %8992 = vmatprep.subr.mxu0 0.0
      %8993 = vmatpush1.msra.mxu0 0.0
      %8994 = vmatprep.subr.mxu0 0.0
      %8995 = vmatpush1.msra.mxu0 0.0
      %8996 = vmatprep.subr.mxu0 0.0
      %8997 = vmatpush1.msra.mxu0 0.0
      %8998 = vmatprep.mubr.f32.mxu0 0.0
      %8999 = vmatmul.mubr.f32.gmra.mrb[0].mxu0 %v8932
      %v9000 = vpop.f32.mrb[0].mxu0
      %v9001 = vadd.f32 %v8688, %v9000
      %v9002 = vpop.f32.mrb[0].mxu0
      %v9003 = vadd.f32 %v8690, %v9002
      %9004 = vdwg.mxu0
      %9005 = vmatprep.subr.mxu0 %v8921
      %9006 = vmatpush1.msra.mxu0 %v8920
      %9007 = vmatprep.subr.mxu0 0.0
      %9008 = vmatpush1.msra.mxu0 0.0
      %9009 = vmatprep.subr.mxu0 0.0
      %9010 = vmatpush1.msra.mxu0 0.0
      %9011 = vmatprep.subr.mxu0 0.0
      %9012 = vmatpush1.msra.mxu0 0.0
      %9013 = vmatprep.subr.mxu0 0.0
      %9014 = vmatpush1.msra.mxu0 0.0
      %9015 = vmatprep.subr.mxu0 0.0
      %9016 = vmatpush1.msra.mxu0 0.0
      %9017 = vmatprep.subr.mxu0 0.0
      %9018 = vmatpush1.msra.mxu0 0.0
      %9019 = vmatprep.subr.mxu0 0.0
      %9020 = vmatpush1.msra.mxu0 0.0
      %9021 = vmatprep.subr.mxu0 0.0
      %9022 = vmatpush1.msra.mxu0 0.0
      %9023 = vmatprep.subr.mxu0 0.0
      %9024 = vmatpush1.msra.mxu0 0.0
      %9025 = vmatprep.subr.mxu0 0.0
      %9026 = vmatpush1.msra.mxu0 0.0
      %9027 = vmatprep.subr.mxu0 0.0
      %9028 = vmatpush1.msra.mxu0 0.0
      %9029 = vmatprep.subr.mxu0 0.0
      %9030 = vmatpush1.msra.mxu0 0.0
      %9031 = vmatprep.subr.mxu0 0.0
      %9032 = vmatpush1.msra.mxu0 0.0
      %9033 = vmatprep.subr.mxu0 0.0
      %9034 = vmatpush1.msra.mxu0 0.0
      %9035 = vmatprep.subr.mxu0 0.0
      %9036 = vmatpush1.msra.mxu0 0.0
      %9037 = vmatprep.subr.mxu0 0.0
      %9038 = vmatpush1.msra.mxu0 0.0
      %9039 = vmatprep.subr.mxu0 0.0
      %9040 = vmatpush1.msra.mxu0 0.0
      %9041 = vmatprep.subr.mxu0 0.0
      %9042 = vmatpush1.msra.mxu0 0.0
      %9043 = vmatprep.subr.mxu0 0.0
      %9044 = vmatpush1.msra.mxu0 0.0
      %9045 = vmatprep.subr.mxu0 0.0
      %9046 = vmatpush1.msra.mxu0 0.0
      %9047 = vmatprep.subr.mxu0 0.0
      %9048 = vmatpush1.msra.mxu0 0.0
      %9049 = vmatprep.subr.mxu0 0.0
      %9050 = vmatpush1.msra.mxu0 0.0
      %9051 = vmatprep.subr.mxu0 0.0
      %9052 = vmatpush1.msra.mxu0 0.0
      %9053 = vmatprep.subr.mxu0 0.0
      %9054 = vmatpush1.msra.mxu0 0.0
      %9055 = vmatprep.subr.mxu0 0.0
      %9056 = vmatpush1.msra.mxu0 0.0
      %9057 = vmatprep.subr.mxu0 0.0
      %9058 = vmatpush1.msra.mxu0 0.0
      %9059 = vmatprep.subr.mxu0 0.0
      %9060 = vmatpush1.msra.mxu0 0.0
      %9061 = vmatprep.subr.mxu0 0.0
      %9062 = vmatpush1.msra.mxu0 0.0
      %9063 = vmatprep.subr.mxu0 0.0
      %9064 = vmatpush1.msra.mxu0 0.0
      %9065 = vmatprep.subr.mxu0 0.0
      %9066 = vmatpush1.msra.mxu0 0.0
      %9067 = vmatprep.subr.mxu0 0.0
      %9068 = vmatpush1.msra.mxu0 0.0
      %9069 = vmatprep.mubr.f32.mxu0 0.0
      %9070 = vmatmul.mubr.f32.gmra.mrb[0].mxu0 %v8932
      %v9071 = vpop.f32.mrb[0].mxu0
      %v9072 = vadd.f32 %v8759, %v9071
      %v9073 = vpop.f32.mrb[0].mxu0
      %v9074 = vadd.f32 %v8761, %v9073
      %9075 = vdwg.mxu0
      %9076 = vmatprep.subr.mxu0 %v8923
      %9077 = vmatpush1.msra.mxu0 %v8922
      %9078 = vmatprep.subr.mxu0 0.0
      %9079 = vmatpush1.msra.mxu0 0.0
      %9080 = vmatprep.subr.mxu0 0.0
      %9081 = vmatpush1.msra.mxu0 0.0
      %9082 = vmatprep.subr.mxu0 0.0
      %9083 = vmatpush1.msra.mxu0 0.0
      %9084 = vmatprep.subr.mxu0 0.0
      %9085 = vmatpush1.msra.mxu0 0.0
      %9086 = vmatprep.subr.mxu0 0.0
      %9087 = vmatpush1.msra.mxu0 0.0
      %9088 = vmatprep.subr.mxu0 0.0
      %9089 = vmatpush1.msra.mxu0 0.0
      %9090 = vmatprep.subr.mxu0 0.0
      %9091 = vmatpush1.msra.mxu0 0.0
      %9092 = vmatprep.subr.mxu0 0.0
      %9093 = vmatpush1.msra.mxu0 0.0
      %9094 = vmatprep.subr.mxu0 0.0
      %9095 = vmatpush1.msra.mxu0 0.0
      %9096 = vmatprep.subr.mxu0 0.0
      %9097 = vmatpush1.msra.mxu0 0.0
      %9098 = vmatprep.subr.mxu0 0.0
      %9099 = vmatpush1.msra.mxu0 0.0
      %9100 = vmatprep.subr.mxu0 0.0
      %9101 = vmatpush1.msra.mxu0 0.0
      %9102 = vmatprep.subr.mxu0 0.0
      %9103 = vmatpush1.msra.mxu0 0.0
      %9104 = vmatprep.subr.mxu0 0.0
      %9105 = vmatpush1.msra.mxu0 0.0
      %9106 = vmatprep.subr.mxu0 0.0
      %9107 = vmatpush1.msra.mxu0 0.0
      %9108 = vmatprep.subr.mxu0 0.0
      %9109 = vmatpush1.msra.mxu0 0.0
      %9110 = vmatprep.subr.mxu0 0.0
      %9111 = vmatpush1.msra.mxu0 0.0
      %9112 = vmatprep.subr.mxu0 0.0
      %9113 = vmatpush1.msra.mxu0 0.0
      %9114 = vmatprep.subr.mxu0 0.0
      %9115 = vmatpush1.msra.mxu0 0.0
      %9116 = vmatprep.subr.mxu0 0.0
      %9117 = vmatpush1.msra.mxu0 0.0
      %9118 = vmatprep.subr.mxu0 0.0
      %9119 = vmatpush1.msra.mxu0 0.0
      %9120 = vmatprep.subr.mxu0 0.0
      %9121 = vmatpush1.msra.mxu0 0.0
      %9122 = vmatprep.subr.mxu0 0.0
      %9123 = vmatpush1.msra.mxu0 0.0
      %9124 = vmatprep.subr.mxu0 0.0
      %9125 = vmatpush1.msra.mxu0 0.0
      %9126 = vmatprep.subr.mxu0 0.0
      %9127 = vmatpush1.msra.mxu0 0.0
      %9128 = vmatprep.subr.mxu0 0.0
      %9129 = vmatpush1.msra.mxu0 0.0
      %9130 = vmatprep.subr.mxu0 0.0
      %9131 = vmatpush1.msra.mxu0 0.0
      %9132 = vmatprep.subr.mxu0 0.0
      %9133 = vmatpush1.msra.mxu0 0.0
      %9134 = vmatprep.subr.mxu0 0.0
      %9135 = vmatpush1.msra.mxu0 0.0
      %9136 = vmatprep.subr.mxu0 0.0
      %9137 = vmatpush1.msra.mxu0 0.0
      %9138 = vmatprep.subr.mxu0 0.0
      %9139 = vmatpush1.msra.mxu0 0.0
      %9140 = vmatprep.mubr.f32.mxu0 0.0
      %9141 = vmatmul.mubr.f32.gmra.mrb[0].mxu0 %v8932
      %v9142 = vpop.f32.mrb[0].mxu0
      %v9143 = vadd.f32 %v8830, %v9142
      %v9144 = vpop.f32.mrb[0].mxu0
      %v9145 = vadd.f32 %v8832, %v9144
      %9146 = vdwg.mxu0
      %9147 = vmatprep.subr.mxu0 0.0
      %9148 = vmatpush1.msra.mxu0 %v8917
      %9149 = vmatprep.subr.mxu0 0.0
      %9150 = vmatpush1.msra.mxu0 0.0
      %9151 = vmatprep.subr.mxu0 0.0
      %9152 = vmatpush1.msra.mxu0 0.0
      %9153 = vmatprep.subr.mxu0 0.0
      %9154 = vmatpush1.msra.mxu0 0.0
      %9155 = vmatprep.subr.mxu0 0.0
      %9156 = vmatpush1.msra.mxu0 0.0
      %9157 = vmatprep.subr.mxu0 0.0
      %9158 = vmatpush1.msra.mxu0 0.0
      %9159 = vmatprep.subr.mxu0 0.0
      %9160 = vmatpush1.msra.mxu0 0.0
      %9161 = vmatprep.subr.mxu0 0.0
      %9162 = vmatpush1.msra.mxu0 0.0
      %9163 = vmatprep.subr.mxu0 0.0
      %9164 = vmatpush1.msra.mxu0 0.0
      %9165 = vmatprep.subr.mxu0 0.0
      %9166 = vmatpush1.msra.mxu0 0.0
      %9167 = vmatprep.subr.mxu0 0.0
      %9168 = vmatpush1.msra.mxu0 0.0
      %9169 = vmatprep.subr.mxu0 0.0
      %9170 = vmatpush1.msra.mxu0 0.0
      %9171 = vmatprep.subr.mxu0 0.0
      %9172 = vmatpush1.msra.mxu0 0.0
      %9173 = vmatprep.subr.mxu0 0.0
      %9174 = vmatpush1.msra.mxu0 0.0
      %9175 = vmatprep.subr.mxu0 0.0
      %9176 = vmatpush1.msra.mxu0 0.0
      %9177 = vmatprep.subr.mxu0 0.0
      %9178 = vmatpush1.msra.mxu0 0.0
      %9179 = vmatprep.subr.mxu0 0.0
      %9180 = vmatpush1.msra.mxu0 0.0
      %9181 = vmatprep.subr.mxu0 0.0
      %9182 = vmatpush1.msra.mxu0 0.0
      %9183 = vmatprep.subr.mxu0 0.0
      %9184 = vmatpush1.msra.mxu0 0.0
      %9185 = vmatprep.subr.mxu0 0.0
      %9186 = vmatpush1.msra.mxu0 0.0
      %9187 = vmatprep.subr.mxu0 0.0
      %9188 = vmatpush1.msra.mxu0 0.0
      %9189 = vmatprep.subr.mxu0 0.0
      %9190 = vmatpush1.msra.mxu0 0.0
      %9191 = vmatprep.subr.mxu0 0.0
      %9192 = vmatpush1.msra.mxu0 0.0
      %9193 = vmatprep.subr.mxu0 0.0
      %9194 = vmatpush1.msra.mxu0 0.0
      %9195 = vmatprep.subr.mxu0 0.0
      %9196 = vmatpush1.msra.mxu0 0.0
      %9197 = vmatprep.subr.mxu0 0.0
      %9198 = vmatpush1.msra.mxu0 0.0
      %9199 = vmatprep.subr.mxu0 0.0
      %9200 = vmatpush1.msra.mxu0 0.0
      %9201 = vmatprep.subr.mxu0 0.0
      %9202 = vmatpush1.msra.mxu0 0.0
      %9203 = vmatprep.subr.mxu0 0.0
      %9204 = vmatpush1.msra.mxu0 0.0
      %9205 = vmatprep.subr.mxu0 0.0
      %9206 = vmatpush1.msra.mxu0 0.0
      %9207 = vmatprep.subr.mxu0 0.0
      %9208 = vmatpush1.msra.mxu0 0.0
      %9209 = vmatprep.subr.mxu0 0.0
      %9210 = vmatpush1.msra.mxu0 0.0
      %9211 = vmatprep.mubr.f32.mxu0 0.0
      %9212 = vmatmul.mubr.f32.gmra.mrb[0].mxu0 %v8932
      %v9213 = vpop.f32.mrb[0].mxu0
      %v9214 = vadd.f32 %v8901, %v9213
      %v9215 = vpop.f32.mrb[0].mxu0
      %9216 = vdwg.mxu0
      %s9217 = scalar_lea.vmem %s9, 16
      %v9218 = vld [vmem:[%s9217] sm:$0xff]
      %9219 = vrot.lane.b32.xlu0 %v8570, 18
      %v9220 = vpop.permute.xlu0 %9219
      %9221 = vrot.lane.b32.xlu0 %v8571, 18
      %v9222 = vpop.permute.xlu0 %9221
      %9223 = vrot.lane.b32.xlu0 %v8572, 18
      %v9224 = vpop.permute.xlu0 %9223
      %9225 = vrot.lane.b32.xlu0 %v8573, 18
      %v9226 = vpop.permute.xlu0 %9225
      %9227 = vrot.lane.b32.xlu0 %v8574, 18
      %v9228 = vpop.permute.xlu0 %9227
      %9229 = vrot.lane.b32.xlu0 %v8575, 18
      %v9230 = vpop.permute.xlu0 %9229
      %9231 = vrot.lane.b32.xlu0 %v8576, 18
      %v9232 = vpop.permute.xlu0 %9231
      %9233 = vrot.lane.b32.xlu0 %v8579, 18
      %v9234 = vpop.permute.xlu0 %9233
      %v9235 = vsel %vm2174, %v9220, %v9222
      %v9236 = vsel %vm2174, %v9222, %v9224
      %v9237 = vsel %vm2174, %v9224, %v9226
      %v9238 = vsel %vm2174, %v9226, %v9228
      %v9239 = vsel %vm2174, %v9228, %v9230
      %v9240 = vsel %vm2174, %v9230, %v9232
      %v9241 = vsel %vm2174, %v9232, %v9234
      %v9250 = vsel %vm1555, %v9218, 0
      %9252 = vmatprep.subr.mxu0 %v9236
      %9253 = vmatpush1.msra.mxu0 %v9235
      %9254 = vmatprep.subr.mxu0 0.0
      %9255 = vmatpush1.msra.mxu0 0.0
      %9256 = vmatprep.subr.mxu0 0.0
      %9257 = vmatpush1.msra.mxu0 0.0
      %9258 = vmatprep.subr.mxu0 0.0
      %9259 = vmatpush1.msra.mxu0 0.0
      %9260 = vmatprep.subr.mxu0 0.0
      %9261 = vmatpush1.msra.mxu0 0.0
      %9262 = vmatprep.subr.mxu0 0.0
      %9263 = vmatpush1.msra.mxu0 0.0
      %9264 = vmatprep.subr.mxu0 0.0
      %9265 = vmatpush1.msra.mxu0 0.0
      %9266 = vmatprep.subr.mxu0 0.0
      %9267 = vmatpush1.msra.mxu0 0.0
      %9268 = vmatprep.subr.mxu0 0.0
      %9269 = vmatpush1.msra.mxu0 0.0
      %9270 = vmatprep.subr.mxu0 0.0
      %9271 = vmatpush1.msra.mxu0 0.0
      %9272 = vmatprep.subr.mxu0 0.0
      %9273 = vmatpush1.msra.mxu0 0.0
      %9274 = vmatprep.subr.mxu0 0.0
      %9275 = vmatpush1.msra.mxu0 0.0
      %9276 = vmatprep.subr.mxu0 0.0
      %9277 = vmatpush1.msra.mxu0 0.0
      %9278 = vmatprep.subr.mxu0 0.0
      %9279 = vmatpush1.msra.mxu0 0.0
      %9280 = vmatprep.subr.mxu0 0.0
      %9281 = vmatpush1.msra.mxu0 0.0
      %9282 = vmatprep.subr.mxu0 0.0
      %9283 = vmatpush1.msra.mxu0 0.0
      %9284 = vmatprep.subr.mxu0 0.0
      %9285 = vmatpush1.msra.mxu0 0.0
      %9286 = vmatprep.subr.mxu0 0.0
      %9287 = vmatpush1.msra.mxu0 0.0
      %9288 = vmatprep.subr.mxu0 0.0
      %9289 = vmatpush1.msra.mxu0 0.0
      %9290 = vmatprep.subr.mxu0 0.0
      %9291 = vmatpush1.msra.mxu0 0.0
      %9292 = vmatprep.subr.mxu0 0.0
      %9293 = vmatpush1.msra.mxu0 0.0
      %9294 = vmatprep.subr.mxu0 0.0
      %9295 = vmatpush1.msra.mxu0 0.0
      %9296 = vmatprep.subr.mxu0 0.0
      %9297 = vmatpush1.msra.mxu0 0.0
      %9298 = vmatprep.subr.mxu0 0.0
      %9299 = vmatpush1.msra.mxu0 0.0
      %9300 = vmatprep.subr.mxu0 0.0
      %9301 = vmatpush1.msra.mxu0 0.0
      %9302 = vmatprep.subr.mxu0 0.0
      %9303 = vmatpush1.msra.mxu0 0.0
      %9304 = vmatprep.subr.mxu0 0.0
      %9305 = vmatpush1.msra.mxu0 0.0
      %9306 = vmatprep.subr.mxu0 0.0
      %9307 = vmatpush1.msra.mxu0 0.0
      %9308 = vmatprep.subr.mxu0 0.0
      %9309 = vmatpush1.msra.mxu0 0.0
      %9310 = vmatprep.subr.mxu0 0.0
      %9311 = vmatpush1.msra.mxu0 0.0
      %9312 = vmatprep.subr.mxu0 0.0
      %9313 = vmatpush1.msra.mxu0 0.0
      %9314 = vmatprep.subr.mxu0 0.0
      %9315 = vmatpush1.msra.mxu0 0.0
      %9316 = vmatprep.mubr.f32.mxu0 0.0
      %9317 = vmatmul.mubr.f32.gmra.mrb[0].mxu0 %v9250
      %v9318 = vpop.f32.mrb[0].mxu0
      %v9319 = vadd.f32 0.0, %v9318
      %v9320 = vpop.f32.mrb[0].mxu0
      %v9321 = vadd.f32 0.0, %v9320
      %9322 = vdwg.mxu0
      %9323 = vmatprep.subr.mxu0 %v9238
      %9324 = vmatpush1.msra.mxu0 %v9237
      %9325 = vmatprep.subr.mxu0 0.0
      %9326 = vmatpush1.msra.mxu0 0.0
      %9327 = vmatprep.subr.mxu0 0.0
      %9328 = vmatpush1.msra.mxu0 0.0
      %9329 = vmatprep.subr.mxu0 0.0
      %9330 = vmatpush1.msra.mxu0 0.0
      %9331 = vmatprep.subr.mxu0 0.0
      %9332 = vmatpush1.msra.mxu0 0.0
      %9333 = vmatprep.subr.mxu0 0.0
      %9334 = vmatpush1.msra.mxu0 0.0
      %9335 = vmatprep.subr.mxu0 0.0
      %9336 = vmatpush1.msra.mxu0 0.0
      %9337 = vmatprep.subr.mxu0 0.0
      %9338 = vmatpush1.msra.mxu0 0.0
      %9339 = vmatprep.subr.mxu0 0.0
      %9340 = vmatpush1.msra.mxu0 0.0
      %9341 = vmatprep.subr.mxu0 0.0
      %9342 = vmatpush1.msra.mxu0 0.0
      %9343 = vmatprep.subr.mxu0 0.0
      %9344 = vmatpush1.msra.mxu0 0.0
      %9345 = vmatprep.subr.mxu0 0.0
      %9346 = vmatpush1.msra.mxu0 0.0
      %9347 = vmatprep.subr.mxu0 0.0
      %9348 = vmatpush1.msra.mxu0 0.0
      %9349 = vmatprep.subr.mxu0 0.0
      %9350 = vmatpush1.msra.mxu0 0.0
      %9351 = vmatprep.subr.mxu0 0.0
      %9352 = vmatpush1.msra.mxu0 0.0
      %9353 = vmatprep.subr.mxu0 0.0
      %9354 = vmatpush1.msra.mxu0 0.0
      %9355 = vmatprep.subr.mxu0 0.0
      %9356 = vmatpush1.msra.mxu0 0.0
      %9357 = vmatprep.subr.mxu0 0.0
      %9358 = vmatpush1.msra.mxu0 0.0
      %9359 = vmatprep.subr.mxu0 0.0
      %9360 = vmatpush1.msra.mxu0 0.0
      %9361 = vmatprep.subr.mxu0 0.0
      %9362 = vmatpush1.msra.mxu0 0.0
      %9363 = vmatprep.subr.mxu0 0.0
      %9364 = vmatpush1.msra.mxu0 0.0
      %9365 = vmatprep.subr.mxu0 0.0
      %9366 = vmatpush1.msra.mxu0 0.0
      %9367 = vmatprep.subr.mxu0 0.0
      %9368 = vmatpush1.msra.mxu0 0.0
      %9369 = vmatprep.subr.mxu0 0.0
      %9370 = vmatpush1.msra.mxu0 0.0
      %9371 = vmatprep.subr.mxu0 0.0
      %9372 = vmatpush1.msra.mxu0 0.0
      %9373 = vmatprep.subr.mxu0 0.0
      %9374 = vmatpush1.msra.mxu0 0.0
      %9375 = vmatprep.subr.mxu0 0.0
      %9376 = vmatpush1.msra.mxu0 0.0
      %9377 = vmatprep.subr.mxu0 0.0
      %9378 = vmatpush1.msra.mxu0 0.0
      %9379 = vmatprep.subr.mxu0 0.0
      %9380 = vmatpush1.msra.mxu0 0.0
      %9381 = vmatprep.subr.mxu0 0.0
      %9382 = vmatpush1.msra.mxu0 0.0
      %9383 = vmatprep.subr.mxu0 0.0
      %9384 = vmatpush1.msra.mxu0 0.0
      %9385 = vmatprep.subr.mxu0 0.0
      %9386 = vmatpush1.msra.mxu0 0.0
      %9387 = vmatprep.mubr.f32.mxu0 0.0
      %9388 = vmatmul.mubr.f32.gmra.mrb[0].mxu0 %v9250
      %v9389 = vpop.f32.mrb[0].mxu0
      %v9390 = vadd.f32 0.0, %v9389
      %v9391 = vpop.f32.mrb[0].mxu0
      %v9392 = vadd.f32 0.0, %v9391
      %9393 = vdwg.mxu0
      %9394 = vmatprep.subr.mxu0 %v9240
      %9395 = vmatpush1.msra.mxu0 %v9239
      %9396 = vmatprep.subr.mxu0 0.0
      %9397 = vmatpush1.msra.mxu0 0.0
      %9398 = vmatprep.subr.mxu0 0.0
      %9399 = vmatpush1.msra.mxu0 0.0
      %9400 = vmatprep.subr.mxu0 0.0
      %9401 = vmatpush1.msra.mxu0 0.0
      %9402 = vmatprep.subr.mxu0 0.0
      %9403 = vmatpush1.msra.mxu0 0.0
      %9404 = vmatprep.subr.mxu0 0.0
      %9405 = vmatpush1.msra.mxu0 0.0
      %9406 = vmatprep.subr.mxu0 0.0
      %9407 = vmatpush1.msra.mxu0 0.0
      %9408 = vmatprep.subr.mxu0 0.0
      %9409 = vmatpush1.msra.mxu0 0.0
      %9410 = vmatprep.subr.mxu0 0.0
      %9411 = vmatpush1.msra.mxu0 0.0
      %9412 = vmatprep.subr.mxu0 0.0
      %9413 = vmatpush1.msra.mxu0 0.0
      %9414 = vmatprep.subr.mxu0 0.0
      %9415 = vmatpush1.msra.mxu0 0.0
      %9416 = vmatprep.subr.mxu0 0.0
      %9417 = vmatpush1.msra.mxu0 0.0
      %9418 = vmatprep.subr.mxu0 0.0
      %9419 = vmatpush1.msra.mxu0 0.0
      %9420 = vmatprep.subr.mxu0 0.0
      %9421 = vmatpush1.msra.mxu0 0.0
      %9422 = vmatprep.subr.mxu0 0.0
      %9423 = vmatpush1.msra.mxu0 0.0
      %9424 = vmatprep.subr.mxu0 0.0
      %9425 = vmatpush1.msra.mxu0 0.0
      %9426 = vmatprep.subr.mxu0 0.0
      %9427 = vmatpush1.msra.mxu0 0.0
      %9428 = vmatprep.subr.mxu0 0.0
      %9429 = vmatpush1.msra.mxu0 0.0
      %9430 = vmatprep.subr.mxu0 0.0
      %9431 = vmatpush1.msra.mxu0 0.0
      %9432 = vmatprep.subr.mxu0 0.0
      %9433 = vmatpush1.msra.mxu0 0.0
      %9434 = vmatprep.subr.mxu0 0.0
      %9435 = vmatpush1.msra.mxu0 0.0
      %9436 = vmatprep.subr.mxu0 0.0
      %9437 = vmatpush1.msra.mxu0 0.0
      %9438 = vmatprep.subr.mxu0 0.0
      %9439 = vmatpush1.msra.mxu0 0.0
      %9440 = vmatprep.subr.mxu0 0.0
      %9441 = vmatpush1.msra.mxu0 0.0
      %9442 = vmatprep.subr.mxu0 0.0
      %9443 = vmatpush1.msra.mxu0 0.0
      %9444 = vmatprep.subr.mxu0 0.0
      %9445 = vmatpush1.msra.mxu0 0.0
      %9446 = vmatprep.subr.mxu0 0.0
      %9447 = vmatpush1.msra.mxu0 0.0
      %9448 = vmatprep.subr.mxu0 0.0
      %9449 = vmatpush1.msra.mxu0 0.0
      %9450 = vmatprep.subr.mxu0 0.0
      %9451 = vmatpush1.msra.mxu0 0.0
      %9452 = vmatprep.subr.mxu0 0.0
      %9453 = vmatpush1.msra.mxu0 0.0
      %9454 = vmatprep.subr.mxu0 0.0
      %9455 = vmatpush1.msra.mxu0 0.0
      %9456 = vmatprep.subr.mxu0 0.0
      %9457 = vmatpush1.msra.mxu0 0.0
      %9458 = vmatprep.mubr.f32.mxu0 0.0
      %9459 = vmatmul.mubr.f32.gmra.mrb[0].mxu0 %v9250
      %v9460 = vpop.f32.mrb[0].mxu0
      %v9461 = vadd.f32 0.0, %v9460
      %v9462 = vpop.f32.mrb[0].mxu0
      %v9463 = vadd.f32 0.0, %v9462
      %9464 = vdwg.mxu0
      %9465 = vmatprep.subr.mxu0 0.0
      %9466 = vmatpush1.msra.mxu0 %v9241
      %9467 = vmatprep.subr.mxu0 0.0
      %9468 = vmatpush1.msra.mxu0 0.0
      %9469 = vmatprep.subr.mxu0 0.0
      %9470 = vmatpush1.msra.mxu0 0.0
      %9471 = vmatprep.subr.mxu0 0.0
      %9472 = vmatpush1.msra.mxu0 0.0
      %9473 = vmatprep.subr.mxu0 0.0
      %9474 = vmatpush1.msra.mxu0 0.0
      %9475 = vmatprep.subr.mxu0 0.0
      %9476 = vmatpush1.msra.mxu0 0.0
      %9477 = vmatprep.subr.mxu0 0.0
      %9478 = vmatpush1.msra.mxu0 0.0
      %9479 = vmatprep.subr.mxu0 0.0
      %9480 = vmatpush1.msra.mxu0 0.0
      %9481 = vmatprep.subr.mxu0 0.0
      %9482 = vmatpush1.msra.mxu0 0.0
      %9483 = vmatprep.subr.mxu0 0.0
      %9484 = vmatpush1.msra.mxu0 0.0
      %9485 = vmatprep.subr.mxu0 0.0
      %9486 = vmatpush1.msra.mxu0 0.0
      %9487 = vmatprep.subr.mxu0 0.0
      %9488 = vmatpush1.msra.mxu0 0.0
      %9489 = vmatprep.subr.mxu0 0.0
      %9490 = vmatpush1.msra.mxu0 0.0
      %9491 = vmatprep.subr.mxu0 0.0
      %9492 = vmatpush1.msra.mxu0 0.0
      %9493 = vmatprep.subr.mxu0 0.0
      %9494 = vmatpush1.msra.mxu0 0.0
      %9495 = vmatprep.subr.mxu0 0.0
      %9496 = vmatpush1.msra.mxu0 0.0
      %9497 = vmatprep.subr.mxu0 0.0
      %9498 = vmatpush1.msra.mxu0 0.0
      %9499 = vmatprep.subr.mxu0 0.0
      %9500 = vmatpush1.msra.mxu0 0.0
      %9501 = vmatprep.subr.mxu0 0.0
      %9502 = vmatpush1.msra.mxu0 0.0
      %9503 = vmatprep.subr.mxu0 0.0
      %9504 = vmatpush1.msra.mxu0 0.0
      %9505 = vmatprep.subr.mxu0 0.0
      %9506 = vmatpush1.msra.mxu0 0.0
      %9507 = vmatprep.subr.mxu0 0.0
      %9508 = vmatpush1.msra.mxu0 0.0
      %9509 = vmatprep.subr.mxu0 0.0
      %9510 = vmatpush1.msra.mxu0 0.0
      %9511 = vmatprep.subr.mxu0 0.0
      %9512 = vmatpush1.msra.mxu0 0.0
      %9513 = vmatprep.subr.mxu0 0.0
      %9514 = vmatpush1.msra.mxu0 0.0
      %9515 = vmatprep.subr.mxu0 0.0
      %9516 = vmatpush1.msra.mxu0 0.0
      %9517 = vmatprep.subr.mxu0 0.0
      %9518 = vmatpush1.msra.mxu0 0.0
      %9519 = vmatprep.subr.mxu0 0.0
      %9520 = vmatpush1.msra.mxu0 0.0
      %9521 = vmatprep.subr.mxu0 0.0
      %9522 = vmatpush1.msra.mxu0 0.0
      %9523 = vmatprep.subr.mxu0 0.0
      %9524 = vmatpush1.msra.mxu0 0.0
      %9525 = vmatprep.subr.mxu0 0.0
      %9526 = vmatpush1.msra.mxu0 0.0
      %9527 = vmatprep.subr.mxu0 0.0
      %9528 = vmatpush1.msra.mxu0 0.0
      %9529 = vmatprep.mubr.f32.mxu0 0.0
      %9530 = vmatmul.mubr.f32.gmra.mrb[0].mxu0 %v9250
      %v9531 = vpop.f32.mrb[0].mxu0
      %v9532 = vadd.f32 0.0, %v9531
      %v9533 = vpop.f32.mrb[0].mxu0
      %9534 = vdwg.mxu0
      %v9535 = vadd.f32 %v9001, %v9319
      %v9536 = vadd.f32 %v9003, %v9321
      %v9537 = vadd.f32 %v9072, %v9390
      %v9538 = vadd.f32 %v9074, %v9392
      %v9539 = vadd.f32 %v9143, %v9461
      %v9540 = vadd.f32 %v9145, %v9463
      %v9541 = vadd.f32 %v9214, %v9532
      %9543 = vset.pattern.permute.xlu0 0
      %9544 = vperm.xlu0 %9543, %v8568
      %v9545 = vpop.permute.xlu0 %9544
      %v9547 = vadd.f32 %v9535, %v9545
      %v9548 = vadd.f32 %v9536, %v9545
      %v9549 = vadd.f32 %v9537, %v9545
      %v9550 = vadd.f32 %v9538, %v9545
      %v9551 = vadd.f32 %v9539, %v9545
      %v9552 = vadd.f32 %v9540, %v9545
      %v9553 = vadd.f32 %v9541, %v9545
      %v9554 = vadd.f32 %v6545, %v9547
      %v9555 = vadd.f32 %v6546, %v9548
      %v9556 = vadd.f32 %v6547, %v9549
      %v9557 = vadd.f32 %v6548, %v9550
      %v9558 = vadd.f32 %v6549, %v9551
      %v9559 = vadd.f32 %v6550, %v9552
      %v9560 = vadd.f32 %v6551, %v9553
      %9561 = vst [vmem:[%s413] sm:$0xff] %v9554
      %9562 = vst [vmem:[%s413 + $0x8] sm:$0xff] %v9555
      %9563 = vst [vmem:[%s413 + $0x10] sm:$0xff] %v9556
      %9564 = vst [vmem:[%s413 + $0x18] sm:$0xff] %v9557
      %9565 = vst [vmem:[%s413 + $0x20] sm:$0xff] %v9558
      %9566 = vst [vmem:[%s413 + $0x28] sm:$0xff] %v9559
      %vm9567 = vcmask 261120
      %9568 = vst.msk [vmem:[%s413 + $0x30] sm:$0xff] %vm9567, %v9560
      %p9569 = scmp.lt.s32.totalorder %s23, 1
      %s9570 = scalar_select %p9569, %s23, 1
      %s9571 = smul.addr %s9570, 7
      %s9572 = smul.addr %s9571, 8
      %s9573 = scalar_lea.vmem %s12, %s9572
      // Predicated region
      $region69: #{global_conv_block.1} parent=67 // pred_check
        %p9574 = pneg %p298
      $region70: #{global_conv_block.1} parent=67 // pred_check_branch
        %9576 = sbr.rel (%p9574) target = $region72
      $region71: #{global_conv_block.1} parent=67 // pred_region
        _
      $region72: #{global_conv_block.1} parent=67 // pred_fallthru
        _
    $region68: #{global_conv_block.1} parent=5 // pred_fallthru
      _
    %p9577 = scmp.le.s32.totalorder 2, %s18
    // Predicated region
    $region73: #{global_conv_block.1} parent=5 // pred_check
      %p9578 = pneg %p9577
    $region74: #{global_conv_block.1} parent=5 // pred_check_branch
      %9580 = sbr.rel (%p9578) target = $region76
    $region75: #{global_conv_block.1} parent=5 // pred_region
      %s9581 = ssub.s32 %s18, 2
      // Predicated region
      $region77: #{global_conv_block.1} parent=75 // pred_check
        %p9582 = pneg %p304
      $region78: #{global_conv_block.1} parent=75 // pred_check_branch
        %9584 = sbr.rel (%p9582) target = $region80
      $region79: #{global_conv_block.1} parent=75 // pred_region
        %p9585 = scmp.lt.s32.totalorder %s24, 1
        %s9586 = scalar_select %p9585, %s24, 1
        %s9587 = smul.addr %s9586, 7
        %s9588 = smul.addr %s9587, 8
        %s9589 = scalar_lea.vmem %s12, %s9588
      $region80: #{global_conv_block.1} parent=75 // pred_fallthru
        _
    $region76: #{global_conv_block.1} parent=5 // pred_fallthru
      _
  $region6: #{global_conv_block.1} parent=0 // loop_footer
    %s22 = sadd.s32 1, %s18
  $region7: #{global_conv_block.1} parent=0 // loop_footer_branch
    %17 = sbr.rel target = $region3
  $region8: #{global_conv_block.1} parent=0 // loop_exit
    _

</llo_original>
